<compile_context>
chip_gen: v7x
topology: tpu7x:2x2x1
jax: 0.10.0
libtpu: 0.0.40
codegen_flags: <defaults>
</compile_context>

<pallas_src>
import jax
import jax.numpy as jnp
from jax.experimental import pallas as pl
from jax.experimental.pallas import tpu as pltpu


# -----------------------------------------------------------------------------
# Flat spatial layout
#
# An (H, W, C) image is stored as a (LF, C) matrix with
#   LF = (H + 2) * (W + 2) + 2
# i.e. the zero-padded (H+2, W+2) image in row-major order plus one extra zero
# row at the front and the back.  Pixel (h, w) lives at row
#   r(h, w) = 1 + (h + 1) * (W + 2) + (w + 1).
# A 3x3 conv is then a single matmul against a (Cin, 9*Cout) weight followed by
# 9 statically shifted row slices of the result.  The "slab" of rows
# [r_lo, r_lo + H*(W+2)) covers every image pixel (plus some pad columns).
# -----------------------------------------------------------------------------


def _flat_dims(H, W):
    Wp = W + 2
    LF = (H + 2) * Wp + 2
    Mm = H * Wp
    r_lo = Wp + 1
    return Wp, LF, Mm, r_lo


def _to_flat(x_nhwc):
    """(N, H, W, C) -> (N, LF, C) canonical zero-padded flat layout."""
    N, H, W, C = x_nhwc.shape
    xp = jnp.pad(x_nhwc, ((0, 0), (1, 1), (1, 1), (0, 0)))
    xf = xp.reshape(N, (H + 2) * (W + 2), C)
    return jnp.pad(xf, ((0, 0), (1, 1), (0, 0)))


def _from_slab(slab, H, W):
    """(N, Mm, C) slab -> (N, H, W, C).  Valid pixels sit in columns 1..W."""
    N, _, C = slab.shape
    return slab.reshape(N, H, W + 2, C)[:, :, 1:W + 1, :]


def _interior_mask(H, W):
    """(LF, 1) float mask: 1 at real-pixel rows, 0 at all padding rows."""
    m = jnp.zeros((H + 2, W + 2), jnp.float32)
    m = m.at[1:H + 1, 1:W + 1].set(1.0)
    m = m.reshape(-1, 1)
    return jnp.pad(m, ((1, 1), (0, 0)))


def _w3x3_to_mat(w_oihw):
    """(Cout, Cin, 3, 3) -> (Cin, 9*Cout); tap k=3*ky+kx -> cols [k*Cout,(k+1)*Cout)."""
    Cout, Cin = w_oihw.shape[:2]
    w = jnp.transpose(w_oihw, (2, 3, 1, 0))          # (3, 3, Cin, Cout)
    w = w.reshape(9, Cin, Cout).transpose(1, 0, 2)   # (Cin, 9, Cout)
    return w.reshape(Cin, 9 * Cout)


def _w2x2_to_mat(w_oihw):
    """(Cout, Cin, 2, 2) -> (4*Cin, Cout) matching the space-to-depth layout."""
    return jnp.transpose(w_oihw, (2, 3, 1, 0)).reshape(-1, w_oihw.shape[0])


def _space_to_depth(x_nhwc):
    """(N, H, W, C) -> (N, H//2, W//2, 4*C); last dim ordered (ky, kx, c)."""
    N, H, W, C = x_nhwc.shape
    x = x_nhwc.reshape(N, H // 2, 2, W // 2, 2, C)
    x = jnp.transpose(x, (0, 1, 3, 2, 4, 5))
    return x.reshape(N, H // 2, W // 2, 4 * C)


# -----------------------------------------------------------------------------
# In-kernel compute helpers
# -----------------------------------------------------------------------------


def _matmul(a, b):
    return jnp.dot(a, b, preferred_element_type=jnp.float32)


def _prelu(x, a):
    return jnp.where(x >= 0, x, a * x)


def _conv3x3_slab(a_full, w9, bias, Wp, Mm, r_lo):
    """3x3 'same' conv on a canonical flat activation.

    a_full : (LF, Cin)   zero-padded flat activation (value)
    w9     : (Cin, 9*Cout)
    bias   : (1, Cout)
    returns: (Mm, Cout) slab (pad columns carry garbage; callers mask them)
    """
    cout = w9.shape[1] // 9
    y = _matmul(a_full, w9)                      # one MXU pass, total input reuse
    acc = None
    for k in range(9):
        ky, kx = divmod(k, 3)
        start = r_lo + (ky - 1) * Wp + (kx - 1)  # in [0, LF - Mm]
        blk = y[start:start + Mm, k * cout:(k + 1) * cout]
        acc = blk if acc is None else acc + blk
    return acc + bias


# -----------------------------------------------------------------------------
# Kernels
# -----------------------------------------------------------------------------


def _make_conv3x3_kernel(H, W):
    Wp, _, Mm, r_lo = _flat_dims(H, W)

    def kernel(x_ref, w_ref, b_ref, o_ref):
        # x_ref: (LF, Cin)  w_ref: (Cin, 9*Cout)  b_ref: (1, Cout)  o_ref: (Mm, Cout)
        o_ref[...] = _conv3x3_slab(x_ref[...], w_ref[...], b_ref[...],
                                   Wp, Mm, r_lo)

    return kernel


def _make_feblock_kernel(H, W, C):
    """H, W: spatial size AFTER the stride-2 down conv; C: block channel count."""
    Wp, LF, Mm, r_lo = _flat_dims(H, W)

    def kernel(x_ref, mask_ref, wd_ref, w3_ref, b_ref, ln_ref, alpha_ref,
               o_ref, pad_ref):
        # x_ref    : (LF, 4*Cin)  space-to-depth input in flat layout
        # mask_ref : (LF, 1)      interior mask
        # wd_ref   : (4*Cin, C)   down-conv weight
        # w3_ref   : (4, C, 9*C)  [rb1_w1, rb1_w2, rb2_w1, rb2_w2]
        # b_ref    : (5, C)       [down_b, rb1_b1, rb1_b2, rb2_b1, rb2_b2]
        # ln_ref   : (2, C)       [ln_gamma, ln_beta]
        # alpha_ref: SMEM (5,)    [down_a, rb1_a1, rb1_a2, rb2_a1, rb2_a2]
        # o_ref    : (Mm, C)      output slab
        # pad_ref  : (LF, C)      VMEM scratch: re-zero-padded intermediate
        mask = mask_ref[...]                               # (LF, 1)
        colmask = mask_ref[r_lo:r_lo + Mm, :]              # (Mm, 1)

        # ---- down: 2x2 stride-2 conv (one matmul on s2d input) + PReLU ------
        d = _matmul(x_ref[...], wd_ref[...]) + b_ref[0:1, :]
        a0 = _prelu(d, alpha_ref[0]) * mask                # canonical flat layout

        pad_ref[...] = jnp.zeros((LF, C), jnp.float32)

        # ---- ResBlock 1 ------------------------------------------------------
        h = _conv3x3_slab(a0, w3_ref[0], b_ref[1:2, :], Wp, Mm, r_lo)
        h = _prelu(h, alpha_ref[1])
        pad_ref[r_lo:r_lo + Mm, :] = h * colmask           # re-zero-pad in VMEM
        h = _conv3x3_slab(pad_ref[...], w3_ref[1], b_ref[2:3, :], Wp, Mm, r_lo)
        r1 = _prelu(h + a0[r_lo:r_lo + Mm, :], alpha_ref[2])

        # ---- ResBlock 2 ------------------------------------------------------
        pad_ref[r_lo:r_lo + Mm, :] = r1 * colmask
        h = _conv3x3_slab(pad_ref[...], w3_ref[2], b_ref[3:4, :], Wp, Mm, r_lo)
        h = _prelu(h, alpha_ref[3])
        pad_ref[r_lo:r_lo + Mm, :] = h * colmask
        h = _conv3x3_slab(pad_ref[...], w3_ref[3], b_ref[4:5, :], Wp, Mm, r_lo)
        r2 = _prelu(h + r1, alpha_ref[4])

        # ---- LayerNorm over channels (lane dim) ------------------------------
        mu = jnp.mean(r2, axis=1, keepdims=True)
        var = jnp.mean((r2 - mu) * (r2 - mu), axis=1, keepdims=True)
        y = (r2 - mu) * jax.lax.rsqrt(var + 1e-5)
        o_ref[...] = y * ln_ref[0:1, :] + ln_ref[1:2, :]

    return kernel


# -----------------------------------------------------------------------------
# Wrappers
# -----------------------------------------------------------------------------


def _conv3x3_pallas(x_nhwc, w_oihw, b):
    """3x3 'same' conv (no activation), NHWC in / NHWC out."""
    N, H, W, Cin = x_nhwc.shape
    Cout = w_oihw.shape[0]
    cin_p = ((Cin + 7) // 8) * 8
    if cin_p != Cin:                       # pad tiny channel counts (e.g. RGB=3)
        x_nhwc = jnp.pad(x_nhwc, ((0, 0), (0, 0), (0, 0), (0, cin_p - Cin)))
        w_oihw = jnp.pad(w_oihw, ((0, 0), (0, cin_p - Cin), (0, 0), (0, 0)))
    _, LF, Mm, _ = _flat_dims(H, W)
    xf = _to_flat(x_nhwc)                  # (N, LF, cin_p)
    w9 = _w3x3_to_mat(w_oihw)              # (cin_p, 9*Cout)
    b2 = b.reshape(1, Cout)

    out = pl.pallas_call(
        _make_conv3x3_kernel(H, W),
        out_shape=jax.ShapeDtypeStruct((N, Mm, Cout), jnp.float32),
        grid_spec=pltpu.PrefetchScalarGridSpec(
            num_scalar_prefetch=0,
            grid=(N,),
            in_specs=[
                pl.BlockSpec((pl.Squeezed(), LF, cin_p), lambda n: (n, 0, 0)),
                pl.BlockSpec((cin_p, 9 * Cout), lambda n: (0, 0)),
                pl.BlockSpec((1, Cout), lambda n: (0, 0)),
            ],
            out_specs=pl.BlockSpec((pl.Squeezed(), Mm, Cout),
                                   lambda n: (n, 0, 0)),
        ),
        compiler_params=pltpu.CompilerParams(
            dimension_semantics=("parallel",)),
    )(xf, w9, b2)
    return _from_slab(out, H, W)


def _feblock_pallas(x_nhwc, blk):
    """One fused FEBlock: 2x2/s2 down conv + PReLU + 2 ResBlocks + LayerNorm."""
    N, H, W, Cin = x_nhwc.shape
    assert H % 2 == 0 and W % 2 == 0
    H2, W2 = H // 2, W // 2
    C = blk["down_w"].shape[0]
    _, LF, Mm, _ = _flat_dims(H2, W2)
    cin4 = 4 * Cin

    xs = _to_flat(_space_to_depth(x_nhwc))        # (N, LF, 4*Cin)
    mask = _interior_mask(H2, W2)                 # (LF, 1)

    wd = _w2x2_to_mat(blk["down_w"])              # (4*Cin, C)
    w3 = jnp.stack([_w3x3_to_mat(blk["rb1_w1"]), _w3x3_to_mat(blk["rb1_w2"]),
                    _w3x3_to_mat(blk["rb2_w1"]), _w3x3_to_mat(blk["rb2_w2"])])
    bb = jnp.stack([blk["down_b"], blk["rb1_b1"], blk["rb1_b2"],
                    blk["rb2_b1"], blk["rb2_b2"]])
    ln = jnp.stack([blk["ln_g"], blk["ln_b"]])
    alphas = jnp.stack([blk["down_a"], blk["rb1_a1"], blk["rb1_a2"],
                        blk["rb2_a1"], blk["rb2_a2"]])

    out = pl.pallas_call(
        _make_feblock_kernel(H2, W2, C),
        out_shape=jax.ShapeDtypeStruct((N, Mm, C), jnp.float32),
        grid_spec=pltpu.PrefetchScalarGridSpec(
            num_scalar_prefetch=0,
            grid=(N,),
            in_specs=[
                pl.BlockSpec((pl.Squeezed(), LF, cin4), lambda n: (n, 0, 0)),
                pl.BlockSpec((LF, 1), lambda n: (0, 0)),
                pl.BlockSpec((cin4, C), lambda n: (0, 0)),
                pl.BlockSpec((4, C, 9 * C), lambda n: (0, 0, 0)),
                pl.BlockSpec((5, C), lambda n: (0, 0)),
                pl.BlockSpec((2, C), lambda n: (0, 0)),
                pl.BlockSpec(memory_space=pltpu.MemorySpace.SMEM),
            ],
            out_specs=pl.BlockSpec((pl.Squeezed(), Mm, C), lambda n: (n, 0, 0)),
            scratch_shapes=[pltpu.VMEM((LF, C), jnp.float32)],
        ),
        compiler_params=pltpu.CompilerParams(
            dimension_semantics=("parallel",)),
    )(xs, mask, wd, w3, bb, ln, alphas)
    return _from_slab(out, H2, W2)


@jax.jit
def feature_extractor_pallas(frame, params):
    """frame: (N, 3, H, W) NCHW.  Returns (feat0, feat1, feat2) in NCHW."""
    x = jnp.transpose(frame, (0, 2, 3, 1))                        # NHWC
    x = _conv3x3_pallas(x, params["emb_w"], params["emb_b"])      # emb conv
    feats = []
    for blk in params["blocks"]:
        x = _feblock_pallas(x, blk)
        feats.append(jnp.transpose(x, (0, 3, 1, 2)))
    return tuple(feats)


# -----------------------------------------------------------------------------
# Pure-JAX reference matching the PyTorch forward
# -----------------------------------------------------------------------------


def _conv_ref(x, w, b, stride=1, pad=1):
    y = jax.lax.conv_general_dilated(
        x, w, window_strides=(stride, stride),
        padding=((pad, pad), (pad, pad)),
        dimension_numbers=("NCHW", "OIHW", "NCHW"),
        precision=jax.lax.Precision.HIGHEST)
    return y + b.reshape(1, -1, 1, 1)


def _prelu_ref(x, a):
    return jnp.where(x >= 0, x, a * x)


def _resblock_ref(x, w1, b1, a1, w2, b2, a2):
    out = _prelu_ref(_conv_ref(x, w1, b1), a1)
    out = _conv_ref(out, w2, b2)
    out = out + x                                  # identity downsample
    return _prelu_ref(out, a2)


def _feblock_ref(x, blk):
    x = _prelu_ref(_conv_ref(x, blk["down_w"], blk["down_b"], stride=2, pad=0),
                   blk["down_a"])
    x = _resblock_ref(x, blk["rb1_w1"], blk["rb1_b1"], blk["rb1_a1"],
                      blk["rb1_w2"], blk["rb1_b2"], blk["rb1_a2"])
    x = _resblock_ref(x, blk["rb2_w1"], blk["rb2_b1"], blk["rb2_a1"],
                      blk["rb2_w2"], blk["rb2_b2"], blk["rb2_a2"])
    xt = jnp.transpose(x, (0, 2, 3, 1))
    mu = jnp.mean(xt, axis=-1, keepdims=True)
    var = jnp.mean((xt - mu) ** 2, axis=-1, keepdims=True)
    xt = (xt - mu) * jax.lax.rsqrt(var + 1e-5) * blk["ln_g"] + blk["ln_b"]
    return jnp.transpose(xt, (0, 3, 1, 2))


def feature_extractor_ref(frame, params):
    x = _conv_ref(frame, params["emb_w"], params["emb_b"])
    feats = []
    for blk in params["blocks"]:
        x = _feblock_ref(x, blk)
        feats.append(x)
    return tuple(feats)


# -----------------------------------------------------------------------------
# Params / main
# -----------------------------------------------------------------------------


def init_params(key, dim):
    def conv_init(k, cout, cin, kh, kw):
        k1, k2 = jax.random.split(k)
        bound = 1.0 / jnp.sqrt(cin * kh * kw)
        w = jax.random.uniform(k1, (cout, cin, kh, kw), jnp.float32, -bound, bound)
        b = jax.random.uniform(k2, (cout,), jnp.float32, -bound, bound)
        return w, b

    keys = jax.random.split(key, 4)
    emb_w, emb_b = conv_init(keys[0], dim[0], 3, 3, 3)
    blocks = []
    for i, (cin, cout) in enumerate([(dim[0], dim[1]), (dim[1], dim[2]),
                                     (dim[2], dim[3])]):
        kb = jax.random.split(keys[i + 1], 7)
        dw, db = conv_init(kb[0], cout, cin, 2, 2)
        w11, b11 = conv_init(kb[1], cout, cout, 3, 3)
        w12, b12 = conv_init(kb[2], cout, cout, 3, 3)
        w21, b21 = conv_init(kb[3], cout, cout, 3, 3)
        w22, b22 = conv_init(kb[4], cout, cout, 3, 3)
        a = jnp.array(0.25, jnp.float32)           # PReLU default init
        blocks.append({
            "down_w": dw, "down_b": db, "down_a": a,
            "rb1_w1": w11, "rb1_b1": b11, "rb1_a1": a,
            "rb1_w2": w12, "rb1_b2": b12, "rb1_a2": a,
            "rb2_w1": w21, "rb2_b1": b21, "rb2_a1": a,
            "rb2_w2": w22, "rb2_b2": b22, "rb2_a2": a,
            "ln_g": 1.0 + 0.1 * jax.random.normal(kb[5], (cout,), jnp.float32),
            "ln_b": 0.1 * jax.random.normal(kb[6], (cout,), jnp.float32),
        })
    return {"emb_w": emb_w, "emb_b": emb_b, "blocks": blocks}


if __name__ == "__main__":
    N, H, W = 2, 16, 16
    dim = (8, 16, 32, 64)

    key = jax.random.PRNGKey(0)
    kx, kp = jax.random.split(key)
    frame = jax.random.normal(kx, (N, 3, H, W), jnp.float32)
    params = init_params(kp, dim)

    feats = feature_extractor_pallas(frame, params)
    for f in feats:
        f.block_until_ready()

    refs = feature_extractor_ref(frame, params)
    expect = [(N, dim[1], H // 2, W // 2), (N, dim[2], H // 4, W // 4),
              (N, dim[3], H // 8, W // 8)]
    assert len(feats) == 3
    for f, r, s in zip(feats, refs, expect):
        assert f.shape == s, (f.shape, s)
        err = jnp.max(jnp.abs(f - r))
        # tolerance allows for MXU precision-mode differences vs. the XLA conv
        assert jnp.allclose(f, r, rtol=1e-2, atol=1e-2), f"max abs err = {err}"

    print("KERNEL_OK")
</pallas_src>

<mosaic_0001>
module attributes {stable_mosaic.version = 11 : i64} {
  func.func @kernel(%arg0: i32, %arg1: memref<1x326x8xf32, #tpu.memory_space<vmem>>, %arg2: memref<8x72xf32, #tpu.memory_space<vmem>>, %arg3: memref<1x8xf32, #tpu.memory_space<vmem>>, %arg4: memref<1x288x8xf32, #tpu.memory_space<vmem>>) attributes {dimension_semantics = [#tpu.dimension_semantics<parallel>], iteration_bounds = array<i64: 2>, scalar_prefetch = 0 : i64, scratch_operands = 0 : i64, tpu.core_type = #tpu.core_type<tc>, window_params = [{transform_indices = @transform_0, window_bounds = array<i64: 1, 326, 8>}, {pipeline_mode = #tpu.pipeline_mode<synchronous>, transform_indices = @transform_1, window_bounds = array<i64: 8, 72>}, {pipeline_mode = #tpu.pipeline_mode<synchronous>, transform_indices = @transform_2, window_bounds = array<i64: 1, 8>}, {transform_indices = @transform_3, window_bounds = array<i64: 1, 288, 8>}]} {
    %c0 = arith.constant 0 : index
    %c0_0 = arith.constant 0 : index
    %c0_1 = arith.constant 0 : index
    %0 = vector.load %arg1[%c0, %c0_0, %c0_1] : memref<1x326x8xf32, #tpu.memory_space<vmem>>, vector<1x326x8xf32>
    %1 = vector.shape_cast %0 : vector<1x326x8xf32> to vector<326x8xf32>
    %c0_2 = arith.constant 0 : index
    %c0_3 = arith.constant 0 : index
    %2 = vector.load %arg2[%c0_2, %c0_3] : memref<8x72xf32, #tpu.memory_space<vmem>>, vector<8x72xf32>
    %c0_4 = arith.constant 0 : index
    %c0_5 = arith.constant 0 : index
    %3 = vector.load %arg3[%c0_4, %c0_5] : memref<1x8xf32, #tpu.memory_space<vmem>>, vector<1x8xf32>
    %cst = arith.constant dense<0.000000e+00> : vector<326x72xf32>
    %4 = tpu.matmul %1, %2, %cst {dimension_numbers = #tpu.dot_dimension_numbers<[1], [0], [0], [1], [0, 0, 1, 1], [], []>} : vector<326x8xf32>, vector<8x72xf32>, vector<326x72xf32> -> vector<326x72xf32>
    %5 = vector.extract_strided_slice %4 {offsets = [0, 0], sizes = [288, 8], strides = [1, 1]} : vector<326x72xf32> to vector<288x8xf32>
    %6 = vector.extract_strided_slice %4 {offsets = [1, 8], sizes = [288, 8], strides = [1, 1]} : vector<326x72xf32> to vector<288x8xf32>
    %7 = arith.addf %5, %6 : vector<288x8xf32>
    %8 = vector.extract_strided_slice %4 {offsets = [2, 16], sizes = [288, 8], strides = [1, 1]} : vector<326x72xf32> to vector<288x8xf32>
    %9 = arith.addf %7, %8 : vector<288x8xf32>
    %10 = vector.extract_strided_slice %4 {offsets = [18, 24], sizes = [288, 8], strides = [1, 1]} : vector<326x72xf32> to vector<288x8xf32>
    %11 = arith.addf %9, %10 : vector<288x8xf32>
    %12 = vector.extract_strided_slice %4 {offsets = [19, 32], sizes = [288, 8], strides = [1, 1]} : vector<326x72xf32> to vector<288x8xf32>
    %13 = arith.addf %11, %12 : vector<288x8xf32>
    %14 = vector.extract_strided_slice %4 {offsets = [20, 40], sizes = [288, 8], strides = [1, 1]} : vector<326x72xf32> to vector<288x8xf32>
    %15 = arith.addf %13, %14 : vector<288x8xf32>
    %16 = vector.extract_strided_slice %4 {offsets = [36, 48], sizes = [288, 8], strides = [1, 1]} : vector<326x72xf32> to vector<288x8xf32>
    %17 = arith.addf %15, %16 : vector<288x8xf32>
    %18 = vector.extract_strided_slice %4 {offsets = [37, 56], sizes = [288, 8], strides = [1, 1]} : vector<326x72xf32> to vector<288x8xf32>
    %19 = arith.addf %17, %18 : vector<288x8xf32>
    %20 = vector.extract_strided_slice %4 {offsets = [38, 64], sizes = [288, 8], strides = [1, 1]} : vector<326x72xf32> to vector<288x8xf32>
    %21 = arith.addf %19, %20 : vector<288x8xf32>
    %22 = vector.broadcast %3 : vector<1x8xf32> to vector<288x8xf32>
    %23 = arith.addf %21, %22 : vector<288x8xf32>
    %c0_6 = arith.constant 0 : index
    %c0_7 = arith.constant 0 : index
    %c0_8 = arith.constant 0 : index
    %24 = vector.load %arg4[%c0_6, %c0_7, %c0_8] : memref<1x288x8xf32, #tpu.memory_space<vmem>>, vector<1x288x8xf32>
    %25 = vector.shape_cast %24 : vector<1x288x8xf32> to vector<288x8xf32>
    %26 = vector.shape_cast %23 : vector<288x8xf32> to vector<1x288x8xf32>
    tpu.vector_store %arg4[%c0_6, %c0_7, %c0_8], %26 {strides = array<i32>} : memref<1x288x8xf32, #tpu.memory_space<vmem>>, vector<1x288x8xf32>,
    return
  }
  func.func @transform_0(%arg0: i32) -> (i32, i32, i32) {
    %c0_i32 = arith.constant 0 : i32
    %c0_i32_0 = arith.constant 0 : i32
    %c0_i32_1 = arith.constant 0 : i32
    return %arg0, %c0_i32, %c0_i32_0 : i32, i32, i32
  }
  func.func @transform_1(%arg0: i32) -> (i32, i32) {
    %c0_i32 = arith.constant 0 : i32
    %c0_i32_0 = arith.constant 0 : i32
    %c0_i32_1 = arith.constant 0 : i32
    return %c0_i32, %c0_i32_0 : i32, i32
  }
  func.func @transform_2(%arg0: i32) -> (i32, i32) {
    %c0_i32 = arith.constant 0 : i32
    %c0_i32_0 = arith.constant 0 : i32
    %c0_i32_1 = arith.constant 0 : i32
    return %c0_i32, %c0_i32_0 : i32, i32
  }
  func.func @transform_3(%arg0: i32) -> (i32, i32, i32) {
    %c0_i32 = arith.constant 0 : i32
    %c0_i32_0 = arith.constant 0 : i32
    %c0_i32_1 = arith.constant 0 : i32
    return %arg0, %c0_i32, %c0_i32_0 : i32, i32, i32
  }
}

module attributes {stable_mosaic.version = 11 : i64} {
  func.func @kernel(%arg0: i32, %arg1: memref<1x102x32xf32, #tpu.memory_space<vmem>>, %arg2: memref<102x1xf32, #tpu.memory_space<vmem>>, %arg3: memref<32x16xf32, #tpu.memory_space<vmem>>, %arg4: memref<4x16x144xf32, #tpu.memory_space<vmem>>, %arg5: memref<5x16xf32, #tpu.memory_space<vmem>>, %arg6: memref<2x16xf32, #tpu.memory_space<vmem>>, %arg7: memref<5xf32, #tpu.memory_space<smem>>, %arg8: memref<1x80x16xf32, #tpu.memory_space<vmem>>, %arg9: memref<102x16xf32, #tpu.memory_space<vmem>>) attributes {dimension_semantics = [#tpu.dimension_semantics<parallel>], iteration_bounds = array<i64: 2>, scalar_prefetch = 0 : i64, scratch_operands = 1 : i64, tpu.core_type = #tpu.core_type<tc>, window_params = [{transform_indices = @transform_0, window_bounds = array<i64: 1, 102, 32>}, {pipeline_mode = #tpu.pipeline_mode<synchronous>, transform_indices = @transform_1, window_bounds = array<i64: 102, 1>}, {pipeline_mode = #tpu.pipeline_mode<synchronous>, transform_indices = @transform_2, window_bounds = array<i64: 32, 16>}, {pipeline_mode = #tpu.pipeline_mode<synchronous>, transform_indices = @transform_3, window_bounds = array<i64: 4, 16, 144>}, {pipeline_mode = #tpu.pipeline_mode<synchronous>, transform_indices = @transform_4, window_bounds = array<i64: 5, 16>}, {pipeline_mode = #tpu.pipeline_mode<synchronous>, transform_indices = @transform_5, window_bounds = array<i64: 2, 16>}, {transform_indices = @transform_6, window_bounds = array<i64: 5>}, {transform_indices = @transform_7, window_bounds = array<i64: 1, 80, 16>}]} {
    %c0 = arith.constant 0 : index
    %c0_0 = arith.constant 0 : index
    %0 = vector.load %arg2[%c0, %c0_0] : memref<102x1xf32, #tpu.memory_space<vmem>>, vector<102x1xf32>
    %c11 = arith.constant 11 : index
    %c0_1 = arith.constant 0 : index
    %1 = vector.load %arg2[%c11, %c0_1] : memref<102x1xf32, #tpu.memory_space<vmem>>, vector<80x1xf32>
    %c0_2 = arith.constant 0 : index
    %c0_3 = arith.constant 0 : index
    %c0_4 = arith.constant 0 : index
    %2 = vector.load %arg1[%c0_2, %c0_3, %c0_4] : memref<1x102x32xf32, #tpu.memory_space<vmem>>, vector<1x102x32xf32>
    %3 = vector.shape_cast %2 : vector<1x102x32xf32> to vector<102x32xf32>
    %c0_5 = arith.constant 0 : index
    %c0_6 = arith.constant 0 : index
    %4 = vector.load %arg3[%c0_5, %c0_6] : memref<32x16xf32, #tpu.memory_space<vmem>>, vector<32x16xf32>
    %cst = arith.constant dense<0.000000e+00> : vector<102x16xf32>
    %5 = tpu.matmul %3, %4, %cst {dimension_numbers = #tpu.dot_dimension_numbers<[1], [0], [0], [1], [0, 0, 1, 1], [], []>} : vector<102x32xf32>, vector<32x16xf32>, vector<102x16xf32> -> vector<102x16xf32>
    %c0_7 = arith.constant 0 : index
    %c0_8 = arith.constant 0 : index
    %6 = vector.load %arg5[%c0_7, %c0_8] : memref<5x16xf32, #tpu.memory_space<vmem>>, vector<1x16xf32>
    %7 = vector.broadcast %6 : vector<1x16xf32> to vector<102x16xf32>
    %8 = arith.addf %5, %7 : vector<102x16xf32>
    %c0_9 = arith.constant 0 : index
    %9 = memref.load %arg7[%c0_9] : memref<5xf32, #tpu.memory_space<smem>>
    %cst_10 = arith.constant 0.000000e+00 : f32
    %10 = vector.broadcast %cst_10 : f32 to vector<102x16xf32>
    %11 = arith.cmpf oge, %8, %10 : vector<102x16xf32>
    %12 = vector.broadcast %9 : f32 to vector<102x16xf32>
    %13 = arith.mulf %12, %8 : vector<102x16xf32>
    %14 = arith.select %11, %8, %13 : vector<102x16xi1>, vector<102x16xf32>
    %15 = vector.broadcast %0 : vector<102x1xf32> to vector<102x16xf32>
    %16 = arith.mulf %14, %15 : vector<102x16xf32>
    %cst_11 = arith.constant 0.000000e+00 : f32
    %17 = vector.broadcast %cst_11 : f32 to vector<102x16xf32>
    %c0_12 = arith.constant 0 : index
    %c0_13 = arith.constant 0 : index
    %18 = vector.load %arg9[%c0_12, %c0_13] : memref<102x16xf32, #tpu.memory_space<vmem>>, vector<102x16xf32>
    tpu.vector_store %arg9[%c0_12, %c0_13], %17 {strides = array<i32>} : memref<102x16xf32, #tpu.memory_space<vmem>>, vector<102x16xf32>,
    %c0_14 = arith.constant 0 : index
    %c0_15 = arith.constant 0 : index
    %c0_16 = arith.constant 0 : index
    %19 = vector.load %arg4[%c0_14, %c0_15, %c0_16] : memref<4x16x144xf32, #tpu.memory_space<vmem>>, vector<1x16x144xf32>
    %20 = vector.shape_cast %19 : vector<1x16x144xf32> to vector<16x144xf32>
    %c1 = arith.constant 1 : index
    %c0_17 = arith.constant 0 : index
    %21 = vector.load %arg5[%c1, %c0_17] : memref<5x16xf32, #tpu.memory_space<vmem>>, vector<1x16xf32>
    %cst_18 = arith.constant dense<0.000000e+00> : vector<102x144xf32>
    %22 = tpu.matmul %16, %20, %cst_18 {dimension_numbers = #tpu.dot_dimension_numbers<[1], [0], [0], [1], [0, 0, 1, 1], [], []>} : vector<102x16xf32>, vector<16x144xf32>, vector<102x144xf32> -> vector<102x144xf32>
    %23 = vector.extract_strided_slice %22 {offsets = [0, 0], sizes = [80, 16], strides = [1, 1]} : vector<102x144xf32> to vector<80x16xf32>
    %24 = vector.extract_strided_slice %22 {offsets = [1, 16], sizes = [80, 16], strides = [1, 1]} : vector<102x144xf32> to vector<80x16xf32>
    %25 = arith.addf %23, %24 : vector<80x16xf32>
    %26 = vector.extract_strided_slice %22 {offsets = [2, 32], sizes = [80, 16], strides = [1, 1]} : vector<102x144xf32> to vector<80x16xf32>
    %27 = arith.addf %25, %26 : vector<80x16xf32>
    %28 = vector.extract_strided_slice %22 {offsets = [10, 48], sizes = [80, 16], strides = [1, 1]} : vector<102x144xf32> to vector<80x16xf32>
    %29 = arith.addf %27, %28 : vector<80x16xf32>
    %30 = vector.extract_strided_slice %22 {offsets = [11, 64], sizes = [80, 16], strides = [1, 1]} : vector<102x144xf32> to vector<80x16xf32>
    %31 = arith.addf %29, %30 : vector<80x16xf32>
    %32 = vector.extract_strided_slice %22 {offsets = [12, 80], sizes = [80, 16], strides = [1, 1]} : vector<102x144xf32> to vector<80x16xf32>
    %33 = arith.addf %31, %32 : vector<80x16xf32>
    %34 = vector.extract_strided_slice %22 {offsets = [20, 96], sizes = [80, 16], strides = [1, 1]} : vector<102x144xf32> to vector<80x16xf32>
    %35 = arith.addf %33, %34 : vector<80x16xf32>
    %36 = vector.extract_strided_slice %22 {offsets = [21, 112], sizes = [80, 16], strides = [1, 1]} : vector<102x144xf32> to vector<80x16xf32>
    %37 = arith.addf %35, %36 : vector<80x16xf32>
    %38 = vector.extract_strided_slice %22 {offsets = [22, 128], sizes = [80, 16], strides = [1, 1]} : vector<102x144xf32> to vector<80x16xf32>
    %39 = arith.addf %37, %38 : vector<80x16xf32>
    %40 = vector.broadcast %21 : vector<1x16xf32> to vector<80x16xf32>
    %41 = arith.addf %39, %40 : vector<80x16xf32>
    %c1_19 = arith.constant 1 : index
    %42 = memref.load %arg7[%c1_19] : memref<5xf32, #tpu.memory_space<smem>>
    %cst_20 = arith.constant 0.000000e+00 : f32
    %43 = vector.broadcast %cst_20 : f32 to vector<80x16xf32>
    %44 = arith.cmpf oge, %41, %43 : vector<80x16xf32>
    %45 = vector.broadcast %42 : f32 to vector<80x16xf32>
    %46 = arith.mulf %45, %41 : vector<80x16xf32>
    %47 = arith.select %44, %41, %46 : vector<80x16xi1>, vector<80x16xf32>
    %48 = vector.broadcast %1 : vector<80x1xf32> to vector<80x16xf32>
    %49 = arith.mulf %47, %48 : vector<80x16xf32>
    %c11_21 = arith.constant 11 : index
    %c0_22 = arith.constant 0 : index
    %50 = vector.load %arg9[%c11_21, %c0_22] : memref<102x16xf32, #tpu.memory_space<vmem>>, vector<80x16xf32>
    tpu.vector_store %arg9[%c11_21, %c0_22], %49 {strides = array<i32>} : memref<102x16xf32, #tpu.memory_space<vmem>>, vector<80x16xf32>,
    %c0_23 = arith.constant 0 : index
    %c0_24 = arith.constant 0 : index
    %51 = vector.load %arg9[%c0_23, %c0_24] : memref<102x16xf32, #tpu.memory_space<vmem>>, vector<102x16xf32>
    %c1_25 = arith.constant 1 : index
    %c0_26 = arith.constant 0 : index
    %c0_27 = arith.constant 0 : index
    %52 = vector.load %arg4[%c1_25, %c0_26, %c0_27] : memref<4x16x144xf32, #tpu.memory_space<vmem>>, vector<1x16x144xf32>
    %53 = vector.shape_cast %52 : vector<1x16x144xf32> to vector<16x144xf32>
    %c2 = arith.constant 2 : index
    %c0_28 = arith.constant 0 : index
    %54 = vector.load %arg5[%c2, %c0_28] : memref<5x16xf32, #tpu.memory_space<vmem>>, vector<1x16xf32>
    %cst_29 = arith.constant dense<0.000000e+00> : vector<102x144xf32>
    %55 = tpu.matmul %51, %53, %cst_29 {dimension_numbers = #tpu.dot_dimension_numbers<[1], [0], [0], [1], [0, 0, 1, 1], [], []>} : vector<102x16xf32>, vector<16x144xf32>, vector<102x144xf32> -> vector<102x144xf32>
    %56 = vector.extract_strided_slice %55 {offsets = [0, 0], sizes = [80, 16], strides = [1, 1]} : vector<102x144xf32> to vector<80x16xf32>
    %57 = vector.extract_strided_slice %55 {offsets = [1, 16], sizes = [80, 16], strides = [1, 1]} : vector<102x144xf32> to vector<80x16xf32>
    %58 = arith.addf %56, %57 : vector<80x16xf32>
    %59 = vector.extract_strided_slice %55 {offsets = [2, 32], sizes = [80, 16], strides = [1, 1]} : vector<102x144xf32> to vector<80x16xf32>
    %60 = arith.addf %58, %59 : vector<80x16xf32>
    %61 = vector.extract_strided_slice %55 {offsets = [10, 48], sizes = [80, 16], strides = [1, 1]} : vector<102x144xf32> to vector<80x16xf32>
    %62 = arith.addf %60, %61 : vector<80x16xf32>
    %63 = vector.extract_strided_slice %55 {offsets = [11, 64], sizes = [80, 16], strides = [1, 1]} : vector<102x144xf32> to vector<80x16xf32>
    %64 = arith.addf %62, %63 : vector<80x16xf32>
    %65 = vector.extract_strided_slice %55 {offsets = [12, 80], sizes = [80, 16], strides = [1, 1]} : vector<102x144xf32> to vector<80x16xf32>
    %66 = arith.addf %64, %65 : vector<80x16xf32>
    %67 = vector.extract_strided_slice %55 {offsets = [20, 96], sizes = [80, 16], strides = [1, 1]} : vector<102x144xf32> to vector<80x16xf32>
    %68 = arith.addf %66, %67 : vector<80x16xf32>
    %69 = vector.extract_strided_slice %55 {offsets = [21, 112], sizes = [80, 16], strides = [1, 1]} : vector<102x144xf32> to vector<80x16xf32>
    %70 = arith.addf %68, %69 : vector<80x16xf32>
    %71 = vector.extract_strided_slice %55 {offsets = [22, 128], sizes = [80, 16], strides = [1, 1]} : vector<102x144xf32> to vector<80x16xf32>
    %72 = arith.addf %70, %71 : vector<80x16xf32>
    %73 = vector.broadcast %54 : vector<1x16xf32> to vector<80x16xf32>
    %74 = arith.addf %72, %73 : vector<80x16xf32>
    %75 = vector.extract_strided_slice %16 {offsets = [11, 0], sizes = [80, 16], strides = [1, 1]} : vector<102x16xf32> to vector<80x16xf32>
    %76 = arith.addf %74, %75 : vector<80x16xf32>
    %c2_30 = arith.constant 2 : index
    %77 = memref.load %arg7[%c2_30] : memref<5xf32, #tpu.memory_space<smem>>
    %cst_31 = arith.constant 0.000000e+00 : f32
    %78 = vector.broadcast %cst_31 : f32 to vector<80x16xf32>
    %79 = arith.cmpf oge, %76, %78 : vector<80x16xf32>
    %80 = vector.broadcast %77 : f32 to vector<80x16xf32>
    %81 = arith.mulf %80, %76 : vector<80x16xf32>
    %82 = arith.select %79, %76, %81 : vector<80x16xi1>, vector<80x16xf32>
    %83 = vector.broadcast %1 : vector<80x1xf32> to vector<80x16xf32>
    %84 = arith.mulf %82, %83 : vector<80x16xf32>
    %c11_32 = arith.constant 11 : index
    %c0_33 = arith.constant 0 : index
    %85 = vector.load %arg9[%c11_32, %c0_33] : memref<102x16xf32, #tpu.memory_space<vmem>>, vector<80x16xf32>
    tpu.vector_store %arg9[%c11_32, %c0_33], %84 {strides = array<i32>} : memref<102x16xf32, #tpu.memory_space<vmem>>, vector<80x16xf32>,
    %c0_34 = arith.constant 0 : index
    %c0_35 = arith.constant 0 : index
    %86 = vector.load %arg9[%c0_34, %c0_35] : memref<102x16xf32, #tpu.memory_space<vmem>>, vector<102x16xf32>
    %c2_36 = arith.constant 2 : index
    %c0_37 = arith.constant 0 : index
    %c0_38 = arith.constant 0 : index
    %87 = vector.load %arg4[%c2_36, %c0_37, %c0_38] : memref<4x16x144xf32, #tpu.memory_space<vmem>>, vector<1x16x144xf32>
    %88 = vector.shape_cast %87 : vector<1x16x144xf32> to vector<16x144xf32>
    %c3 = arith.constant 3 : index
    %c0_39 = arith.constant 0 : index
    %89 = vector.load %arg5[%c3, %c0_39] : memref<5x16xf32, #tpu.memory_space<vmem>>, vector<1x16xf32>
    %cst_40 = arith.constant dense<0.000000e+00> : vector<102x144xf32>
    %90 = tpu.matmul %86, %88, %cst_40 {dimension_numbers = #tpu.dot_dimension_numbers<[1], [0], [0], [1], [0, 0, 1, 1], [], []>} : vector<102x16xf32>, vector<16x144xf32>, vector<102x144xf32> -> vector<102x144xf32>
    %91 = vector.extract_strided_slice %90 {offsets = [0, 0], sizes = [80, 16], strides = [1, 1]} : vector<102x144xf32> to vector<80x16xf32>
    %92 = vector.extract_strided_slice %90 {offsets = [1, 16], sizes = [80, 16], strides = [1, 1]} : vector<102x144xf32> to vector<80x16xf32>
    %93 = arith.addf %91, %92 : vector<80x16xf32>
    %94 = vector.extract_strided_slice %90 {offsets = [2, 32], sizes = [80, 16], strides = [1, 1]} : vector<102x144xf32> to vector<80x16xf32>
    %95 = arith.addf %93, %94 : vector<80x16xf32>
    %96 = vector.extract_strided_slice %90 {offsets = [10, 48], sizes = [80, 16], strides = [1, 1]} : vector<102x144xf32> to vector<80x16xf32>
    %97 = arith.addf %95, %96 : vector<80x16xf32>
    %98 = vector.extract_strided_slice %90 {offsets = [11, 64], sizes = [80, 16], strides = [1, 1]} : vector<102x144xf32> to vector<80x16xf32>
    %99 = arith.addf %97, %98 : vector<80x16xf32>
    %100 = vector.extract_strided_slice %90 {offsets = [12, 80], sizes = [80, 16], strides = [1, 1]} : vector<102x144xf32> to vector<80x16xf32>
    %101 = arith.addf %99, %100 : vector<80x16xf32>
    %102 = vector.extract_strided_slice %90 {offsets = [20, 96], sizes = [80, 16], strides = [1, 1]} : vector<102x144xf32> to vector<80x16xf32>
    %103 = arith.addf %101, %102 : vector<80x16xf32>
    %104 = vector.extract_strided_slice %90 {offsets = [21, 112], sizes = [80, 16], strides = [1, 1]} : vector<102x144xf32> to vector<80x16xf32>
    %105 = arith.addf %103, %104 : vector<80x16xf32>
    %106 = vector.extract_strided_slice %90 {offsets = [22, 128], sizes = [80, 16], strides = [1, 1]} : vector<102x144xf32> to vector<80x16xf32>
    %107 = arith.addf %105, %106 : vector<80x16xf32>
    %108 = vector.broadcast %89 : vector<1x16xf32> to vector<80x16xf32>
    %109 = arith.addf %107, %108 : vector<80x16xf32>
    %c3_41 = arith.constant 3 : index
    %110 = memref.load %arg7[%c3_41] : memref<5xf32, #tpu.memory_space<smem>>
    %cst_42 = arith.constant 0.000000e+00 : f32
    %111 = vector.broadcast %cst_42 : f32 to vector<80x16xf32>
    %112 = arith.cmpf oge, %109, %111 : vector<80x16xf32>
    %113 = vector.broadcast %110 : f32 to vector<80x16xf32>
    %114 = arith.mulf %113, %109 : vector<80x16xf32>
    %115 = arith.select %112, %109, %114 : vector<80x16xi1>, vector<80x16xf32>
    %116 = vector.broadcast %1 : vector<80x1xf32> to vector<80x16xf32>
    %117 = arith.mulf %115, %116 : vector<80x16xf32>
    %c11_43 = arith.constant 11 : index
    %c0_44 = arith.constant 0 : index
    %118 = vector.load %arg9[%c11_43, %c0_44] : memref<102x16xf32, #tpu.memory_space<vmem>>, vector<80x16xf32>
    tpu.vector_store %arg9[%c11_43, %c0_44], %117 {strides = array<i32>} : memref<102x16xf32, #tpu.memory_space<vmem>>, vector<80x16xf32>,
    %c0_45 = arith.constant 0 : index
    %c0_46 = arith.constant 0 : index
    %119 = vector.load %arg9[%c0_45, %c0_46] : memref<102x16xf32, #tpu.memory_space<vmem>>, vector<102x16xf32>
    %c3_47 = arith.constant 3 : index
    %c0_48 = arith.constant 0 : index
    %c0_49 = arith.constant 0 : index
    %120 = vector.load %arg4[%c3_47, %c0_48, %c0_49] : memref<4x16x144xf32, #tpu.memory_space<vmem>>, vector<1x16x144xf32>
    %121 = vector.shape_cast %120 : vector<1x16x144xf32> to vector<16x144xf32>
    %c4 = arith.constant 4 : index
    %c0_50 = arith.constant 0 : index
    %122 = vector.load %arg5[%c4, %c0_50] : memref<5x16xf32, #tpu.memory_space<vmem>>, vector<1x16xf32>
    %cst_51 = arith.constant dense<0.000000e+00> : vector<102x144xf32>
    %123 = tpu.matmul %119, %121, %cst_51 {dimension_numbers = #tpu.dot_dimension_numbers<[1], [0], [0], [1], [0, 0, 1, 1], [], []>} : vector<102x16xf32>, vector<16x144xf32>, vector<102x144xf32> -> vector<102x144xf32>
    %124 = vector.extract_strided_slice %123 {offsets = [0, 0], sizes = [80, 16], strides = [1, 1]} : vector<102x144xf32> to vector<80x16xf32>
    %125 = vector.extract_strided_slice %123 {offsets = [1, 16], sizes = [80, 16], strides = [1, 1]} : vector<102x144xf32> to vector<80x16xf32>
    %126 = arith.addf %124, %125 : vector<80x16xf32>
    %127 = vector.extract_strided_slice %123 {offsets = [2, 32], sizes = [80, 16], strides = [1, 1]} : vector<102x144xf32> to vector<80x16xf32>
    %128 = arith.addf %126, %127 : vector<80x16xf32>
    %129 = vector.extract_strided_slice %123 {offsets = [10, 48], sizes = [80, 16], strides = [1, 1]} : vector<102x144xf32> to vector<80x16xf32>
    %130 = arith.addf %128, %129 : vector<80x16xf32>
    %131 = vector.extract_strided_slice %123 {offsets = [11, 64], sizes = [80, 16], strides = [1, 1]} : vector<102x144xf32> to vector<80x16xf32>
    %132 = arith.addf %130, %131 : vector<80x16xf32>
    %133 = vector.extract_strided_slice %123 {offsets = [12, 80], sizes = [80, 16], strides = [1, 1]} : vector<102x144xf32> to vector<80x16xf32>
    %134 = arith.addf %132, %133 : vector<80x16xf32>
    %135 = vector.extract_strided_slice %123 {offsets = [20, 96], sizes = [80, 16], strides = [1, 1]} : vector<102x144xf32> to vector<80x16xf32>
    %136 = arith.addf %134, %135 : vector<80x16xf32>
    %137 = vector.extract_strided_slice %123 {offsets = [21, 112], sizes = [80, 16], strides = [1, 1]} : vector<102x144xf32> to vector<80x16xf32>
    %138 = arith.addf %136, %137 : vector<80x16xf32>
    %139 = vector.extract_strided_slice %123 {offsets = [22, 128], sizes = [80, 16], strides = [1, 1]} : vector<102x144xf32> to vector<80x16xf32>
    %140 = arith.addf %138, %139 : vector<80x16xf32>
    %141 = vector.broadcast %122 : vector<1x16xf32> to vector<80x16xf32>
    %142 = arith.addf %140, %141 : vector<80x16xf32>
    %143 = arith.addf %142, %82 : vector<80x16xf32>
    %c4_52 = arith.constant 4 : index
    %144 = memref.load %arg7[%c4_52] : memref<5xf32, #tpu.memory_space<smem>>
    %cst_53 = arith.constant 0.000000e+00 : f32
    %145 = vector.broadcast %cst_53 : f32 to vector<80x16xf32>
    %146 = arith.cmpf oge, %143, %145 : vector<80x16xf32>
    %147 = vector.broadcast %144 : f32 to vector<80x16xf32>
    %148 = arith.mulf %147, %143 : vector<80x16xf32>
    %149 = arith.select %146, %143, %148 : vector<80x16xi1>, vector<80x16xf32>
    %cst_54 = arith.constant dense<0.000000e+00> : vector<80xf32>
    %150 = vector.multi_reduction <add>, %149, %cst_54 [1] : vector<80x16xf32> to vector<80xf32>
    %151 = vector.shape_cast %150 : vector<80xf32> to vector<80x1xf32>
    %cst_55 = arith.constant 1.600000e+01 : f32
    %152 = vector.broadcast %cst_55 : f32 to vector<80x1xf32>
    %153 = arith.divf %151, %152 : vector<80x1xf32>
    %154 = vector.broadcast %153 : vector<80x1xf32> to vector<80x16xf32>
    %155 = arith.subf %149, %154 : vector<80x16xf32>
    %156 = vector.broadcast %153 : vector<80x1xf32> to vector<80x16xf32>
    %157 = arith.subf %149, %156 : vector<80x16xf32>
    %158 = arith.mulf %155, %157 : vector<80x16xf32>
    %cst_56 = arith.constant dense<0.000000e+00> : vector<80xf32>
    %159 = vector.multi_reduction <add>, %158, %cst_56 [1] : vector<80x16xf32> to vector<80xf32>
    %160 = vector.shape_cast %159 : vector<80xf32> to vector<80x1xf32>
    %cst_57 = arith.constant 1.600000e+01 : f32
    %161 = vector.broadcast %cst_57 : f32 to vector<80x1xf32>
    %162 = arith.divf %160, %161 : vector<80x1xf32>
    %163 = vector.broadcast %153 : vector<80x1xf32> to vector<80x16xf32>
    %164 = arith.subf %149, %163 : vector<80x16xf32>
    %cst_58 = arith.constant 9.99999974E-6 : f32
    %165 = vector.broadcast %cst_58 : f32 to vector<80x1xf32>
    %166 = arith.addf %162, %165 : vector<80x1xf32>
    %167 = math.rsqrt %166 : vector<80x1xf32>
    %168 = vector.broadcast %167 : vector<80x1xf32> to vector<80x16xf32>
    %169 = arith.mulf %164, %168 : vector<80x16xf32>
    %c0_59 = arith.constant 0 : index
    %c0_60 = arith.constant 0 : index
    %170 = vector.load %arg6[%c0_59, %c0_60] : memref<2x16xf32, #tpu.memory_space<vmem>>, vector<1x16xf32>
    %171 = vector.broadcast %170 : vector<1x16xf32> to vector<80x16xf32>
    %172 = arith.mulf %169, %171 : vector<80x16xf32>
    %c1_61 = arith.constant 1 : index
    %c0_62 = arith.constant 0 : index
    %173 = vector.load %arg6[%c1_61, %c0_62] : memref<2x16xf32, #tpu.memory_space<vmem>>, vector<1x16xf32>
    %174 = vector.broadcast %173 : vector<1x16xf32> to vector<80x16xf32>
    %175 = arith.addf %172, %174 : vector<80x16xf32>
    %c0_63 = arith.constant 0 : index
    %c0_64 = arith.constant 0 : index
    %c0_65 = arith.constant 0 : index
    %176 = vector.load %arg8[%c0_63, %c0_64, %c0_65] : memref<1x80x16xf32, #tpu.memory_space<vmem>>, vector<1x80x16xf32>
    %177 = vector.shape_cast %176 : vector<1x80x16xf32> to vector<80x16xf32>
    %178 = vector.shape_cast %175 : vector<80x16xf32> to vector<1x80x16xf32>
    tpu.vector_store %arg8[%c0_63, %c0_64, %c0_65], %178 {strides = array<i32>} : memref<1x80x16xf32, #tpu.memory_space<vmem>>, vector<1x80x16xf32>,
    return
  }
  func.func @transform_0(%arg0: i32) -> (i32, i32, i32) {
    %c0_i32 = arith.constant 0 : i32
    %c0_i32_0 = arith.constant 0 : i32
    %c0_i32_1 = arith.constant 0 : i32
    return %arg0, %c0_i32, %c0_i32_0 : i32, i32, i32
  }
  func.func @transform_1(%arg0: i32) -> (i32, i32) {
    %c0_i32 = arith.constant 0 : i32
    %c0_i32_0 = arith.constant 0 : i32
    %c0_i32_1 = arith.constant 0 : i32
    return %c0_i32, %c0_i32_0 : i32, i32
  }
  func.func @transform_2(%arg0: i32) -> (i32, i32) {
    %c0_i32 = arith.constant 0 : i32
    %c0_i32_0 = arith.constant 0 : i32
    %c0_i32_1 = arith.constant 0 : i32
    return %c0_i32, %c0_i32_0 : i32, i32
  }
  func.func @transform_3(%arg0: i32) -> (i32, i32, i32) {
    %c0_i32 = arith.constant 0 : i32
    %c0_i32_0 = arith.constant 0 : i32
    %c0_i32_1 = arith.constant 0 : i32
    %c0_i32_2 = arith.constant 0 : i32
    return %c0_i32, %c0_i32_0, %c0_i32_1 : i32, i32, i32
  }
  func.func @transform_4(%arg0: i32) -> (i32, i32) {
    %c0_i32 = arith.constant 0 : i32
    %c0_i32_0 = arith.constant 0 : i32
    %c0_i32_1 = arith.constant 0 : i32
    return %c0_i32, %c0_i32_0 : i32, i32
  }
  func.func @transform_5(%arg0: i32) -> (i32, i32) {
    %c0_i32 = arith.constant 0 : i32
    %c0_i32_0 = arith.constant 0 : i32
    %c0_i32_1 = arith.constant 0 : i32
    return %c0_i32, %c0_i32_0 : i32, i32
  }
  func.func @transform_6(%arg0: i32) -> i32 {
    %c0_i32 = arith.constant 0 : i32
    %c0_i32_0 = arith.constant 0 : i32
    return %c0_i32 : i32
  }
  func.func @transform_7(%arg0: i32) -> (i32, i32, i32) {
    %c0_i32 = arith.constant 0 : i32
    %c0_i32_0 = arith.constant 0 : i32
    %c0_i32_1 = arith.constant 0 : i32
    return %arg0, %c0_i32, %c0_i32_0 : i32, i32, i32
  }
}

module attributes {stable_mosaic.version = 11 : i64} {
  func.func @kernel(%arg0: i32, %arg1: memref<1x38x64xf32, #tpu.memory_space<vmem>>, %arg2: memref<38x1xf32, #tpu.memory_space<vmem>>, %arg3: memref<64x32xf32, #tpu.memory_space<vmem>>, %arg4: memref<4x32x288xf32, #tpu.memory_space<vmem>>, %arg5: memref<5x32xf32, #tpu.memory_space<vmem>>, %arg6: memref<2x32xf32, #tpu.memory_space<vmem>>, %arg7: memref<5xf32, #tpu.memory_space<smem>>, %arg8: memref<1x24x32xf32, #tpu.memory_space<vmem>>, %arg9: memref<38x32xf32, #tpu.memory_space<vmem>>) attributes {dimension_semantics = [#tpu.dimension_semantics<parallel>], iteration_bounds = array<i64: 2>, scalar_prefetch = 0 : i64, scratch_operands = 1 : i64, tpu.core_type = #tpu.core_type<tc>, window_params = [{transform_indices = @transform_0, window_bounds = array<i64: 1, 38, 64>}, {pipeline_mode = #tpu.pipeline_mode<synchronous>, transform_indices = @transform_1, window_bounds = array<i64: 38, 1>}, {pipeline_mode = #tpu.pipeline_mode<synchronous>, transform_indices = @transform_2, window_bounds = array<i64: 64, 32>}, {pipeline_mode = #tpu.pipeline_mode<synchronous>, transform_indices = @transform_3, window_bounds = array<i64: 4, 32, 288>}, {pipeline_mode = #tpu.pipeline_mode<synchronous>, transform_indices = @transform_4, window_bounds = array<i64: 5, 32>}, {pipeline_mode = #tpu.pipeline_mode<synchronous>, transform_indices = @transform_5, window_bounds = array<i64: 2, 32>}, {transform_indices = @transform_6, window_bounds = array<i64: 5>}, {transform_indices = @transform_7, window_bounds = array<i64: 1, 24, 32>}]} {
    %c0 = arith.constant 0 : index
    %c0_0 = arith.constant 0 : index
    %0 = vector.load %arg2[%c0, %c0_0] : memref<38x1xf32, #tpu.memory_space<vmem>>, vector<38x1xf32>
    %c7 = arith.constant 7 : index
    %c0_1 = arith.constant 0 : index
    %1 = vector.load %arg2[%c7, %c0_1] : memref<38x1xf32, #tpu.memory_space<vmem>>, vector<24x1xf32>
    %c0_2 = arith.constant 0 : index
    %c0_3 = arith.constant 0 : index
    %c0_4 = arith.constant 0 : index
    %2 = vector.load %arg1[%c0_2, %c0_3, %c0_4] : memref<1x38x64xf32, #tpu.memory_space<vmem>>, vector<1x38x64xf32>
    %3 = vector.shape_cast %2 : vector<1x38x64xf32> to vector<38x64xf32>
    %c0_5 = arith.constant 0 : index
    %c0_6 = arith.constant 0 : index
    %4 = vector.load %arg3[%c0_5, %c0_6] : memref<64x32xf32, #tpu.memory_space<vmem>>, vector<64x32xf32>
    %cst = arith.constant dense<0.000000e+00> : vector<38x32xf32>
    %5 = tpu.matmul %3, %4, %cst {dimension_numbers = #tpu.dot_dimension_numbers<[1], [0], [0], [1], [0, 0, 1, 1], [], []>} : vector<38x64xf32>, vector<64x32xf32>, vector<38x32xf32> -> vector<38x32xf32>
    %c0_7 = arith.constant 0 : index
    %c0_8 = arith.constant 0 : index
    %6 = vector.load %arg5[%c0_7, %c0_8] : memref<5x32xf32, #tpu.memory_space<vmem>>, vector<1x32xf32>
    %7 = vector.broadcast %6 : vector<1x32xf32> to vector<38x32xf32>
    %8 = arith.addf %5, %7 : vector<38x32xf32>
    %c0_9 = arith.constant 0 : index
    %9 = memref.load %arg7[%c0_9] : memref<5xf32, #tpu.memory_space<smem>>
    %cst_10 = arith.constant 0.000000e+00 : f32
    %10 = vector.broadcast %cst_10 : f32 to vector<38x32xf32>
    %11 = arith.cmpf oge, %8, %10 : vector<38x32xf32>
    %12 = vector.broadcast %9 : f32 to vector<38x32xf32>
    %13 = arith.mulf %12, %8 : vector<38x32xf32>
    %14 = arith.select %11, %8, %13 : vector<38x32xi1>, vector<38x32xf32>
    %15 = vector.broadcast %0 : vector<38x1xf32> to vector<38x32xf32>
    %16 = arith.mulf %14, %15 : vector<38x32xf32>
    %cst_11 = arith.constant 0.000000e+00 : f32
    %17 = vector.broadcast %cst_11 : f32 to vector<38x32xf32>
    %c0_12 = arith.constant 0 : index
    %c0_13 = arith.constant 0 : index
    %18 = vector.load %arg9[%c0_12, %c0_13] : memref<38x32xf32, #tpu.memory_space<vmem>>, vector<38x32xf32>
    tpu.vector_store %arg9[%c0_12, %c0_13], %17 {strides = array<i32>} : memref<38x32xf32, #tpu.memory_space<vmem>>, vector<38x32xf32>,
    %c0_14 = arith.constant 0 : index
    %c0_15 = arith.constant 0 : index
    %c0_16 = arith.constant 0 : index
    %19 = vector.load %arg4[%c0_14, %c0_15, %c0_16] : memref<4x32x288xf32, #tpu.memory_space<vmem>>, vector<1x32x288xf32>
    %20 = vector.shape_cast %19 : vector<1x32x288xf32> to vector<32x288xf32>
    %c1 = arith.constant 1 : index
    %c0_17 = arith.constant 0 : index
    %21 = vector.load %arg5[%c1, %c0_17] : memref<5x32xf32, #tpu.memory_space<vmem>>, vector<1x32xf32>
    %cst_18 = arith.constant dense<0.000000e+00> : vector<38x288xf32>
    %22 = tpu.matmul %16, %20, %cst_18 {dimension_numbers = #tpu.dot_dimension_numbers<[1], [0], [0], [1], [0, 0, 1, 1], [], []>} : vector<38x32xf32>, vector<32x288xf32>, vector<38x288xf32> -> vector<38x288xf32>
    %23 = vector.extract_strided_slice %22 {offsets = [0, 0], sizes = [24, 32], strides = [1, 1]} : vector<38x288xf32> to vector<24x32xf32>
    %24 = vector.extract_strided_slice %22 {offsets = [1, 32], sizes = [24, 32], strides = [1, 1]} : vector<38x288xf32> to vector<24x32xf32>
    %25 = arith.addf %23, %24 : vector<24x32xf32>
    %26 = vector.extract_strided_slice %22 {offsets = [2, 64], sizes = [24, 32], strides = [1, 1]} : vector<38x288xf32> to vector<24x32xf32>
    %27 = arith.addf %25, %26 : vector<24x32xf32>
    %28 = vector.extract_strided_slice %22 {offsets = [6, 96], sizes = [24, 32], strides = [1, 1]} : vector<38x288xf32> to vector<24x32xf32>
    %29 = arith.addf %27, %28 : vector<24x32xf32>
    %30 = vector.extract_strided_slice %22 {offsets = [7, 128], sizes = [24, 32], strides = [1, 1]} : vector<38x288xf32> to vector<24x32xf32>
    %31 = arith.addf %29, %30 : vector<24x32xf32>
    %32 = vector.extract_strided_slice %22 {offsets = [8, 160], sizes = [24, 32], strides = [1, 1]} : vector<38x288xf32> to vector<24x32xf32>
    %33 = arith.addf %31, %32 : vector<24x32xf32>
    %34 = vector.extract_strided_slice %22 {offsets = [12, 192], sizes = [24, 32], strides = [1, 1]} : vector<38x288xf32> to vector<24x32xf32>
    %35 = arith.addf %33, %34 : vector<24x32xf32>
    %36 = vector.extract_strided_slice %22 {offsets = [13, 224], sizes = [24, 32], strides = [1, 1]} : vector<38x288xf32> to vector<24x32xf32>
    %37 = arith.addf %35, %36 : vector<24x32xf32>
    %38 = vector.extract_strided_slice %22 {offsets = [14, 256], sizes = [24, 32], strides = [1, 1]} : vector<38x288xf32> to vector<24x32xf32>
    %39 = arith.addf %37, %38 : vector<24x32xf32>
    %40 = vector.broadcast %21 : vector<1x32xf32> to vector<24x32xf32>
    %41 = arith.addf %39, %40 : vector<24x32xf32>
    %c1_19 = arith.constant 1 : index
    %42 = memref.load %arg7[%c1_19] : memref<5xf32, #tpu.memory_space<smem>>
    %cst_20 = arith.constant 0.000000e+00 : f32
    %43 = vector.broadcast %cst_20 : f32 to vector<24x32xf32>
    %44 = arith.cmpf oge, %41, %43 : vector<24x32xf32>
    %45 = vector.broadcast %42 : f32 to vector<24x32xf32>
    %46 = arith.mulf %45, %41 : vector<24x32xf32>
    %47 = arith.select %44, %41, %46 : vector<24x32xi1>, vector<24x32xf32>
    %48 = vector.broadcast %1 : vector<24x1xf32> to vector<24x32xf32>
    %49 = arith.mulf %47, %48 : vector<24x32xf32>
    %c7_21 = arith.constant 7 : index
    %c0_22 = arith.constant 0 : index
    %50 = vector.load %arg9[%c7_21, %c0_22] : memref<38x32xf32, #tpu.memory_space<vmem>>, vector<24x32xf32>
    tpu.vector_store %arg9[%c7_21, %c0_22], %49 {strides = array<i32>} : memref<38x32xf32, #tpu.memory_space<vmem>>, vector<24x32xf32>,
    %c0_23 = arith.constant 0 : index
    %c0_24 = arith.constant 0 : index
    %51 = vector.load %arg9[%c0_23, %c0_24] : memref<38x32xf32, #tpu.memory_space<vmem>>, vector<38x32xf32>
    %c1_25 = arith.constant 1 : index
    %c0_26 = arith.constant 0 : index
    %c0_27 = arith.constant 0 : index
    %52 = vector.load %arg4[%c1_25, %c0_26, %c0_27] : memref<4x32x288xf32, #tpu.memory_space<vmem>>, vector<1x32x288xf32>
    %53 = vector.shape_cast %52 : vector<1x32x288xf32> to vector<32x288xf32>
    %c2 = arith.constant 2 : index
    %c0_28 = arith.constant 0 : index
    %54 = vector.load %arg5[%c2, %c0_28] : memref<5x32xf32, #tpu.memory_space<vmem>>, vector<1x32xf32>
    %cst_29 = arith.constant dense<0.000000e+00> : vector<38x288xf32>
    %55 = tpu.matmul %51, %53, %cst_29 {dimension_numbers = #tpu.dot_dimension_numbers<[1], [0], [0], [1], [0, 0, 1, 1], [], []>} : vector<38x32xf32>, vector<32x288xf32>, vector<38x288xf32> -> vector<38x288xf32>
    %56 = vector.extract_strided_slice %55 {offsets = [0, 0], sizes = [24, 32], strides = [1, 1]} : vector<38x288xf32> to vector<24x32xf32>
    %57 = vector.extract_strided_slice %55 {offsets = [1, 32], sizes = [24, 32], strides = [1, 1]} : vector<38x288xf32> to vector<24x32xf32>
    %58 = arith.addf %56, %57 : vector<24x32xf32>
    %59 = vector.extract_strided_slice %55 {offsets = [2, 64], sizes = [24, 32], strides = [1, 1]} : vector<38x288xf32> to vector<24x32xf32>
    %60 = arith.addf %58, %59 : vector<24x32xf32>
    %61 = vector.extract_strided_slice %55 {offsets = [6, 96], sizes = [24, 32], strides = [1, 1]} : vector<38x288xf32> to vector<24x32xf32>
    %62 = arith.addf %60, %61 : vector<24x32xf32>
    %63 = vector.extract_strided_slice %55 {offsets = [7, 128], sizes = [24, 32], strides = [1, 1]} : vector<38x288xf32> to vector<24x32xf32>
    %64 = arith.addf %62, %63 : vector<24x32xf32>
    %65 = vector.extract_strided_slice %55 {offsets = [8, 160], sizes = [24, 32], strides = [1, 1]} : vector<38x288xf32> to vector<24x32xf32>
    %66 = arith.addf %64, %65 : vector<24x32xf32>
    %67 = vector.extract_strided_slice %55 {offsets = [12, 192], sizes = [24, 32], strides = [1, 1]} : vector<38x288xf32> to vector<24x32xf32>
    %68 = arith.addf %66, %67 : vector<24x32xf32>
    %69 = vector.extract_strided_slice %55 {offsets = [13, 224], sizes = [24, 32], strides = [1, 1]} : vector<38x288xf32> to vector<24x32xf32>
    %70 = arith.addf %68, %69 : vector<24x32xf32>
    %71 = vector.extract_strided_slice %55 {offsets = [14, 256], sizes = [24, 32], strides = [1, 1]} : vector<38x288xf32> to vector<24x32xf32>
    %72 = arith.addf %70, %71 : vector<24x32xf32>
    %73 = vector.broadcast %54 : vector<1x32xf32> to vector<24x32xf32>
    %74 = arith.addf %72, %73 : vector<24x32xf32>
    %75 = vector.extract_strided_slice %16 {offsets = [7, 0], sizes = [24, 32], strides = [1, 1]} : vector<38x32xf32> to vector<24x32xf32>
    %76 = arith.addf %74, %75 : vector<24x32xf32>
    %c2_30 = arith.constant 2 : index
    %77 = memref.load %arg7[%c2_30] : memref<5xf32, #tpu.memory_space<smem>>
    %cst_31 = arith.constant 0.000000e+00 : f32
    %78 = vector.broadcast %cst_31 : f32 to vector<24x32xf32>
    %79 = arith.cmpf oge, %76, %78 : vector<24x32xf32>
    %80 = vector.broadcast %77 : f32 to vector<24x32xf32>
    %81 = arith.mulf %80, %76 : vector<24x32xf32>
    %82 = arith.select %79, %76, %81 : vector<24x32xi1>, vector<24x32xf32>
    %83 = vector.broadcast %1 : vector<24x1xf32> to vector<24x32xf32>
    %84 = arith.mulf %82, %83 : vector<24x32xf32>
    %c7_32 = arith.constant 7 : index
    %c0_33 = arith.constant 0 : index
    %85 = vector.load %arg9[%c7_32, %c0_33] : memref<38x32xf32, #tpu.memory_space<vmem>>, vector<24x32xf32>
    tpu.vector_store %arg9[%c7_32, %c0_33], %84 {strides = array<i32>} : memref<38x32xf32, #tpu.memory_space<vmem>>, vector<24x32xf32>,
    %c0_34 = arith.constant 0 : index
    %c0_35 = arith.constant 0 : index
    %86 = vector.load %arg9[%c0_34, %c0_35] : memref<38x32xf32, #tpu.memory_space<vmem>>, vector<38x32xf32>
    %c2_36 = arith.constant 2 : index
    %c0_37 = arith.constant 0 : index
    %c0_38 = arith.constant 0 : index
    %87 = vector.load %arg4[%c2_36, %c0_37, %c0_38] : memref<4x32x288xf32, #tpu.memory_space<vmem>>, vector<1x32x288xf32>
    %88 = vector.shape_cast %87 : vector<1x32x288xf32> to vector<32x288xf32>
    %c3 = arith.constant 3 : index
    %c0_39 = arith.constant 0 : index
    %89 = vector.load %arg5[%c3, %c0_39] : memref<5x32xf32, #tpu.memory_space<vmem>>, vector<1x32xf32>
    %cst_40 = arith.constant dense<0.000000e+00> : vector<38x288xf32>
    %90 = tpu.matmul %86, %88, %cst_40 {dimension_numbers = #tpu.dot_dimension_numbers<[1], [0], [0], [1], [0, 0, 1, 1], [], []>} : vector<38x32xf32>, vector<32x288xf32>, vector<38x288xf32> -> vector<38x288xf32>
    %91 = vector.extract_strided_slice %90 {offsets = [0, 0], sizes = [24, 32], strides = [1, 1]} : vector<38x288xf32> to vector<24x32xf32>
    %92 = vector.extract_strided_slice %90 {offsets = [1, 32], sizes = [24, 32], strides = [1, 1]} : vector<38x288xf32> to vector<24x32xf32>
    %93 = arith.addf %91, %92 : vector<24x32xf32>
    %94 = vector.extract_strided_slice %90 {offsets = [2, 64], sizes = [24, 32], strides = [1, 1]} : vector<38x288xf32> to vector<24x32xf32>
    %95 = arith.addf %93, %94 : vector<24x32xf32>
    %96 = vector.extract_strided_slice %90 {offsets = [6, 96], sizes = [24, 32], strides = [1, 1]} : vector<38x288xf32> to vector<24x32xf32>
    %97 = arith.addf %95, %96 : vector<24x32xf32>
    %98 = vector.extract_strided_slice %90 {offsets = [7, 128], sizes = [24, 32], strides = [1, 1]} : vector<38x288xf32> to vector<24x32xf32>
    %99 = arith.addf %97, %98 : vector<24x32xf32>
    %100 = vector.extract_strided_slice %90 {offsets = [8, 160], sizes = [24, 32], strides = [1, 1]} : vector<38x288xf32> to vector<24x32xf32>
    %101 = arith.addf %99, %100 : vector<24x32xf32>
    %102 = vector.extract_strided_slice %90 {offsets = [12, 192], sizes = [24, 32], strides = [1, 1]} : vector<38x288xf32> to vector<24x32xf32>
    %103 = arith.addf %101, %102 : vector<24x32xf32>
    %104 = vector.extract_strided_slice %90 {offsets = [13, 224], sizes = [24, 32], strides = [1, 1]} : vector<38x288xf32> to vector<24x32xf32>
    %105 = arith.addf %103, %104 : vector<24x32xf32>
    %106 = vector.extract_strided_slice %90 {offsets = [14, 256], sizes = [24, 32], strides = [1, 1]} : vector<38x288xf32> to vector<24x32xf32>
    %107 = arith.addf %105, %106 : vector<24x32xf32>
    %108 = vector.broadcast %89 : vector<1x32xf32> to vector<24x32xf32>
    %109 = arith.addf %107, %108 : vector<24x32xf32>
    %c3_41 = arith.constant 3 : index
    %110 = memref.load %arg7[%c3_41] : memref<5xf32, #tpu.memory_space<smem>>
    %cst_42 = arith.constant 0.000000e+00 : f32
    %111 = vector.broadcast %cst_42 : f32 to vector<24x32xf32>
    %112 = arith.cmpf oge, %109, %111 : vector<24x32xf32>
    %113 = vector.broadcast %110 : f32 to vector<24x32xf32>
    %114 = arith.mulf %113, %109 : vector<24x32xf32>
    %115 = arith.select %112, %109, %114 : vector<24x32xi1>, vector<24x32xf32>
    %116 = vector.broadcast %1 : vector<24x1xf32> to vector<24x32xf32>
    %117 = arith.mulf %115, %116 : vector<24x32xf32>
    %c7_43 = arith.constant 7 : index
    %c0_44 = arith.constant 0 : index
    %118 = vector.load %arg9[%c7_43, %c0_44] : memref<38x32xf32, #tpu.memory_space<vmem>>, vector<24x32xf32>
    tpu.vector_store %arg9[%c7_43, %c0_44], %117 {strides = array<i32>} : memref<38x32xf32, #tpu.memory_space<vmem>>, vector<24x32xf32>,
    %c0_45 = arith.constant 0 : index
    %c0_46 = arith.constant 0 : index
    %119 = vector.load %arg9[%c0_45, %c0_46] : memref<38x32xf32, #tpu.memory_space<vmem>>, vector<38x32xf32>
    %c3_47 = arith.constant 3 : index
    %c0_48 = arith.constant 0 : index
    %c0_49 = arith.constant 0 : index
    %120 = vector.load %arg4[%c3_47, %c0_48, %c0_49] : memref<4x32x288xf32, #tpu.memory_space<vmem>>, vector<1x32x288xf32>
    %121 = vector.shape_cast %120 : vector<1x32x288xf32> to vector<32x288xf32>
    %c4 = arith.constant 4 : index
    %c0_50 = arith.constant 0 : index
    %122 = vector.load %arg5[%c4, %c0_50] : memref<5x32xf32, #tpu.memory_space<vmem>>, vector<1x32xf32>
    %cst_51 = arith.constant dense<0.000000e+00> : vector<38x288xf32>
    %123 = tpu.matmul %119, %121, %cst_51 {dimension_numbers = #tpu.dot_dimension_numbers<[1], [0], [0], [1], [0, 0, 1, 1], [], []>} : vector<38x32xf32>, vector<32x288xf32>, vector<38x288xf32> -> vector<38x288xf32>
    %124 = vector.extract_strided_slice %123 {offsets = [0, 0], sizes = [24, 32], strides = [1, 1]} : vector<38x288xf32> to vector<24x32xf32>
    %125 = vector.extract_strided_slice %123 {offsets = [1, 32], sizes = [24, 32], strides = [1, 1]} : vector<38x288xf32> to vector<24x32xf32>
    %126 = arith.addf %124, %125 : vector<24x32xf32>
    %127 = vector.extract_strided_slice %123 {offsets = [2, 64], sizes = [24, 32], strides = [1, 1]} : vector<38x288xf32> to vector<24x32xf32>
    %128 = arith.addf %126, %127 : vector<24x32xf32>
    %129 = vector.extract_strided_slice %123 {offsets = [6, 96], sizes = [24, 32], strides = [1, 1]} : vector<38x288xf32> to vector<24x32xf32>
    %130 = arith.addf %128, %129 : vector<24x32xf32>
    %131 = vector.extract_strided_slice %123 {offsets = [7, 128], sizes = [24, 32], strides = [1, 1]} : vector<38x288xf32> to vector<24x32xf32>
    %132 = arith.addf %130, %131 : vector<24x32xf32>
    %133 = vector.extract_strided_slice %123 {offsets = [8, 160], sizes = [24, 32], strides = [1, 1]} : vector<38x288xf32> to vector<24x32xf32>
    %134 = arith.addf %132, %133 : vector<24x32xf32>
    %135 = vector.extract_strided_slice %123 {offsets = [12, 192], sizes = [24, 32], strides = [1, 1]} : vector<38x288xf32> to vector<24x32xf32>
    %136 = arith.addf %134, %135 : vector<24x32xf32>
    %137 = vector.extract_strided_slice %123 {offsets = [13, 224], sizes = [24, 32], strides = [1, 1]} : vector<38x288xf32> to vector<24x32xf32>
    %138 = arith.addf %136, %137 : vector<24x32xf32>
    %139 = vector.extract_strided_slice %123 {offsets = [14, 256], sizes = [24, 32], strides = [1, 1]} : vector<38x288xf32> to vector<24x32xf32>
    %140 = arith.addf %138, %139 : vector<24x32xf32>
    %141 = vector.broadcast %122 : vector<1x32xf32> to vector<24x32xf32>
    %142 = arith.addf %140, %141 : vector<24x32xf32>
    %143 = arith.addf %142, %82 : vector<24x32xf32>
    %c4_52 = arith.constant 4 : index
    %144 = memref.load %arg7[%c4_52] : memref<5xf32, #tpu.memory_space<smem>>
    %cst_53 = arith.constant 0.000000e+00 : f32
    %145 = vector.broadcast %cst_53 : f32 to vector<24x32xf32>
    %146 = arith.cmpf oge, %143, %145 : vector<24x32xf32>
    %147 = vector.broadcast %144 : f32 to vector<24x32xf32>
    %148 = arith.mulf %147, %143 : vector<24x32xf32>
    %149 = arith.select %146, %143, %148 : vector<24x32xi1>, vector<24x32xf32>
    %cst_54 = arith.constant dense<0.000000e+00> : vector<24xf32>
    %150 = vector.multi_reduction <add>, %149, %cst_54 [1] : vector<24x32xf32> to vector<24xf32>
    %151 = vector.shape_cast %150 : vector<24xf32> to vector<24x1xf32>
    %cst_55 = arith.constant 3.200000e+01 : f32
    %152 = vector.broadcast %cst_55 : f32 to vector<24x1xf32>
    %153 = arith.divf %151, %152 : vector<24x1xf32>
    %154 = vector.broadcast %153 : vector<24x1xf32> to vector<24x32xf32>
    %155 = arith.subf %149, %154 : vector<24x32xf32>
    %156 = vector.broadcast %153 : vector<24x1xf32> to vector<24x32xf32>
    %157 = arith.subf %149, %156 : vector<24x32xf32>
    %158 = arith.mulf %155, %157 : vector<24x32xf32>
    %cst_56 = arith.constant dense<0.000000e+00> : vector<24xf32>
    %159 = vector.multi_reduction <add>, %158, %cst_56 [1] : vector<24x32xf32> to vector<24xf32>
    %160 = vector.shape_cast %159 : vector<24xf32> to vector<24x1xf32>
    %cst_57 = arith.constant 3.200000e+01 : f32
    %161 = vector.broadcast %cst_57 : f32 to vector<24x1xf32>
    %162 = arith.divf %160, %161 : vector<24x1xf32>
    %163 = vector.broadcast %153 : vector<24x1xf32> to vector<24x32xf32>
    %164 = arith.subf %149, %163 : vector<24x32xf32>
    %cst_58 = arith.constant 9.99999974E-6 : f32
    %165 = vector.broadcast %cst_58 : f32 to vector<24x1xf32>
    %166 = arith.addf %162, %165 : vector<24x1xf32>
    %167 = math.rsqrt %166 : vector<24x1xf32>
    %168 = vector.broadcast %167 : vector<24x1xf32> to vector<24x32xf32>
    %169 = arith.mulf %164, %168 : vector<24x32xf32>
    %c0_59 = arith.constant 0 : index
    %c0_60 = arith.constant 0 : index
    %170 = vector.load %arg6[%c0_59, %c0_60] : memref<2x32xf32, #tpu.memory_space<vmem>>, vector<1x32xf32>
    %171 = vector.broadcast %170 : vector<1x32xf32> to vector<24x32xf32>
    %172 = arith.mulf %169, %171 : vector<24x32xf32>
    %c1_61 = arith.constant 1 : index
    %c0_62 = arith.constant 0 : index
    %173 = vector.load %arg6[%c1_61, %c0_62] : memref<2x32xf32, #tpu.memory_space<vmem>>, vector<1x32xf32>
    %174 = vector.broadcast %173 : vector<1x32xf32> to vector<24x32xf32>
    %175 = arith.addf %172, %174 : vector<24x32xf32>
    %c0_63 = arith.constant 0 : index
    %c0_64 = arith.constant 0 : index
    %c0_65 = arith.constant 0 : index
    %176 = vector.load %arg8[%c0_63, %c0_64, %c0_65] : memref<1x24x32xf32, #tpu.memory_space<vmem>>, vector<1x24x32xf32>
    %177 = vector.shape_cast %176 : vector<1x24x32xf32> to vector<24x32xf32>
    %178 = vector.shape_cast %175 : vector<24x32xf32> to vector<1x24x32xf32>
    tpu.vector_store %arg8[%c0_63, %c0_64, %c0_65], %178 {strides = array<i32>} : memref<1x24x32xf32, #tpu.memory_space<vmem>>, vector<1x24x32xf32>,
    return
  }
  func.func @transform_0(%arg0: i32) -> (i32, i32, i32) {
    %c0_i32 = arith.constant 0 : i32
    %c0_i32_0 = arith.constant 0 : i32
    %c0_i32_1 = arith.constant 0 : i32
    return %arg0, %c0_i32, %c0_i32_0 : i32, i32, i32
  }
  func.func @transform_1(%arg0: i32) -> (i32, i32) {
    %c0_i32 = arith.constant 0 : i32
    %c0_i32_0 = arith.constant 0 : i32
    %c0_i32_1 = arith.constant 0 : i32
    return %c0_i32, %c0_i32_0 : i32, i32
  }
  func.func @transform_2(%arg0: i32) -> (i32, i32) {
    %c0_i32 = arith.constant 0 : i32
    %c0_i32_0 = arith.constant 0 : i32
    %c0_i32_1 = arith.constant 0 : i32
    return %c0_i32, %c0_i32_0 : i32, i32
  }
  func.func @transform_3(%arg0: i32) -> (i32, i32, i32) {
    %c0_i32 = arith.constant 0 : i32
    %c0_i32_0 = arith.constant 0 : i32
    %c0_i32_1 = arith.constant 0 : i32
    %c0_i32_2 = arith.constant 0 : i32
    return %c0_i32, %c0_i32_0, %c0_i32_1 : i32, i32, i32
  }
  func.func @transform_4(%arg0: i32) -> (i32, i32) {
    %c0_i32 = arith.constant 0 : i32
    %c0_i32_0 = arith.constant 0 : i32
    %c0_i32_1 = arith.constant 0 : i32
    return %c0_i32, %c0_i32_0 : i32, i32
  }
  func.func @transform_5(%arg0: i32) -> (i32, i32) {
    %c0_i32 = arith.constant 0 : i32
    %c0_i32_0 = arith.constant 0 : i32
    %c0_i32_1 = arith.constant 0 : i32
    return %c0_i32, %c0_i32_0 : i32, i32
  }
  func.func @transform_6(%arg0: i32) -> i32 {
    %c0_i32 = arith.constant 0 : i32
    %c0_i32_0 = arith.constant 0 : i32
    return %c0_i32 : i32
  }
  func.func @transform_7(%arg0: i32) -> (i32, i32, i32) {
    %c0_i32 = arith.constant 0 : i32
    %c0_i32_0 = arith.constant 0 : i32
    %c0_i32_1 = arith.constant 0 : i32
    return %arg0, %c0_i32, %c0_i32_0 : i32, i32, i32
  }
}

module attributes {stable_mosaic.version = 11 : i64} {
  func.func @kernel(%arg0: i32, %arg1: memref<1x18x128xf32, #tpu.memory_space<vmem>>, %arg2: memref<18x1xf32, #tpu.memory_space<vmem>>, %arg3: memref<128x64xf32, #tpu.memory_space<vmem>>, %arg4: memref<4x64x576xf32, #tpu.memory_space<vmem>>, %arg5: memref<5x64xf32, #tpu.memory_space<vmem>>, %arg6: memref<2x64xf32, #tpu.memory_space<vmem>>, %arg7: memref<5xf32, #tpu.memory_space<smem>>, %arg8: memref<1x8x64xf32, #tpu.memory_space<vmem>>, %arg9: memref<18x64xf32, #tpu.memory_space<vmem>>) attributes {dimension_semantics = [#tpu.dimension_semantics<parallel>], iteration_bounds = array<i64: 2>, scalar_prefetch = 0 : i64, scratch_operands = 1 : i64, tpu.core_type = #tpu.core_type<tc>, window_params = [{transform_indices = @transform_0, window_bounds = array<i64: 1, 18, 128>}, {pipeline_mode = #tpu.pipeline_mode<synchronous>, transform_indices = @transform_1, window_bounds = array<i64: 18, 1>}, {pipeline_mode = #tpu.pipeline_mode<synchronous>, transform_indices = @transform_2, window_bounds = array<i64: 128, 64>}, {pipeline_mode = #tpu.pipeline_mode<synchronous>, transform_indices = @transform_3, window_bounds = array<i64: 4, 64, 576>}, {pipeline_mode = #tpu.pipeline_mode<synchronous>, transform_indices = @transform_4, window_bounds = array<i64: 5, 64>}, {pipeline_mode = #tpu.pipeline_mode<synchronous>, transform_indices = @transform_5, window_bounds = array<i64: 2, 64>}, {transform_indices = @transform_6, window_bounds = array<i64: 5>}, {transform_indices = @transform_7, window_bounds = array<i64: 1, 8, 64>}]} {
    %c0 = arith.constant 0 : index
    %c0_0 = arith.constant 0 : index
    %0 = vector.load %arg2[%c0, %c0_0] : memref<18x1xf32, #tpu.memory_space<vmem>>, vector<18x1xf32>
    %c5 = arith.constant 5 : index
    %c0_1 = arith.constant 0 : index
    %1 = vector.load %arg2[%c5, %c0_1] : memref<18x1xf32, #tpu.memory_space<vmem>>, vector<8x1xf32>
    %c0_2 = arith.constant 0 : index
    %c0_3 = arith.constant 0 : index
    %c0_4 = arith.constant 0 : index
    %2 = vector.load %arg1[%c0_2, %c0_3, %c0_4] : memref<1x18x128xf32, #tpu.memory_space<vmem>>, vector<1x18x128xf32>
    %3 = vector.shape_cast %2 : vector<1x18x128xf32> to vector<18x128xf32>
    %c0_5 = arith.constant 0 : index
    %c0_6 = arith.constant 0 : index
    %4 = vector.load %arg3[%c0_5, %c0_6] : memref<128x64xf32, #tpu.memory_space<vmem>>, vector<128x64xf32>
    %cst = arith.constant dense<0.000000e+00> : vector<18x64xf32>
    %5 = tpu.matmul %3, %4, %cst {dimension_numbers = #tpu.dot_dimension_numbers<[1], [0], [0], [1], [0, 0, 1, 1], [], []>} : vector<18x128xf32>, vector<128x64xf32>, vector<18x64xf32> -> vector<18x64xf32>
    %c0_7 = arith.constant 0 : index
    %c0_8 = arith.constant 0 : index
    %6 = vector.load %arg5[%c0_7, %c0_8] : memref<5x64xf32, #tpu.memory_space<vmem>>, vector<1x64xf32>
    %7 = vector.broadcast %6 : vector<1x64xf32> to vector<18x64xf32>
    %8 = arith.addf %5, %7 : vector<18x64xf32>
    %c0_9 = arith.constant 0 : index
    %9 = memref.load %arg7[%c0_9] : memref<5xf32, #tpu.memory_space<smem>>
    %cst_10 = arith.constant 0.000000e+00 : f32
    %10 = vector.broadcast %cst_10 : f32 to vector<18x64xf32>
    %11 = arith.cmpf oge, %8, %10 : vector<18x64xf32>
    %12 = vector.broadcast %9 : f32 to vector<18x64xf32>
    %13 = arith.mulf %12, %8 : vector<18x64xf32>
    %14 = arith.select %11, %8, %13 : vector<18x64xi1>, vector<18x64xf32>
    %15 = vector.broadcast %0 : vector<18x1xf32> to vector<18x64xf32>
    %16 = arith.mulf %14, %15 : vector<18x64xf32>
    %cst_11 = arith.constant 0.000000e+00 : f32
    %17 = vector.broadcast %cst_11 : f32 to vector<18x64xf32>
    %c0_12 = arith.constant 0 : index
    %c0_13 = arith.constant 0 : index
    %18 = vector.load %arg9[%c0_12, %c0_13] : memref<18x64xf32, #tpu.memory_space<vmem>>, vector<18x64xf32>
    tpu.vector_store %arg9[%c0_12, %c0_13], %17 {strides = array<i32>} : memref<18x64xf32, #tpu.memory_space<vmem>>, vector<18x64xf32>,
    %c0_14 = arith.constant 0 : index
    %c0_15 = arith.constant 0 : index
    %c0_16 = arith.constant 0 : index
    %19 = vector.load %arg4[%c0_14, %c0_15, %c0_16] : memref<4x64x576xf32, #tpu.memory_space<vmem>>, vector<1x64x576xf32>
    %20 = vector.shape_cast %19 : vector<1x64x576xf32> to vector<64x576xf32>
    %c1 = arith.constant 1 : index
    %c0_17 = arith.constant 0 : index
    %21 = vector.load %arg5[%c1, %c0_17] : memref<5x64xf32, #tpu.memory_space<vmem>>, vector<1x64xf32>
    %cst_18 = arith.constant dense<0.000000e+00> : vector<18x576xf32>
    %22 = tpu.matmul %16, %20, %cst_18 {dimension_numbers = #tpu.dot_dimension_numbers<[1], [0], [0], [1], [0, 0, 1, 1], [], []>} : vector<18x64xf32>, vector<64x576xf32>, vector<18x576xf32> -> vector<18x576xf32>
    %23 = vector.extract_strided_slice %22 {offsets = [0, 0], sizes = [8, 64], strides = [1, 1]} : vector<18x576xf32> to vector<8x64xf32>
    %24 = vector.extract_strided_slice %22 {offsets = [1, 64], sizes = [8, 64], strides = [1, 1]} : vector<18x576xf32> to vector<8x64xf32>
    %25 = arith.addf %23, %24 : vector<8x64xf32>
    %26 = vector.extract_strided_slice %22 {offsets = [2, 128], sizes = [8, 64], strides = [1, 1]} : vector<18x576xf32> to vector<8x64xf32>
    %27 = arith.addf %25, %26 : vector<8x64xf32>
    %28 = vector.extract_strided_slice %22 {offsets = [4, 192], sizes = [8, 64], strides = [1, 1]} : vector<18x576xf32> to vector<8x64xf32>
    %29 = arith.addf %27, %28 : vector<8x64xf32>
    %30 = vector.extract_strided_slice %22 {offsets = [5, 256], sizes = [8, 64], strides = [1, 1]} : vector<18x576xf32> to vector<8x64xf32>
    %31 = arith.addf %29, %30 : vector<8x64xf32>
    %32 = vector.extract_strided_slice %22 {offsets = [6, 320], sizes = [8, 64], strides = [1, 1]} : vector<18x576xf32> to vector<8x64xf32>
    %33 = arith.addf %31, %32 : vector<8x64xf32>
    %34 = vector.extract_strided_slice %22 {offsets = [8, 384], sizes = [8, 64], strides = [1, 1]} : vector<18x576xf32> to vector<8x64xf32>
    %35 = arith.addf %33, %34 : vector<8x64xf32>
    %36 = vector.extract_strided_slice %22 {offsets = [9, 448], sizes = [8, 64], strides = [1, 1]} : vector<18x576xf32> to vector<8x64xf32>
    %37 = arith.addf %35, %36 : vector<8x64xf32>
    %38 = vector.extract_strided_slice %22 {offsets = [10, 512], sizes = [8, 64], strides = [1, 1]} : vector<18x576xf32> to vector<8x64xf32>
    %39 = arith.addf %37, %38 : vector<8x64xf32>
    %40 = vector.broadcast %21 : vector<1x64xf32> to vector<8x64xf32>
    %41 = arith.addf %39, %40 : vector<8x64xf32>
    %c1_19 = arith.constant 1 : index
    %42 = memref.load %arg7[%c1_19] : memref<5xf32, #tpu.memory_space<smem>>
    %cst_20 = arith.constant 0.000000e+00 : f32
    %43 = vector.broadcast %cst_20 : f32 to vector<8x64xf32>
    %44 = arith.cmpf oge, %41, %43 : vector<8x64xf32>
    %45 = vector.broadcast %42 : f32 to vector<8x64xf32>
    %46 = arith.mulf %45, %41 : vector<8x64xf32>
    %47 = arith.select %44, %41, %46 : vector<8x64xi1>, vector<8x64xf32>
    %48 = vector.broadcast %1 : vector<8x1xf32> to vector<8x64xf32>
    %49 = arith.mulf %47, %48 : vector<8x64xf32>
    %c5_21 = arith.constant 5 : index
    %c0_22 = arith.constant 0 : index
    %50 = vector.load %arg9[%c5_21, %c0_22] : memref<18x64xf32, #tpu.memory_space<vmem>>, vector<8x64xf32>
    tpu.vector_store %arg9[%c5_21, %c0_22], %49 {strides = array<i32>} : memref<18x64xf32, #tpu.memory_space<vmem>>, vector<8x64xf32>,
    %c0_23 = arith.constant 0 : index
    %c0_24 = arith.constant 0 : index
    %51 = vector.load %arg9[%c0_23, %c0_24] : memref<18x64xf32, #tpu.memory_space<vmem>>, vector<18x64xf32>
    %c1_25 = arith.constant 1 : index
    %c0_26 = arith.constant 0 : index
    %c0_27 = arith.constant 0 : index
    %52 = vector.load %arg4[%c1_25, %c0_26, %c0_27] : memref<4x64x576xf32, #tpu.memory_space<vmem>>, vector<1x64x576xf32>
    %53 = vector.shape_cast %52 : vector<1x64x576xf32> to vector<64x576xf32>
    %c2 = arith.constant 2 : index
    %c0_28 = arith.constant 0 : index
    %54 = vector.load %arg5[%c2, %c0_28] : memref<5x64xf32, #tpu.memory_space<vmem>>, vector<1x64xf32>
    %cst_29 = arith.constant dense<0.000000e+00> : vector<18x576xf32>
    %55 = tpu.matmul %51, %53, %cst_29 {dimension_numbers = #tpu.dot_dimension_numbers<[1], [0], [0], [1], [0, 0, 1, 1], [], []>} : vector<18x64xf32>, vector<64x576xf32>, vector<18x576xf32> -> vector<18x576xf32>
    %56 = vector.extract_strided_slice %55 {offsets = [0, 0], sizes = [8, 64], strides = [1, 1]} : vector<18x576xf32> to vector<8x64xf32>
    %57 = vector.extract_strided_slice %55 {offsets = [1, 64], sizes = [8, 64], strides = [1, 1]} : vector<18x576xf32> to vector<8x64xf32>
    %58 = arith.addf %56, %57 : vector<8x64xf32>
    %59 = vector.extract_strided_slice %55 {offsets = [2, 128], sizes = [8, 64], strides = [1, 1]} : vector<18x576xf32> to vector<8x64xf32>
    %60 = arith.addf %58, %59 : vector<8x64xf32>
    %61 = vector.extract_strided_slice %55 {offsets = [4, 192], sizes = [8, 64], strides = [1, 1]} : vector<18x576xf32> to vector<8x64xf32>
    %62 = arith.addf %60, %61 : vector<8x64xf32>
    %63 = vector.extract_strided_slice %55 {offsets = [5, 256], sizes = [8, 64], strides = [1, 1]} : vector<18x576xf32> to vector<8x64xf32>
    %64 = arith.addf %62, %63 : vector<8x64xf32>
    %65 = vector.extract_strided_slice %55 {offsets = [6, 320], sizes = [8, 64], strides = [1, 1]} : vector<18x576xf32> to vector<8x64xf32>
    %66 = arith.addf %64, %65 : vector<8x64xf32>
    %67 = vector.extract_strided_slice %55 {offsets = [8, 384], sizes = [8, 64], strides = [1, 1]} : vector<18x576xf32> to vector<8x64xf32>
    %68 = arith.addf %66, %67 : vector<8x64xf32>
    %69 = vector.extract_strided_slice %55 {offsets = [9, 448], sizes = [8, 64], strides = [1, 1]} : vector<18x576xf32> to vector<8x64xf32>
    %70 = arith.addf %68, %69 : vector<8x64xf32>
    %71 = vector.extract_strided_slice %55 {offsets = [10, 512], sizes = [8, 64], strides = [1, 1]} : vector<18x576xf32> to vector<8x64xf32>
    %72 = arith.addf %70, %71 : vector<8x64xf32>
    %73 = vector.broadcast %54 : vector<1x64xf32> to vector<8x64xf32>
    %74 = arith.addf %72, %73 : vector<8x64xf32>
    %75 = vector.extract_strided_slice %16 {offsets = [5, 0], sizes = [8, 64], strides = [1, 1]} : vector<18x64xf32> to vector<8x64xf32>
    %76 = arith.addf %74, %75 : vector<8x64xf32>
    %c2_30 = arith.constant 2 : index
    %77 = memref.load %arg7[%c2_30] : memref<5xf32, #tpu.memory_space<smem>>
    %cst_31 = arith.constant 0.000000e+00 : f32
    %78 = vector.broadcast %cst_31 : f32 to vector<8x64xf32>
    %79 = arith.cmpf oge, %76, %78 : vector<8x64xf32>
    %80 = vector.broadcast %77 : f32 to vector<8x64xf32>
    %81 = arith.mulf %80, %76 : vector<8x64xf32>
    %82 = arith.select %79, %76, %81 : vector<8x64xi1>, vector<8x64xf32>
    %83 = vector.broadcast %1 : vector<8x1xf32> to vector<8x64xf32>
    %84 = arith.mulf %82, %83 : vector<8x64xf32>
    %c5_32 = arith.constant 5 : index
    %c0_33 = arith.constant 0 : index
    %85 = vector.load %arg9[%c5_32, %c0_33] : memref<18x64xf32, #tpu.memory_space<vmem>>, vector<8x64xf32>
    tpu.vector_store %arg9[%c5_32, %c0_33], %84 {strides = array<i32>} : memref<18x64xf32, #tpu.memory_space<vmem>>, vector<8x64xf32>,
    %c0_34 = arith.constant 0 : index
    %c0_35 = arith.constant 0 : index
    %86 = vector.load %arg9[%c0_34, %c0_35] : memref<18x64xf32, #tpu.memory_space<vmem>>, vector<18x64xf32>
    %c2_36 = arith.constant 2 : index
    %c0_37 = arith.constant 0 : index
    %c0_38 = arith.constant 0 : index
    %87 = vector.load %arg4[%c2_36, %c0_37, %c0_38] : memref<4x64x576xf32, #tpu.memory_space<vmem>>, vector<1x64x576xf32>
    %88 = vector.shape_cast %87 : vector<1x64x576xf32> to vector<64x576xf32>
    %c3 = arith.constant 3 : index
    %c0_39 = arith.constant 0 : index
    %89 = vector.load %arg5[%c3, %c0_39] : memref<5x64xf32, #tpu.memory_space<vmem>>, vector<1x64xf32>
    %cst_40 = arith.constant dense<0.000000e+00> : vector<18x576xf32>
    %90 = tpu.matmul %86, %88, %cst_40 {dimension_numbers = #tpu.dot_dimension_numbers<[1], [0], [0], [1], [0, 0, 1, 1], [], []>} : vector<18x64xf32>, vector<64x576xf32>, vector<18x576xf32> -> vector<18x576xf32>
    %91 = vector.extract_strided_slice %90 {offsets = [0, 0], sizes = [8, 64], strides = [1, 1]} : vector<18x576xf32> to vector<8x64xf32>
    %92 = vector.extract_strided_slice %90 {offsets = [1, 64], sizes = [8, 64], strides = [1, 1]} : vector<18x576xf32> to vector<8x64xf32>
    %93 = arith.addf %91, %92 : vector<8x64xf32>
    %94 = vector.extract_strided_slice %90 {offsets = [2, 128], sizes = [8, 64], strides = [1, 1]} : vector<18x576xf32> to vector<8x64xf32>
    %95 = arith.addf %93, %94 : vector<8x64xf32>
    %96 = vector.extract_strided_slice %90 {offsets = [4, 192], sizes = [8, 64], strides = [1, 1]} : vector<18x576xf32> to vector<8x64xf32>
    %97 = arith.addf %95, %96 : vector<8x64xf32>
    %98 = vector.extract_strided_slice %90 {offsets = [5, 256], sizes = [8, 64], strides = [1, 1]} : vector<18x576xf32> to vector<8x64xf32>
    %99 = arith.addf %97, %98 : vector<8x64xf32>
    %100 = vector.extract_strided_slice %90 {offsets = [6, 320], sizes = [8, 64], strides = [1, 1]} : vector<18x576xf32> to vector<8x64xf32>
    %101 = arith.addf %99, %100 : vector<8x64xf32>
    %102 = vector.extract_strided_slice %90 {offsets = [8, 384], sizes = [8, 64], strides = [1, 1]} : vector<18x576xf32> to vector<8x64xf32>
    %103 = arith.addf %101, %102 : vector<8x64xf32>
    %104 = vector.extract_strided_slice %90 {offsets = [9, 448], sizes = [8, 64], strides = [1, 1]} : vector<18x576xf32> to vector<8x64xf32>
    %105 = arith.addf %103, %104 : vector<8x64xf32>
    %106 = vector.extract_strided_slice %90 {offsets = [10, 512], sizes = [8, 64], strides = [1, 1]} : vector<18x576xf32> to vector<8x64xf32>
    %107 = arith.addf %105, %106 : vector<8x64xf32>
    %108 = vector.broadcast %89 : vector<1x64xf32> to vector<8x64xf32>
    %109 = arith.addf %107, %108 : vector<8x64xf32>
    %c3_41 = arith.constant 3 : index
    %110 = memref.load %arg7[%c3_41] : memref<5xf32, #tpu.memory_space<smem>>
    %cst_42 = arith.constant 0.000000e+00 : f32
    %111 = vector.broadcast %cst_42 : f32 to vector<8x64xf32>
    %112 = arith.cmpf oge, %109, %111 : vector<8x64xf32>
    %113 = vector.broadcast %110 : f32 to vector<8x64xf32>
    %114 = arith.mulf %113, %109 : vector<8x64xf32>
    %115 = arith.select %112, %109, %114 : vector<8x64xi1>, vector<8x64xf32>
    %116 = vector.broadcast %1 : vector<8x1xf32> to vector<8x64xf32>
    %117 = arith.mulf %115, %116 : vector<8x64xf32>
    %c5_43 = arith.constant 5 : index
    %c0_44 = arith.constant 0 : index
    %118 = vector.load %arg9[%c5_43, %c0_44] : memref<18x64xf32, #tpu.memory_space<vmem>>, vector<8x64xf32>
    tpu.vector_store %arg9[%c5_43, %c0_44], %117 {strides = array<i32>} : memref<18x64xf32, #tpu.memory_space<vmem>>, vector<8x64xf32>,
    %c0_45 = arith.constant 0 : index
    %c0_46 = arith.constant 0 : index
    %119 = vector.load %arg9[%c0_45, %c0_46] : memref<18x64xf32, #tpu.memory_space<vmem>>, vector<18x64xf32>
    %c3_47 = arith.constant 3 : index
    %c0_48 = arith.constant 0 : index
    %c0_49 = arith.constant 0 : index
    %120 = vector.load %arg4[%c3_47, %c0_48, %c0_49] : memref<4x64x576xf32, #tpu.memory_space<vmem>>, vector<1x64x576xf32>
    %121 = vector.shape_cast %120 : vector<1x64x576xf32> to vector<64x576xf32>
    %c4 = arith.constant 4 : index
    %c0_50 = arith.constant 0 : index
    %122 = vector.load %arg5[%c4, %c0_50] : memref<5x64xf32, #tpu.memory_space<vmem>>, vector<1x64xf32>
    %cst_51 = arith.constant dense<0.000000e+00> : vector<18x576xf32>
    %123 = tpu.matmul %119, %121, %cst_51 {dimension_numbers = #tpu.dot_dimension_numbers<[1], [0], [0], [1], [0, 0, 1, 1], [], []>} : vector<18x64xf32>, vector<64x576xf32>, vector<18x576xf32> -> vector<18x576xf32>
    %124 = vector.extract_strided_slice %123 {offsets = [0, 0], sizes = [8, 64], strides = [1, 1]} : vector<18x576xf32> to vector<8x64xf32>
    %125 = vector.extract_strided_slice %123 {offsets = [1, 64], sizes = [8, 64], strides = [1, 1]} : vector<18x576xf32> to vector<8x64xf32>
    %126 = arith.addf %124, %125 : vector<8x64xf32>
    %127 = vector.extract_strided_slice %123 {offsets = [2, 128], sizes = [8, 64], strides = [1, 1]} : vector<18x576xf32> to vector<8x64xf32>
    %128 = arith.addf %126, %127 : vector<8x64xf32>
    %129 = vector.extract_strided_slice %123 {offsets = [4, 192], sizes = [8, 64], strides = [1, 1]} : vector<18x576xf32> to vector<8x64xf32>
    %130 = arith.addf %128, %129 : vector<8x64xf32>
    %131 = vector.extract_strided_slice %123 {offsets = [5, 256], sizes = [8, 64], strides = [1, 1]} : vector<18x576xf32> to vector<8x64xf32>
    %132 = arith.addf %130, %131 : vector<8x64xf32>
    %133 = vector.extract_strided_slice %123 {offsets = [6, 320], sizes = [8, 64], strides = [1, 1]} : vector<18x576xf32> to vector<8x64xf32>
    %134 = arith.addf %132, %133 : vector<8x64xf32>
    %135 = vector.extract_strided_slice %123 {offsets = [8, 384], sizes = [8, 64], strides = [1, 1]} : vector<18x576xf32> to vector<8x64xf32>
    %136 = arith.addf %134, %135 : vector<8x64xf32>
    %137 = vector.extract_strided_slice %123 {offsets = [9, 448], sizes = [8, 64], strides = [1, 1]} : vector<18x576xf32> to vector<8x64xf32>
    %138 = arith.addf %136, %137 : vector<8x64xf32>
    %139 = vector.extract_strided_slice %123 {offsets = [10, 512], sizes = [8, 64], strides = [1, 1]} : vector<18x576xf32> to vector<8x64xf32>
    %140 = arith.addf %138, %139 : vector<8x64xf32>
    %141 = vector.broadcast %122 : vector<1x64xf32> to vector<8x64xf32>
    %142 = arith.addf %140, %141 : vector<8x64xf32>
    %143 = arith.addf %142, %82 : vector<8x64xf32>
    %c4_52 = arith.constant 4 : index
    %144 = memref.load %arg7[%c4_52] : memref<5xf32, #tpu.memory_space<smem>>
    %cst_53 = arith.constant 0.000000e+00 : f32
    %145 = vector.broadcast %cst_53 : f32 to vector<8x64xf32>
    %146 = arith.cmpf oge, %143, %145 : vector<8x64xf32>
    %147 = vector.broadcast %144 : f32 to vector<8x64xf32>
    %148 = arith.mulf %147, %143 : vector<8x64xf32>
    %149 = arith.select %146, %143, %148 : vector<8x64xi1>, vector<8x64xf32>
    %cst_54 = arith.constant dense<0.000000e+00> : vector<8xf32>
    %150 = vector.multi_reduction <add>, %149, %cst_54 [1] : vector<8x64xf32> to vector<8xf32>
    %151 = vector.shape_cast %150 : vector<8xf32> to vector<8x1xf32>
    %cst_55 = arith.constant 6.400000e+01 : f32
    %152 = vector.broadcast %cst_55 : f32 to vector<8x1xf32>
    %153 = arith.divf %151, %152 : vector<8x1xf32>
    %154 = vector.broadcast %153 : vector<8x1xf32> to vector<8x64xf32>
    %155 = arith.subf %149, %154 : vector<8x64xf32>
    %156 = vector.broadcast %153 : vector<8x1xf32> to vector<8x64xf32>
    %157 = arith.subf %149, %156 : vector<8x64xf32>
    %158 = arith.mulf %155, %157 : vector<8x64xf32>
    %cst_56 = arith.constant dense<0.000000e+00> : vector<8xf32>
    %159 = vector.multi_reduction <add>, %158, %cst_56 [1] : vector<8x64xf32> to vector<8xf32>
    %160 = vector.shape_cast %159 : vector<8xf32> to vector<8x1xf32>
    %cst_57 = arith.constant 6.400000e+01 : f32
    %161 = vector.broadcast %cst_57 : f32 to vector<8x1xf32>
    %162 = arith.divf %160, %161 : vector<8x1xf32>
    %163 = vector.broadcast %153 : vector<8x1xf32> to vector<8x64xf32>
    %164 = arith.subf %149, %163 : vector<8x64xf32>
    %cst_58 = arith.constant 9.99999974E-6 : f32
    %165 = vector.broadcast %cst_58 : f32 to vector<8x1xf32>
    %166 = arith.addf %162, %165 : vector<8x1xf32>
    %167 = math.rsqrt %166 : vector<8x1xf32>
    %168 = vector.broadcast %167 : vector<8x1xf32> to vector<8x64xf32>
    %169 = arith.mulf %164, %168 : vector<8x64xf32>
    %c0_59 = arith.constant 0 : index
    %c0_60 = arith.constant 0 : index
    %170 = vector.load %arg6[%c0_59, %c0_60] : memref<2x64xf32, #tpu.memory_space<vmem>>, vector<1x64xf32>
    %171 = vector.broadcast %170 : vector<1x64xf32> to vector<8x64xf32>
    %172 = arith.mulf %169, %171 : vector<8x64xf32>
    %c1_61 = arith.constant 1 : index
    %c0_62 = arith.constant 0 : index
    %173 = vector.load %arg6[%c1_61, %c0_62] : memref<2x64xf32, #tpu.memory_space<vmem>>, vector<1x64xf32>
    %174 = vector.broadcast %173 : vector<1x64xf32> to vector<8x64xf32>
    %175 = arith.addf %172, %174 : vector<8x64xf32>
    %c0_63 = arith.constant 0 : index
    %c0_64 = arith.constant 0 : index
    %c0_65 = arith.constant 0 : index
    %176 = vector.load %arg8[%c0_63, %c0_64, %c0_65] : memref<1x8x64xf32, #tpu.memory_space<vmem>>, vector<1x8x64xf32>
    %177 = vector.shape_cast %176 : vector<1x8x64xf32> to vector<8x64xf32>
    %178 = vector.shape_cast %175 : vector<8x64xf32> to vector<1x8x64xf32>
    tpu.vector_store %arg8[%c0_63, %c0_64, %c0_65], %178 {strides = array<i32>} : memref<1x8x64xf32, #tpu.memory_space<vmem>>, vector<1x8x64xf32>,
    return
  }
  func.func @transform_0(%arg0: i32) -> (i32, i32, i32) {
    %c0_i32 = arith.constant 0 : i32
    %c0_i32_0 = arith.constant 0 : i32
    %c0_i32_1 = arith.constant 0 : i32
    return %arg0, %c0_i32, %c0_i32_0 : i32, i32, i32
  }
  func.func @transform_1(%arg0: i32) -> (i32, i32) {
    %c0_i32 = arith.constant 0 : i32
    %c0_i32_0 = arith.constant 0 : i32
    %c0_i32_1 = arith.constant 0 : i32
    return %c0_i32, %c0_i32_0 : i32, i32
  }
  func.func @transform_2(%arg0: i32) -> (i32, i32) {
    %c0_i32 = arith.constant 0 : i32
    %c0_i32_0 = arith.constant 0 : i32
    %c0_i32_1 = arith.constant 0 : i32
    return %c0_i32, %c0_i32_0 : i32, i32
  }
  func.func @transform_3(%arg0: i32) -> (i32, i32, i32) {
    %c0_i32 = arith.constant 0 : i32
    %c0_i32_0 = arith.constant 0 : i32
    %c0_i32_1 = arith.constant 0 : i32
    %c0_i32_2 = arith.constant 0 : i32
    return %c0_i32, %c0_i32_0, %c0_i32_1 : i32, i32, i32
  }
  func.func @transform_4(%arg0: i32) -> (i32, i32) {
    %c0_i32 = arith.constant 0 : i32
    %c0_i32_0 = arith.constant 0 : i32
    %c0_i32_1 = arith.constant 0 : i32
    return %c0_i32, %c0_i32_0 : i32, i32
  }
  func.func @transform_5(%arg0: i32) -> (i32, i32) {
    %c0_i32 = arith.constant 0 : i32
    %c0_i32_0 = arith.constant 0 : i32
    %c0_i32_1 = arith.constant 0 : i32
    return %c0_i32, %c0_i32_0 : i32, i32
  }
  func.func @transform_6(%arg0: i32) -> i32 {
    %c0_i32 = arith.constant 0 : i32
    %c0_i32_0 = arith.constant 0 : i32
    return %c0_i32 : i32
  }
  func.func @transform_7(%arg0: i32) -> (i32, i32, i32) {
    %c0_i32 = arith.constant 0 : i32
    %c0_i32_0 = arith.constant 0 : i32
    %c0_i32_1 = arith.constant 0 : i32
    return %arg0, %c0_i32, %c0_i32_0 : i32, i32, i32
  }
}

</mosaic_0001>

<llo_original>
// kernel: feature_extractor_pallas.4
$region0: #{feature_extractor_pallas.4}
  #allocation0 [shape = 'u32[]', space=smem, size = 0x4, offset = 0x4, fixed_abs, tag = 'smem constant byte address 0x4 - core index']
  #allocation1 [shape = 'u32[144,128]{1,0:T(1,128)}', space=vmem, size = 0x12000, scoped, tag = 'internal scratch']
  %s0 = inlined_call_operand.vmem [shape: f32[2,326,8], index: 0, kind: input, shape index: {}]
  %s1 = inlined_call_operand.vmem [shape: f32[8,72], index: 1, kind: input, shape index: {}]
  %s2 = inlined_call_operand.vmem [shape: f32[1,8], index: 2, kind: input, shape index: {}]
  %s3 = inlined_call_operand.vmem [shape: f32[2,288,8], index: 3, kind: output, shape index: {}]
  %s4 = sld [smem:[#allocation0]]
  $region45: #{feature_extractor_pallas.4} parent=0
    _
  %s6 = ssub.s32 1, %s4
  %s7 = scalar_select 0, %s6, %s4
  loop: start=0, step=1, limit=4
  $region2: #{feature_extractor_pallas.4} parent=0 // loop_pre_header
    _
  $region3: #{feature_extractor_pallas.4} parent=0 // loop_header
    %s9 = sphi 0, %s13
    %p10 = scmp.ge.s32.totalorder %s9, 4
    %s19 = sphi 0, %s21
    %s22 = sphi 0, %s19
    %s23 = sphi 0, %s22
    %s39 = sphi 0, %s23
    %s43 = sphi 0, %s43
    %s45 = sphi 0, %s43
    %s46 = sphi 0, %s45
    %s60 = sphi 0, %s46
    %s64 = sphi 0, %s64
    %s66 = sphi 0, %s64
    %s67 = sphi 0, %s66
    %s81 = sphi 0, %s67
    %s87 = sphi 0, %s89
    %s90 = sphi 0, %s87
    %s91 = sphi 0, %s90
    %s107 = sphi 0, %s91
  $region4: #{feature_extractor_pallas.4} parent=0 // loop_header_branch
    %12 = sbr.rel (%p10) target = $region8
  $region5: #{feature_extractor_pallas.4} parent=0 // loop_body
    %s14 = ssub.s32 %s9, 1
    %s15 = ssub.s32 %s9, 2
    %s16 = sadd.s32 %s9, 1
    %s17 = ssub.s32 %s9, %s16
    %p18 = scmp.eq.s32.totalorder %s17, 0
    %s20 = sadd.s32 %s19, 1
    %s21 = scalar_select %p18, %s19, %s20
    %p24 = pneg %p18
    %p25 = scmp.eq.s32.totalorder %s9, 1
    %p26 = por %p24, %p25
    %p27 = scmp.ne.s32.totalorder %s19, %s22
    %p28 = scmp.eq.s32.totalorder %s9, 0
    %p29 = por %p27, %p28
    %p30 = scmp.ne.s32.totalorder %s19, %s22
    %p31 = scmp.eq.s32.totalorder %s14, 1
    %p32 = por %p30, %p31
    %p33 = scmp.ne.s32.totalorder %s22, %s23
    %p34 = scmp.eq.s32.totalorder %s14, 0
    %p35 = por %p33, %p34
    %p36 = scmp.ne.s32.totalorder %s22, %s23
    %p37 = scmp.eq.s32.totalorder %s15, 1
    %p38 = por %p36, %p37
    %p40 = scmp.ne.s32.totalorder %s23, %s39
    %p41 = scmp.eq.s32.totalorder %s15, 0
    %p42 = por %p40, %p41
    %s44 = sadd.s32 %s43, 1
    %p47 = scmp.eq.s32.totalorder %s9, 1
    %p48 = scmp.ne.s32.totalorder %s43, %s45
    %p49 = scmp.eq.s32.totalorder %s9, 0
    %p50 = por %p48, %p49
    %p51 = scmp.ne.s32.totalorder %s43, %s45
    %p52 = scmp.eq.s32.totalorder %s14, 1
    %p53 = por %p51, %p52
    %p54 = scmp.ne.s32.totalorder %s45, %s46
    %p55 = scmp.eq.s32.totalorder %s14, 0
    %p56 = por %p54, %p55
    %p57 = scmp.ne.s32.totalorder %s45, %s46
    %p58 = scmp.eq.s32.totalorder %s15, 1
    %p59 = por %p57, %p58
    %p61 = scmp.ne.s32.totalorder %s46, %s60
    %p62 = scmp.eq.s32.totalorder %s15, 0
    %p63 = por %p61, %p62
    %s65 = sadd.s32 %s64, 1
    %p68 = scmp.eq.s32.totalorder %s9, 1
    %p69 = scmp.ne.s32.totalorder %s64, %s66
    %p70 = scmp.eq.s32.totalorder %s9, 0
    %p71 = por %p69, %p70
    %p72 = scmp.ne.s32.totalorder %s64, %s66
    %p73 = scmp.eq.s32.totalorder %s14, 1
    %p74 = por %p72, %p73
    %p75 = scmp.ne.s32.totalorder %s66, %s67
    %p76 = scmp.eq.s32.totalorder %s14, 0
    %p77 = por %p75, %p76
    %p78 = scmp.ne.s32.totalorder %s66, %s67
    %p79 = scmp.eq.s32.totalorder %s15, 1
    %p80 = por %p78, %p79
    %p82 = scmp.ne.s32.totalorder %s67, %s81
    %p83 = scmp.eq.s32.totalorder %s15, 0
    %p84 = por %p82, %p83
    %s85 = ssub.s32 %s9, %s16
    %p86 = scmp.eq.s32.totalorder %s85, 0
    %s88 = sadd.s32 %s87, 1
    %s89 = scalar_select %p86, %s87, %s88
    %p92 = pneg %p86
    %p93 = scmp.eq.s32.totalorder %s9, 1
    %p94 = por %p92, %p93
    %p95 = scmp.ne.s32.totalorder %s87, %s90
    %p96 = scmp.eq.s32.totalorder %s9, 0
    %p97 = por %p95, %p96
    %p98 = scmp.ne.s32.totalorder %s87, %s90
    %p99 = scmp.eq.s32.totalorder %s14, 1
    %p100 = por %p98, %p99
    %p101 = scmp.ne.s32.totalorder %s90, %s91
    %p102 = scmp.eq.s32.totalorder %s14, 0
    %p103 = por %p101, %p102
    %p104 = scmp.ne.s32.totalorder %s90, %s91
    %p105 = scmp.eq.s32.totalorder %s15, 1
    %p106 = por %p104, %p105
    %p108 = scmp.ne.s32.totalorder %s91, %s107
    %p109 = scmp.eq.s32.totalorder %s15, 0
    %p110 = por %p108, %p109
    %p111 = scmp.le.s32.totalorder 1, %s9
    %p112 = scmp.lt.s32.totalorder %s9, 3
    %p113 = pnand %p111, %p112
    %p114 = pneg %p113
    // Predicated region
    $region9: #{feature_extractor_pallas.4} parent=5 // pred_check
      _
    $region10: #{feature_extractor_pallas.4} parent=5 // pred_check_branch
      %116 = sbr.rel (%p113) target = $region12
    $region11: #{feature_extractor_pallas.4} parent=5 // pred_region
      %s117 = ssub.s32 %s9, 1
      // Predicated region
      $region13: #{feature_extractor_pallas.4} parent=11 // pred_check
        %p118 = pneg %p56
      $region14: #{feature_extractor_pallas.4} parent=11 // pred_check_branch
        %120 = sbr.rel (%p118) target = $region16
      $region15: #{feature_extractor_pallas.4} parent=11 // pred_region
        _
      $region16: #{feature_extractor_pallas.4} parent=11 // pred_fallthru
        _
      // Predicated region
      $region17: #{feature_extractor_pallas.4} parent=11 // pred_check
        %p121 = pneg %p77
      $region18: #{feature_extractor_pallas.4} parent=11 // pred_check_branch
        %123 = sbr.rel (%p121) target = $region20
      $region19: #{feature_extractor_pallas.4} parent=11 // pred_region
        _
      $region20: #{feature_extractor_pallas.4} parent=11 // pred_fallthru
        _
    $region12: #{feature_extractor_pallas.4} parent=5 // pred_fallthru
      _
    %p124 = scmp.lt.s32.totalorder %s9, 2
    // Predicated region
    $region21: #{feature_extractor_pallas.4} parent=5 // pred_check
      %p125 = pneg %p124
    $region22: #{feature_extractor_pallas.4} parent=5 // pred_check_branch
      %127 = sbr.rel (%p125) target = $region24
    $region23: #{feature_extractor_pallas.4} parent=5 // pred_region
      // Predicated region
      $region25: #{feature_extractor_pallas.4} parent=23 // pred_check
        %p128 = pneg %p29
      $region26: #{feature_extractor_pallas.4} parent=23 // pred_check_branch
        %130 = sbr.rel (%p128) target = $region28
      $region27: #{feature_extractor_pallas.4} parent=23 // pred_region
        %p131 = scmp.lt.s32.totalorder %s9, 1
        %s132 = scalar_select %p131, %s9, 1
        %s133 = smul.addr %s132, 41
        %s134 = smul.addr %s133, 8
        %s135 = scalar_lea.vmem %s0, %s134
      $region28: #{feature_extractor_pallas.4} parent=23 // pred_fallthru
        _
    $region24: #{feature_extractor_pallas.4} parent=5 // pred_fallthru
      _
    %p136 = scmp.le.s32.totalorder 1, %s9
    %p137 = scmp.lt.s32.totalorder %s9, 3
    %p138 = pnand %p136, %p137
    %p139 = pneg %p138
    // Predicated region
    $region29: #{feature_extractor_pallas.4} parent=5 // pred_check
      _
    $region30: #{feature_extractor_pallas.4} parent=5 // pred_check_branch
      %141 = sbr.rel (%p138) target = $region32
    $region31: #{feature_extractor_pallas.4} parent=5 // pred_region
      %s142 = ssub.s32 %s9, 1
      %p143 = scmp.lt.s32.totalorder %s14, 1
      %s144 = scalar_select %p143, %s14, 1
      %s145 = smul.addr %s144, 41
      %s146 = smul.addr %s145, 8
      %s147 = scalar_lea.vmem %s0, %s146
      %p148 = pneg %p35
      %p149 = pneg %p32
      %p150 = pneg %p56
      %p151 = pneg %p53
      %p152 = pneg %p77
      %p153 = pneg %p74
      %p154 = pneg %p103
      %p155 = pneg %p100
      %p156 = scmp.lt.s32.totalorder %s14, 1
      %s157 = scalar_select %p156, %s14, 1
      %s158 = smul.addr %s157, 36
      %s159 = smul.addr %s158, 8
      %s160 = scalar_lea.vmem %s3, %s159
      %p161 = scmp.lt.s32.totalorder %s14, 1
      %s162 = scalar_select %p161, %s14, 1
      %s163 = smul.addr %s162, 41
      %s164 = smul.addr %s163, 8
      %s165 = scalar_lea.vmem %s0, %s164
      %p166 = scmp.lt.s32.totalorder %s14, 1
      %s167 = scalar_select %p166, %s14, 1
      %s168 = smul.addr %s167, 36
      %s169 = smul.addr %s168, 8
      %s170 = scalar_lea.vmem %s3, %s169
      %v171 = vld [vmem:[%s165] sm:$0xff]
      %v172 = vld [vmem:[%s165 + $0x8] sm:$0xff]
      %v173 = vld [vmem:[%s165 + $0x10] sm:$0xff]
      %v174 = vld [vmem:[%s165 + $0x18] sm:$0xff]
      %v175 = vld [vmem:[%s165 + $0x20] sm:$0xff]
      %v176 = vld [vmem:[%s165 + $0x28] sm:$0xff]
      %v177 = vld [vmem:[%s165 + $0x30] sm:$0xff]
      %v178 = vld [vmem:[%s165 + $0x38] sm:$0xff]
      %v179 = vld [vmem:[%s165 + $0x40] sm:$0xff]
      %v180 = vld [vmem:[%s165 + $0x48] sm:$0xff]
      %v181 = vld [vmem:[%s165 + $0x50] sm:$0xff]
      %v182 = vld [vmem:[%s165 + $0x58] sm:$0xff]
      %v183 = vld [vmem:[%s165 + $0x60] sm:$0xff]
      %v184 = vld [vmem:[%s165 + $0x68] sm:$0xff]
      %v185 = vld [vmem:[%s165 + $0x70] sm:$0xff]
      %v186 = vld [vmem:[%s165 + $0x78] sm:$0xff]
      %v187 = vld [vmem:[%s165 + $0x80] sm:$0xff]
      %v188 = vld [vmem:[%s165 + $0x88] sm:$0xff]
      %v189 = vld [vmem:[%s165 + $0x90] sm:$0xff]
      %v190 = vld [vmem:[%s165 + $0x98] sm:$0xff]
      %v191 = vld [vmem:[%s165 + $0xa0] sm:$0xff]
      %v192 = vld [vmem:[%s165 + $0xa8] sm:$0xff]
      %v193 = vld [vmem:[%s165 + $0xb0] sm:$0xff]
      %v194 = vld [vmem:[%s165 + $0xb8] sm:$0xff]
      %v195 = vld [vmem:[%s165 + $0xc0] sm:$0xff]
      %v196 = vld [vmem:[%s165 + $0xc8] sm:$0xff]
      %v197 = vld [vmem:[%s165 + $0xd0] sm:$0xff]
      %v198 = vld [vmem:[%s165 + $0xd8] sm:$0xff]
      %v199 = vld [vmem:[%s165 + $0xe0] sm:$0xff]
      %v200 = vld [vmem:[%s165 + $0xe8] sm:$0xff]
      %v201 = vld [vmem:[%s165 + $0xf0] sm:$0xff]
      %v202 = vld [vmem:[%s165 + $0xf8] sm:$0xff]
      %v203 = vld [vmem:[%s165 + $0x100] sm:$0xff]
      %v204 = vld [vmem:[%s165 + $0x108] sm:$0xff]
      %v205 = vld [vmem:[%s165 + $0x110] sm:$0xff]
      %v206 = vld [vmem:[%s165 + $0x118] sm:$0xff]
      %v207 = vld [vmem:[%s165 + $0x120] sm:$0xff]
      %v208 = vld [vmem:[%s165 + $0x128] sm:$0xff]
      %v209 = vld [vmem:[%s165 + $0x130] sm:$0xff]
      %v210 = vld [vmem:[%s165 + $0x138] sm:$0xff]
      %v211 = vld [vmem:[%s165 + $0x140] sm:$0x3f]
      %v212 = vld [vmem:[%s1] sm:$0xff]
      %v213 = vld [vmem:[%s2] sm:$0x1]
      %vm214 = vcmask 64512
      %v216 = vsel %vm214, %v171, 0
      %v219 = vsel %vm214, %v172, 0
      %v222 = vsel %vm214, %v173, 0
      %v225 = vsel %vm214, %v174, 0
      %v228 = vsel %vm214, %v175, 0
      %v231 = vsel %vm214, %v176, 0
      %v234 = vsel %vm214, %v177, 0
      %v237 = vsel %vm214, %v178, 0
      %v240 = vsel %vm214, %v179, 0
      %v243 = vsel %vm214, %v180, 0
      %v246 = vsel %vm214, %v181, 0
      %v249 = vsel %vm214, %v182, 0
      %v252 = vsel %vm214, %v183, 0
      %v255 = vsel %vm214, %v184, 0
      %v258 = vsel %vm214, %v185, 0
      %v261 = vsel %vm214, %v186, 0
      %v264 = vsel %vm214, %v187, 0
      %v267 = vsel %vm214, %v188, 0
      %v270 = vsel %vm214, %v189, 0
      %v273 = vsel %vm214, %v190, 0
      %v276 = vsel %vm214, %v191, 0
      %v279 = vsel %vm214, %v192, 0
      %v282 = vsel %vm214, %v193, 0
      %v285 = vsel %vm214, %v194, 0
      %v288 = vsel %vm214, %v195, 0
      %v291 = vsel %vm214, %v196, 0
      %v294 = vsel %vm214, %v197, 0
      %v297 = vsel %vm214, %v198, 0
      %v300 = vsel %vm214, %v199, 0
      %v303 = vsel %vm214, %v200, 0
      %v306 = vsel %vm214, %v201, 0
      %v309 = vsel %vm214, %v202, 0
      %v312 = vsel %vm214, %v203, 0
      %v315 = vsel %vm214, %v204, 0
      %v318 = vsel %vm214, %v205, 0
      %v321 = vsel %vm214, %v206, 0
      %v324 = vsel %vm214, %v207, 0
      %v327 = vsel %vm214, %v208, 0
      %v330 = vsel %vm214, %v209, 0
      %v333 = vsel %vm214, %v210, 0
      %v336 = vsel %vm214, %v211, 0
      %338 = vmatprep.subr.mxu0 0.0
      %339 = vmatpush1.msra.mxu0 %v212
      %340 = vmatprep.subr.mxu0 0.0
      %341 = vmatpush1.msra.mxu0 0.0
      %342 = vmatprep.subr.mxu0 0.0
      %343 = vmatpush1.msra.mxu0 0.0
      %344 = vmatprep.subr.mxu0 0.0
      %345 = vmatpush1.msra.mxu0 0.0
      %346 = vmatprep.subr.mxu0 0.0
      %347 = vmatpush1.msra.mxu0 0.0
      %348 = vmatprep.subr.mxu0 0.0
      %349 = vmatpush1.msra.mxu0 0.0
      %350 = vmatprep.subr.mxu0 0.0
      %351 = vmatpush1.msra.mxu0 0.0
      %352 = vmatprep.subr.mxu0 0.0
      %353 = vmatpush1.msra.mxu0 0.0
      %354 = vmatprep.subr.mxu0 0.0
      %355 = vmatpush1.msra.mxu0 0.0
      %356 = vmatprep.subr.mxu0 0.0
      %357 = vmatpush1.msra.mxu0 0.0
      %358 = vmatprep.subr.mxu0 0.0
      %359 = vmatpush1.msra.mxu0 0.0
      %360 = vmatprep.subr.mxu0 0.0
      %361 = vmatpush1.msra.mxu0 0.0
      %362 = vmatprep.subr.mxu0 0.0
      %363 = vmatpush1.msra.mxu0 0.0
      %364 = vmatprep.subr.mxu0 0.0
      %365 = vmatpush1.msra.mxu0 0.0
      %366 = vmatprep.subr.mxu0 0.0
      %367 = vmatpush1.msra.mxu0 0.0
      %368 = vmatprep.subr.mxu0 0.0
      %369 = vmatpush1.msra.mxu0 0.0
      %370 = vmatprep.subr.mxu0 0.0
      %371 = vmatpush1.msra.mxu0 0.0
      %372 = vmatprep.subr.mxu0 0.0
      %373 = vmatpush1.msra.mxu0 0.0
      %374 = vmatprep.subr.mxu0 0.0
      %375 = vmatpush1.msra.mxu0 0.0
      %376 = vmatprep.subr.mxu0 0.0
      %377 = vmatpush1.msra.mxu0 0.0
      %378 = vmatprep.subr.mxu0 0.0
      %379 = vmatpush1.msra.mxu0 0.0
      %380 = vmatprep.subr.mxu0 0.0
      %381 = vmatpush1.msra.mxu0 0.0
      %382 = vmatprep.subr.mxu0 0.0
      %383 = vmatpush1.msra.mxu0 0.0
      %384 = vmatprep.subr.mxu0 0.0
      %385 = vmatpush1.msra.mxu0 0.0
      %386 = vmatprep.subr.mxu0 0.0
      %387 = vmatpush1.msra.mxu0 0.0
      %388 = vmatprep.subr.mxu0 0.0
      %389 = vmatpush1.msra.mxu0 0.0
      %390 = vmatprep.subr.mxu0 0.0
      %391 = vmatpush1.msra.mxu0 0.0
      %392 = vmatprep.subr.mxu0 0.0
      %393 = vmatpush1.msra.mxu0 0.0
      %394 = vmatprep.subr.mxu0 0.0
      %395 = vmatpush1.msra.mxu0 0.0
      %396 = vmatprep.subr.mxu0 0.0
      %397 = vmatpush1.msra.mxu0 0.0
      %398 = vmatprep.subr.mxu0 0.0
      %399 = vmatpush1.msra.mxu0 0.0
      %400 = vmatprep.subr.mxu0 0.0
      %401 = vmatpush1.msra.mxu0 0.0
      %402 = vmatprep.mubr.f32.mxu0 0.0
      %403 = vmatmul.mubr.f32.gmra.mrb[0].mxu0 %v216
      %v404 = vpop.f32.mrb[0].mxu0
      %v405 = vadd.f32 0.0, %v404
      %v406 = vpop.f32.mrb[0].mxu0
      %407 = vmatprep.mubr.f32.mxu0 0.0
      %408 = vmatmul.mubr.f32.gmra.mrb[0].mxu0 %v219
      %v409 = vpop.f32.mrb[0].mxu0
      %v410 = vadd.f32 0.0, %v409
      %v411 = vpop.f32.mrb[0].mxu0
      %412 = vmatprep.mubr.f32.mxu0 0.0
      %413 = vmatmul.mubr.f32.gmra.mrb[0].mxu0 %v222
      %v414 = vpop.f32.mrb[0].mxu0
      %v415 = vadd.f32 0.0, %v414
      %v416 = vpop.f32.mrb[0].mxu0
      %417 = vmatprep.mubr.f32.mxu0 0.0
      %418 = vmatmul.mubr.f32.gmra.mrb[0].mxu0 %v225
      %v419 = vpop.f32.mrb[0].mxu0
      %v420 = vadd.f32 0.0, %v419
      %v421 = vpop.f32.mrb[0].mxu0
      %422 = vmatprep.mubr.f32.mxu0 0.0
      %423 = vmatmul.mubr.f32.gmra.mrb[0].mxu0 %v228
      %v424 = vpop.f32.mrb[0].mxu0
      %v425 = vadd.f32 0.0, %v424
      %v426 = vpop.f32.mrb[0].mxu0
      %427 = vmatprep.mubr.f32.mxu0 0.0
      %428 = vmatmul.mubr.f32.gmra.mrb[0].mxu0 %v231
      %v429 = vpop.f32.mrb[0].mxu0
      %v430 = vadd.f32 0.0, %v429
      %v431 = vpop.f32.mrb[0].mxu0
      %432 = vmatprep.mubr.f32.mxu0 0.0
      %433 = vmatmul.mubr.f32.gmra.mrb[0].mxu0 %v234
      %v434 = vpop.f32.mrb[0].mxu0
      %v435 = vadd.f32 0.0, %v434
      %v436 = vpop.f32.mrb[0].mxu0
      %437 = vmatprep.mubr.f32.mxu0 0.0
      %438 = vmatmul.mubr.f32.gmra.mrb[0].mxu0 %v237
      %v439 = vpop.f32.mrb[0].mxu0
      %v440 = vadd.f32 0.0, %v439
      %v441 = vpop.f32.mrb[0].mxu0
      %442 = vmatprep.mubr.f32.mxu0 0.0
      %443 = vmatmul.mubr.f32.gmra.mrb[0].mxu0 %v240
      %v444 = vpop.f32.mrb[0].mxu0
      %v445 = vadd.f32 0.0, %v444
      %v446 = vpop.f32.mrb[0].mxu0
      %447 = vmatprep.mubr.f32.mxu0 0.0
      %448 = vmatmul.mubr.f32.gmra.mrb[0].mxu0 %v243
      %v449 = vpop.f32.mrb[0].mxu0
      %v450 = vadd.f32 0.0, %v449
      %v451 = vpop.f32.mrb[0].mxu0
      %452 = vmatprep.mubr.f32.mxu0 0.0
      %453 = vmatmul.mubr.f32.gmra.mrb[0].mxu0 %v246
      %v454 = vpop.f32.mrb[0].mxu0
      %v455 = vadd.f32 0.0, %v454
      %v456 = vpop.f32.mrb[0].mxu0
      %457 = vmatprep.mubr.f32.mxu0 0.0
      %458 = vmatmul.mubr.f32.gmra.mrb[0].mxu0 %v249
      %v459 = vpop.f32.mrb[0].mxu0
      %v460 = vadd.f32 0.0, %v459
      %v461 = vpop.f32.mrb[0].mxu0
      %462 = vmatprep.mubr.f32.mxu0 0.0
      %463 = vmatmul.mubr.f32.gmra.mrb[0].mxu0 %v252
      %v464 = vpop.f32.mrb[0].mxu0
      %v465 = vadd.f32 0.0, %v464
      %v466 = vpop.f32.mrb[0].mxu0
      %467 = vmatprep.mubr.f32.mxu0 0.0
      %468 = vmatmul.mubr.f32.gmra.mrb[0].mxu0 %v255
      %v469 = vpop.f32.mrb[0].mxu0
      %v470 = vadd.f32 0.0, %v469
      %v471 = vpop.f32.mrb[0].mxu0
      %472 = vmatprep.mubr.f32.mxu0 0.0
      %473 = vmatmul.mubr.f32.gmra.mrb[0].mxu0 %v258
      %v474 = vpop.f32.mrb[0].mxu0
      %v475 = vadd.f32 0.0, %v474
      %v476 = vpop.f32.mrb[0].mxu0
      %477 = vmatprep.mubr.f32.mxu0 0.0
      %478 = vmatmul.mubr.f32.gmra.mrb[0].mxu0 %v261
      %v479 = vpop.f32.mrb[0].mxu0
      %v480 = vadd.f32 0.0, %v479
      %v481 = vpop.f32.mrb[0].mxu0
      %482 = vmatprep.mubr.f32.mxu0 0.0
      %483 = vmatmul.mubr.f32.gmra.mrb[0].mxu0 %v264
      %v484 = vpop.f32.mrb[0].mxu0
      %v485 = vadd.f32 0.0, %v484
      %v486 = vpop.f32.mrb[0].mxu0
      %487 = vmatprep.mubr.f32.mxu0 0.0
      %488 = vmatmul.mubr.f32.gmra.mrb[0].mxu0 %v267
      %v489 = vpop.f32.mrb[0].mxu0
      %v490 = vadd.f32 0.0, %v489
      %v491 = vpop.f32.mrb[0].mxu0
      %492 = vmatprep.mubr.f32.mxu0 0.0
      %493 = vmatmul.mubr.f32.gmra.mrb[0].mxu0 %v270
      %v494 = vpop.f32.mrb[0].mxu0
      %v495 = vadd.f32 0.0, %v494
      %v496 = vpop.f32.mrb[0].mxu0
      %497 = vmatprep.mubr.f32.mxu0 0.0
      %498 = vmatmul.mubr.f32.gmra.mrb[0].mxu0 %v273
      %v499 = vpop.f32.mrb[0].mxu0
      %v500 = vadd.f32 0.0, %v499
      %v501 = vpop.f32.mrb[0].mxu0
      %502 = vmatprep.mubr.f32.mxu0 0.0
      %503 = vmatmul.mubr.f32.gmra.mrb[0].mxu0 %v276
      %v504 = vpop.f32.mrb[0].mxu0
      %v505 = vadd.f32 0.0, %v504
      %v506 = vpop.f32.mrb[0].mxu0
      %507 = vmatprep.mubr.f32.mxu0 0.0
      %508 = vmatmul.mubr.f32.gmra.mrb[0].mxu0 %v279
      %v509 = vpop.f32.mrb[0].mxu0
      %v510 = vadd.f32 0.0, %v509
      %v511 = vpop.f32.mrb[0].mxu0
      %512 = vmatprep.mubr.f32.mxu0 0.0
      %513 = vmatmul.mubr.f32.gmra.mrb[0].mxu0 %v282
      %v514 = vpop.f32.mrb[0].mxu0
      %v515 = vadd.f32 0.0, %v514
      %v516 = vpop.f32.mrb[0].mxu0
      %517 = vmatprep.mubr.f32.mxu0 0.0
      %518 = vmatmul.mubr.f32.gmra.mrb[0].mxu0 %v285
      %v519 = vpop.f32.mrb[0].mxu0
      %v520 = vadd.f32 0.0, %v519
      %v521 = vpop.f32.mrb[0].mxu0
      %522 = vmatprep.mubr.f32.mxu0 0.0
      %523 = vmatmul.mubr.f32.gmra.mrb[0].mxu0 %v288
      %v524 = vpop.f32.mrb[0].mxu0
      %v525 = vadd.f32 0.0, %v524
      %v526 = vpop.f32.mrb[0].mxu0
      %527 = vmatprep.mubr.f32.mxu0 0.0
      %528 = vmatmul.mubr.f32.gmra.mrb[0].mxu0 %v291
      %v529 = vpop.f32.mrb[0].mxu0
      %v530 = vadd.f32 0.0, %v529
      %v531 = vpop.f32.mrb[0].mxu0
      %532 = vmatprep.mubr.f32.mxu0 0.0
      %533 = vmatmul.mubr.f32.gmra.mrb[0].mxu0 %v294
      %v534 = vpop.f32.mrb[0].mxu0
      %v535 = vadd.f32 0.0, %v534
      %v536 = vpop.f32.mrb[0].mxu0
      %537 = vmatprep.mubr.f32.mxu0 0.0
      %538 = vmatmul.mubr.f32.gmra.mrb[0].mxu0 %v297
      %v539 = vpop.f32.mrb[0].mxu0
      %v540 = vadd.f32 0.0, %v539
      %v541 = vpop.f32.mrb[0].mxu0
      %542 = vmatprep.mubr.f32.mxu0 0.0
      %543 = vmatmul.mubr.f32.gmra.mrb[0].mxu0 %v300
      %v544 = vpop.f32.mrb[0].mxu0
      %v545 = vadd.f32 0.0, %v544
      %v546 = vpop.f32.mrb[0].mxu0
      %547 = vmatprep.mubr.f32.mxu0 0.0
      %548 = vmatmul.mubr.f32.gmra.mrb[0].mxu0 %v303
      %v549 = vpop.f32.mrb[0].mxu0
      %v550 = vadd.f32 0.0, %v549
      %v551 = vpop.f32.mrb[0].mxu0
      %552 = vmatprep.mubr.f32.mxu0 0.0
      %553 = vmatmul.mubr.f32.gmra.mrb[0].mxu0 %v306
      %v554 = vpop.f32.mrb[0].mxu0
      %v555 = vadd.f32 0.0, %v554
      %v556 = vpop.f32.mrb[0].mxu0
      %557 = vmatprep.mubr.f32.mxu0 0.0
      %558 = vmatmul.mubr.f32.gmra.mrb[0].mxu0 %v309
      %v559 = vpop.f32.mrb[0].mxu0
      %v560 = vadd.f32 0.0, %v559
      %v561 = vpop.f32.mrb[0].mxu0
      %562 = vmatprep.mubr.f32.mxu0 0.0
      %563 = vmatmul.mubr.f32.gmra.mrb[0].mxu0 %v312
      %v564 = vpop.f32.mrb[0].mxu0
      %v565 = vadd.f32 0.0, %v564
      %v566 = vpop.f32.mrb[0].mxu0
      %567 = vmatprep.mubr.f32.mxu0 0.0
      %568 = vmatmul.mubr.f32.gmra.mrb[0].mxu0 %v315
      %v569 = vpop.f32.mrb[0].mxu0
      %v570 = vadd.f32 0.0, %v569
      %v571 = vpop.f32.mrb[0].mxu0
      %572 = vmatprep.mubr.f32.mxu0 0.0
      %573 = vmatmul.mubr.f32.gmra.mrb[0].mxu0 %v318
      %v574 = vpop.f32.mrb[0].mxu0
      %v575 = vadd.f32 0.0, %v574
      %v576 = vpop.f32.mrb[0].mxu0
      %577 = vmatprep.mubr.f32.mxu0 0.0
      %578 = vmatmul.mubr.f32.gmra.mrb[0].mxu0 %v321
      %v579 = vpop.f32.mrb[0].mxu0
      %v580 = vadd.f32 0.0, %v579
      %v581 = vpop.f32.mrb[0].mxu0
      %582 = vmatprep.mubr.f32.mxu0 0.0
      %583 = vmatmul.mubr.f32.gmra.mrb[0].mxu0 %v324
      %v584 = vpop.f32.mrb[0].mxu0
      %v585 = vadd.f32 0.0, %v584
      %v586 = vpop.f32.mrb[0].mxu0
      %587 = vmatprep.mubr.f32.mxu0 0.0
      %588 = vmatmul.mubr.f32.gmra.mrb[0].mxu0 %v327
      %v589 = vpop.f32.mrb[0].mxu0
      %v590 = vadd.f32 0.0, %v589
      %v591 = vpop.f32.mrb[0].mxu0
      %592 = vmatprep.mubr.f32.mxu0 0.0
      %593 = vmatmul.mubr.f32.gmra.mrb[0].mxu0 %v330
      %v594 = vpop.f32.mrb[0].mxu0
      %v595 = vadd.f32 0.0, %v594
      %v596 = vpop.f32.mrb[0].mxu0
      %597 = vmatprep.mubr.f32.mxu0 0.0
      %598 = vmatmul.mubr.f32.gmra.mrb[0].mxu0 %v333
      %v599 = vpop.f32.mrb[0].mxu0
      %v600 = vadd.f32 0.0, %v599
      %v601 = vpop.f32.mrb[0].mxu0
      %602 = vmatprep.mubr.f32.mxu0 0.0
      %603 = vmatmul.mubr.f32.gmra.mrb[0].mxu0 %v336
      %v604 = vpop.f32.mrb[0].mxu0
      %v605 = vadd.f32 0.0, %v604
      %v606 = vpop.f32.mrb[0].mxu0
      %607 = vdwg.mxu0
      %vm645 = vcmask 1046528
      %v646 = vrot.slane %v405, 1
      %v647 = vrot.slane %v410, 1
      %v648 = vsel %vm645, %v646, %v647
      %v649 = vrot.slane %v415, 1
      %v650 = vsel %vm645, %v647, %v649
      %v651 = vrot.slane %v420, 1
      %v652 = vsel %vm645, %v649, %v651
      %v653 = vrot.slane %v425, 1
      %v654 = vsel %vm645, %v651, %v653
      %v655 = vrot.slane %v430, 1
      %v656 = vsel %vm645, %v653, %v655
      %v657 = vrot.slane %v435, 1
      %v658 = vsel %vm645, %v655, %v657
      %v659 = vrot.slane %v440, 1
      %v660 = vsel %vm645, %v657, %v659
      %v661 = vrot.slane %v445, 1
      %v662 = vsel %vm645, %v659, %v661
      %v663 = vrot.slane %v450, 1
      %v664 = vsel %vm645, %v661, %v663
      %v665 = vrot.slane %v455, 1
      %v666 = vsel %vm645, %v663, %v665
      %v667 = vrot.slane %v460, 1
      %v668 = vsel %vm645, %v665, %v667
      %v669 = vrot.slane %v465, 1
      %v670 = vsel %vm645, %v667, %v669
      %v671 = vrot.slane %v470, 1
      %v672 = vsel %vm645, %v669, %v671
      %v673 = vrot.slane %v475, 1
      %v674 = vsel %vm645, %v671, %v673
      %v675 = vrot.slane %v480, 1
      %v676 = vsel %vm645, %v673, %v675
      %v677 = vrot.slane %v485, 1
      %v678 = vsel %vm645, %v675, %v677
      %v679 = vrot.slane %v490, 1
      %v680 = vsel %vm645, %v677, %v679
      %v681 = vrot.slane %v495, 1
      %v682 = vsel %vm645, %v679, %v681
      %v683 = vrot.slane %v500, 1
      %v684 = vsel %vm645, %v681, %v683
      %v685 = vrot.slane %v505, 1
      %v686 = vsel %vm645, %v683, %v685
      %v687 = vrot.slane %v510, 1
      %v688 = vsel %vm645, %v685, %v687
      %v689 = vrot.slane %v515, 1
      %v690 = vsel %vm645, %v687, %v689
      %v691 = vrot.slane %v520, 1
      %v692 = vsel %vm645, %v689, %v691
      %v693 = vrot.slane %v525, 1
      %v694 = vsel %vm645, %v691, %v693
      %v695 = vrot.slane %v530, 1
      %v696 = vsel %vm645, %v693, %v695
      %v697 = vrot.slane %v535, 1
      %v698 = vsel %vm645, %v695, %v697
      %v699 = vrot.slane %v540, 1
      %v700 = vsel %vm645, %v697, %v699
      %v701 = vrot.slane %v545, 1
      %v702 = vsel %vm645, %v699, %v701
      %v703 = vrot.slane %v550, 1
      %v704 = vsel %vm645, %v701, %v703
      %v705 = vrot.slane %v555, 1
      %v706 = vsel %vm645, %v703, %v705
      %v707 = vrot.slane %v560, 1
      %v708 = vsel %vm645, %v705, %v707
      %v709 = vrot.slane %v565, 1
      %v710 = vsel %vm645, %v707, %v709
      %v711 = vrot.slane %v570, 1
      %v712 = vsel %vm645, %v709, %v711
      %v713 = vrot.slane %v575, 1
      %v714 = vsel %vm645, %v711, %v713
      %v715 = vrot.slane %v580, 1
      %v716 = vsel %vm645, %v713, %v715
      %v717 = vrot.slane %v585, 1
      %v718 = vsel %vm645, %v715, %v717
      %719 = vrot.lane.b32.xlu0 %v648, 120
      %v720 = vpop.permute.xlu0 %719
      %721 = vrot.lane.b32.xlu0 %v650, 120
      %v722 = vpop.permute.xlu0 %721
      %723 = vrot.lane.b32.xlu0 %v652, 120
      %v724 = vpop.permute.xlu0 %723
      %725 = vrot.lane.b32.xlu0 %v654, 120
      %v726 = vpop.permute.xlu0 %725
      %727 = vrot.lane.b32.xlu0 %v656, 120
      %v728 = vpop.permute.xlu0 %727
      %729 = vrot.lane.b32.xlu0 %v658, 120
      %v730 = vpop.permute.xlu0 %729
      %731 = vrot.lane.b32.xlu0 %v660, 120
      %v732 = vpop.permute.xlu0 %731
      %733 = vrot.lane.b32.xlu0 %v662, 120
      %v734 = vpop.permute.xlu0 %733
      %735 = vrot.lane.b32.xlu0 %v664, 120
      %v736 = vpop.permute.xlu0 %735
      %737 = vrot.lane.b32.xlu0 %v666, 120
      %v738 = vpop.permute.xlu0 %737
      %739 = vrot.lane.b32.xlu0 %v668, 120
      %v740 = vpop.permute.xlu0 %739
      %741 = vrot.lane.b32.xlu0 %v670, 120
      %v742 = vpop.permute.xlu0 %741
      %743 = vrot.lane.b32.xlu0 %v672, 120
      %v744 = vpop.permute.xlu0 %743
      %745 = vrot.lane.b32.xlu0 %v674, 120
      %v746 = vpop.permute.xlu0 %745
      %747 = vrot.lane.b32.xlu0 %v676, 120
      %v748 = vpop.permute.xlu0 %747
      %749 = vrot.lane.b32.xlu0 %v678, 120
      %v750 = vpop.permute.xlu0 %749
      %751 = vrot.lane.b32.xlu0 %v680, 120
      %v752 = vpop.permute.xlu0 %751
      %753 = vrot.lane.b32.xlu0 %v682, 120
      %v754 = vpop.permute.xlu0 %753
      %755 = vrot.lane.b32.xlu0 %v684, 120
      %v756 = vpop.permute.xlu0 %755
      %757 = vrot.lane.b32.xlu0 %v686, 120
      %v758 = vpop.permute.xlu0 %757
      %759 = vrot.lane.b32.xlu0 %v688, 120
      %v760 = vpop.permute.xlu0 %759
      %761 = vrot.lane.b32.xlu0 %v690, 120
      %v762 = vpop.permute.xlu0 %761
      %763 = vrot.lane.b32.xlu0 %v692, 120
      %v764 = vpop.permute.xlu0 %763
      %765 = vrot.lane.b32.xlu0 %v694, 120
      %v766 = vpop.permute.xlu0 %765
      %767 = vrot.lane.b32.xlu0 %v696, 120
      %v768 = vpop.permute.xlu0 %767
      %769 = vrot.lane.b32.xlu0 %v698, 120
      %v770 = vpop.permute.xlu0 %769
      %771 = vrot.lane.b32.xlu0 %v700, 120
      %v772 = vpop.permute.xlu0 %771
      %773 = vrot.lane.b32.xlu0 %v702, 120
      %v774 = vpop.permute.xlu0 %773
      %775 = vrot.lane.b32.xlu0 %v704, 120
      %v776 = vpop.permute.xlu0 %775
      %777 = vrot.lane.b32.xlu0 %v706, 120
      %v778 = vpop.permute.xlu0 %777
      %779 = vrot.lane.b32.xlu0 %v708, 120
      %v780 = vpop.permute.xlu0 %779
      %781 = vrot.lane.b32.xlu0 %v710, 120
      %v782 = vpop.permute.xlu0 %781
      %783 = vrot.lane.b32.xlu0 %v712, 120
      %v784 = vpop.permute.xlu0 %783
      %785 = vrot.lane.b32.xlu0 %v714, 120
      %v786 = vpop.permute.xlu0 %785
      %787 = vrot.lane.b32.xlu0 %v716, 120
      %v788 = vpop.permute.xlu0 %787
      %789 = vrot.lane.b32.xlu0 %v718, 120
      %v790 = vpop.permute.xlu0 %789
      %v827 = vadd.f32 %v405, %v720
      %v828 = vadd.f32 %v410, %v722
      %v829 = vadd.f32 %v415, %v724
      %v830 = vadd.f32 %v420, %v726
      %v831 = vadd.f32 %v425, %v728
      %v832 = vadd.f32 %v430, %v730
      %v833 = vadd.f32 %v435, %v732
      %v834 = vadd.f32 %v440, %v734
      %v835 = vadd.f32 %v445, %v736
      %v836 = vadd.f32 %v450, %v738
      %v837 = vadd.f32 %v455, %v740
      %v838 = vadd.f32 %v460, %v742
      %v839 = vadd.f32 %v465, %v744
      %v840 = vadd.f32 %v470, %v746
      %v841 = vadd.f32 %v475, %v748
      %v842 = vadd.f32 %v480, %v750
      %v843 = vadd.f32 %v485, %v752
      %v844 = vadd.f32 %v490, %v754
      %v845 = vadd.f32 %v495, %v756
      %v846 = vadd.f32 %v500, %v758
      %v847 = vadd.f32 %v505, %v760
      %v848 = vadd.f32 %v510, %v762
      %v849 = vadd.f32 %v515, %v764
      %v850 = vadd.f32 %v520, %v766
      %v851 = vadd.f32 %v525, %v768
      %v852 = vadd.f32 %v530, %v770
      %v853 = vadd.f32 %v535, %v772
      %v854 = vadd.f32 %v540, %v774
      %v855 = vadd.f32 %v545, %v776
      %v856 = vadd.f32 %v550, %v778
      %v857 = vadd.f32 %v555, %v780
      %v858 = vadd.f32 %v560, %v782
      %v859 = vadd.f32 %v565, %v784
      %v860 = vadd.f32 %v570, %v786
      %v861 = vadd.f32 %v575, %v788
      %v862 = vadd.f32 %v580, %v790
      %vm863 = vcmask 1045504
      %v864 = vrot.slane %v405, 2
      %v865 = vrot.slane %v410, 2
      %v866 = vsel %vm863, %v864, %v865
      %v867 = vrot.slane %v415, 2
      %v868 = vsel %vm863, %v865, %v867
      %v869 = vrot.slane %v420, 2
      %v870 = vsel %vm863, %v867, %v869
      %v871 = vrot.slane %v425, 2
      %v872 = vsel %vm863, %v869, %v871
      %v873 = vrot.slane %v430, 2
      %v874 = vsel %vm863, %v871, %v873
      %v875 = vrot.slane %v435, 2
      %v876 = vsel %vm863, %v873, %v875
      %v877 = vrot.slane %v440, 2
      %v878 = vsel %vm863, %v875, %v877
      %v879 = vrot.slane %v445, 2
      %v880 = vsel %vm863, %v877, %v879
      %v881 = vrot.slane %v450, 2
      %v882 = vsel %vm863, %v879, %v881
      %v883 = vrot.slane %v455, 2
      %v884 = vsel %vm863, %v881, %v883
      %v885 = vrot.slane %v460, 2
      %v886 = vsel %vm863, %v883, %v885
      %v887 = vrot.slane %v465, 2
      %v888 = vsel %vm863, %v885, %v887
      %v889 = vrot.slane %v470, 2
      %v890 = vsel %vm863, %v887, %v889
      %v891 = vrot.slane %v475, 2
      %v892 = vsel %vm863, %v889, %v891
      %v893 = vrot.slane %v480, 2
      %v894 = vsel %vm863, %v891, %v893
      %v895 = vrot.slane %v485, 2
      %v896 = vsel %vm863, %v893, %v895
      %v897 = vrot.slane %v490, 2
      %v898 = vsel %vm863, %v895, %v897
      %v899 = vrot.slane %v495, 2
      %v900 = vsel %vm863, %v897, %v899
      %v901 = vrot.slane %v500, 2
      %v902 = vsel %vm863, %v899, %v901
      %v903 = vrot.slane %v505, 2
      %v904 = vsel %vm863, %v901, %v903
      %v905 = vrot.slane %v510, 2
      %v906 = vsel %vm863, %v903, %v905
      %v907 = vrot.slane %v515, 2
      %v908 = vsel %vm863, %v905, %v907
      %v909 = vrot.slane %v520, 2
      %v910 = vsel %vm863, %v907, %v909
      %v911 = vrot.slane %v525, 2
      %v912 = vsel %vm863, %v909, %v911
      %v913 = vrot.slane %v530, 2
      %v914 = vsel %vm863, %v911, %v913
      %v915 = vrot.slane %v535, 2
      %v916 = vsel %vm863, %v913, %v915
      %v917 = vrot.slane %v540, 2
      %v918 = vsel %vm863, %v915, %v917
      %v919 = vrot.slane %v545, 2
      %v920 = vsel %vm863, %v917, %v919
      %v921 = vrot.slane %v550, 2
      %v922 = vsel %vm863, %v919, %v921
      %v923 = vrot.slane %v555, 2
      %v924 = vsel %vm863, %v921, %v923
      %v925 = vrot.slane %v560, 2
      %v926 = vsel %vm863, %v923, %v925
      %v927 = vrot.slane %v565, 2
      %v928 = vsel %vm863, %v925, %v927
      %v929 = vrot.slane %v570, 2
      %v930 = vsel %vm863, %v927, %v929
      %v931 = vrot.slane %v575, 2
      %v932 = vsel %vm863, %v929, %v931
      %v933 = vrot.slane %v580, 2
      %v934 = vsel %vm863, %v931, %v933
      %v935 = vrot.slane %v585, 2
      %v936 = vsel %vm863, %v933, %v935
      %937 = vrot.lane.b32.xlu0 %v866, 112
      %v938 = vpop.permute.xlu0 %937
      %939 = vrot.lane.b32.xlu0 %v868, 112
      %v940 = vpop.permute.xlu0 %939
      %941 = vrot.lane.b32.xlu0 %v870, 112
      %v942 = vpop.permute.xlu0 %941
      %943 = vrot.lane.b32.xlu0 %v872, 112
      %v944 = vpop.permute.xlu0 %943
      %945 = vrot.lane.b32.xlu0 %v874, 112
      %v946 = vpop.permute.xlu0 %945
      %947 = vrot.lane.b32.xlu0 %v876, 112
      %v948 = vpop.permute.xlu0 %947
      %949 = vrot.lane.b32.xlu0 %v878, 112
      %v950 = vpop.permute.xlu0 %949
      %951 = vrot.lane.b32.xlu0 %v880, 112
      %v952 = vpop.permute.xlu0 %951
      %953 = vrot.lane.b32.xlu0 %v882, 112
      %v954 = vpop.permute.xlu0 %953
      %955 = vrot.lane.b32.xlu0 %v884, 112
      %v956 = vpop.permute.xlu0 %955
      %957 = vrot.lane.b32.xlu0 %v886, 112
      %v958 = vpop.permute.xlu0 %957
      %959 = vrot.lane.b32.xlu0 %v888, 112
      %v960 = vpop.permute.xlu0 %959
      %961 = vrot.lane.b32.xlu0 %v890, 112
      %v962 = vpop.permute.xlu0 %961
      %963 = vrot.lane.b32.xlu0 %v892, 112
      %v964 = vpop.permute.xlu0 %963
      %965 = vrot.lane.b32.xlu0 %v894, 112
      %v966 = vpop.permute.xlu0 %965
      %967 = vrot.lane.b32.xlu0 %v896, 112
      %v968 = vpop.permute.xlu0 %967
      %969 = vrot.lane.b32.xlu0 %v898, 112
      %v970 = vpop.permute.xlu0 %969
      %971 = vrot.lane.b32.xlu0 %v900, 112
      %v972 = vpop.permute.xlu0 %971
      %973 = vrot.lane.b32.xlu0 %v902, 112
      %v974 = vpop.permute.xlu0 %973
      %975 = vrot.lane.b32.xlu0 %v904, 112
      %v976 = vpop.permute.xlu0 %975
      %977 = vrot.lane.b32.xlu0 %v906, 112
      %v978 = vpop.permute.xlu0 %977
      %979 = vrot.lane.b32.xlu0 %v908, 112
      %v980 = vpop.permute.xlu0 %979
      %981 = vrot.lane.b32.xlu0 %v910, 112
      %v982 = vpop.permute.xlu0 %981
      %983 = vrot.lane.b32.xlu0 %v912, 112
      %v984 = vpop.permute.xlu0 %983
      %985 = vrot.lane.b32.xlu0 %v914, 112
      %v986 = vpop.permute.xlu0 %985
      %987 = vrot.lane.b32.xlu0 %v916, 112
      %v988 = vpop.permute.xlu0 %987
      %989 = vrot.lane.b32.xlu0 %v918, 112
      %v990 = vpop.permute.xlu0 %989
      %991 = vrot.lane.b32.xlu0 %v920, 112
      %v992 = vpop.permute.xlu0 %991
      %993 = vrot.lane.b32.xlu0 %v922, 112
      %v994 = vpop.permute.xlu0 %993
      %995 = vrot.lane.b32.xlu0 %v924, 112
      %v996 = vpop.permute.xlu0 %995
      %997 = vrot.lane.b32.xlu0 %v926, 112
      %v998 = vpop.permute.xlu0 %997
      %999 = vrot.lane.b32.xlu0 %v928, 112
      %v1000 = vpop.permute.xlu0 %999
      %1001 = vrot.lane.b32.xlu0 %v930, 112
      %v1002 = vpop.permute.xlu0 %1001
      %1003 = vrot.lane.b32.xlu0 %v932, 112
      %v1004 = vpop.permute.xlu0 %1003
      %1005 = vrot.lane.b32.xlu0 %v934, 112
      %v1006 = vpop.permute.xlu0 %1005
      %1007 = vrot.lane.b32.xlu0 %v936, 112
      %v1008 = vpop.permute.xlu0 %1007
      %v1045 = vadd.f32 %v827, %v938
      %v1046 = vadd.f32 %v828, %v940
      %v1047 = vadd.f32 %v829, %v942
      %v1048 = vadd.f32 %v830, %v944
      %v1049 = vadd.f32 %v831, %v946
      %v1050 = vadd.f32 %v832, %v948
      %v1051 = vadd.f32 %v833, %v950
      %v1052 = vadd.f32 %v834, %v952
      %v1053 = vadd.f32 %v835, %v954
      %v1054 = vadd.f32 %v836, %v956
      %v1055 = vadd.f32 %v837, %v958
      %v1056 = vadd.f32 %v838, %v960
      %v1057 = vadd.f32 %v839, %v962
      %v1058 = vadd.f32 %v840, %v964
      %v1059 = vadd.f32 %v841, %v966
      %v1060 = vadd.f32 %v842, %v968
      %v1061 = vadd.f32 %v843, %v970
      %v1062 = vadd.f32 %v844, %v972
      %v1063 = vadd.f32 %v845, %v974
      %v1064 = vadd.f32 %v846, %v976
      %v1065 = vadd.f32 %v847, %v978
      %v1066 = vadd.f32 %v848, %v980
      %v1067 = vadd.f32 %v849, %v982
      %v1068 = vadd.f32 %v850, %v984
      %v1069 = vadd.f32 %v851, %v986
      %v1070 = vadd.f32 %v852, %v988
      %v1071 = vadd.f32 %v853, %v990
      %v1072 = vadd.f32 %v854, %v992
      %v1073 = vadd.f32 %v855, %v994
      %v1074 = vadd.f32 %v856, %v996
      %v1075 = vadd.f32 %v857, %v998
      %v1076 = vadd.f32 %v858, %v1000
      %v1077 = vadd.f32 %v859, %v1002
      %v1078 = vadd.f32 %v860, %v1004
      %v1079 = vadd.f32 %v861, %v1006
      %v1080 = vadd.f32 %v862, %v1008
      %v1083 = vrot.slane %v590, 2
      %v1084 = vsel %vm863, %v935, %v1083
      %v1085 = vrot.slane %v595, 2
      %v1086 = vsel %vm863, %v1083, %v1085
      %1087 = vrot.lane.b32.xlu0 %v870, 104
      %v1088 = vpop.permute.xlu0 %1087
      %1089 = vrot.lane.b32.xlu0 %v872, 104
      %v1090 = vpop.permute.xlu0 %1089
      %1091 = vrot.lane.b32.xlu0 %v874, 104
      %v1092 = vpop.permute.xlu0 %1091
      %1093 = vrot.lane.b32.xlu0 %v876, 104
      %v1094 = vpop.permute.xlu0 %1093
      %1095 = vrot.lane.b32.xlu0 %v878, 104
      %v1096 = vpop.permute.xlu0 %1095
      %1097 = vrot.lane.b32.xlu0 %v880, 104
      %v1098 = vpop.permute.xlu0 %1097
      %1099 = vrot.lane.b32.xlu0 %v882, 104
      %v1100 = vpop.permute.xlu0 %1099
      %1101 = vrot.lane.b32.xlu0 %v884, 104
      %v1102 = vpop.permute.xlu0 %1101
      %1103 = vrot.lane.b32.xlu0 %v886, 104
      %v1104 = vpop.permute.xlu0 %1103
      %1105 = vrot.lane.b32.xlu0 %v888, 104
      %v1106 = vpop.permute.xlu0 %1105
      %1107 = vrot.lane.b32.xlu0 %v890, 104
      %v1108 = vpop.permute.xlu0 %1107
      %1109 = vrot.lane.b32.xlu0 %v892, 104
      %v1110 = vpop.permute.xlu0 %1109
      %1111 = vrot.lane.b32.xlu0 %v894, 104
      %v1112 = vpop.permute.xlu0 %1111
      %1113 = vrot.lane.b32.xlu0 %v896, 104
      %v1114 = vpop.permute.xlu0 %1113
      %1115 = vrot.lane.b32.xlu0 %v898, 104
      %v1116 = vpop.permute.xlu0 %1115
      %1117 = vrot.lane.b32.xlu0 %v900, 104
      %v1118 = vpop.permute.xlu0 %1117
      %1119 = vrot.lane.b32.xlu0 %v902, 104
      %v1120 = vpop.permute.xlu0 %1119
      %1121 = vrot.lane.b32.xlu0 %v904, 104
      %v1122 = vpop.permute.xlu0 %1121
      %1123 = vrot.lane.b32.xlu0 %v906, 104
      %v1124 = vpop.permute.xlu0 %1123
      %1125 = vrot.lane.b32.xlu0 %v908, 104
      %v1126 = vpop.permute.xlu0 %1125
      %1127 = vrot.lane.b32.xlu0 %v910, 104
      %v1128 = vpop.permute.xlu0 %1127
      %1129 = vrot.lane.b32.xlu0 %v912, 104
      %v1130 = vpop.permute.xlu0 %1129
      %1131 = vrot.lane.b32.xlu0 %v914, 104
      %v1132 = vpop.permute.xlu0 %1131
      %1133 = vrot.lane.b32.xlu0 %v916, 104
      %v1134 = vpop.permute.xlu0 %1133
      %1135 = vrot.lane.b32.xlu0 %v918, 104
      %v1136 = vpop.permute.xlu0 %1135
      %1137 = vrot.lane.b32.xlu0 %v920, 104
      %v1138 = vpop.permute.xlu0 %1137
      %1139 = vrot.lane.b32.xlu0 %v922, 104
      %v1140 = vpop.permute.xlu0 %1139
      %1141 = vrot.lane.b32.xlu0 %v924, 104
      %v1142 = vpop.permute.xlu0 %1141
      %1143 = vrot.lane.b32.xlu0 %v926, 104
      %v1144 = vpop.permute.xlu0 %1143
      %1145 = vrot.lane.b32.xlu0 %v928, 104
      %v1146 = vpop.permute.xlu0 %1145
      %1147 = vrot.lane.b32.xlu0 %v930, 104
      %v1148 = vpop.permute.xlu0 %1147
      %1149 = vrot.lane.b32.xlu0 %v932, 104
      %v1150 = vpop.permute.xlu0 %1149
      %1151 = vrot.lane.b32.xlu0 %v934, 104
      %v1152 = vpop.permute.xlu0 %1151
      %1153 = vrot.lane.b32.xlu0 %v936, 104
      %v1154 = vpop.permute.xlu0 %1153
      %1155 = vrot.lane.b32.xlu0 %v1084, 104
      %v1156 = vpop.permute.xlu0 %1155
      %1157 = vrot.lane.b32.xlu0 %v1086, 104
      %v1158 = vpop.permute.xlu0 %1157
      %v1195 = vadd.f32 %v1045, %v1088
      %v1196 = vadd.f32 %v1046, %v1090
      %v1197 = vadd.f32 %v1047, %v1092
      %v1198 = vadd.f32 %v1048, %v1094
      %v1199 = vadd.f32 %v1049, %v1096
      %v1200 = vadd.f32 %v1050, %v1098
      %v1201 = vadd.f32 %v1051, %v1100
      %v1202 = vadd.f32 %v1052, %v1102
      %v1203 = vadd.f32 %v1053, %v1104
      %v1204 = vadd.f32 %v1054, %v1106
      %v1205 = vadd.f32 %v1055, %v1108
      %v1206 = vadd.f32 %v1056, %v1110
      %v1207 = vadd.f32 %v1057, %v1112
      %v1208 = vadd.f32 %v1058, %v1114
      %v1209 = vadd.f32 %v1059, %v1116
      %v1210 = vadd.f32 %v1060, %v1118
      %v1211 = vadd.f32 %v1061, %v1120
      %v1212 = vadd.f32 %v1062, %v1122
      %v1213 = vadd.f32 %v1063, %v1124
      %v1214 = vadd.f32 %v1064, %v1126
      %v1215 = vadd.f32 %v1065, %v1128
      %v1216 = vadd.f32 %v1066, %v1130
      %v1217 = vadd.f32 %v1067, %v1132
      %v1218 = vadd.f32 %v1068, %v1134
      %v1219 = vadd.f32 %v1069, %v1136
      %v1220 = vadd.f32 %v1070, %v1138
      %v1221 = vadd.f32 %v1071, %v1140
      %v1222 = vadd.f32 %v1072, %v1142
      %v1223 = vadd.f32 %v1073, %v1144
      %v1224 = vadd.f32 %v1074, %v1146
      %v1225 = vadd.f32 %v1075, %v1148
      %v1226 = vadd.f32 %v1076, %v1150
      %v1227 = vadd.f32 %v1077, %v1152
      %v1228 = vadd.f32 %v1078, %v1154
      %v1229 = vadd.f32 %v1079, %v1156
      %v1230 = vadd.f32 %v1080, %v1158
      %vm1231 = vcmask 1044480
      %v1232 = vrot.slane %v415, 3
      %v1233 = vrot.slane %v420, 3
      %v1234 = vsel %vm1231, %v1232, %v1233
      %v1235 = vrot.slane %v425, 3
      %v1236 = vsel %vm1231, %v1233, %v1235
      %v1237 = vrot.slane %v430, 3
      %v1238 = vsel %vm1231, %v1235, %v1237
      %v1239 = vrot.slane %v435, 3
      %v1240 = vsel %vm1231, %v1237, %v1239
      %v1241 = vrot.slane %v440, 3
      %v1242 = vsel %vm1231, %v1239, %v1241
      %v1243 = vrot.slane %v445, 3
      %v1244 = vsel %vm1231, %v1241, %v1243
      %v1245 = vrot.slane %v450, 3
      %v1246 = vsel %vm1231, %v1243, %v1245
      %v1247 = vrot.slane %v455, 3
      %v1248 = vsel %vm1231, %v1245, %v1247
      %v1249 = vrot.slane %v460, 3
      %v1250 = vsel %vm1231, %v1247, %v1249
      %v1251 = vrot.slane %v465, 3
      %v1252 = vsel %vm1231, %v1249, %v1251
      %v1253 = vrot.slane %v470, 3
      %v1254 = vsel %vm1231, %v1251, %v1253
      %v1255 = vrot.slane %v475, 3
      %v1256 = vsel %vm1231, %v1253, %v1255
      %v1257 = vrot.slane %v480, 3
      %v1258 = vsel %vm1231, %v1255, %v1257
      %v1259 = vrot.slane %v485, 3
      %v1260 = vsel %vm1231, %v1257, %v1259
      %v1261 = vrot.slane %v490, 3
      %v1262 = vsel %vm1231, %v1259, %v1261
      %v1263 = vrot.slane %v495, 3
      %v1264 = vsel %vm1231, %v1261, %v1263
      %v1265 = vrot.slane %v500, 3
      %v1266 = vsel %vm1231, %v1263, %v1265
      %v1267 = vrot.slane %v505, 3
      %v1268 = vsel %vm1231, %v1265, %v1267
      %v1269 = vrot.slane %v510, 3
      %v1270 = vsel %vm1231, %v1267, %v1269
      %v1271 = vrot.slane %v515, 3
      %v1272 = vsel %vm1231, %v1269, %v1271
      %v1273 = vrot.slane %v520, 3
      %v1274 = vsel %vm1231, %v1271, %v1273
      %v1275 = vrot.slane %v525, 3
      %v1276 = vsel %vm1231, %v1273, %v1275
      %v1277 = vrot.slane %v530, 3
      %v1278 = vsel %vm1231, %v1275, %v1277
      %v1279 = vrot.slane %v535, 3
      %v1280 = vsel %vm1231, %v1277, %v1279
      %v1281 = vrot.slane %v540, 3
      %v1282 = vsel %vm1231, %v1279, %v1281
      %v1283 = vrot.slane %v545, 3
      %v1284 = vsel %vm1231, %v1281, %v1283
      %v1285 = vrot.slane %v550, 3
      %v1286 = vsel %vm1231, %v1283, %v1285
      %v1287 = vrot.slane %v555, 3
      %v1288 = vsel %vm1231, %v1285, %v1287
      %v1289 = vrot.slane %v560, 3
      %v1290 = vsel %vm1231, %v1287, %v1289
      %v1291 = vrot.slane %v565, 3
      %v1292 = vsel %vm1231, %v1289, %v1291
      %v1293 = vrot.slane %v570, 3
      %v1294 = vsel %vm1231, %v1291, %v1293
      %v1295 = vrot.slane %v575, 3
      %v1296 = vsel %vm1231, %v1293, %v1295
      %v1297 = vrot.slane %v580, 3
      %v1298 = vsel %vm1231, %v1295, %v1297
      %v1299 = vrot.slane %v585, 3
      %v1300 = vsel %vm1231, %v1297, %v1299
      %v1301 = vrot.slane %v590, 3
      %v1302 = vsel %vm1231, %v1299, %v1301
      %v1303 = vrot.slane %v595, 3
      %v1304 = vsel %vm1231, %v1301, %v1303
      %1305 = vrot.lane.b32.xlu0 %v1234, 96
      %v1306 = vpop.permute.xlu0 %1305
      %1307 = vrot.lane.b32.xlu0 %v1236, 96
      %v1308 = vpop.permute.xlu0 %1307
      %1309 = vrot.lane.b32.xlu0 %v1238, 96
      %v1310 = vpop.permute.xlu0 %1309
      %1311 = vrot.lane.b32.xlu0 %v1240, 96
      %v1312 = vpop.permute.xlu0 %1311
      %1313 = vrot.lane.b32.xlu0 %v1242, 96
      %v1314 = vpop.permute.xlu0 %1313
      %1315 = vrot.lane.b32.xlu0 %v1244, 96
      %v1316 = vpop.permute.xlu0 %1315
      %1317 = vrot.lane.b32.xlu0 %v1246, 96
      %v1318 = vpop.permute.xlu0 %1317
      %1319 = vrot.lane.b32.xlu0 %v1248, 96
      %v1320 = vpop.permute.xlu0 %1319
      %1321 = vrot.lane.b32.xlu0 %v1250, 96
      %v1322 = vpop.permute.xlu0 %1321
      %1323 = vrot.lane.b32.xlu0 %v1252, 96
      %v1324 = vpop.permute.xlu0 %1323
      %1325 = vrot.lane.b32.xlu0 %v1254, 96
      %v1326 = vpop.permute.xlu0 %1325
      %1327 = vrot.lane.b32.xlu0 %v1256, 96
      %v1328 = vpop.permute.xlu0 %1327
      %1329 = vrot.lane.b32.xlu0 %v1258, 96
      %v1330 = vpop.permute.xlu0 %1329
      %1331 = vrot.lane.b32.xlu0 %v1260, 96
      %v1332 = vpop.permute.xlu0 %1331
      %1333 = vrot.lane.b32.xlu0 %v1262, 96
      %v1334 = vpop.permute.xlu0 %1333
      %1335 = vrot.lane.b32.xlu0 %v1264, 96
      %v1336 = vpop.permute.xlu0 %1335
      %1337 = vrot.lane.b32.xlu0 %v1266, 96
      %v1338 = vpop.permute.xlu0 %1337
      %1339 = vrot.lane.b32.xlu0 %v1268, 96
      %v1340 = vpop.permute.xlu0 %1339
      %1341 = vrot.lane.b32.xlu0 %v1270, 96
      %v1342 = vpop.permute.xlu0 %1341
      %1343 = vrot.lane.b32.xlu0 %v1272, 96
      %v1344 = vpop.permute.xlu0 %1343
      %1345 = vrot.lane.b32.xlu0 %v1274, 96
      %v1346 = vpop.permute.xlu0 %1345
      %1347 = vrot.lane.b32.xlu0 %v1276, 96
      %v1348 = vpop.permute.xlu0 %1347
      %1349 = vrot.lane.b32.xlu0 %v1278, 96
      %v1350 = vpop.permute.xlu0 %1349
      %1351 = vrot.lane.b32.xlu0 %v1280, 96
      %v1352 = vpop.permute.xlu0 %1351
      %1353 = vrot.lane.b32.xlu0 %v1282, 96
      %v1354 = vpop.permute.xlu0 %1353
      %1355 = vrot.lane.b32.xlu0 %v1284, 96
      %v1356 = vpop.permute.xlu0 %1355
      %1357 = vrot.lane.b32.xlu0 %v1286, 96
      %v1358 = vpop.permute.xlu0 %1357
      %1359 = vrot.lane.b32.xlu0 %v1288, 96
      %v1360 = vpop.permute.xlu0 %1359
      %1361 = vrot.lane.b32.xlu0 %v1290, 96
      %v1362 = vpop.permute.xlu0 %1361
      %1363 = vrot.lane.b32.xlu0 %v1292, 96
      %v1364 = vpop.permute.xlu0 %1363
      %1365 = vrot.lane.b32.xlu0 %v1294, 96
      %v1366 = vpop.permute.xlu0 %1365
      %1367 = vrot.lane.b32.xlu0 %v1296, 96
      %v1368 = vpop.permute.xlu0 %1367
      %1369 = vrot.lane.b32.xlu0 %v1298, 96
      %v1370 = vpop.permute.xlu0 %1369
      %1371 = vrot.lane.b32.xlu0 %v1300, 96
      %v1372 = vpop.permute.xlu0 %1371
      %1373 = vrot.lane.b32.xlu0 %v1302, 96
      %v1374 = vpop.permute.xlu0 %1373
      %1375 = vrot.lane.b32.xlu0 %v1304, 96
      %v1376 = vpop.permute.xlu0 %1375
      %v1413 = vadd.f32 %v1195, %v1306
      %v1414 = vadd.f32 %v1196, %v1308
      %v1415 = vadd.f32 %v1197, %v1310
      %v1416 = vadd.f32 %v1198, %v1312
      %v1417 = vadd.f32 %v1199, %v1314
      %v1418 = vadd.f32 %v1200, %v1316
      %v1419 = vadd.f32 %v1201, %v1318
      %v1420 = vadd.f32 %v1202, %v1320
      %v1421 = vadd.f32 %v1203, %v1322
      %v1422 = vadd.f32 %v1204, %v1324
      %v1423 = vadd.f32 %v1205, %v1326
      %v1424 = vadd.f32 %v1206, %v1328
      %v1425 = vadd.f32 %v1207, %v1330
      %v1426 = vadd.f32 %v1208, %v1332
      %v1427 = vadd.f32 %v1209, %v1334
      %v1428 = vadd.f32 %v1210, %v1336
      %v1429 = vadd.f32 %v1211, %v1338
      %v1430 = vadd.f32 %v1212, %v1340
      %v1431 = vadd.f32 %v1213, %v1342
      %v1432 = vadd.f32 %v1214, %v1344
      %v1433 = vadd.f32 %v1215, %v1346
      %v1434 = vadd.f32 %v1216, %v1348
      %v1435 = vadd.f32 %v1217, %v1350
      %v1436 = vadd.f32 %v1218, %v1352
      %v1437 = vadd.f32 %v1219, %v1354
      %v1438 = vadd.f32 %v1220, %v1356
      %v1439 = vadd.f32 %v1221, %v1358
      %v1440 = vadd.f32 %v1222, %v1360
      %v1441 = vadd.f32 %v1223, %v1362
      %v1442 = vadd.f32 %v1224, %v1364
      %v1443 = vadd.f32 %v1225, %v1366
      %v1444 = vadd.f32 %v1226, %v1368
      %v1445 = vadd.f32 %v1227, %v1370
      %v1446 = vadd.f32 %v1228, %v1372
      %v1447 = vadd.f32 %v1229, %v1374
      %v1448 = vadd.f32 %v1230, %v1376
      %vm1449 = vcmask 1043456
      %v1450 = vrot.slane %v415, 4
      %v1451 = vrot.slane %v420, 4
      %v1452 = vsel %vm1449, %v1450, %v1451
      %v1453 = vrot.slane %v425, 4
      %v1454 = vsel %vm1449, %v1451, %v1453
      %v1455 = vrot.slane %v430, 4
      %v1456 = vsel %vm1449, %v1453, %v1455
      %v1457 = vrot.slane %v435, 4
      %v1458 = vsel %vm1449, %v1455, %v1457
      %v1459 = vrot.slane %v440, 4
      %v1460 = vsel %vm1449, %v1457, %v1459
      %v1461 = vrot.slane %v445, 4
      %v1462 = vsel %vm1449, %v1459, %v1461
      %v1463 = vrot.slane %v450, 4
      %v1464 = vsel %vm1449, %v1461, %v1463
      %v1465 = vrot.slane %v455, 4
      %v1466 = vsel %vm1449, %v1463, %v1465
      %v1467 = vrot.slane %v460, 4
      %v1468 = vsel %vm1449, %v1465, %v1467
      %v1469 = vrot.slane %v465, 4
      %v1470 = vsel %vm1449, %v1467, %v1469
      %v1471 = vrot.slane %v470, 4
      %v1472 = vsel %vm1449, %v1469, %v1471
      %v1473 = vrot.slane %v475, 4
      %v1474 = vsel %vm1449, %v1471, %v1473
      %v1475 = vrot.slane %v480, 4
      %v1476 = vsel %vm1449, %v1473, %v1475
      %v1477 = vrot.slane %v485, 4
      %v1478 = vsel %vm1449, %v1475, %v1477
      %v1479 = vrot.slane %v490, 4
      %v1480 = vsel %vm1449, %v1477, %v1479
      %v1481 = vrot.slane %v495, 4
      %v1482 = vsel %vm1449, %v1479, %v1481
      %v1483 = vrot.slane %v500, 4
      %v1484 = vsel %vm1449, %v1481, %v1483
      %v1485 = vrot.slane %v505, 4
      %v1486 = vsel %vm1449, %v1483, %v1485
      %v1487 = vrot.slane %v510, 4
      %v1488 = vsel %vm1449, %v1485, %v1487
      %v1489 = vrot.slane %v515, 4
      %v1490 = vsel %vm1449, %v1487, %v1489
      %v1491 = vrot.slane %v520, 4
      %v1492 = vsel %vm1449, %v1489, %v1491
      %v1493 = vrot.slane %v525, 4
      %v1494 = vsel %vm1449, %v1491, %v1493
      %v1495 = vrot.slane %v530, 4
      %v1496 = vsel %vm1449, %v1493, %v1495
      %v1497 = vrot.slane %v535, 4
      %v1498 = vsel %vm1449, %v1495, %v1497
      %v1499 = vrot.slane %v540, 4
      %v1500 = vsel %vm1449, %v1497, %v1499
      %v1501 = vrot.slane %v545, 4
      %v1502 = vsel %vm1449, %v1499, %v1501
      %v1503 = vrot.slane %v550, 4
      %v1504 = vsel %vm1449, %v1501, %v1503
      %v1505 = vrot.slane %v555, 4
      %v1506 = vsel %vm1449, %v1503, %v1505
      %v1507 = vrot.slane %v560, 4
      %v1508 = vsel %vm1449, %v1505, %v1507
      %v1509 = vrot.slane %v565, 4
      %v1510 = vsel %vm1449, %v1507, %v1509
      %v1511 = vrot.slane %v570, 4
      %v1512 = vsel %vm1449, %v1509, %v1511
      %v1513 = vrot.slane %v575, 4
      %v1514 = vsel %vm1449, %v1511, %v1513
      %v1515 = vrot.slane %v580, 4
      %v1516 = vsel %vm1449, %v1513, %v1515
      %v1517 = vrot.slane %v585, 4
      %v1518 = vsel %vm1449, %v1515, %v1517
      %v1519 = vrot.slane %v590, 4
      %v1520 = vsel %vm1449, %v1517, %v1519
      %v1521 = vrot.slane %v595, 4
      %v1522 = vsel %vm1449, %v1519, %v1521
      %1523 = vrot.lane.b32.xlu0 %v1452, 88
      %v1524 = vpop.permute.xlu0 %1523
      %1525 = vrot.lane.b32.xlu0 %v1454, 88
      %v1526 = vpop.permute.xlu0 %1525
      %1527 = vrot.lane.b32.xlu0 %v1456, 88
      %v1528 = vpop.permute.xlu0 %1527
      %1529 = vrot.lane.b32.xlu0 %v1458, 88
      %v1530 = vpop.permute.xlu0 %1529
      %1531 = vrot.lane.b32.xlu0 %v1460, 88
      %v1532 = vpop.permute.xlu0 %1531
      %1533 = vrot.lane.b32.xlu0 %v1462, 88
      %v1534 = vpop.permute.xlu0 %1533
      %1535 = vrot.lane.b32.xlu0 %v1464, 88
      %v1536 = vpop.permute.xlu0 %1535
      %1537 = vrot.lane.b32.xlu0 %v1466, 88
      %v1538 = vpop.permute.xlu0 %1537
      %1539 = vrot.lane.b32.xlu0 %v1468, 88
      %v1540 = vpop.permute.xlu0 %1539
      %1541 = vrot.lane.b32.xlu0 %v1470, 88
      %v1542 = vpop.permute.xlu0 %1541
      %1543 = vrot.lane.b32.xlu0 %v1472, 88
      %v1544 = vpop.permute.xlu0 %1543
      %1545 = vrot.lane.b32.xlu0 %v1474, 88
      %v1546 = vpop.permute.xlu0 %1545
      %1547 = vrot.lane.b32.xlu0 %v1476, 88
      %v1548 = vpop.permute.xlu0 %1547
      %1549 = vrot.lane.b32.xlu0 %v1478, 88
      %v1550 = vpop.permute.xlu0 %1549
      %1551 = vrot.lane.b32.xlu0 %v1480, 88
      %v1552 = vpop.permute.xlu0 %1551
      %1553 = vrot.lane.b32.xlu0 %v1482, 88
      %v1554 = vpop.permute.xlu0 %1553
      %1555 = vrot.lane.b32.xlu0 %v1484, 88
      %v1556 = vpop.permute.xlu0 %1555
      %1557 = vrot.lane.b32.xlu0 %v1486, 88
      %v1558 = vpop.permute.xlu0 %1557
      %1559 = vrot.lane.b32.xlu0 %v1488, 88
      %v1560 = vpop.permute.xlu0 %1559
      %1561 = vrot.lane.b32.xlu0 %v1490, 88
      %v1562 = vpop.permute.xlu0 %1561
      %1563 = vrot.lane.b32.xlu0 %v1492, 88
      %v1564 = vpop.permute.xlu0 %1563
      %1565 = vrot.lane.b32.xlu0 %v1494, 88
      %v1566 = vpop.permute.xlu0 %1565
      %1567 = vrot.lane.b32.xlu0 %v1496, 88
      %v1568 = vpop.permute.xlu0 %1567
      %1569 = vrot.lane.b32.xlu0 %v1498, 88
      %v1570 = vpop.permute.xlu0 %1569
      %1571 = vrot.lane.b32.xlu0 %v1500, 88
      %v1572 = vpop.permute.xlu0 %1571
      %1573 = vrot.lane.b32.xlu0 %v1502, 88
      %v1574 = vpop.permute.xlu0 %1573
      %1575 = vrot.lane.b32.xlu0 %v1504, 88
      %v1576 = vpop.permute.xlu0 %1575
      %1577 = vrot.lane.b32.xlu0 %v1506, 88
      %v1578 = vpop.permute.xlu0 %1577
      %1579 = vrot.lane.b32.xlu0 %v1508, 88
      %v1580 = vpop.permute.xlu0 %1579
      %1581 = vrot.lane.b32.xlu0 %v1510, 88
      %v1582 = vpop.permute.xlu0 %1581
      %1583 = vrot.lane.b32.xlu0 %v1512, 88
      %v1584 = vpop.permute.xlu0 %1583
      %1585 = vrot.lane.b32.xlu0 %v1514, 88
      %v1586 = vpop.permute.xlu0 %1585
      %1587 = vrot.lane.b32.xlu0 %v1516, 88
      %v1588 = vpop.permute.xlu0 %1587
      %1589 = vrot.lane.b32.xlu0 %v1518, 88
      %v1590 = vpop.permute.xlu0 %1589
      %1591 = vrot.lane.b32.xlu0 %v1520, 88
      %v1592 = vpop.permute.xlu0 %1591
      %1593 = vrot.lane.b32.xlu0 %v1522, 88
      %v1594 = vpop.permute.xlu0 %1593
      %v1631 = vadd.f32 %v1413, %v1524
      %v1632 = vadd.f32 %v1414, %v1526
      %v1633 = vadd.f32 %v1415, %v1528
      %v1634 = vadd.f32 %v1416, %v1530
      %v1635 = vadd.f32 %v1417, %v1532
      %v1636 = vadd.f32 %v1418, %v1534
      %v1637 = vadd.f32 %v1419, %v1536
      %v1638 = vadd.f32 %v1420, %v1538
      %v1639 = vadd.f32 %v1421, %v1540
      %v1640 = vadd.f32 %v1422, %v1542
      %v1641 = vadd.f32 %v1423, %v1544
      %v1642 = vadd.f32 %v1424, %v1546
      %v1643 = vadd.f32 %v1425, %v1548
      %v1644 = vadd.f32 %v1426, %v1550
      %v1645 = vadd.f32 %v1427, %v1552
      %v1646 = vadd.f32 %v1428, %v1554
      %v1647 = vadd.f32 %v1429, %v1556
      %v1648 = vadd.f32 %v1430, %v1558
      %v1649 = vadd.f32 %v1431, %v1560
      %v1650 = vadd.f32 %v1432, %v1562
      %v1651 = vadd.f32 %v1433, %v1564
      %v1652 = vadd.f32 %v1434, %v1566
      %v1653 = vadd.f32 %v1435, %v1568
      %v1654 = vadd.f32 %v1436, %v1570
      %v1655 = vadd.f32 %v1437, %v1572
      %v1656 = vadd.f32 %v1438, %v1574
      %v1657 = vadd.f32 %v1439, %v1576
      %v1658 = vadd.f32 %v1440, %v1578
      %v1659 = vadd.f32 %v1441, %v1580
      %v1660 = vadd.f32 %v1442, %v1582
      %v1661 = vadd.f32 %v1443, %v1584
      %v1662 = vadd.f32 %v1444, %v1586
      %v1663 = vadd.f32 %v1445, %v1588
      %v1664 = vadd.f32 %v1446, %v1590
      %v1665 = vadd.f32 %v1447, %v1592
      %v1666 = vadd.f32 %v1448, %v1594
      %v1669 = vrot.slane %v600, 4
      %v1670 = vsel %vm1449, %v1521, %v1669
      %v1671 = vrot.slane %v605, 4
      %v1672 = vsel %vm1449, %v1669, %v1671
      %1673 = vrot.lane.b32.xlu0 %v1456, 80
      %v1674 = vpop.permute.xlu0 %1673
      %1675 = vrot.lane.b32.xlu0 %v1458, 80
      %v1676 = vpop.permute.xlu0 %1675
      %1677 = vrot.lane.b32.xlu0 %v1460, 80
      %v1678 = vpop.permute.xlu0 %1677
      %1679 = vrot.lane.b32.xlu0 %v1462, 80
      %v1680 = vpop.permute.xlu0 %1679
      %1681 = vrot.lane.b32.xlu0 %v1464, 80
      %v1682 = vpop.permute.xlu0 %1681
      %1683 = vrot.lane.b32.xlu0 %v1466, 80
      %v1684 = vpop.permute.xlu0 %1683
      %1685 = vrot.lane.b32.xlu0 %v1468, 80
      %v1686 = vpop.permute.xlu0 %1685
      %1687 = vrot.lane.b32.xlu0 %v1470, 80
      %v1688 = vpop.permute.xlu0 %1687
      %1689 = vrot.lane.b32.xlu0 %v1472, 80
      %v1690 = vpop.permute.xlu0 %1689
      %1691 = vrot.lane.b32.xlu0 %v1474, 80
      %v1692 = vpop.permute.xlu0 %1691
      %1693 = vrot.lane.b32.xlu0 %v1476, 80
      %v1694 = vpop.permute.xlu0 %1693
      %1695 = vrot.lane.b32.xlu0 %v1478, 80
      %v1696 = vpop.permute.xlu0 %1695
      %1697 = vrot.lane.b32.xlu0 %v1480, 80
      %v1698 = vpop.permute.xlu0 %1697
      %1699 = vrot.lane.b32.xlu0 %v1482, 80
      %v1700 = vpop.permute.xlu0 %1699
      %1701 = vrot.lane.b32.xlu0 %v1484, 80
      %v1702 = vpop.permute.xlu0 %1701
      %1703 = vrot.lane.b32.xlu0 %v1486, 80
      %v1704 = vpop.permute.xlu0 %1703
      %1705 = vrot.lane.b32.xlu0 %v1488, 80
      %v1706 = vpop.permute.xlu0 %1705
      %1707 = vrot.lane.b32.xlu0 %v1490, 80
      %v1708 = vpop.permute.xlu0 %1707
      %1709 = vrot.lane.b32.xlu0 %v1492, 80
      %v1710 = vpop.permute.xlu0 %1709
      %1711 = vrot.lane.b32.xlu0 %v1494, 80
      %v1712 = vpop.permute.xlu0 %1711
      %1713 = vrot.lane.b32.xlu0 %v1496, 80
      %v1714 = vpop.permute.xlu0 %1713
      %1715 = vrot.lane.b32.xlu0 %v1498, 80
      %v1716 = vpop.permute.xlu0 %1715
      %1717 = vrot.lane.b32.xlu0 %v1500, 80
      %v1718 = vpop.permute.xlu0 %1717
      %1719 = vrot.lane.b32.xlu0 %v1502, 80
      %v1720 = vpop.permute.xlu0 %1719
      %1721 = vrot.lane.b32.xlu0 %v1504, 80
      %v1722 = vpop.permute.xlu0 %1721
      %1723 = vrot.lane.b32.xlu0 %v1506, 80
      %v1724 = vpop.permute.xlu0 %1723
      %1725 = vrot.lane.b32.xlu0 %v1508, 80
      %v1726 = vpop.permute.xlu0 %1725
      %1727 = vrot.lane.b32.xlu0 %v1510, 80
      %v1728 = vpop.permute.xlu0 %1727
      %1729 = vrot.lane.b32.xlu0 %v1512, 80
      %v1730 = vpop.permute.xlu0 %1729
      %1731 = vrot.lane.b32.xlu0 %v1514, 80
      %v1732 = vpop.permute.xlu0 %1731
      %1733 = vrot.lane.b32.xlu0 %v1516, 80
      %v1734 = vpop.permute.xlu0 %1733
      %1735 = vrot.lane.b32.xlu0 %v1518, 80
      %v1736 = vpop.permute.xlu0 %1735
      %1737 = vrot.lane.b32.xlu0 %v1520, 80
      %v1738 = vpop.permute.xlu0 %1737
      %1739 = vrot.lane.b32.xlu0 %v1522, 80
      %v1740 = vpop.permute.xlu0 %1739
      %1741 = vrot.lane.b32.xlu0 %v1670, 80
      %v1742 = vpop.permute.xlu0 %1741
      %1743 = vrot.lane.b32.xlu0 %v1672, 80
      %v1744 = vpop.permute.xlu0 %1743
      %v1781 = vadd.f32 %v1631, %v1674
      %v1782 = vadd.f32 %v1632, %v1676
      %v1783 = vadd.f32 %v1633, %v1678
      %v1784 = vadd.f32 %v1634, %v1680
      %v1785 = vadd.f32 %v1635, %v1682
      %v1786 = vadd.f32 %v1636, %v1684
      %v1787 = vadd.f32 %v1637, %v1686
      %v1788 = vadd.f32 %v1638, %v1688
      %v1789 = vadd.f32 %v1639, %v1690
      %v1790 = vadd.f32 %v1640, %v1692
      %v1791 = vadd.f32 %v1641, %v1694
      %v1792 = vadd.f32 %v1642, %v1696
      %v1793 = vadd.f32 %v1643, %v1698
      %v1794 = vadd.f32 %v1644, %v1700
      %v1795 = vadd.f32 %v1645, %v1702
      %v1796 = vadd.f32 %v1646, %v1704
      %v1797 = vadd.f32 %v1647, %v1706
      %v1798 = vadd.f32 %v1648, %v1708
      %v1799 = vadd.f32 %v1649, %v1710
      %v1800 = vadd.f32 %v1650, %v1712
      %v1801 = vadd.f32 %v1651, %v1714
      %v1802 = vadd.f32 %v1652, %v1716
      %v1803 = vadd.f32 %v1653, %v1718
      %v1804 = vadd.f32 %v1654, %v1720
      %v1805 = vadd.f32 %v1655, %v1722
      %v1806 = vadd.f32 %v1656, %v1724
      %v1807 = vadd.f32 %v1657, %v1726
      %v1808 = vadd.f32 %v1658, %v1728
      %v1809 = vadd.f32 %v1659, %v1730
      %v1810 = vadd.f32 %v1660, %v1732
      %v1811 = vadd.f32 %v1661, %v1734
      %v1812 = vadd.f32 %v1662, %v1736
      %v1813 = vadd.f32 %v1663, %v1738
      %v1814 = vadd.f32 %v1664, %v1740
      %v1815 = vadd.f32 %v1665, %v1742
      %v1816 = vadd.f32 %v1666, %v1744
      %vm1817 = vcmask 1042432
      %v1818 = vrot.slane %v425, 5
      %v1819 = vrot.slane %v430, 5
      %v1820 = vsel %vm1817, %v1818, %v1819
      %v1821 = vrot.slane %v435, 5
      %v1822 = vsel %vm1817, %v1819, %v1821
      %v1823 = vrot.slane %v440, 5
      %v1824 = vsel %vm1817, %v1821, %v1823
      %v1825 = vrot.slane %v445, 5
      %v1826 = vsel %vm1817, %v1823, %v1825
      %v1827 = vrot.slane %v450, 5
      %v1828 = vsel %vm1817, %v1825, %v1827
      %v1829 = vrot.slane %v455, 5
      %v1830 = vsel %vm1817, %v1827, %v1829
      %v1831 = vrot.slane %v460, 5
      %v1832 = vsel %vm1817, %v1829, %v1831
      %v1833 = vrot.slane %v465, 5
      %v1834 = vsel %vm1817, %v1831, %v1833
      %v1835 = vrot.slane %v470, 5
      %v1836 = vsel %vm1817, %v1833, %v1835
      %v1837 = vrot.slane %v475, 5
      %v1838 = vsel %vm1817, %v1835, %v1837
      %v1839 = vrot.slane %v480, 5
      %v1840 = vsel %vm1817, %v1837, %v1839
      %v1841 = vrot.slane %v485, 5
      %v1842 = vsel %vm1817, %v1839, %v1841
      %v1843 = vrot.slane %v490, 5
      %v1844 = vsel %vm1817, %v1841, %v1843
      %v1845 = vrot.slane %v495, 5
      %v1846 = vsel %vm1817, %v1843, %v1845
      %v1847 = vrot.slane %v500, 5
      %v1848 = vsel %vm1817, %v1845, %v1847
      %v1849 = vrot.slane %v505, 5
      %v1850 = vsel %vm1817, %v1847, %v1849
      %v1851 = vrot.slane %v510, 5
      %v1852 = vsel %vm1817, %v1849, %v1851
      %v1853 = vrot.slane %v515, 5
      %v1854 = vsel %vm1817, %v1851, %v1853
      %v1855 = vrot.slane %v520, 5
      %v1856 = vsel %vm1817, %v1853, %v1855
      %v1857 = vrot.slane %v525, 5
      %v1858 = vsel %vm1817, %v1855, %v1857
      %v1859 = vrot.slane %v530, 5
      %v1860 = vsel %vm1817, %v1857, %v1859
      %v1861 = vrot.slane %v535, 5
      %v1862 = vsel %vm1817, %v1859, %v1861
      %v1863 = vrot.slane %v540, 5
      %v1864 = vsel %vm1817, %v1861, %v1863
      %v1865 = vrot.slane %v545, 5
      %v1866 = vsel %vm1817, %v1863, %v1865
      %v1867 = vrot.slane %v550, 5
      %v1868 = vsel %vm1817, %v1865, %v1867
      %v1869 = vrot.slane %v555, 5
      %v1870 = vsel %vm1817, %v1867, %v1869
      %v1871 = vrot.slane %v560, 5
      %v1872 = vsel %vm1817, %v1869, %v1871
      %v1873 = vrot.slane %v565, 5
      %v1874 = vsel %vm1817, %v1871, %v1873
      %v1875 = vrot.slane %v570, 5
      %v1876 = vsel %vm1817, %v1873, %v1875
      %v1877 = vrot.slane %v575, 5
      %v1878 = vsel %vm1817, %v1875, %v1877
      %v1879 = vrot.slane %v580, 5
      %v1880 = vsel %vm1817, %v1877, %v1879
      %v1881 = vrot.slane %v585, 5
      %v1882 = vsel %vm1817, %v1879, %v1881
      %v1883 = vrot.slane %v590, 5
      %v1884 = vsel %vm1817, %v1881, %v1883
      %v1885 = vrot.slane %v595, 5
      %v1886 = vsel %vm1817, %v1883, %v1885
      %v1887 = vrot.slane %v600, 5
      %v1888 = vsel %vm1817, %v1885, %v1887
      %v1889 = vrot.slane %v605, 5
      %v1890 = vsel %vm1817, %v1887, %v1889
      %1891 = vrot.lane.b32.xlu0 %v1820, 72
      %v1892 = vpop.permute.xlu0 %1891
      %1893 = vrot.lane.b32.xlu0 %v1822, 72
      %v1894 = vpop.permute.xlu0 %1893
      %1895 = vrot.lane.b32.xlu0 %v1824, 72
      %v1896 = vpop.permute.xlu0 %1895
      %1897 = vrot.lane.b32.xlu0 %v1826, 72
      %v1898 = vpop.permute.xlu0 %1897
      %1899 = vrot.lane.b32.xlu0 %v1828, 72
      %v1900 = vpop.permute.xlu0 %1899
      %1901 = vrot.lane.b32.xlu0 %v1830, 72
      %v1902 = vpop.permute.xlu0 %1901
      %1903 = vrot.lane.b32.xlu0 %v1832, 72
      %v1904 = vpop.permute.xlu0 %1903
      %1905 = vrot.lane.b32.xlu0 %v1834, 72
      %v1906 = vpop.permute.xlu0 %1905
      %1907 = vrot.lane.b32.xlu0 %v1836, 72
      %v1908 = vpop.permute.xlu0 %1907
      %1909 = vrot.lane.b32.xlu0 %v1838, 72
      %v1910 = vpop.permute.xlu0 %1909
      %1911 = vrot.lane.b32.xlu0 %v1840, 72
      %v1912 = vpop.permute.xlu0 %1911
      %1913 = vrot.lane.b32.xlu0 %v1842, 72
      %v1914 = vpop.permute.xlu0 %1913
      %1915 = vrot.lane.b32.xlu0 %v1844, 72
      %v1916 = vpop.permute.xlu0 %1915
      %1917 = vrot.lane.b32.xlu0 %v1846, 72
      %v1918 = vpop.permute.xlu0 %1917
      %1919 = vrot.lane.b32.xlu0 %v1848, 72
      %v1920 = vpop.permute.xlu0 %1919
      %1921 = vrot.lane.b32.xlu0 %v1850, 72
      %v1922 = vpop.permute.xlu0 %1921
      %1923 = vrot.lane.b32.xlu0 %v1852, 72
      %v1924 = vpop.permute.xlu0 %1923
      %1925 = vrot.lane.b32.xlu0 %v1854, 72
      %v1926 = vpop.permute.xlu0 %1925
      %1927 = vrot.lane.b32.xlu0 %v1856, 72
      %v1928 = vpop.permute.xlu0 %1927
      %1929 = vrot.lane.b32.xlu0 %v1858, 72
      %v1930 = vpop.permute.xlu0 %1929
      %1931 = vrot.lane.b32.xlu0 %v1860, 72
      %v1932 = vpop.permute.xlu0 %1931
      %1933 = vrot.lane.b32.xlu0 %v1862, 72
      %v1934 = vpop.permute.xlu0 %1933
      %1935 = vrot.lane.b32.xlu0 %v1864, 72
      %v1936 = vpop.permute.xlu0 %1935
      %1937 = vrot.lane.b32.xlu0 %v1866, 72
      %v1938 = vpop.permute.xlu0 %1937
      %1939 = vrot.lane.b32.xlu0 %v1868, 72
      %v1940 = vpop.permute.xlu0 %1939
      %1941 = vrot.lane.b32.xlu0 %v1870, 72
      %v1942 = vpop.permute.xlu0 %1941
      %1943 = vrot.lane.b32.xlu0 %v1872, 72
      %v1944 = vpop.permute.xlu0 %1943
      %1945 = vrot.lane.b32.xlu0 %v1874, 72
      %v1946 = vpop.permute.xlu0 %1945
      %1947 = vrot.lane.b32.xlu0 %v1876, 72
      %v1948 = vpop.permute.xlu0 %1947
      %1949 = vrot.lane.b32.xlu0 %v1878, 72
      %v1950 = vpop.permute.xlu0 %1949
      %1951 = vrot.lane.b32.xlu0 %v1880, 72
      %v1952 = vpop.permute.xlu0 %1951
      %1953 = vrot.lane.b32.xlu0 %v1882, 72
      %v1954 = vpop.permute.xlu0 %1953
      %1955 = vrot.lane.b32.xlu0 %v1884, 72
      %v1956 = vpop.permute.xlu0 %1955
      %1957 = vrot.lane.b32.xlu0 %v1886, 72
      %v1958 = vpop.permute.xlu0 %1957
      %1959 = vrot.lane.b32.xlu0 %v1888, 72
      %v1960 = vpop.permute.xlu0 %1959
      %1961 = vrot.lane.b32.xlu0 %v1890, 72
      %v1962 = vpop.permute.xlu0 %1961
      %v1999 = vadd.f32 %v1781, %v1892
      %v2000 = vadd.f32 %v1782, %v1894
      %v2001 = vadd.f32 %v1783, %v1896
      %v2002 = vadd.f32 %v1784, %v1898
      %v2003 = vadd.f32 %v1785, %v1900
      %v2004 = vadd.f32 %v1786, %v1902
      %v2005 = vadd.f32 %v1787, %v1904
      %v2006 = vadd.f32 %v1788, %v1906
      %v2007 = vadd.f32 %v1789, %v1908
      %v2008 = vadd.f32 %v1790, %v1910
      %v2009 = vadd.f32 %v1791, %v1912
      %v2010 = vadd.f32 %v1792, %v1914
      %v2011 = vadd.f32 %v1793, %v1916
      %v2012 = vadd.f32 %v1794, %v1918
      %v2013 = vadd.f32 %v1795, %v1920
      %v2014 = vadd.f32 %v1796, %v1922
      %v2015 = vadd.f32 %v1797, %v1924
      %v2016 = vadd.f32 %v1798, %v1926
      %v2017 = vadd.f32 %v1799, %v1928
      %v2018 = vadd.f32 %v1800, %v1930
      %v2019 = vadd.f32 %v1801, %v1932
      %v2020 = vadd.f32 %v1802, %v1934
      %v2021 = vadd.f32 %v1803, %v1936
      %v2022 = vadd.f32 %v1804, %v1938
      %v2023 = vadd.f32 %v1805, %v1940
      %v2024 = vadd.f32 %v1806, %v1942
      %v2025 = vadd.f32 %v1807, %v1944
      %v2026 = vadd.f32 %v1808, %v1946
      %v2027 = vadd.f32 %v1809, %v1948
      %v2028 = vadd.f32 %v1810, %v1950
      %v2029 = vadd.f32 %v1811, %v1952
      %v2030 = vadd.f32 %v1812, %v1954
      %v2031 = vadd.f32 %v1813, %v1956
      %v2032 = vadd.f32 %v1814, %v1958
      %v2033 = vadd.f32 %v1815, %v1960
      %v2034 = vadd.f32 %v1816, %v1962
      %vm2035 = vcmask 1041408
      %v2036 = vrot.slane %v425, 6
      %v2037 = vrot.slane %v430, 6
      %v2038 = vsel %vm2035, %v2036, %v2037
      %v2039 = vrot.slane %v435, 6
      %v2040 = vsel %vm2035, %v2037, %v2039
      %v2041 = vrot.slane %v440, 6
      %v2042 = vsel %vm2035, %v2039, %v2041
      %v2043 = vrot.slane %v445, 6
      %v2044 = vsel %vm2035, %v2041, %v2043
      %v2045 = vrot.slane %v450, 6
      %v2046 = vsel %vm2035, %v2043, %v2045
      %v2047 = vrot.slane %v455, 6
      %v2048 = vsel %vm2035, %v2045, %v2047
      %v2049 = vrot.slane %v460, 6
      %v2050 = vsel %vm2035, %v2047, %v2049
      %v2051 = vrot.slane %v465, 6
      %v2052 = vsel %vm2035, %v2049, %v2051
      %v2053 = vrot.slane %v470, 6
      %v2054 = vsel %vm2035, %v2051, %v2053
      %v2055 = vrot.slane %v475, 6
      %v2056 = vsel %vm2035, %v2053, %v2055
      %v2057 = vrot.slane %v480, 6
      %v2058 = vsel %vm2035, %v2055, %v2057
      %v2059 = vrot.slane %v485, 6
      %v2060 = vsel %vm2035, %v2057, %v2059
      %v2061 = vrot.slane %v490, 6
      %v2062 = vsel %vm2035, %v2059, %v2061
      %v2063 = vrot.slane %v495, 6
      %v2064 = vsel %vm2035, %v2061, %v2063
      %v2065 = vrot.slane %v500, 6
      %v2066 = vsel %vm2035, %v2063, %v2065
      %v2067 = vrot.slane %v505, 6
      %v2068 = vsel %vm2035, %v2065, %v2067
      %v2069 = vrot.slane %v510, 6
      %v2070 = vsel %vm2035, %v2067, %v2069
      %v2071 = vrot.slane %v515, 6
      %v2072 = vsel %vm2035, %v2069, %v2071
      %v2073 = vrot.slane %v520, 6
      %v2074 = vsel %vm2035, %v2071, %v2073
      %v2075 = vrot.slane %v525, 6
      %v2076 = vsel %vm2035, %v2073, %v2075
      %v2077 = vrot.slane %v530, 6
      %v2078 = vsel %vm2035, %v2075, %v2077
      %v2079 = vrot.slane %v535, 6
      %v2080 = vsel %vm2035, %v2077, %v2079
      %v2081 = vrot.slane %v540, 6
      %v2082 = vsel %vm2035, %v2079, %v2081
      %v2083 = vrot.slane %v545, 6
      %v2084 = vsel %vm2035, %v2081, %v2083
      %v2085 = vrot.slane %v550, 6
      %v2086 = vsel %vm2035, %v2083, %v2085
      %v2087 = vrot.slane %v555, 6
      %v2088 = vsel %vm2035, %v2085, %v2087
      %v2089 = vrot.slane %v560, 6
      %v2090 = vsel %vm2035, %v2087, %v2089
      %v2091 = vrot.slane %v565, 6
      %v2092 = vsel %vm2035, %v2089, %v2091
      %v2093 = vrot.slane %v570, 6
      %v2094 = vsel %vm2035, %v2091, %v2093
      %v2095 = vrot.slane %v575, 6
      %v2096 = vsel %vm2035, %v2093, %v2095
      %v2097 = vrot.slane %v580, 6
      %v2098 = vsel %vm2035, %v2095, %v2097
      %v2099 = vrot.slane %v585, 6
      %v2100 = vsel %vm2035, %v2097, %v2099
      %v2101 = vrot.slane %v590, 6
      %v2102 = vsel %vm2035, %v2099, %v2101
      %v2103 = vrot.slane %v595, 6
      %v2104 = vsel %vm2035, %v2101, %v2103
      %v2105 = vrot.slane %v600, 6
      %v2106 = vsel %vm2035, %v2103, %v2105
      %v2107 = vrot.slane %v605, 6
      %v2108 = vsel %vm2035, %v2105, %v2107
      %2109 = vrot.lane.b32.xlu0 %v2038, 64
      %v2110 = vpop.permute.xlu0 %2109
      %2111 = vrot.lane.b32.xlu0 %v2040, 64
      %v2112 = vpop.permute.xlu0 %2111
      %2113 = vrot.lane.b32.xlu0 %v2042, 64
      %v2114 = vpop.permute.xlu0 %2113
      %2115 = vrot.lane.b32.xlu0 %v2044, 64
      %v2116 = vpop.permute.xlu0 %2115
      %2117 = vrot.lane.b32.xlu0 %v2046, 64
      %v2118 = vpop.permute.xlu0 %2117
      %2119 = vrot.lane.b32.xlu0 %v2048, 64
      %v2120 = vpop.permute.xlu0 %2119
      %2121 = vrot.lane.b32.xlu0 %v2050, 64
      %v2122 = vpop.permute.xlu0 %2121
      %2123 = vrot.lane.b32.xlu0 %v2052, 64
      %v2124 = vpop.permute.xlu0 %2123
      %2125 = vrot.lane.b32.xlu0 %v2054, 64
      %v2126 = vpop.permute.xlu0 %2125
      %2127 = vrot.lane.b32.xlu0 %v2056, 64
      %v2128 = vpop.permute.xlu0 %2127
      %2129 = vrot.lane.b32.xlu0 %v2058, 64
      %v2130 = vpop.permute.xlu0 %2129
      %2131 = vrot.lane.b32.xlu0 %v2060, 64
      %v2132 = vpop.permute.xlu0 %2131
      %2133 = vrot.lane.b32.xlu0 %v2062, 64
      %v2134 = vpop.permute.xlu0 %2133
      %2135 = vrot.lane.b32.xlu0 %v2064, 64
      %v2136 = vpop.permute.xlu0 %2135
      %2137 = vrot.lane.b32.xlu0 %v2066, 64
      %v2138 = vpop.permute.xlu0 %2137
      %2139 = vrot.lane.b32.xlu0 %v2068, 64
      %v2140 = vpop.permute.xlu0 %2139
      %2141 = vrot.lane.b32.xlu0 %v2070, 64
      %v2142 = vpop.permute.xlu0 %2141
      %2143 = vrot.lane.b32.xlu0 %v2072, 64
      %v2144 = vpop.permute.xlu0 %2143
      %2145 = vrot.lane.b32.xlu0 %v2074, 64
      %v2146 = vpop.permute.xlu0 %2145
      %2147 = vrot.lane.b32.xlu0 %v2076, 64
      %v2148 = vpop.permute.xlu0 %2147
      %2149 = vrot.lane.b32.xlu0 %v2078, 64
      %v2150 = vpop.permute.xlu0 %2149
      %2151 = vrot.lane.b32.xlu0 %v2080, 64
      %v2152 = vpop.permute.xlu0 %2151
      %2153 = vrot.lane.b32.xlu0 %v2082, 64
      %v2154 = vpop.permute.xlu0 %2153
      %2155 = vrot.lane.b32.xlu0 %v2084, 64
      %v2156 = vpop.permute.xlu0 %2155
      %2157 = vrot.lane.b32.xlu0 %v2086, 64
      %v2158 = vpop.permute.xlu0 %2157
      %2159 = vrot.lane.b32.xlu0 %v2088, 64
      %v2160 = vpop.permute.xlu0 %2159
      %2161 = vrot.lane.b32.xlu0 %v2090, 64
      %v2162 = vpop.permute.xlu0 %2161
      %2163 = vrot.lane.b32.xlu0 %v2092, 64
      %v2164 = vpop.permute.xlu0 %2163
      %2165 = vrot.lane.b32.xlu0 %v2094, 64
      %v2166 = vpop.permute.xlu0 %2165
      %2167 = vrot.lane.b32.xlu0 %v2096, 64
      %v2168 = vpop.permute.xlu0 %2167
      %2169 = vrot.lane.b32.xlu0 %v2098, 64
      %v2170 = vpop.permute.xlu0 %2169
      %2171 = vrot.lane.b32.xlu0 %v2100, 64
      %v2172 = vpop.permute.xlu0 %2171
      %2173 = vrot.lane.b32.xlu0 %v2102, 64
      %v2174 = vpop.permute.xlu0 %2173
      %2175 = vrot.lane.b32.xlu0 %v2104, 64
      %v2176 = vpop.permute.xlu0 %2175
      %2177 = vrot.lane.b32.xlu0 %v2106, 64
      %v2178 = vpop.permute.xlu0 %2177
      %2179 = vrot.lane.b32.xlu0 %v2108, 64
      %v2180 = vpop.permute.xlu0 %2179
      %v2217 = vadd.f32 %v1999, %v2110
      %v2218 = vadd.f32 %v2000, %v2112
      %v2219 = vadd.f32 %v2001, %v2114
      %v2220 = vadd.f32 %v2002, %v2116
      %v2221 = vadd.f32 %v2003, %v2118
      %v2222 = vadd.f32 %v2004, %v2120
      %v2223 = vadd.f32 %v2005, %v2122
      %v2224 = vadd.f32 %v2006, %v2124
      %v2225 = vadd.f32 %v2007, %v2126
      %v2226 = vadd.f32 %v2008, %v2128
      %v2227 = vadd.f32 %v2009, %v2130
      %v2228 = vadd.f32 %v2010, %v2132
      %v2229 = vadd.f32 %v2011, %v2134
      %v2230 = vadd.f32 %v2012, %v2136
      %v2231 = vadd.f32 %v2013, %v2138
      %v2232 = vadd.f32 %v2014, %v2140
      %v2233 = vadd.f32 %v2015, %v2142
      %v2234 = vadd.f32 %v2016, %v2144
      %v2235 = vadd.f32 %v2017, %v2146
      %v2236 = vadd.f32 %v2018, %v2148
      %v2237 = vadd.f32 %v2019, %v2150
      %v2238 = vadd.f32 %v2020, %v2152
      %v2239 = vadd.f32 %v2021, %v2154
      %v2240 = vadd.f32 %v2022, %v2156
      %v2241 = vadd.f32 %v2023, %v2158
      %v2242 = vadd.f32 %v2024, %v2160
      %v2243 = vadd.f32 %v2025, %v2162
      %v2244 = vadd.f32 %v2026, %v2164
      %v2245 = vadd.f32 %v2027, %v2166
      %v2246 = vadd.f32 %v2028, %v2168
      %v2247 = vadd.f32 %v2029, %v2170
      %v2248 = vadd.f32 %v2030, %v2172
      %v2249 = vadd.f32 %v2031, %v2174
      %v2250 = vadd.f32 %v2032, %v2176
      %v2251 = vadd.f32 %v2033, %v2178
      %v2252 = vadd.f32 %v2034, %v2180
      %v2254 = vlaneseq
      %v2255 = vshrl.u32 %v2254, 7
      %v2256 = vsub.s32 0, %v2255
      %v2257 = vrot.slane %v213, %v2256
      %v2259 = vadd.f32 %v2217, %v2257
      %v2260 = vadd.f32 %v2218, %v2257
      %v2261 = vadd.f32 %v2219, %v2257
      %v2262 = vadd.f32 %v2220, %v2257
      %v2263 = vadd.f32 %v2221, %v2257
      %v2264 = vadd.f32 %v2222, %v2257
      %v2265 = vadd.f32 %v2223, %v2257
      %v2266 = vadd.f32 %v2224, %v2257
      %v2267 = vadd.f32 %v2225, %v2257
      %v2268 = vadd.f32 %v2226, %v2257
      %v2269 = vadd.f32 %v2227, %v2257
      %v2270 = vadd.f32 %v2228, %v2257
      %v2271 = vadd.f32 %v2229, %v2257
      %v2272 = vadd.f32 %v2230, %v2257
      %v2273 = vadd.f32 %v2231, %v2257
      %v2274 = vadd.f32 %v2232, %v2257
      %v2275 = vadd.f32 %v2233, %v2257
      %v2276 = vadd.f32 %v2234, %v2257
      %v2277 = vadd.f32 %v2235, %v2257
      %v2278 = vadd.f32 %v2236, %v2257
      %v2279 = vadd.f32 %v2237, %v2257
      %v2280 = vadd.f32 %v2238, %v2257
      %v2281 = vadd.f32 %v2239, %v2257
      %v2282 = vadd.f32 %v2240, %v2257
      %v2283 = vadd.f32 %v2241, %v2257
      %v2284 = vadd.f32 %v2242, %v2257
      %v2285 = vadd.f32 %v2243, %v2257
      %v2286 = vadd.f32 %v2244, %v2257
      %v2287 = vadd.f32 %v2245, %v2257
      %v2288 = vadd.f32 %v2246, %v2257
      %v2289 = vadd.f32 %v2247, %v2257
      %v2290 = vadd.f32 %v2248, %v2257
      %v2291 = vadd.f32 %v2249, %v2257
      %v2292 = vadd.f32 %v2250, %v2257
      %v2293 = vadd.f32 %v2251, %v2257
      %v2294 = vadd.f32 %v2252, %v2257
      %2295 = vst.msk [vmem:[%s170] sm:$0xff] %vm214, %v2259
      %2296 = vst.msk [vmem:[%s170 + $0x8] sm:$0xff] %vm214, %v2260
      %2297 = vst.msk [vmem:[%s170 + $0x10] sm:$0xff] %vm214, %v2261
      %2298 = vst.msk [vmem:[%s170 + $0x18] sm:$0xff] %vm214, %v2262
      %2299 = vst.msk [vmem:[%s170 + $0x20] sm:$0xff] %vm214, %v2263
      %2300 = vst.msk [vmem:[%s170 + $0x28] sm:$0xff] %vm214, %v2264
      %2301 = vst.msk [vmem:[%s170 + $0x30] sm:$0xff] %vm214, %v2265
      %2302 = vst.msk [vmem:[%s170 + $0x38] sm:$0xff] %vm214, %v2266
      %2303 = vst.msk [vmem:[%s170 + $0x40] sm:$0xff] %vm214, %v2267
      %2304 = vst.msk [vmem:[%s170 + $0x48] sm:$0xff] %vm214, %v2268
      %2305 = vst.msk [vmem:[%s170 + $0x50] sm:$0xff] %vm214, %v2269
      %2306 = vst.msk [vmem:[%s170 + $0x58] sm:$0xff] %vm214, %v2270
      %2307 = vst.msk [vmem:[%s170 + $0x60] sm:$0xff] %vm214, %v2271
      %2308 = vst.msk [vmem:[%s170 + $0x68] sm:$0xff] %vm214, %v2272
      %2309 = vst.msk [vmem:[%s170 + $0x70] sm:$0xff] %vm214, %v2273
      %2310 = vst.msk [vmem:[%s170 + $0x78] sm:$0xff] %vm214, %v2274
      %2311 = vst.msk [vmem:[%s170 + $0x80] sm:$0xff] %vm214, %v2275
      %2312 = vst.msk [vmem:[%s170 + $0x88] sm:$0xff] %vm214, %v2276
      %2313 = vst.msk [vmem:[%s170 + $0x90] sm:$0xff] %vm214, %v2277
      %2314 = vst.msk [vmem:[%s170 + $0x98] sm:$0xff] %vm214, %v2278
      %2315 = vst.msk [vmem:[%s170 + $0xa0] sm:$0xff] %vm214, %v2279
      %2316 = vst.msk [vmem:[%s170 + $0xa8] sm:$0xff] %vm214, %v2280
      %2317 = vst.msk [vmem:[%s170 + $0xb0] sm:$0xff] %vm214, %v2281
      %2318 = vst.msk [vmem:[%s170 + $0xb8] sm:$0xff] %vm214, %v2282
      %2319 = vst.msk [vmem:[%s170 + $0xc0] sm:$0xff] %vm214, %v2283
      %2320 = vst.msk [vmem:[%s170 + $0xc8] sm:$0xff] %vm214, %v2284
      %2321 = vst.msk [vmem:[%s170 + $0xd0] sm:$0xff] %vm214, %v2285
      %2322 = vst.msk [vmem:[%s170 + $0xd8] sm:$0xff] %vm214, %v2286
      %2323 = vst.msk [vmem:[%s170 + $0xe0] sm:$0xff] %vm214, %v2287
      %2324 = vst.msk [vmem:[%s170 + $0xe8] sm:$0xff] %vm214, %v2288
      %2325 = vst.msk [vmem:[%s170 + $0xf0] sm:$0xff] %vm214, %v2289
      %2326 = vst.msk [vmem:[%s170 + $0xf8] sm:$0xff] %vm214, %v2290
      %2327 = vst.msk [vmem:[%s170 + $0x100] sm:$0xff] %vm214, %v2291
      %2328 = vst.msk [vmem:[%s170 + $0x108] sm:$0xff] %vm214, %v2292
      %2329 = vst.msk [vmem:[%s170 + $0x110] sm:$0xff] %vm214, %v2293
      %2330 = vst.msk [vmem:[%s170 + $0x118] sm:$0xff] %vm214, %v2294
      %p2331 = scmp.lt.s32.totalorder %s14, 1
      %s2332 = scalar_select %p2331, %s14, 1
      %s2333 = smul.addr %s2332, 36
      %s2334 = smul.addr %s2333, 8
      %s2335 = scalar_lea.vmem %s3, %s2334
      // Predicated region
      $region33: #{feature_extractor_pallas.4} parent=31 // pred_check
        %p2336 = pneg %p100
      $region34: #{feature_extractor_pallas.4} parent=31 // pred_check_branch
        %2338 = sbr.rel (%p2336) target = $region36
      $region35: #{feature_extractor_pallas.4} parent=31 // pred_region
        _
      $region36: #{feature_extractor_pallas.4} parent=31 // pred_fallthru
        _
    $region32: #{feature_extractor_pallas.4} parent=5 // pred_fallthru
      _
    %p2339 = scmp.le.s32.totalorder 2, %s9
    // Predicated region
    $region37: #{feature_extractor_pallas.4} parent=5 // pred_check
      %p2340 = pneg %p2339
    $region38: #{feature_extractor_pallas.4} parent=5 // pred_check_branch
      %2342 = sbr.rel (%p2340) target = $region40
    $region39: #{feature_extractor_pallas.4} parent=5 // pred_region
      %s2343 = ssub.s32 %s9, 2
      // Predicated region
      $region41: #{feature_extractor_pallas.4} parent=39 // pred_check
        %p2344 = pneg %p106
      $region42: #{feature_extractor_pallas.4} parent=39 // pred_check_branch
        %2346 = sbr.rel (%p2344) target = $region44
      $region43: #{feature_extractor_pallas.4} parent=39 // pred_region
        %p2347 = scmp.lt.s32.totalorder %s15, 1
        %s2348 = scalar_select %p2347, %s15, 1
        %s2349 = smul.addr %s2348, 36
        %s2350 = smul.addr %s2349, 8
        %s2351 = scalar_lea.vmem %s3, %s2350
      $region44: #{feature_extractor_pallas.4} parent=39 // pred_fallthru
        _
    $region40: #{feature_extractor_pallas.4} parent=5 // pred_fallthru
      _
  $region6: #{feature_extractor_pallas.4} parent=0 // loop_footer
    %s13 = sadd.s32 1, %s9
  $region7: #{feature_extractor_pallas.4} parent=0 // loop_footer_branch
    %8 = sbr.rel target = $region3
  $region8: #{feature_extractor_pallas.4} parent=0 // loop_exit
    _

// kernel: feature_extractor_pallas.5
$region0: #{feature_extractor_pallas.5}
  #allocation0 [shape = 'u32[]', space=smem, size = 0x4, offset = 0x4, fixed_abs, tag = 'smem constant byte address 0x4 - core index']
  #allocation1 [shape = 'u32[144,128]{1,0:T(1,128)}', space=vmem, size = 0x12000, scoped, tag = 'internal scratch']
  #allocation2 [shape = 'f32[102,16]{1,0:T(8,128)}', space=vmem, size = 0xd000, scoped, tag = 'scratch operand']
  %s0 = inlined_call_operand.vmem [shape: f32[2,102,32], index: 0, kind: input, shape index: {}]
  %s1 = inlined_call_operand.vmem [shape: f32[102,1], index: 1, kind: input, shape index: {}]
  %s2 = inlined_call_operand.vmem [shape: f32[32,16], index: 2, kind: input, shape index: {}]
  %s3 = inlined_call_operand.vmem [shape: f32[4,16,144], index: 3, kind: input, shape index: {}]
  %s4 = inlined_call_operand.vmem [shape: f32[5,16], index: 4, kind: input, shape index: {}]
  %s5 = inlined_call_operand.vmem [shape: f32[2,16], index: 5, kind: input, shape index: {}]
  %s6 = inlined_call_operand.vmem [shape: f32[5], index: 6, kind: input, shape index: {}]
  %s7 = inlined_call_operand.vmem [shape: f32[2,80,16], index: 7, kind: output, shape index: {}]
  %s8 = sld [smem:[#allocation0]]
  $region65: #{feature_extractor_pallas.5} parent=0
    _
  %s10 = ssub.s32 1, %s8
  %s11 = scalar_select 0, %s10, %s8
  $region1: #{feature_extractor_pallas.5} parent=0
    #allocation3 [shape = 'u8[512]{0}', space=smem, size = 0x200, scoped, tag = 'input window, operand 6, single buffered']
    #allocation4 [shape = 's32[2]{0}', space=sflag, size = 0x8, scoped, tag = 'scoped memory for feature_extractor_pallas.5']
    %12 = vsyncpa [#allocation4], 0
    loop: start=0, step=1, limit=4
    $region2: #{feature_extractor_pallas.5} parent=1 // loop_pre_header
      _
    $region3: #{feature_extractor_pallas.5} parent=1 // loop_header
      %s14 = sphi 0, %s18
      %p15 = scmp.ge.s32.totalorder %s14, 4
      %s24 = sphi 0, %s26
      %s27 = sphi 0, %s24
      %s28 = sphi 0, %s27
      %s44 = sphi 0, %s28
      %s48 = sphi 0, %s48
      %s50 = sphi 0, %s48
      %s51 = sphi 0, %s50
      %s65 = sphi 0, %s51
      %s69 = sphi 0, %s69
      %s71 = sphi 0, %s69
      %s72 = sphi 0, %s71
      %s86 = sphi 0, %s72
      %s90 = sphi 0, %s90
      %s92 = sphi 0, %s90
      %s93 = sphi 0, %s92
      %s107 = sphi 0, %s93
      %s111 = sphi 0, %s111
      %s113 = sphi 0, %s111
      %s114 = sphi 0, %s113
      %s128 = sphi 0, %s114
      %s132 = sphi 0, %s132
      %s134 = sphi 0, %s132
      %s135 = sphi 0, %s134
      %s149 = sphi 0, %s135
      %s153 = sphi 0, %s153
      %s155 = sphi 0, %s153
      %s156 = sphi 0, %s155
      %s170 = sphi 0, %s156
      %s176 = sphi 0, %s178
      %s179 = sphi 0, %s176
      %s180 = sphi 0, %s179
      %s196 = sphi 0, %s180
    $region4: #{feature_extractor_pallas.5} parent=1 // loop_header_branch
      %17 = sbr.rel (%p15) target = $region8
    $region5: #{feature_extractor_pallas.5} parent=1 // loop_body
      %s19 = ssub.s32 %s14, 1
      %s20 = ssub.s32 %s14, 2
      %s21 = sadd.s32 %s14, 1
      %s22 = ssub.s32 %s14, %s21
      %p23 = scmp.eq.s32.totalorder %s22, 0
      %s25 = sadd.s32 %s24, 1
      %s26 = scalar_select %p23, %s24, %s25
      %p29 = pneg %p23
      %p30 = scmp.eq.s32.totalorder %s14, 1
      %p31 = por %p29, %p30
      %p32 = scmp.ne.s32.totalorder %s24, %s27
      %p33 = scmp.eq.s32.totalorder %s14, 0
      %p34 = por %p32, %p33
      %p35 = scmp.ne.s32.totalorder %s24, %s27
      %p36 = scmp.eq.s32.totalorder %s19, 1
      %p37 = por %p35, %p36
      %p38 = scmp.ne.s32.totalorder %s27, %s28
      %p39 = scmp.eq.s32.totalorder %s19, 0
      %p40 = por %p38, %p39
      %p41 = scmp.ne.s32.totalorder %s27, %s28
      %p42 = scmp.eq.s32.totalorder %s20, 1
      %p43 = por %p41, %p42
      %p45 = scmp.ne.s32.totalorder %s28, %s44
      %p46 = scmp.eq.s32.totalorder %s20, 0
      %p47 = por %p45, %p46
      %s49 = sadd.s32 %s48, 1
      %p52 = scmp.eq.s32.totalorder %s14, 1
      %p53 = scmp.ne.s32.totalorder %s48, %s50
      %p54 = scmp.eq.s32.totalorder %s14, 0
      %p55 = por %p53, %p54
      %p56 = scmp.ne.s32.totalorder %s48, %s50
      %p57 = scmp.eq.s32.totalorder %s19, 1
      %p58 = por %p56, %p57
      %p59 = scmp.ne.s32.totalorder %s50, %s51
      %p60 = scmp.eq.s32.totalorder %s19, 0
      %p61 = por %p59, %p60
      %p62 = scmp.ne.s32.totalorder %s50, %s51
      %p63 = scmp.eq.s32.totalorder %s20, 1
      %p64 = por %p62, %p63
      %p66 = scmp.ne.s32.totalorder %s51, %s65
      %p67 = scmp.eq.s32.totalorder %s20, 0
      %p68 = por %p66, %p67
      %s70 = sadd.s32 %s69, 1
      %p73 = scmp.eq.s32.totalorder %s14, 1
      %p74 = scmp.ne.s32.totalorder %s69, %s71
      %p75 = scmp.eq.s32.totalorder %s14, 0
      %p76 = por %p74, %p75
      %p77 = scmp.ne.s32.totalorder %s69, %s71
      %p78 = scmp.eq.s32.totalorder %s19, 1
      %p79 = por %p77, %p78
      %p80 = scmp.ne.s32.totalorder %s71, %s72
      %p81 = scmp.eq.s32.totalorder %s19, 0
      %p82 = por %p80, %p81
      %p83 = scmp.ne.s32.totalorder %s71, %s72
      %p84 = scmp.eq.s32.totalorder %s20, 1
      %p85 = por %p83, %p84
      %p87 = scmp.ne.s32.totalorder %s72, %s86
      %p88 = scmp.eq.s32.totalorder %s20, 0
      %p89 = por %p87, %p88
      %s91 = sadd.s32 %s90, 1
      %p94 = scmp.eq.s32.totalorder %s14, 1
      %p95 = scmp.ne.s32.totalorder %s90, %s92
      %p96 = scmp.eq.s32.totalorder %s14, 0
      %p97 = por %p95, %p96
      %p98 = scmp.ne.s32.totalorder %s90, %s92
      %p99 = scmp.eq.s32.totalorder %s19, 1
      %p100 = por %p98, %p99
      %p101 = scmp.ne.s32.totalorder %s92, %s93
      %p102 = scmp.eq.s32.totalorder %s19, 0
      %p103 = por %p101, %p102
      %p104 = scmp.ne.s32.totalorder %s92, %s93
      %p105 = scmp.eq.s32.totalorder %s20, 1
      %p106 = por %p104, %p105
      %p108 = scmp.ne.s32.totalorder %s93, %s107
      %p109 = scmp.eq.s32.totalorder %s20, 0
      %p110 = por %p108, %p109
      %s112 = sadd.s32 %s111, 1
      %p115 = scmp.eq.s32.totalorder %s14, 1
      %p116 = scmp.ne.s32.totalorder %s111, %s113
      %p117 = scmp.eq.s32.totalorder %s14, 0
      %p118 = por %p116, %p117
      %p119 = scmp.ne.s32.totalorder %s111, %s113
      %p120 = scmp.eq.s32.totalorder %s19, 1
      %p121 = por %p119, %p120
      %p122 = scmp.ne.s32.totalorder %s113, %s114
      %p123 = scmp.eq.s32.totalorder %s19, 0
      %p124 = por %p122, %p123
      %p125 = scmp.ne.s32.totalorder %s113, %s114
      %p126 = scmp.eq.s32.totalorder %s20, 1
      %p127 = por %p125, %p126
      %p129 = scmp.ne.s32.totalorder %s114, %s128
      %p130 = scmp.eq.s32.totalorder %s20, 0
      %p131 = por %p129, %p130
      %s133 = sadd.s32 %s132, 1
      %p136 = scmp.eq.s32.totalorder %s14, 1
      %p137 = scmp.ne.s32.totalorder %s132, %s134
      %p138 = scmp.eq.s32.totalorder %s14, 0
      %p139 = por %p137, %p138
      %p140 = scmp.ne.s32.totalorder %s132, %s134
      %p141 = scmp.eq.s32.totalorder %s19, 1
      %p142 = por %p140, %p141
      %p143 = scmp.ne.s32.totalorder %s134, %s135
      %p144 = scmp.eq.s32.totalorder %s19, 0
      %p145 = por %p143, %p144
      %p146 = scmp.ne.s32.totalorder %s134, %s135
      %p147 = scmp.eq.s32.totalorder %s20, 1
      %p148 = por %p146, %p147
      %p150 = scmp.ne.s32.totalorder %s135, %s149
      %p151 = scmp.eq.s32.totalorder %s20, 0
      %p152 = por %p150, %p151
      %s154 = sadd.s32 %s153, 1
      %p157 = scmp.eq.s32.totalorder %s14, 1
      %p158 = scmp.ne.s32.totalorder %s153, %s155
      %p159 = scmp.eq.s32.totalorder %s14, 0
      %p160 = por %p158, %p159
      %p161 = scmp.ne.s32.totalorder %s153, %s155
      %p162 = scmp.eq.s32.totalorder %s19, 1
      %p163 = por %p161, %p162
      %p164 = scmp.ne.s32.totalorder %s155, %s156
      %p165 = scmp.eq.s32.totalorder %s19, 0
      %p166 = por %p164, %p165
      %p167 = scmp.ne.s32.totalorder %s155, %s156
      %p168 = scmp.eq.s32.totalorder %s20, 1
      %p169 = por %p167, %p168
      %p171 = scmp.ne.s32.totalorder %s156, %s170
      %p172 = scmp.eq.s32.totalorder %s20, 0
      %p173 = por %p171, %p172
      %s174 = ssub.s32 %s14, %s21
      %p175 = scmp.eq.s32.totalorder %s174, 0
      %s177 = sadd.s32 %s176, 1
      %s178 = scalar_select %p175, %s176, %s177
      %p181 = pneg %p175
      %p182 = scmp.eq.s32.totalorder %s14, 1
      %p183 = por %p181, %p182
      %p184 = scmp.ne.s32.totalorder %s176, %s179
      %p185 = scmp.eq.s32.totalorder %s14, 0
      %p186 = por %p184, %p185
      %p187 = scmp.ne.s32.totalorder %s176, %s179
      %p188 = scmp.eq.s32.totalorder %s19, 1
      %p189 = por %p187, %p188
      %p190 = scmp.ne.s32.totalorder %s179, %s180
      %p191 = scmp.eq.s32.totalorder %s19, 0
      %p192 = por %p190, %p191
      %p193 = scmp.ne.s32.totalorder %s179, %s180
      %p194 = scmp.eq.s32.totalorder %s20, 1
      %p195 = por %p193, %p194
      %p197 = scmp.ne.s32.totalorder %s180, %s196
      %p198 = scmp.eq.s32.totalorder %s20, 0
      %p199 = por %p197, %p198
      %p200 = scmp.le.s32.totalorder 1, %s14
      %p201 = scmp.lt.s32.totalorder %s14, 3
      %p202 = pnand %p200, %p201
      %p203 = pneg %p202
      // Predicated region
      $region9: #{feature_extractor_pallas.5} parent=5 // pred_check
        _
      $region10: #{feature_extractor_pallas.5} parent=5 // pred_check_branch
        %205 = sbr.rel (%p202) target = $region12
      $region11: #{feature_extractor_pallas.5} parent=5 // pred_region
        %s206 = ssub.s32 %s14, 1
        // Predicated region
        $region13: #{feature_extractor_pallas.5} parent=11 // pred_check
          %p207 = pneg %p61
        $region14: #{feature_extractor_pallas.5} parent=11 // pred_check_branch
          %209 = sbr.rel (%p207) target = $region16
        $region15: #{feature_extractor_pallas.5} parent=11 // pred_region
          _
        $region16: #{feature_extractor_pallas.5} parent=11 // pred_fallthru
          _
        // Predicated region
        $region17: #{feature_extractor_pallas.5} parent=11 // pred_check
          %p210 = pneg %p82
        $region18: #{feature_extractor_pallas.5} parent=11 // pred_check_branch
          %212 = sbr.rel (%p210) target = $region20
        $region19: #{feature_extractor_pallas.5} parent=11 // pred_region
          _
        $region20: #{feature_extractor_pallas.5} parent=11 // pred_fallthru
          _
        // Predicated region
        $region21: #{feature_extractor_pallas.5} parent=11 // pred_check
          %p213 = pneg %p103
        $region22: #{feature_extractor_pallas.5} parent=11 // pred_check_branch
          %215 = sbr.rel (%p213) target = $region24
        $region23: #{feature_extractor_pallas.5} parent=11 // pred_region
          _
        $region24: #{feature_extractor_pallas.5} parent=11 // pred_fallthru
          _
        // Predicated region
        $region25: #{feature_extractor_pallas.5} parent=11 // pred_check
          %p216 = pneg %p124
        $region26: #{feature_extractor_pallas.5} parent=11 // pred_check_branch
          %218 = sbr.rel (%p216) target = $region28
        $region27: #{feature_extractor_pallas.5} parent=11 // pred_region
          _
        $region28: #{feature_extractor_pallas.5} parent=11 // pred_fallthru
          _
        // Predicated region
        $region29: #{feature_extractor_pallas.5} parent=11 // pred_check
          %p219 = pneg %p145
        $region30: #{feature_extractor_pallas.5} parent=11 // pred_check_branch
          %221 = sbr.rel (%p219) target = $region32
        $region31: #{feature_extractor_pallas.5} parent=11 // pred_region
          _
        $region32: #{feature_extractor_pallas.5} parent=11 // pred_fallthru
          _
        // Predicated region
        $region33: #{feature_extractor_pallas.5} parent=11 // pred_check
          %p222 = pneg %p166
        $region34: #{feature_extractor_pallas.5} parent=11 // pred_check_branch
          %224 = sbr.rel (%p222) target = $region36
        $region35: #{feature_extractor_pallas.5} parent=11 // pred_region
          %s226 = ssub.s32 16, 16
          %227 = vsyncadd [#allocation4], %s226
          %s229 = sshll.u32 %s6, 4
          %s230 = int_to_ptr.vmem [resolvable:$true] %s229
          %232 = dma.vmem_to_smem %s230, 16, [#allocation3], [#allocation4]
        $region36: #{feature_extractor_pallas.5} parent=11 // pred_fallthru
          _
      $region12: #{feature_extractor_pallas.5} parent=5 // pred_fallthru
        _
      %p233 = scmp.lt.s32.totalorder %s14, 2
      // Predicated region
      $region37: #{feature_extractor_pallas.5} parent=5 // pred_check
        %p234 = pneg %p233
      $region38: #{feature_extractor_pallas.5} parent=5 // pred_check_branch
        %236 = sbr.rel (%p234) target = $region40
      $region39: #{feature_extractor_pallas.5} parent=5 // pred_region
        // Predicated region
        $region41: #{feature_extractor_pallas.5} parent=39 // pred_check
          %p237 = pneg %p34
        $region42: #{feature_extractor_pallas.5} parent=39 // pred_check_branch
          %239 = sbr.rel (%p237) target = $region44
        $region43: #{feature_extractor_pallas.5} parent=39 // pred_region
          %p240 = scmp.lt.s32.totalorder %s14, 1
          %s241 = scalar_select %p240, %s14, 1
          %s242 = smul.addr %s241, 13
          %s243 = smul.addr %s242, 8
          %s244 = scalar_lea.vmem %s0, %s243
        $region44: #{feature_extractor_pallas.5} parent=39 // pred_fallthru
          _
      $region40: #{feature_extractor_pallas.5} parent=5 // pred_fallthru
        _
      %p245 = scmp.le.s32.totalorder 1, %s14
      %p246 = scmp.lt.s32.totalorder %s14, 3
      %p247 = pnand %p245, %p246
      %p248 = pneg %p247
      // Predicated region
      $region45: #{feature_extractor_pallas.5} parent=5 // pred_check
        _
      $region46: #{feature_extractor_pallas.5} parent=5 // pred_check_branch
        %250 = sbr.rel (%p247) target = $region48
      $region47: #{feature_extractor_pallas.5} parent=5 // pred_region
        %s251 = ssub.s32 %s14, 1
        // Predicated region
        $region49: #{feature_extractor_pallas.5} parent=47 // pred_check
          %p252 = pneg %p166
        $region50: #{feature_extractor_pallas.5} parent=47 // pred_check_branch
          %254 = sbr.rel (%p252) target = $region52
        $region51: #{feature_extractor_pallas.5} parent=47 // pred_region
          %255 = dma.done [#allocation4], 16
        $region52: #{feature_extractor_pallas.5} parent=47 // pred_fallthru
          _
        %256 = sfence
        %p257 = scmp.lt.s32.totalorder %s19, 1
        %s258 = scalar_select %p257, %s19, 1
        %s259 = smul.addr %s258, 13
        %s260 = smul.addr %s259, 8
        %s261 = scalar_lea.vmem %s0, %s260
        %p262 = pneg %p40
        %p263 = pneg %p37
        %p264 = pneg %p61
        %p265 = pneg %p58
        %p266 = pneg %p82
        %p267 = pneg %p79
        %p268 = pneg %p103
        %p269 = pneg %p100
        %p270 = pneg %p124
        %p271 = pneg %p121
        %p272 = pneg %p145
        %p273 = pneg %p142
        %p274 = pneg %p166
        %p275 = pneg %p163
        %p276 = pneg %p192
        %p277 = pneg %p189
        %p278 = scmp.lt.s32.totalorder %s19, 1
        %s279 = scalar_select %p278, %s19, 1
        %s280 = smul.addr %s279, 10
        %s281 = smul.addr %s280, 8
        %s282 = scalar_lea.vmem %s7, %s281
        %p283 = scmp.lt.s32.totalorder %s19, 1
        %s284 = scalar_select %p283, %s19, 1
        %s285 = smul.addr %s284, 13
        %s286 = smul.addr %s285, 8
        %s287 = scalar_lea.vmem %s0, %s286
        %p288 = scmp.lt.s32.totalorder %s19, 1
        %s289 = scalar_select %p288, %s19, 1
        %s290 = smul.addr %s289, 10
        %s291 = smul.addr %s290, 8
        %s292 = scalar_lea.vmem %s7, %s291
        %v293 = vld [vmem:[%s1] sm:$0xff]
        %v294 = vld [vmem:[%s1 + $0x8] sm:$0xff]
        %v295 = vld [vmem:[%s1 + $0x10] sm:$0xff]
        %v296 = vld [vmem:[%s1 + $0x18] sm:$0xff]
        %v297 = vld [vmem:[%s1 + $0x20] sm:$0xff]
        %v298 = vld [vmem:[%s1 + $0x28] sm:$0xff]
        %v299 = vld [vmem:[%s1 + $0x30] sm:$0xff]
        %v300 = vld [vmem:[%s1 + $0x38] sm:$0xff]
        %v301 = vld [vmem:[%s1 + $0x40] sm:$0xff]
        %v302 = vld [vmem:[%s1 + $0x48] sm:$0xff]
        %v303 = vld [vmem:[%s1 + $0x50] sm:$0xff]
        %v304 = vld [vmem:[%s1 + $0x58] sm:$0xff]
        %v305 = vld [vmem:[%s1 + $0x60] sm:$0x3f]
        %v306 = vld [vmem:[%s1 + $0xb] sm:$0xff]
        %v307 = vld [vmem:[%s1 + $0x13] sm:$0xff]
        %v308 = vld [vmem:[%s1 + $0x1b] sm:$0xff]
        %v309 = vld [vmem:[%s1 + $0x23] sm:$0xff]
        %v310 = vld [vmem:[%s1 + $0x2b] sm:$0xff]
        %v311 = vld [vmem:[%s1 + $0x33] sm:$0xff]
        %v312 = vld [vmem:[%s1 + $0x3b] sm:$0xff]
        %v313 = vld [vmem:[%s1 + $0x43] sm:$0xff]
        %v314 = vld [vmem:[%s1 + $0x4b] sm:$0xff]
        %v315 = vld [vmem:[%s1 + $0x53] sm:$0xff]
        %v316 = vld [vmem:[%s287] sm:$0xff]
        %v317 = vld [vmem:[%s287 + $0x8] sm:$0xff]
        %v318 = vld [vmem:[%s287 + $0x10] sm:$0xff]
        %v319 = vld [vmem:[%s287 + $0x18] sm:$0xff]
        %v320 = vld [vmem:[%s287 + $0x20] sm:$0xff]
        %v321 = vld [vmem:[%s287 + $0x28] sm:$0xff]
        %v322 = vld [vmem:[%s287 + $0x30] sm:$0xff]
        %v323 = vld [vmem:[%s287 + $0x38] sm:$0xff]
        %v324 = vld [vmem:[%s287 + $0x40] sm:$0xff]
        %v325 = vld [vmem:[%s287 + $0x48] sm:$0xff]
        %v326 = vld [vmem:[%s287 + $0x50] sm:$0xff]
        %v327 = vld [vmem:[%s287 + $0x58] sm:$0xff]
        %v328 = vld [vmem:[%s287 + $0x60] sm:$0x3f]
        %v329 = vld [vmem:[%s2] sm:$0xff]
        %v330 = vld [vmem:[%s2 + $0x8] sm:$0xff]
        %v331 = vld [vmem:[%s2 + $0x10] sm:$0xff]
        %v332 = vld [vmem:[%s2 + $0x18] sm:$0xff]
        %v333 = vld [vmem:[%s4] sm:$0x1]
        %v334 = vlaneseq
        %v335 = vshrl.u32 %v334, 7
        %v336 = vsub.s32 0, %v335
        %v337 = vrot.slane %v333, %v336
        %vm338 = vcmask 261120
        %v340 = vsel %vm338, %v316, 0
        %v343 = vsel %vm338, %v317, 0
        %v346 = vsel %vm338, %v318, 0
        %v349 = vsel %vm338, %v319, 0
        %v352 = vsel %vm338, %v320, 0
        %v355 = vsel %vm338, %v321, 0
        %v358 = vsel %vm338, %v322, 0
        %v361 = vsel %vm338, %v323, 0
        %v364 = vsel %vm338, %v324, 0
        %v367 = vsel %vm338, %v325, 0
        %v370 = vsel %vm338, %v326, 0
        %v373 = vsel %vm338, %v327, 0
        %v376 = vsel %vm338, %v328, 0
        %378 = vmatprep.subr.mxu0 0.0
        %379 = vmatpush1.msra.mxu0 %v329
        %380 = vmatprep.subr.mxu0 0.0
        %381 = vmatpush1.msra.mxu0 %v330
        %382 = vmatprep.subr.mxu0 0.0
        %383 = vmatpush1.msra.mxu0 %v331
        %384 = vmatprep.subr.mxu0 0.0
        %385 = vmatpush1.msra.mxu0 %v332
        %386 = vmatprep.subr.mxu0 0.0
        %387 = vmatpush1.msra.mxu0 0.0
        %388 = vmatprep.subr.mxu0 0.0
        %389 = vmatpush1.msra.mxu0 0.0
        %390 = vmatprep.subr.mxu0 0.0
        %391 = vmatpush1.msra.mxu0 0.0
        %392 = vmatprep.subr.mxu0 0.0
        %393 = vmatpush1.msra.mxu0 0.0
        %394 = vmatprep.subr.mxu0 0.0
        %395 = vmatpush1.msra.mxu0 0.0
        %396 = vmatprep.subr.mxu0 0.0
        %397 = vmatpush1.msra.mxu0 0.0
        %398 = vmatprep.subr.mxu0 0.0
        %399 = vmatpush1.msra.mxu0 0.0
        %400 = vmatprep.subr.mxu0 0.0
        %401 = vmatpush1.msra.mxu0 0.0
        %402 = vmatprep.subr.mxu0 0.0
        %403 = vmatpush1.msra.mxu0 0.0
        %404 = vmatprep.subr.mxu0 0.0
        %405 = vmatpush1.msra.mxu0 0.0
        %406 = vmatprep.subr.mxu0 0.0
        %407 = vmatpush1.msra.mxu0 0.0
        %408 = vmatprep.subr.mxu0 0.0
        %409 = vmatpush1.msra.mxu0 0.0
        %410 = vmatprep.subr.mxu0 0.0
        %411 = vmatpush1.msra.mxu0 0.0
        %412 = vmatprep.subr.mxu0 0.0
        %413 = vmatpush1.msra.mxu0 0.0
        %414 = vmatprep.subr.mxu0 0.0
        %415 = vmatpush1.msra.mxu0 0.0
        %416 = vmatprep.subr.mxu0 0.0
        %417 = vmatpush1.msra.mxu0 0.0
        %418 = vmatprep.subr.mxu0 0.0
        %419 = vmatpush1.msra.mxu0 0.0
        %420 = vmatprep.subr.mxu0 0.0
        %421 = vmatpush1.msra.mxu0 0.0
        %422 = vmatprep.subr.mxu0 0.0
        %423 = vmatpush1.msra.mxu0 0.0
        %424 = vmatprep.subr.mxu0 0.0
        %425 = vmatpush1.msra.mxu0 0.0
        %426 = vmatprep.subr.mxu0 0.0
        %427 = vmatpush1.msra.mxu0 0.0
        %428 = vmatprep.subr.mxu0 0.0
        %429 = vmatpush1.msra.mxu0 0.0
        %430 = vmatprep.subr.mxu0 0.0
        %431 = vmatpush1.msra.mxu0 0.0
        %432 = vmatprep.subr.mxu0 0.0
        %433 = vmatpush1.msra.mxu0 0.0
        %434 = vmatprep.subr.mxu0 0.0
        %435 = vmatpush1.msra.mxu0 0.0
        %436 = vmatprep.subr.mxu0 0.0
        %437 = vmatpush1.msra.mxu0 0.0
        %438 = vmatprep.subr.mxu0 0.0
        %439 = vmatpush1.msra.mxu0 0.0
        %440 = vmatprep.subr.mxu0 0.0
        %441 = vmatpush1.msra.mxu0 0.0
        %442 = vmatprep.mubr.f32.mxu0 0.0
        %443 = vmatmul.mubr.f32.gmra.mrb[0].mxu0 %v340
        %v444 = vpop.f32.mrb[0].mxu0
        %v445 = vadd.f32 %v337, %v444
        %v446 = vpop.f32.mrb[0].mxu0
        %447 = vmatprep.mubr.f32.mxu0 0.0
        %448 = vmatmul.mubr.f32.gmra.mrb[0].mxu0 %v343
        %v449 = vpop.f32.mrb[0].mxu0
        %v450 = vadd.f32 %v337, %v449
        %v451 = vpop.f32.mrb[0].mxu0
        %452 = vmatprep.mubr.f32.mxu0 0.0
        %453 = vmatmul.mubr.f32.gmra.mrb[0].mxu0 %v346
        %v454 = vpop.f32.mrb[0].mxu0
        %v455 = vadd.f32 %v337, %v454
        %v456 = vpop.f32.mrb[0].mxu0
        %457 = vmatprep.mubr.f32.mxu0 0.0
        %458 = vmatmul.mubr.f32.gmra.mrb[0].mxu0 %v349
        %v459 = vpop.f32.mrb[0].mxu0
        %v460 = vadd.f32 %v337, %v459
        %v461 = vpop.f32.mrb[0].mxu0
        %462 = vmatprep.mubr.f32.mxu0 0.0
        %463 = vmatmul.mubr.f32.gmra.mrb[0].mxu0 %v352
        %v464 = vpop.f32.mrb[0].mxu0
        %v465 = vadd.f32 %v337, %v464
        %v466 = vpop.f32.mrb[0].mxu0
        %467 = vmatprep.mubr.f32.mxu0 0.0
        %468 = vmatmul.mubr.f32.gmra.mrb[0].mxu0 %v355
        %v469 = vpop.f32.mrb[0].mxu0
        %v470 = vadd.f32 %v337, %v469
        %v471 = vpop.f32.mrb[0].mxu0
        %472 = vmatprep.mubr.f32.mxu0 0.0
        %473 = vmatmul.mubr.f32.gmra.mrb[0].mxu0 %v358
        %v474 = vpop.f32.mrb[0].mxu0
        %v475 = vadd.f32 %v337, %v474
        %v476 = vpop.f32.mrb[0].mxu0
        %477 = vmatprep.mubr.f32.mxu0 0.0
        %478 = vmatmul.mubr.f32.gmra.mrb[0].mxu0 %v361
        %v479 = vpop.f32.mrb[0].mxu0
        %v480 = vadd.f32 %v337, %v479
        %v481 = vpop.f32.mrb[0].mxu0
        %482 = vmatprep.mubr.f32.mxu0 0.0
        %483 = vmatmul.mubr.f32.gmra.mrb[0].mxu0 %v364
        %v484 = vpop.f32.mrb[0].mxu0
        %v485 = vadd.f32 %v337, %v484
        %v486 = vpop.f32.mrb[0].mxu0
        %487 = vmatprep.mubr.f32.mxu0 0.0
        %488 = vmatmul.mubr.f32.gmra.mrb[0].mxu0 %v367
        %v489 = vpop.f32.mrb[0].mxu0
        %v490 = vadd.f32 %v337, %v489
        %v491 = vpop.f32.mrb[0].mxu0
        %492 = vmatprep.mubr.f32.mxu0 0.0
        %493 = vmatmul.mubr.f32.gmra.mrb[0].mxu0 %v370
        %v494 = vpop.f32.mrb[0].mxu0
        %v495 = vadd.f32 %v337, %v494
        %v496 = vpop.f32.mrb[0].mxu0
        %497 = vmatprep.mubr.f32.mxu0 0.0
        %498 = vmatmul.mubr.f32.gmra.mrb[0].mxu0 %v373
        %v499 = vpop.f32.mrb[0].mxu0
        %v500 = vadd.f32 %v337, %v499
        %v501 = vpop.f32.mrb[0].mxu0
        %502 = vmatprep.mubr.f32.mxu0 0.0
        %503 = vmatmul.mubr.f32.gmra.mrb[0].mxu0 %v376
        %v504 = vpop.f32.mrb[0].mxu0
        %v505 = vadd.f32 %v337, %v504
        %v506 = vpop.f32.mrb[0].mxu0
        %507 = vdwg.mxu0
        %s508 = sld [smem:[#allocation3]]
        %vm509 = vcmp.ge.f32.partialorder %v445, 0.0
        %vm510 = vcmp.ge.f32.partialorder %v450, 0.0
        %vm511 = vcmp.ge.f32.partialorder %v455, 0.0
        %vm512 = vcmp.ge.f32.partialorder %v460, 0.0
        %vm513 = vcmp.ge.f32.partialorder %v465, 0.0
        %vm514 = vcmp.ge.f32.partialorder %v470, 0.0
        %vm515 = vcmp.ge.f32.partialorder %v475, 0.0
        %vm516 = vcmp.ge.f32.partialorder %v480, 0.0
        %vm517 = vcmp.ge.f32.partialorder %v485, 0.0
        %vm518 = vcmp.ge.f32.partialorder %v490, 0.0
        %vm519 = vcmp.ge.f32.partialorder %v495, 0.0
        %vm520 = vcmp.ge.f32.partialorder %v500, 0.0
        %vm521 = vcmp.ge.f32.partialorder %v505, 0.0
        %v522 = vstv %s508
        %v523 = vmul.f32 %v522, %v445
        %v524 = vmul.f32 %v522, %v450
        %v525 = vmul.f32 %v522, %v455
        %v526 = vmul.f32 %v522, %v460
        %v527 = vmul.f32 %v522, %v465
        %v528 = vmul.f32 %v522, %v470
        %v529 = vmul.f32 %v522, %v475
        %v530 = vmul.f32 %v522, %v480
        %v531 = vmul.f32 %v522, %v485
        %v532 = vmul.f32 %v522, %v490
        %v533 = vmul.f32 %v522, %v495
        %v534 = vmul.f32 %v522, %v500
        %v535 = vmul.f32 %v522, %v505
        %v536 = vsel %vm509, %v445, %v523
        %v537 = vsel %vm510, %v450, %v524
        %v538 = vsel %vm511, %v455, %v525
        %v539 = vsel %vm512, %v460, %v526
        %v540 = vsel %vm513, %v465, %v527
        %v541 = vsel %vm514, %v470, %v528
        %v542 = vsel %vm515, %v475, %v529
        %v543 = vsel %vm516, %v480, %v530
        %v544 = vsel %vm517, %v485, %v531
        %v545 = vsel %vm518, %v490, %v532
        %v546 = vsel %vm519, %v495, %v533
        %v547 = vsel %vm520, %v500, %v534
        %v548 = vsel %vm521, %v505, %v535
        %550 = vset.pattern.permute.xlu0 0
        %551 = vperm.xlu0 %550, %v293
        %v552 = vpop.permute.xlu0 %551
        %555 = vset.pattern.permute.xlu0 0
        %556 = vperm.xlu0 %555, %v294
        %v557 = vpop.permute.xlu0 %556
        %560 = vset.pattern.permute.xlu0 0
        %561 = vperm.xlu0 %560, %v295
        %v562 = vpop.permute.xlu0 %561
        %565 = vset.pattern.permute.xlu0 0
        %566 = vperm.xlu0 %565, %v296
        %v567 = vpop.permute.xlu0 %566
        %570 = vset.pattern.permute.xlu0 0
        %571 = vperm.xlu0 %570, %v297
        %v572 = vpop.permute.xlu0 %571
        %575 = vset.pattern.permute.xlu0 0
        %576 = vperm.xlu0 %575, %v298
        %v577 = vpop.permute.xlu0 %576
        %580 = vset.pattern.permute.xlu0 0
        %581 = vperm.xlu0 %580, %v299
        %v582 = vpop.permute.xlu0 %581
        %585 = vset.pattern.permute.xlu0 0
        %586 = vperm.xlu0 %585, %v300
        %v587 = vpop.permute.xlu0 %586
        %590 = vset.pattern.permute.xlu0 0
        %591 = vperm.xlu0 %590, %v301
        %v592 = vpop.permute.xlu0 %591
        %595 = vset.pattern.permute.xlu0 0
        %596 = vperm.xlu0 %595, %v302
        %v597 = vpop.permute.xlu0 %596
        %600 = vset.pattern.permute.xlu0 0
        %601 = vperm.xlu0 %600, %v303
        %v602 = vpop.permute.xlu0 %601
        %605 = vset.pattern.permute.xlu0 0
        %606 = vperm.xlu0 %605, %v304
        %v607 = vpop.permute.xlu0 %606
        %610 = vset.pattern.permute.xlu0 0
        %611 = vperm.xlu0 %610, %v305
        %v612 = vpop.permute.xlu0 %611
        %v614 = vmul.f32 %v536, %v552
        %v615 = vmul.f32 %v537, %v557
        %v616 = vmul.f32 %v538, %v562
        %v617 = vmul.f32 %v539, %v567
        %v618 = vmul.f32 %v540, %v572
        %v619 = vmul.f32 %v541, %v577
        %v620 = vmul.f32 %v542, %v582
        %v621 = vmul.f32 %v543, %v587
        %v622 = vmul.f32 %v544, %v592
        %v623 = vmul.f32 %v545, %v597
        %v624 = vmul.f32 %v546, %v602
        %v625 = vmul.f32 %v547, %v607
        %v626 = vmul.f32 %v548, %v612
        %vm627 = vcmask 130048
        %628 = vst.msk [vmem:[#allocation2] sm:$0xff] %vm627, 0.0
        %629 = vst.msk [vmem:[#allocation2 + $0x8] sm:$0xff] %vm627, 0.0
        %630 = vst.msk [vmem:[#allocation2 + $0x10] sm:$0xff] %vm627, 0.0
        %631 = vst.msk [vmem:[#allocation2 + $0x18] sm:$0xff] %vm627, 0.0
        %632 = vst.msk [vmem:[#allocation2 + $0x20] sm:$0xff] %vm627, 0.0
        %633 = vst.msk [vmem:[#allocation2 + $0x28] sm:$0xff] %vm627, 0.0
        %634 = vst.msk [vmem:[#allocation2 + $0x30] sm:$0xff] %vm627, 0.0
        %635 = vst.msk [vmem:[#allocation2 + $0x38] sm:$0xff] %vm627, 0.0
        %636 = vst.msk [vmem:[#allocation2 + $0x40] sm:$0xff] %vm627, 0.0
        %637 = vst.msk [vmem:[#allocation2 + $0x48] sm:$0xff] %vm627, 0.0
        %638 = vst.msk [vmem:[#allocation2 + $0x50] sm:$0xff] %vm627, 0.0
        %639 = vst.msk [vmem:[#allocation2 + $0x58] sm:$0xff] %vm627, 0.0
        %vm640 = vcmask 128000
        %641 = vst.msk [vmem:[#allocation2 + $0x60] sm:$0x3f] %vm640, 0.0
        %v642 = vld [vmem:[%s3] sm:$0xff]
        %v643 = vld [vmem:[%s3 + $0x8] sm:$0xff]
        %v644 = vld [vmem:[%s3 + $0x10] sm:$0xff]
        %v645 = vld [vmem:[%s3 + $0x18] sm:$0xff]
        %v646 = vld [vmem:[%s4 + $0x1] sm:$0x1]
        %v648 = vsel %vm627, %v614, 0
        %v651 = vsel %vm627, %v615, 0
        %v654 = vsel %vm627, %v616, 0
        %v657 = vsel %vm627, %v617, 0
        %v660 = vsel %vm627, %v618, 0
        %v663 = vsel %vm627, %v619, 0
        %v666 = vsel %vm627, %v620, 0
        %v669 = vsel %vm627, %v621, 0
        %v672 = vsel %vm627, %v622, 0
        %v675 = vsel %vm627, %v623, 0
        %v678 = vsel %vm627, %v624, 0
        %v681 = vsel %vm627, %v625, 0
        %v684 = vsel %vm627, %v626, 0
        %686 = vmatprep.subr.mxu0 %v643
        %687 = vmatpush1.msra.mxu0 %v642
        %688 = vmatprep.subr.mxu0 %v645
        %689 = vmatpush1.msra.mxu0 %v644
        %690 = vmatprep.subr.mxu0 0.0
        %691 = vmatpush1.msra.mxu0 0.0
        %692 = vmatprep.subr.mxu0 0.0
        %693 = vmatpush1.msra.mxu0 0.0
        %694 = vmatprep.subr.mxu0 0.0
        %695 = vmatpush1.msra.mxu0 0.0
        %696 = vmatprep.subr.mxu0 0.0
        %697 = vmatpush1.msra.mxu0 0.0
        %698 = vmatprep.subr.mxu0 0.0
        %699 = vmatpush1.msra.mxu0 0.0
        %700 = vmatprep.subr.mxu0 0.0
        %701 = vmatpush1.msra.mxu0 0.0
        %702 = vmatprep.subr.mxu0 0.0
        %703 = vmatpush1.msra.mxu0 0.0
        %704 = vmatprep.subr.mxu0 0.0
        %705 = vmatpush1.msra.mxu0 0.0
        %706 = vmatprep.subr.mxu0 0.0
        %707 = vmatpush1.msra.mxu0 0.0
        %708 = vmatprep.subr.mxu0 0.0
        %709 = vmatpush1.msra.mxu0 0.0
        %710 = vmatprep.subr.mxu0 0.0
        %711 = vmatpush1.msra.mxu0 0.0
        %712 = vmatprep.subr.mxu0 0.0
        %713 = vmatpush1.msra.mxu0 0.0
        %714 = vmatprep.subr.mxu0 0.0
        %715 = vmatpush1.msra.mxu0 0.0
        %716 = vmatprep.subr.mxu0 0.0
        %717 = vmatpush1.msra.mxu0 0.0
        %718 = vmatprep.subr.mxu0 0.0
        %719 = vmatpush1.msra.mxu0 0.0
        %720 = vmatprep.subr.mxu0 0.0
        %721 = vmatpush1.msra.mxu0 0.0
        %722 = vmatprep.subr.mxu0 0.0
        %723 = vmatpush1.msra.mxu0 0.0
        %724 = vmatprep.subr.mxu0 0.0
        %725 = vmatpush1.msra.mxu0 0.0
        %726 = vmatprep.subr.mxu0 0.0
        %727 = vmatpush1.msra.mxu0 0.0
        %728 = vmatprep.subr.mxu0 0.0
        %729 = vmatpush1.msra.mxu0 0.0
        %730 = vmatprep.subr.mxu0 0.0
        %731 = vmatpush1.msra.mxu0 0.0
        %732 = vmatprep.subr.mxu0 0.0
        %733 = vmatpush1.msra.mxu0 0.0
        %734 = vmatprep.subr.mxu0 0.0
        %735 = vmatpush1.msra.mxu0 0.0
        %736 = vmatprep.subr.mxu0 0.0
        %737 = vmatpush1.msra.mxu0 0.0
        %738 = vmatprep.subr.mxu0 0.0
        %739 = vmatpush1.msra.mxu0 0.0
        %740 = vmatprep.subr.mxu0 0.0
        %741 = vmatpush1.msra.mxu0 0.0
        %742 = vmatprep.subr.mxu0 0.0
        %743 = vmatpush1.msra.mxu0 0.0
        %744 = vmatprep.subr.mxu0 0.0
        %745 = vmatpush1.msra.mxu0 0.0
        %746 = vmatprep.subr.mxu0 0.0
        %747 = vmatpush1.msra.mxu0 0.0
        %748 = vmatprep.subr.mxu0 0.0
        %749 = vmatpush1.msra.mxu0 0.0
        %750 = vmatprep.mubr.f32.mxu0 0.0
        %751 = vmatmul.mubr.f32.gmra.mrb[0].mxu0 %v648
        %v752 = vpop.f32.mrb[0].mxu0
        %v753 = vadd.f32 0.0, %v752
        %v754 = vpop.f32.mrb[0].mxu0
        %755 = vmatprep.mubr.f32.mxu0 0.0
        %756 = vmatmul.mubr.f32.gmra.mrb[0].mxu0 %v651
        %v757 = vpop.f32.mrb[0].mxu0
        %v758 = vadd.f32 0.0, %v757
        %v759 = vpop.f32.mrb[0].mxu0
        %760 = vmatprep.mubr.f32.mxu0 0.0
        %761 = vmatmul.mubr.f32.gmra.mrb[0].mxu0 %v654
        %v762 = vpop.f32.mrb[0].mxu0
        %v763 = vadd.f32 0.0, %v762
        %v764 = vpop.f32.mrb[0].mxu0
        %v765 = vadd.f32 0.0, %v764
        %766 = vmatprep.mubr.f32.mxu0 0.0
        %767 = vmatmul.mubr.f32.gmra.mrb[0].mxu0 %v657
        %v768 = vpop.f32.mrb[0].mxu0
        %v769 = vadd.f32 0.0, %v768
        %v770 = vpop.f32.mrb[0].mxu0
        %v771 = vadd.f32 0.0, %v770
        %772 = vmatprep.mubr.f32.mxu0 0.0
        %773 = vmatmul.mubr.f32.gmra.mrb[0].mxu0 %v660
        %v774 = vpop.f32.mrb[0].mxu0
        %v775 = vadd.f32 0.0, %v774
        %v776 = vpop.f32.mrb[0].mxu0
        %v777 = vadd.f32 0.0, %v776
        %778 = vmatprep.mubr.f32.mxu0 0.0
        %779 = vmatmul.mubr.f32.gmra.mrb[0].mxu0 %v663
        %v780 = vpop.f32.mrb[0].mxu0
        %v781 = vadd.f32 0.0, %v780
        %v782 = vpop.f32.mrb[0].mxu0
        %v783 = vadd.f32 0.0, %v782
        %784 = vmatprep.mubr.f32.mxu0 0.0
        %785 = vmatmul.mubr.f32.gmra.mrb[0].mxu0 %v666
        %v786 = vpop.f32.mrb[0].mxu0
        %v787 = vadd.f32 0.0, %v786
        %v788 = vpop.f32.mrb[0].mxu0
        %v789 = vadd.f32 0.0, %v788
        %790 = vmatprep.mubr.f32.mxu0 0.0
        %791 = vmatmul.mubr.f32.gmra.mrb[0].mxu0 %v669
        %v792 = vpop.f32.mrb[0].mxu0
        %v793 = vadd.f32 0.0, %v792
        %v794 = vpop.f32.mrb[0].mxu0
        %v795 = vadd.f32 0.0, %v794
        %796 = vmatprep.mubr.f32.mxu0 0.0
        %797 = vmatmul.mubr.f32.gmra.mrb[0].mxu0 %v672
        %v798 = vpop.f32.mrb[0].mxu0
        %v799 = vadd.f32 0.0, %v798
        %v800 = vpop.f32.mrb[0].mxu0
        %v801 = vadd.f32 0.0, %v800
        %802 = vmatprep.mubr.f32.mxu0 0.0
        %803 = vmatmul.mubr.f32.gmra.mrb[0].mxu0 %v675
        %v804 = vpop.f32.mrb[0].mxu0
        %v805 = vadd.f32 0.0, %v804
        %v806 = vpop.f32.mrb[0].mxu0
        %v807 = vadd.f32 0.0, %v806
        %808 = vmatprep.mubr.f32.mxu0 0.0
        %809 = vmatmul.mubr.f32.gmra.mrb[0].mxu0 %v678
        %v810 = vpop.f32.mrb[0].mxu0
        %v811 = vadd.f32 0.0, %v810
        %v812 = vpop.f32.mrb[0].mxu0
        %v813 = vadd.f32 0.0, %v812
        %814 = vmatprep.mubr.f32.mxu0 0.0
        %815 = vmatmul.mubr.f32.gmra.mrb[0].mxu0 %v681
        %v816 = vpop.f32.mrb[0].mxu0
        %v817 = vadd.f32 0.0, %v816
        %v818 = vpop.f32.mrb[0].mxu0
        %v819 = vadd.f32 0.0, %v818
        %820 = vmatprep.mubr.f32.mxu0 0.0
        %821 = vmatmul.mubr.f32.gmra.mrb[0].mxu0 %v684
        %v822 = vpop.f32.mrb[0].mxu0
        %v823 = vadd.f32 0.0, %v822
        %v824 = vpop.f32.mrb[0].mxu0
        %v825 = vadd.f32 0.0, %v824
        %826 = vdwg.mxu0
        %vm838 = vcmask 1046528
        %v839 = vrot.slane %v753, 1
        %v840 = vrot.slane %v758, 1
        %v841 = vsel %vm838, %v839, %v840
        %v842 = vrot.slane %v763, 1
        %v843 = vsel %vm838, %v840, %v842
        %v844 = vrot.slane %v769, 1
        %v845 = vsel %vm838, %v842, %v844
        %v846 = vrot.slane %v775, 1
        %v847 = vsel %vm838, %v844, %v846
        %v848 = vrot.slane %v781, 1
        %v849 = vsel %vm838, %v846, %v848
        %v850 = vrot.slane %v787, 1
        %v851 = vsel %vm838, %v848, %v850
        %v852 = vrot.slane %v793, 1
        %v853 = vsel %vm838, %v850, %v852
        %v854 = vrot.slane %v799, 1
        %v855 = vsel %vm838, %v852, %v854
        %v856 = vrot.slane %v805, 1
        %v857 = vsel %vm838, %v854, %v856
        %v858 = vrot.slane %v811, 1
        %v859 = vsel %vm838, %v856, %v858
        %860 = vrot.lane.b32.xlu0 %v841, 112
        %v861 = vpop.permute.xlu0 %860
        %862 = vrot.lane.b32.xlu0 %v843, 112
        %v863 = vpop.permute.xlu0 %862
        %864 = vrot.lane.b32.xlu0 %v845, 112
        %v865 = vpop.permute.xlu0 %864
        %866 = vrot.lane.b32.xlu0 %v847, 112
        %v867 = vpop.permute.xlu0 %866
        %868 = vrot.lane.b32.xlu0 %v849, 112
        %v869 = vpop.permute.xlu0 %868
        %870 = vrot.lane.b32.xlu0 %v851, 112
        %v871 = vpop.permute.xlu0 %870
        %872 = vrot.lane.b32.xlu0 %v853, 112
        %v873 = vpop.permute.xlu0 %872
        %874 = vrot.lane.b32.xlu0 %v855, 112
        %v875 = vpop.permute.xlu0 %874
        %876 = vrot.lane.b32.xlu0 %v857, 112
        %v877 = vpop.permute.xlu0 %876
        %878 = vrot.lane.b32.xlu0 %v859, 112
        %v879 = vpop.permute.xlu0 %878
        %v890 = vadd.f32 %v753, %v861
        %v891 = vadd.f32 %v758, %v863
        %v892 = vadd.f32 %v763, %v865
        %v893 = vadd.f32 %v769, %v867
        %v894 = vadd.f32 %v775, %v869
        %v895 = vadd.f32 %v781, %v871
        %v896 = vadd.f32 %v787, %v873
        %v897 = vadd.f32 %v793, %v875
        %v898 = vadd.f32 %v799, %v877
        %v899 = vadd.f32 %v805, %v879
        %vm900 = vcmask 1045504
        %v901 = vrot.slane %v753, 2
        %v902 = vrot.slane %v758, 2
        %v903 = vsel %vm900, %v901, %v902
        %v904 = vrot.slane %v763, 2
        %v905 = vsel %vm900, %v902, %v904
        %v906 = vrot.slane %v769, 2
        %v907 = vsel %vm900, %v904, %v906
        %v908 = vrot.slane %v775, 2
        %v909 = vsel %vm900, %v906, %v908
        %v910 = vrot.slane %v781, 2
        %v911 = vsel %vm900, %v908, %v910
        %v912 = vrot.slane %v787, 2
        %v913 = vsel %vm900, %v910, %v912
        %v914 = vrot.slane %v793, 2
        %v915 = vsel %vm900, %v912, %v914
        %v916 = vrot.slane %v799, 2
        %v917 = vsel %vm900, %v914, %v916
        %v918 = vrot.slane %v805, 2
        %v919 = vsel %vm900, %v916, %v918
        %v920 = vrot.slane %v811, 2
        %v921 = vsel %vm900, %v918, %v920
        %922 = vrot.lane.b32.xlu0 %v903, 96
        %v923 = vpop.permute.xlu0 %922
        %924 = vrot.lane.b32.xlu0 %v905, 96
        %v925 = vpop.permute.xlu0 %924
        %926 = vrot.lane.b32.xlu0 %v907, 96
        %v927 = vpop.permute.xlu0 %926
        %928 = vrot.lane.b32.xlu0 %v909, 96
        %v929 = vpop.permute.xlu0 %928
        %930 = vrot.lane.b32.xlu0 %v911, 96
        %v931 = vpop.permute.xlu0 %930
        %932 = vrot.lane.b32.xlu0 %v913, 96
        %v933 = vpop.permute.xlu0 %932
        %934 = vrot.lane.b32.xlu0 %v915, 96
        %v935 = vpop.permute.xlu0 %934
        %936 = vrot.lane.b32.xlu0 %v917, 96
        %v937 = vpop.permute.xlu0 %936
        %938 = vrot.lane.b32.xlu0 %v919, 96
        %v939 = vpop.permute.xlu0 %938
        %940 = vrot.lane.b32.xlu0 %v921, 96
        %v941 = vpop.permute.xlu0 %940
        %v952 = vadd.f32 %v890, %v923
        %v953 = vadd.f32 %v891, %v925
        %v954 = vadd.f32 %v892, %v927
        %v955 = vadd.f32 %v893, %v929
        %v956 = vadd.f32 %v894, %v931
        %v957 = vadd.f32 %v895, %v933
        %v958 = vadd.f32 %v896, %v935
        %v959 = vadd.f32 %v897, %v937
        %v960 = vadd.f32 %v898, %v939
        %v961 = vadd.f32 %v899, %v941
        %v963 = vrot.slane %v817, 2
        %v964 = vsel %vm900, %v920, %v963
        %965 = vrot.lane.b32.xlu0 %v905, 80
        %v966 = vpop.permute.xlu0 %965
        %967 = vrot.lane.b32.xlu0 %v907, 80
        %v968 = vpop.permute.xlu0 %967
        %969 = vrot.lane.b32.xlu0 %v909, 80
        %v970 = vpop.permute.xlu0 %969
        %971 = vrot.lane.b32.xlu0 %v911, 80
        %v972 = vpop.permute.xlu0 %971
        %973 = vrot.lane.b32.xlu0 %v913, 80
        %v974 = vpop.permute.xlu0 %973
        %975 = vrot.lane.b32.xlu0 %v915, 80
        %v976 = vpop.permute.xlu0 %975
        %977 = vrot.lane.b32.xlu0 %v917, 80
        %v978 = vpop.permute.xlu0 %977
        %979 = vrot.lane.b32.xlu0 %v919, 80
        %v980 = vpop.permute.xlu0 %979
        %981 = vrot.lane.b32.xlu0 %v921, 80
        %v982 = vpop.permute.xlu0 %981
        %983 = vrot.lane.b32.xlu0 %v964, 80
        %v984 = vpop.permute.xlu0 %983
        %v995 = vadd.f32 %v952, %v966
        %v996 = vadd.f32 %v953, %v968
        %v997 = vadd.f32 %v954, %v970
        %v998 = vadd.f32 %v955, %v972
        %v999 = vadd.f32 %v956, %v974
        %v1000 = vadd.f32 %v957, %v976
        %v1001 = vadd.f32 %v958, %v978
        %v1002 = vadd.f32 %v959, %v980
        %v1003 = vadd.f32 %v960, %v982
        %v1004 = vadd.f32 %v961, %v984
        %vm1005 = vcmask 1044480
        %v1006 = vrot.slane %v758, 3
        %v1007 = vrot.slane %v763, 3
        %v1008 = vsel %vm1005, %v1006, %v1007
        %v1009 = vrot.slane %v769, 3
        %v1010 = vsel %vm1005, %v1007, %v1009
        %v1011 = vrot.slane %v775, 3
        %v1012 = vsel %vm1005, %v1009, %v1011
        %v1013 = vrot.slane %v781, 3
        %v1014 = vsel %vm1005, %v1011, %v1013
        %v1015 = vrot.slane %v787, 3
        %v1016 = vsel %vm1005, %v1013, %v1015
        %v1017 = vrot.slane %v793, 3
        %v1018 = vsel %vm1005, %v1015, %v1017
        %v1019 = vrot.slane %v799, 3
        %v1020 = vsel %vm1005, %v1017, %v1019
        %v1021 = vrot.slane %v805, 3
        %v1022 = vsel %vm1005, %v1019, %v1021
        %v1023 = vrot.slane %v811, 3
        %v1024 = vsel %vm1005, %v1021, %v1023
        %v1025 = vrot.slane %v817, 3
        %v1026 = vsel %vm1005, %v1023, %v1025
        %1027 = vrot.lane.b32.xlu0 %v1008, 64
        %v1028 = vpop.permute.xlu0 %1027
        %1029 = vrot.lane.b32.xlu0 %v1010, 64
        %v1030 = vpop.permute.xlu0 %1029
        %1031 = vrot.lane.b32.xlu0 %v1012, 64
        %v1032 = vpop.permute.xlu0 %1031
        %1033 = vrot.lane.b32.xlu0 %v1014, 64
        %v1034 = vpop.permute.xlu0 %1033
        %1035 = vrot.lane.b32.xlu0 %v1016, 64
        %v1036 = vpop.permute.xlu0 %1035
        %1037 = vrot.lane.b32.xlu0 %v1018, 64
        %v1038 = vpop.permute.xlu0 %1037
        %1039 = vrot.lane.b32.xlu0 %v1020, 64
        %v1040 = vpop.permute.xlu0 %1039
        %1041 = vrot.lane.b32.xlu0 %v1022, 64
        %v1042 = vpop.permute.xlu0 %1041
        %1043 = vrot.lane.b32.xlu0 %v1024, 64
        %v1044 = vpop.permute.xlu0 %1043
        %1045 = vrot.lane.b32.xlu0 %v1026, 64
        %v1046 = vpop.permute.xlu0 %1045
        %v1057 = vadd.f32 %v995, %v1028
        %v1058 = vadd.f32 %v996, %v1030
        %v1059 = vadd.f32 %v997, %v1032
        %v1060 = vadd.f32 %v998, %v1034
        %v1061 = vadd.f32 %v999, %v1036
        %v1062 = vadd.f32 %v1000, %v1038
        %v1063 = vadd.f32 %v1001, %v1040
        %v1064 = vadd.f32 %v1002, %v1042
        %v1065 = vadd.f32 %v1003, %v1044
        %v1066 = vadd.f32 %v1004, %v1046
        %vm1067 = vcmask 1043456
        %v1068 = vrot.slane %v758, 4
        %v1069 = vrot.slane %v763, 4
        %v1070 = vsel %vm1067, %v1068, %v1069
        %v1071 = vrot.slane %v769, 4
        %v1072 = vsel %vm1067, %v1069, %v1071
        %v1073 = vrot.slane %v775, 4
        %v1074 = vsel %vm1067, %v1071, %v1073
        %v1075 = vrot.slane %v781, 4
        %v1076 = vsel %vm1067, %v1073, %v1075
        %v1077 = vrot.slane %v787, 4
        %v1078 = vsel %vm1067, %v1075, %v1077
        %v1079 = vrot.slane %v793, 4
        %v1080 = vsel %vm1067, %v1077, %v1079
        %v1081 = vrot.slane %v799, 4
        %v1082 = vsel %vm1067, %v1079, %v1081
        %v1083 = vrot.slane %v805, 4
        %v1084 = vsel %vm1067, %v1081, %v1083
        %v1085 = vrot.slane %v811, 4
        %v1086 = vsel %vm1067, %v1083, %v1085
        %v1087 = vrot.slane %v817, 4
        %v1088 = vsel %vm1067, %v1085, %v1087
        %1089 = vrot.lane.b32.xlu0 %v1070, 48
        %v1090 = vpop.permute.xlu0 %1089
        %1091 = vrot.lane.b32.xlu0 %v1072, 48
        %v1092 = vpop.permute.xlu0 %1091
        %1093 = vrot.lane.b32.xlu0 %v1074, 48
        %v1094 = vpop.permute.xlu0 %1093
        %1095 = vrot.lane.b32.xlu0 %v1076, 48
        %v1096 = vpop.permute.xlu0 %1095
        %1097 = vrot.lane.b32.xlu0 %v1078, 48
        %v1098 = vpop.permute.xlu0 %1097
        %1099 = vrot.lane.b32.xlu0 %v1080, 48
        %v1100 = vpop.permute.xlu0 %1099
        %1101 = vrot.lane.b32.xlu0 %v1082, 48
        %v1102 = vpop.permute.xlu0 %1101
        %1103 = vrot.lane.b32.xlu0 %v1084, 48
        %v1104 = vpop.permute.xlu0 %1103
        %1105 = vrot.lane.b32.xlu0 %v1086, 48
        %v1106 = vpop.permute.xlu0 %1105
        %1107 = vrot.lane.b32.xlu0 %v1088, 48
        %v1108 = vpop.permute.xlu0 %1107
        %v1119 = vadd.f32 %v1057, %v1090
        %v1120 = vadd.f32 %v1058, %v1092
        %v1121 = vadd.f32 %v1059, %v1094
        %v1122 = vadd.f32 %v1060, %v1096
        %v1123 = vadd.f32 %v1061, %v1098
        %v1124 = vadd.f32 %v1062, %v1100
        %v1125 = vadd.f32 %v1063, %v1102
        %v1126 = vadd.f32 %v1064, %v1104
        %v1127 = vadd.f32 %v1065, %v1106
        %v1128 = vadd.f32 %v1066, %v1108
        %v1130 = vrot.slane %v823, 4
        %v1131 = vsel %vm1067, %v1087, %v1130
        %1132 = vrot.lane.b32.xlu0 %v1072, 32
        %v1133 = vpop.permute.xlu0 %1132
        %1134 = vrot.lane.b32.xlu0 %v1074, 32
        %v1135 = vpop.permute.xlu0 %1134
        %1136 = vrot.lane.b32.xlu0 %v1076, 32
        %v1137 = vpop.permute.xlu0 %1136
        %1138 = vrot.lane.b32.xlu0 %v1078, 32
        %v1139 = vpop.permute.xlu0 %1138
        %1140 = vrot.lane.b32.xlu0 %v1080, 32
        %v1141 = vpop.permute.xlu0 %1140
        %1142 = vrot.lane.b32.xlu0 %v1082, 32
        %v1143 = vpop.permute.xlu0 %1142
        %1144 = vrot.lane.b32.xlu0 %v1084, 32
        %v1145 = vpop.permute.xlu0 %1144
        %1146 = vrot.lane.b32.xlu0 %v1086, 32
        %v1147 = vpop.permute.xlu0 %1146
        %1148 = vrot.lane.b32.xlu0 %v1088, 32
        %v1149 = vpop.permute.xlu0 %1148
        %1150 = vrot.lane.b32.xlu0 %v1131, 32
        %v1151 = vpop.permute.xlu0 %1150
        %v1162 = vadd.f32 %v1119, %v1133
        %v1163 = vadd.f32 %v1120, %v1135
        %v1164 = vadd.f32 %v1121, %v1137
        %v1165 = vadd.f32 %v1122, %v1139
        %v1166 = vadd.f32 %v1123, %v1141
        %v1167 = vadd.f32 %v1124, %v1143
        %v1168 = vadd.f32 %v1125, %v1145
        %v1169 = vadd.f32 %v1126, %v1147
        %v1170 = vadd.f32 %v1127, %v1149
        %v1171 = vadd.f32 %v1128, %v1151
        %vm1172 = vcmask 1042432
        %v1173 = vrot.slane %v763, 5
        %v1174 = vrot.slane %v769, 5
        %v1175 = vsel %vm1172, %v1173, %v1174
        %v1176 = vrot.slane %v775, 5
        %v1177 = vsel %vm1172, %v1174, %v1176
        %v1178 = vrot.slane %v781, 5
        %v1179 = vsel %vm1172, %v1176, %v1178
        %v1180 = vrot.slane %v787, 5
        %v1181 = vsel %vm1172, %v1178, %v1180
        %v1182 = vrot.slane %v793, 5
        %v1183 = vsel %vm1172, %v1180, %v1182
        %v1184 = vrot.slane %v799, 5
        %v1185 = vsel %vm1172, %v1182, %v1184
        %v1186 = vrot.slane %v805, 5
        %v1187 = vsel %vm1172, %v1184, %v1186
        %v1188 = vrot.slane %v811, 5
        %v1189 = vsel %vm1172, %v1186, %v1188
        %v1190 = vrot.slane %v817, 5
        %v1191 = vsel %vm1172, %v1188, %v1190
        %v1192 = vrot.slane %v823, 5
        %v1193 = vsel %vm1172, %v1190, %v1192
        %1194 = vrot.lane.b32.xlu0 %v1175, 16
        %v1195 = vpop.permute.xlu0 %1194
        %1196 = vrot.lane.b32.xlu0 %v1177, 16
        %v1197 = vpop.permute.xlu0 %1196
        %1198 = vrot.lane.b32.xlu0 %v1179, 16
        %v1199 = vpop.permute.xlu0 %1198
        %1200 = vrot.lane.b32.xlu0 %v1181, 16
        %v1201 = vpop.permute.xlu0 %1200
        %1202 = vrot.lane.b32.xlu0 %v1183, 16
        %v1203 = vpop.permute.xlu0 %1202
        %1204 = vrot.lane.b32.xlu0 %v1185, 16
        %v1205 = vpop.permute.xlu0 %1204
        %1206 = vrot.lane.b32.xlu0 %v1187, 16
        %v1207 = vpop.permute.xlu0 %1206
        %1208 = vrot.lane.b32.xlu0 %v1189, 16
        %v1209 = vpop.permute.xlu0 %1208
        %1210 = vrot.lane.b32.xlu0 %v1191, 16
        %v1211 = vpop.permute.xlu0 %1210
        %1212 = vrot.lane.b32.xlu0 %v1193, 16
        %v1213 = vpop.permute.xlu0 %1212
        %v1224 = vadd.f32 %v1162, %v1195
        %v1225 = vadd.f32 %v1163, %v1197
        %v1226 = vadd.f32 %v1164, %v1199
        %v1227 = vadd.f32 %v1165, %v1201
        %v1228 = vadd.f32 %v1166, %v1203
        %v1229 = vadd.f32 %v1167, %v1205
        %v1230 = vadd.f32 %v1168, %v1207
        %v1231 = vadd.f32 %v1169, %v1209
        %v1232 = vadd.f32 %v1170, %v1211
        %v1233 = vadd.f32 %v1171, %v1213
        %vm1245 = vcmask 1041408
        %v1246 = vrot.slane %v765, 6
        %v1247 = vrot.slane %v771, 6
        %v1248 = vsel %vm1245, %v1246, %v1247
        %v1249 = vrot.slane %v777, 6
        %v1250 = vsel %vm1245, %v1247, %v1249
        %v1251 = vrot.slane %v783, 6
        %v1252 = vsel %vm1245, %v1249, %v1251
        %v1253 = vrot.slane %v789, 6
        %v1254 = vsel %vm1245, %v1251, %v1253
        %v1255 = vrot.slane %v795, 6
        %v1256 = vsel %vm1245, %v1253, %v1255
        %v1257 = vrot.slane %v801, 6
        %v1258 = vsel %vm1245, %v1255, %v1257
        %v1259 = vrot.slane %v807, 6
        %v1260 = vsel %vm1245, %v1257, %v1259
        %v1261 = vrot.slane %v813, 6
        %v1262 = vsel %vm1245, %v1259, %v1261
        %v1263 = vrot.slane %v819, 6
        %v1264 = vsel %vm1245, %v1261, %v1263
        %v1265 = vrot.slane %v825, 6
        %v1266 = vsel %vm1245, %v1263, %v1265
        %v1277 = vadd.f32 %v1224, %v1248
        %v1278 = vadd.f32 %v1225, %v1250
        %v1279 = vadd.f32 %v1226, %v1252
        %v1280 = vadd.f32 %v1227, %v1254
        %v1281 = vadd.f32 %v1228, %v1256
        %v1282 = vadd.f32 %v1229, %v1258
        %v1283 = vadd.f32 %v1230, %v1260
        %v1284 = vadd.f32 %v1231, %v1262
        %v1285 = vadd.f32 %v1232, %v1264
        %v1286 = vadd.f32 %v1233, %v1266
        %v1287 = vlaneseq
        %v1288 = vshrl.u32 %v1287, 7
        %v1289 = vsub.s32 0, %v1288
        %v1290 = vrot.slane %v646, %v1289
        %v1291 = vadd.f32 %v1277, %v1290
        %v1292 = vadd.f32 %v1278, %v1290
        %v1293 = vadd.f32 %v1279, %v1290
        %v1294 = vadd.f32 %v1280, %v1290
        %v1295 = vadd.f32 %v1281, %v1290
        %v1296 = vadd.f32 %v1282, %v1290
        %v1297 = vadd.f32 %v1283, %v1290
        %v1298 = vadd.f32 %v1284, %v1290
        %v1299 = vadd.f32 %v1285, %v1290
        %v1300 = vadd.f32 %v1286, %v1290
        %s1301 = sld [smem:[#allocation3 + $0x1]]
        %vm1302 = vcmp.ge.f32.partialorder %v1291, 0.0
        %vm1303 = vcmp.ge.f32.partialorder %v1292, 0.0
        %vm1304 = vcmp.ge.f32.partialorder %v1293, 0.0
        %vm1305 = vcmp.ge.f32.partialorder %v1294, 0.0
        %vm1306 = vcmp.ge.f32.partialorder %v1295, 0.0
        %vm1307 = vcmp.ge.f32.partialorder %v1296, 0.0
        %vm1308 = vcmp.ge.f32.partialorder %v1297, 0.0
        %vm1309 = vcmp.ge.f32.partialorder %v1298, 0.0
        %vm1310 = vcmp.ge.f32.partialorder %v1299, 0.0
        %vm1311 = vcmp.ge.f32.partialorder %v1300, 0.0
        %v1312 = vstv %s1301
        %v1313 = vmul.f32 %v1312, %v1291
        %v1314 = vmul.f32 %v1312, %v1292
        %v1315 = vmul.f32 %v1312, %v1293
        %v1316 = vmul.f32 %v1312, %v1294
        %v1317 = vmul.f32 %v1312, %v1295
        %v1318 = vmul.f32 %v1312, %v1296
        %v1319 = vmul.f32 %v1312, %v1297
        %v1320 = vmul.f32 %v1312, %v1298
        %v1321 = vmul.f32 %v1312, %v1299
        %v1322 = vmul.f32 %v1312, %v1300
        %v1323 = vsel %vm1302, %v1291, %v1313
        %v1324 = vsel %vm1303, %v1292, %v1314
        %v1325 = vsel %vm1304, %v1293, %v1315
        %v1326 = vsel %vm1305, %v1294, %v1316
        %v1327 = vsel %vm1306, %v1295, %v1317
        %v1328 = vsel %vm1307, %v1296, %v1318
        %v1329 = vsel %vm1308, %v1297, %v1319
        %v1330 = vsel %vm1309, %v1298, %v1320
        %v1331 = vsel %vm1310, %v1299, %v1321
        %v1332 = vsel %vm1311, %v1300, %v1322
        %1334 = vset.pattern.permute.xlu0 0
        %1335 = vperm.xlu0 %1334, %v306
        %v1336 = vpop.permute.xlu0 %1335
        %1339 = vset.pattern.permute.xlu0 0
        %1340 = vperm.xlu0 %1339, %v307
        %v1341 = vpop.permute.xlu0 %1340
        %1344 = vset.pattern.permute.xlu0 0
        %1345 = vperm.xlu0 %1344, %v308
        %v1346 = vpop.permute.xlu0 %1345
        %1349 = vset.pattern.permute.xlu0 0
        %1350 = vperm.xlu0 %1349, %v309
        %v1351 = vpop.permute.xlu0 %1350
        %1354 = vset.pattern.permute.xlu0 0
        %1355 = vperm.xlu0 %1354, %v310
        %v1356 = vpop.permute.xlu0 %1355
        %1359 = vset.pattern.permute.xlu0 0
        %1360 = vperm.xlu0 %1359, %v311
        %v1361 = vpop.permute.xlu0 %1360
        %1364 = vset.pattern.permute.xlu0 0
        %1365 = vperm.xlu0 %1364, %v312
        %v1366 = vpop.permute.xlu0 %1365
        %1369 = vset.pattern.permute.xlu0 0
        %1370 = vperm.xlu0 %1369, %v313
        %v1371 = vpop.permute.xlu0 %1370
        %1374 = vset.pattern.permute.xlu0 0
        %1375 = vperm.xlu0 %1374, %v314
        %v1376 = vpop.permute.xlu0 %1375
        %1379 = vset.pattern.permute.xlu0 0
        %1380 = vperm.xlu0 %1379, %v315
        %v1381 = vpop.permute.xlu0 %1380
        %v1383 = vmul.f32 %v1323, %v1336
        %v1384 = vmul.f32 %v1324, %v1341
        %v1385 = vmul.f32 %v1325, %v1346
        %v1386 = vmul.f32 %v1326, %v1351
        %v1387 = vmul.f32 %v1327, %v1356
        %v1388 = vmul.f32 %v1328, %v1361
        %v1389 = vmul.f32 %v1329, %v1366
        %v1390 = vmul.f32 %v1330, %v1371
        %v1391 = vmul.f32 %v1331, %v1376
        %v1392 = vmul.f32 %v1332, %v1381
        %1393 = vst.msk [vmem:[#allocation2 + $0xb] sm:$0xff] %vm627, %v1383
        %1394 = vst.msk [vmem:[#allocation2 + $0x13] sm:$0xff] %vm627, %v1384
        %1395 = vst.msk [vmem:[#allocation2 + $0x1b] sm:$0xff] %vm627, %v1385
        %1396 = vst.msk [vmem:[#allocation2 + $0x23] sm:$0xff] %vm627, %v1386
        %1397 = vst.msk [vmem:[#allocation2 + $0x2b] sm:$0xff] %vm627, %v1387
        %1398 = vst.msk [vmem:[#allocation2 + $0x33] sm:$0xff] %vm627, %v1388
        %1399 = vst.msk [vmem:[#allocation2 + $0x3b] sm:$0xff] %vm627, %v1389
        %1400 = vst.msk [vmem:[#allocation2 + $0x43] sm:$0xff] %vm627, %v1390
        %1401 = vst.msk [vmem:[#allocation2 + $0x4b] sm:$0xff] %vm627, %v1391
        %1402 = vst.msk [vmem:[#allocation2 + $0x53] sm:$0xff] %vm627, %v1392
        %v1403 = vld [vmem:[#allocation2] sm:$0xff]
        %v1404 = vld [vmem:[#allocation2 + $0x8] sm:$0xff]
        %v1405 = vld [vmem:[#allocation2 + $0x10] sm:$0xff]
        %v1406 = vld [vmem:[#allocation2 + $0x18] sm:$0xff]
        %v1407 = vld [vmem:[#allocation2 + $0x20] sm:$0xff]
        %v1408 = vld [vmem:[#allocation2 + $0x28] sm:$0xff]
        %v1409 = vld [vmem:[#allocation2 + $0x30] sm:$0xff]
        %v1410 = vld [vmem:[#allocation2 + $0x38] sm:$0xff]
        %v1411 = vld [vmem:[#allocation2 + $0x40] sm:$0xff]
        %v1412 = vld [vmem:[#allocation2 + $0x48] sm:$0xff]
        %v1413 = vld [vmem:[#allocation2 + $0x50] sm:$0xff]
        %v1414 = vld [vmem:[#allocation2 + $0x58] sm:$0xff]
        %v1415 = vld [vmem:[#allocation2 + $0x60] sm:$0x3f]
        %s1416 = scalar_lea.vmem %s3, 32
        %v1417 = vld [vmem:[%s1416] sm:$0xff]
        %v1418 = vld [vmem:[%s1416 + $0x8] sm:$0xff]
        %v1419 = vld [vmem:[%s1416 + $0x10] sm:$0xff]
        %v1420 = vld [vmem:[%s1416 + $0x18] sm:$0xff]
        %v1421 = vld [vmem:[%s4 + $0x2] sm:$0x1]
        %v1423 = vsel %vm627, %v1403, 0
        %v1426 = vsel %vm627, %v1404, 0
        %v1429 = vsel %vm627, %v1405, 0
        %v1432 = vsel %vm627, %v1406, 0
        %v1435 = vsel %vm627, %v1407, 0
        %v1438 = vsel %vm627, %v1408, 0
        %v1441 = vsel %vm627, %v1409, 0
        %v1444 = vsel %vm627, %v1410, 0
        %v1447 = vsel %vm627, %v1411, 0
        %v1450 = vsel %vm627, %v1412, 0
        %v1453 = vsel %vm627, %v1413, 0
        %v1456 = vsel %vm627, %v1414, 0
        %v1459 = vsel %vm627, %v1415, 0
        %1461 = vmatprep.subr.mxu0 %v1418
        %1462 = vmatpush1.msra.mxu0 %v1417
        %1463 = vmatprep.subr.mxu0 %v1420
        %1464 = vmatpush1.msra.mxu0 %v1419
        %1465 = vmatprep.subr.mxu0 0.0
        %1466 = vmatpush1.msra.mxu0 0.0
        %1467 = vmatprep.subr.mxu0 0.0
        %1468 = vmatpush1.msra.mxu0 0.0
        %1469 = vmatprep.subr.mxu0 0.0
        %1470 = vmatpush1.msra.mxu0 0.0
        %1471 = vmatprep.subr.mxu0 0.0
        %1472 = vmatpush1.msra.mxu0 0.0
        %1473 = vmatprep.subr.mxu0 0.0
        %1474 = vmatpush1.msra.mxu0 0.0
        %1475 = vmatprep.subr.mxu0 0.0
        %1476 = vmatpush1.msra.mxu0 0.0
        %1477 = vmatprep.subr.mxu0 0.0
        %1478 = vmatpush1.msra.mxu0 0.0
        %1479 = vmatprep.subr.mxu0 0.0
        %1480 = vmatpush1.msra.mxu0 0.0
        %1481 = vmatprep.subr.mxu0 0.0
        %1482 = vmatpush1.msra.mxu0 0.0
        %1483 = vmatprep.subr.mxu0 0.0
        %1484 = vmatpush1.msra.mxu0 0.0
        %1485 = vmatprep.subr.mxu0 0.0
        %1486 = vmatpush1.msra.mxu0 0.0
        %1487 = vmatprep.subr.mxu0 0.0
        %1488 = vmatpush1.msra.mxu0 0.0
        %1489 = vmatprep.subr.mxu0 0.0
        %1490 = vmatpush1.msra.mxu0 0.0
        %1491 = vmatprep.subr.mxu0 0.0
        %1492 = vmatpush1.msra.mxu0 0.0
        %1493 = vmatprep.subr.mxu0 0.0
        %1494 = vmatpush1.msra.mxu0 0.0
        %1495 = vmatprep.subr.mxu0 0.0
        %1496 = vmatpush1.msra.mxu0 0.0
        %1497 = vmatprep.subr.mxu0 0.0
        %1498 = vmatpush1.msra.mxu0 0.0
        %1499 = vmatprep.subr.mxu0 0.0
        %1500 = vmatpush1.msra.mxu0 0.0
        %1501 = vmatprep.subr.mxu0 0.0
        %1502 = vmatpush1.msra.mxu0 0.0
        %1503 = vmatprep.subr.mxu0 0.0
        %1504 = vmatpush1.msra.mxu0 0.0
        %1505 = vmatprep.subr.mxu0 0.0
        %1506 = vmatpush1.msra.mxu0 0.0
        %1507 = vmatprep.subr.mxu0 0.0
        %1508 = vmatpush1.msra.mxu0 0.0
        %1509 = vmatprep.subr.mxu0 0.0
        %1510 = vmatpush1.msra.mxu0 0.0
        %1511 = vmatprep.subr.mxu0 0.0
        %1512 = vmatpush1.msra.mxu0 0.0
        %1513 = vmatprep.subr.mxu0 0.0
        %1514 = vmatpush1.msra.mxu0 0.0
        %1515 = vmatprep.subr.mxu0 0.0
        %1516 = vmatpush1.msra.mxu0 0.0
        %1517 = vmatprep.subr.mxu0 0.0
        %1518 = vmatpush1.msra.mxu0 0.0
        %1519 = vmatprep.subr.mxu0 0.0
        %1520 = vmatpush1.msra.mxu0 0.0
        %1521 = vmatprep.subr.mxu0 0.0
        %1522 = vmatpush1.msra.mxu0 0.0
        %1523 = vmatprep.subr.mxu0 0.0
        %1524 = vmatpush1.msra.mxu0 0.0
        %1525 = vmatprep.mubr.f32.mxu0 0.0
        %1526 = vmatmul.mubr.f32.gmra.mrb[0].mxu0 %v1423
        %v1527 = vpop.f32.mrb[0].mxu0
        %v1528 = vadd.f32 0.0, %v1527
        %v1529 = vpop.f32.mrb[0].mxu0
        %1530 = vmatprep.mubr.f32.mxu0 0.0
        %1531 = vmatmul.mubr.f32.gmra.mrb[0].mxu0 %v1426
        %v1532 = vpop.f32.mrb[0].mxu0
        %v1533 = vadd.f32 0.0, %v1532
        %v1534 = vpop.f32.mrb[0].mxu0
        %1535 = vmatprep.mubr.f32.mxu0 0.0
        %1536 = vmatmul.mubr.f32.gmra.mrb[0].mxu0 %v1429
        %v1537 = vpop.f32.mrb[0].mxu0
        %v1538 = vadd.f32 0.0, %v1537
        %v1539 = vpop.f32.mrb[0].mxu0
        %v1540 = vadd.f32 0.0, %v1539
        %1541 = vmatprep.mubr.f32.mxu0 0.0
        %1542 = vmatmul.mubr.f32.gmra.mrb[0].mxu0 %v1432
        %v1543 = vpop.f32.mrb[0].mxu0
        %v1544 = vadd.f32 0.0, %v1543
        %v1545 = vpop.f32.mrb[0].mxu0
        %v1546 = vadd.f32 0.0, %v1545
        %1547 = vmatprep.mubr.f32.mxu0 0.0
        %1548 = vmatmul.mubr.f32.gmra.mrb[0].mxu0 %v1435
        %v1549 = vpop.f32.mrb[0].mxu0
        %v1550 = vadd.f32 0.0, %v1549
        %v1551 = vpop.f32.mrb[0].mxu0
        %v1552 = vadd.f32 0.0, %v1551
        %1553 = vmatprep.mubr.f32.mxu0 0.0
        %1554 = vmatmul.mubr.f32.gmra.mrb[0].mxu0 %v1438
        %v1555 = vpop.f32.mrb[0].mxu0
        %v1556 = vadd.f32 0.0, %v1555
        %v1557 = vpop.f32.mrb[0].mxu0
        %v1558 = vadd.f32 0.0, %v1557
        %1559 = vmatprep.mubr.f32.mxu0 0.0
        %1560 = vmatmul.mubr.f32.gmra.mrb[0].mxu0 %v1441
        %v1561 = vpop.f32.mrb[0].mxu0
        %v1562 = vadd.f32 0.0, %v1561
        %v1563 = vpop.f32.mrb[0].mxu0
        %v1564 = vadd.f32 0.0, %v1563
        %1565 = vmatprep.mubr.f32.mxu0 0.0
        %1566 = vmatmul.mubr.f32.gmra.mrb[0].mxu0 %v1444
        %v1567 = vpop.f32.mrb[0].mxu0
        %v1568 = vadd.f32 0.0, %v1567
        %v1569 = vpop.f32.mrb[0].mxu0
        %v1570 = vadd.f32 0.0, %v1569
        %1571 = vmatprep.mubr.f32.mxu0 0.0
        %1572 = vmatmul.mubr.f32.gmra.mrb[0].mxu0 %v1447
        %v1573 = vpop.f32.mrb[0].mxu0
        %v1574 = vadd.f32 0.0, %v1573
        %v1575 = vpop.f32.mrb[0].mxu0
        %v1576 = vadd.f32 0.0, %v1575
        %1577 = vmatprep.mubr.f32.mxu0 0.0
        %1578 = vmatmul.mubr.f32.gmra.mrb[0].mxu0 %v1450
        %v1579 = vpop.f32.mrb[0].mxu0
        %v1580 = vadd.f32 0.0, %v1579
        %v1581 = vpop.f32.mrb[0].mxu0
        %v1582 = vadd.f32 0.0, %v1581
        %1583 = vmatprep.mubr.f32.mxu0 0.0
        %1584 = vmatmul.mubr.f32.gmra.mrb[0].mxu0 %v1453
        %v1585 = vpop.f32.mrb[0].mxu0
        %v1586 = vadd.f32 0.0, %v1585
        %v1587 = vpop.f32.mrb[0].mxu0
        %v1588 = vadd.f32 0.0, %v1587
        %1589 = vmatprep.mubr.f32.mxu0 0.0
        %1590 = vmatmul.mubr.f32.gmra.mrb[0].mxu0 %v1456
        %v1591 = vpop.f32.mrb[0].mxu0
        %v1592 = vadd.f32 0.0, %v1591
        %v1593 = vpop.f32.mrb[0].mxu0
        %v1594 = vadd.f32 0.0, %v1593
        %1595 = vmatprep.mubr.f32.mxu0 0.0
        %1596 = vmatmul.mubr.f32.gmra.mrb[0].mxu0 %v1459
        %v1597 = vpop.f32.mrb[0].mxu0
        %v1598 = vadd.f32 0.0, %v1597
        %v1599 = vpop.f32.mrb[0].mxu0
        %v1600 = vadd.f32 0.0, %v1599
        %1601 = vdwg.mxu0
        %v1613 = vrot.slane %v1528, 1
        %v1614 = vrot.slane %v1533, 1
        %v1615 = vsel %vm838, %v1613, %v1614
        %v1616 = vrot.slane %v1538, 1
        %v1617 = vsel %vm838, %v1614, %v1616
        %v1618 = vrot.slane %v1544, 1
        %v1619 = vsel %vm838, %v1616, %v1618
        %v1620 = vrot.slane %v1550, 1
        %v1621 = vsel %vm838, %v1618, %v1620
        %v1622 = vrot.slane %v1556, 1
        %v1623 = vsel %vm838, %v1620, %v1622
        %v1624 = vrot.slane %v1562, 1
        %v1625 = vsel %vm838, %v1622, %v1624
        %v1626 = vrot.slane %v1568, 1
        %v1627 = vsel %vm838, %v1624, %v1626
        %v1628 = vrot.slane %v1574, 1
        %v1629 = vsel %vm838, %v1626, %v1628
        %v1630 = vrot.slane %v1580, 1
        %v1631 = vsel %vm838, %v1628, %v1630
        %v1632 = vrot.slane %v1586, 1
        %v1633 = vsel %vm838, %v1630, %v1632
        %1634 = vrot.lane.b32.xlu0 %v1615, 112
        %v1635 = vpop.permute.xlu0 %1634
        %1636 = vrot.lane.b32.xlu0 %v1617, 112
        %v1637 = vpop.permute.xlu0 %1636
        %1638 = vrot.lane.b32.xlu0 %v1619, 112
        %v1639 = vpop.permute.xlu0 %1638
        %1640 = vrot.lane.b32.xlu0 %v1621, 112
        %v1641 = vpop.permute.xlu0 %1640
        %1642 = vrot.lane.b32.xlu0 %v1623, 112
        %v1643 = vpop.permute.xlu0 %1642
        %1644 = vrot.lane.b32.xlu0 %v1625, 112
        %v1645 = vpop.permute.xlu0 %1644
        %1646 = vrot.lane.b32.xlu0 %v1627, 112
        %v1647 = vpop.permute.xlu0 %1646
        %1648 = vrot.lane.b32.xlu0 %v1629, 112
        %v1649 = vpop.permute.xlu0 %1648
        %1650 = vrot.lane.b32.xlu0 %v1631, 112
        %v1651 = vpop.permute.xlu0 %1650
        %1652 = vrot.lane.b32.xlu0 %v1633, 112
        %v1653 = vpop.permute.xlu0 %1652
        %v1664 = vadd.f32 %v1528, %v1635
        %v1665 = vadd.f32 %v1533, %v1637
        %v1666 = vadd.f32 %v1538, %v1639
        %v1667 = vadd.f32 %v1544, %v1641
        %v1668 = vadd.f32 %v1550, %v1643
        %v1669 = vadd.f32 %v1556, %v1645
        %v1670 = vadd.f32 %v1562, %v1647
        %v1671 = vadd.f32 %v1568, %v1649
        %v1672 = vadd.f32 %v1574, %v1651
        %v1673 = vadd.f32 %v1580, %v1653
        %v1674 = vrot.slane %v1528, 2
        %v1675 = vrot.slane %v1533, 2
        %v1676 = vsel %vm900, %v1674, %v1675
        %v1677 = vrot.slane %v1538, 2
        %v1678 = vsel %vm900, %v1675, %v1677
        %v1679 = vrot.slane %v1544, 2
        %v1680 = vsel %vm900, %v1677, %v1679
        %v1681 = vrot.slane %v1550, 2
        %v1682 = vsel %vm900, %v1679, %v1681
        %v1683 = vrot.slane %v1556, 2
        %v1684 = vsel %vm900, %v1681, %v1683
        %v1685 = vrot.slane %v1562, 2
        %v1686 = vsel %vm900, %v1683, %v1685
        %v1687 = vrot.slane %v1568, 2
        %v1688 = vsel %vm900, %v1685, %v1687
        %v1689 = vrot.slane %v1574, 2
        %v1690 = vsel %vm900, %v1687, %v1689
        %v1691 = vrot.slane %v1580, 2
        %v1692 = vsel %vm900, %v1689, %v1691
        %v1693 = vrot.slane %v1586, 2
        %v1694 = vsel %vm900, %v1691, %v1693
        %1695 = vrot.lane.b32.xlu0 %v1676, 96
        %v1696 = vpop.permute.xlu0 %1695
        %1697 = vrot.lane.b32.xlu0 %v1678, 96
        %v1698 = vpop.permute.xlu0 %1697
        %1699 = vrot.lane.b32.xlu0 %v1680, 96
        %v1700 = vpop.permute.xlu0 %1699
        %1701 = vrot.lane.b32.xlu0 %v1682, 96
        %v1702 = vpop.permute.xlu0 %1701
        %1703 = vrot.lane.b32.xlu0 %v1684, 96
        %v1704 = vpop.permute.xlu0 %1703
        %1705 = vrot.lane.b32.xlu0 %v1686, 96
        %v1706 = vpop.permute.xlu0 %1705
        %1707 = vrot.lane.b32.xlu0 %v1688, 96
        %v1708 = vpop.permute.xlu0 %1707
        %1709 = vrot.lane.b32.xlu0 %v1690, 96
        %v1710 = vpop.permute.xlu0 %1709
        %1711 = vrot.lane.b32.xlu0 %v1692, 96
        %v1712 = vpop.permute.xlu0 %1711
        %1713 = vrot.lane.b32.xlu0 %v1694, 96
        %v1714 = vpop.permute.xlu0 %1713
        %v1725 = vadd.f32 %v1664, %v1696
        %v1726 = vadd.f32 %v1665, %v1698
        %v1727 = vadd.f32 %v1666, %v1700
        %v1728 = vadd.f32 %v1667, %v1702
        %v1729 = vadd.f32 %v1668, %v1704
        %v1730 = vadd.f32 %v1669, %v1706
        %v1731 = vadd.f32 %v1670, %v1708
        %v1732 = vadd.f32 %v1671, %v1710
        %v1733 = vadd.f32 %v1672, %v1712
        %v1734 = vadd.f32 %v1673, %v1714
        %v1736 = vrot.slane %v1592, 2
        %v1737 = vsel %vm900, %v1693, %v1736
        %1738 = vrot.lane.b32.xlu0 %v1678, 80
        %v1739 = vpop.permute.xlu0 %1738
        %1740 = vrot.lane.b32.xlu0 %v1680, 80
        %v1741 = vpop.permute.xlu0 %1740
        %1742 = vrot.lane.b32.xlu0 %v1682, 80
        %v1743 = vpop.permute.xlu0 %1742
        %1744 = vrot.lane.b32.xlu0 %v1684, 80
        %v1745 = vpop.permute.xlu0 %1744
        %1746 = vrot.lane.b32.xlu0 %v1686, 80
        %v1747 = vpop.permute.xlu0 %1746
        %1748 = vrot.lane.b32.xlu0 %v1688, 80
        %v1749 = vpop.permute.xlu0 %1748
        %1750 = vrot.lane.b32.xlu0 %v1690, 80
        %v1751 = vpop.permute.xlu0 %1750
        %1752 = vrot.lane.b32.xlu0 %v1692, 80
        %v1753 = vpop.permute.xlu0 %1752
        %1754 = vrot.lane.b32.xlu0 %v1694, 80
        %v1755 = vpop.permute.xlu0 %1754
        %1756 = vrot.lane.b32.xlu0 %v1737, 80
        %v1757 = vpop.permute.xlu0 %1756
        %v1768 = vadd.f32 %v1725, %v1739
        %v1769 = vadd.f32 %v1726, %v1741
        %v1770 = vadd.f32 %v1727, %v1743
        %v1771 = vadd.f32 %v1728, %v1745
        %v1772 = vadd.f32 %v1729, %v1747
        %v1773 = vadd.f32 %v1730, %v1749
        %v1774 = vadd.f32 %v1731, %v1751
        %v1775 = vadd.f32 %v1732, %v1753
        %v1776 = vadd.f32 %v1733, %v1755
        %v1777 = vadd.f32 %v1734, %v1757
        %v1778 = vrot.slane %v1533, 3
        %v1779 = vrot.slane %v1538, 3
        %v1780 = vsel %vm1005, %v1778, %v1779
        %v1781 = vrot.slane %v1544, 3
        %v1782 = vsel %vm1005, %v1779, %v1781
        %v1783 = vrot.slane %v1550, 3
        %v1784 = vsel %vm1005, %v1781, %v1783
        %v1785 = vrot.slane %v1556, 3
        %v1786 = vsel %vm1005, %v1783, %v1785
        %v1787 = vrot.slane %v1562, 3
        %v1788 = vsel %vm1005, %v1785, %v1787
        %v1789 = vrot.slane %v1568, 3
        %v1790 = vsel %vm1005, %v1787, %v1789
        %v1791 = vrot.slane %v1574, 3
        %v1792 = vsel %vm1005, %v1789, %v1791
        %v1793 = vrot.slane %v1580, 3
        %v1794 = vsel %vm1005, %v1791, %v1793
        %v1795 = vrot.slane %v1586, 3
        %v1796 = vsel %vm1005, %v1793, %v1795
        %v1797 = vrot.slane %v1592, 3
        %v1798 = vsel %vm1005, %v1795, %v1797
        %1799 = vrot.lane.b32.xlu0 %v1780, 64
        %v1800 = vpop.permute.xlu0 %1799
        %1801 = vrot.lane.b32.xlu0 %v1782, 64
        %v1802 = vpop.permute.xlu0 %1801
        %1803 = vrot.lane.b32.xlu0 %v1784, 64
        %v1804 = vpop.permute.xlu0 %1803
        %1805 = vrot.lane.b32.xlu0 %v1786, 64
        %v1806 = vpop.permute.xlu0 %1805
        %1807 = vrot.lane.b32.xlu0 %v1788, 64
        %v1808 = vpop.permute.xlu0 %1807
        %1809 = vrot.lane.b32.xlu0 %v1790, 64
        %v1810 = vpop.permute.xlu0 %1809
        %1811 = vrot.lane.b32.xlu0 %v1792, 64
        %v1812 = vpop.permute.xlu0 %1811
        %1813 = vrot.lane.b32.xlu0 %v1794, 64
        %v1814 = vpop.permute.xlu0 %1813
        %1815 = vrot.lane.b32.xlu0 %v1796, 64
        %v1816 = vpop.permute.xlu0 %1815
        %1817 = vrot.lane.b32.xlu0 %v1798, 64
        %v1818 = vpop.permute.xlu0 %1817
        %v1829 = vadd.f32 %v1768, %v1800
        %v1830 = vadd.f32 %v1769, %v1802
        %v1831 = vadd.f32 %v1770, %v1804
        %v1832 = vadd.f32 %v1771, %v1806
        %v1833 = vadd.f32 %v1772, %v1808
        %v1834 = vadd.f32 %v1773, %v1810
        %v1835 = vadd.f32 %v1774, %v1812
        %v1836 = vadd.f32 %v1775, %v1814
        %v1837 = vadd.f32 %v1776, %v1816
        %v1838 = vadd.f32 %v1777, %v1818
        %v1839 = vrot.slane %v1533, 4
        %v1840 = vrot.slane %v1538, 4
        %v1841 = vsel %vm1067, %v1839, %v1840
        %v1842 = vrot.slane %v1544, 4
        %v1843 = vsel %vm1067, %v1840, %v1842
        %v1844 = vrot.slane %v1550, 4
        %v1845 = vsel %vm1067, %v1842, %v1844
        %v1846 = vrot.slane %v1556, 4
        %v1847 = vsel %vm1067, %v1844, %v1846
        %v1848 = vrot.slane %v1562, 4
        %v1849 = vsel %vm1067, %v1846, %v1848
        %v1850 = vrot.slane %v1568, 4
        %v1851 = vsel %vm1067, %v1848, %v1850
        %v1852 = vrot.slane %v1574, 4
        %v1853 = vsel %vm1067, %v1850, %v1852
        %v1854 = vrot.slane %v1580, 4
        %v1855 = vsel %vm1067, %v1852, %v1854
        %v1856 = vrot.slane %v1586, 4
        %v1857 = vsel %vm1067, %v1854, %v1856
        %v1858 = vrot.slane %v1592, 4
        %v1859 = vsel %vm1067, %v1856, %v1858
        %1860 = vrot.lane.b32.xlu0 %v1841, 48
        %v1861 = vpop.permute.xlu0 %1860
        %1862 = vrot.lane.b32.xlu0 %v1843, 48
        %v1863 = vpop.permute.xlu0 %1862
        %1864 = vrot.lane.b32.xlu0 %v1845, 48
        %v1865 = vpop.permute.xlu0 %1864
        %1866 = vrot.lane.b32.xlu0 %v1847, 48
        %v1867 = vpop.permute.xlu0 %1866
        %1868 = vrot.lane.b32.xlu0 %v1849, 48
        %v1869 = vpop.permute.xlu0 %1868
        %1870 = vrot.lane.b32.xlu0 %v1851, 48
        %v1871 = vpop.permute.xlu0 %1870
        %1872 = vrot.lane.b32.xlu0 %v1853, 48
        %v1873 = vpop.permute.xlu0 %1872
        %1874 = vrot.lane.b32.xlu0 %v1855, 48
        %v1875 = vpop.permute.xlu0 %1874
        %1876 = vrot.lane.b32.xlu0 %v1857, 48
        %v1877 = vpop.permute.xlu0 %1876
        %1878 = vrot.lane.b32.xlu0 %v1859, 48
        %v1879 = vpop.permute.xlu0 %1878
        %v1890 = vadd.f32 %v1829, %v1861
        %v1891 = vadd.f32 %v1830, %v1863
        %v1892 = vadd.f32 %v1831, %v1865
        %v1893 = vadd.f32 %v1832, %v1867
        %v1894 = vadd.f32 %v1833, %v1869
        %v1895 = vadd.f32 %v1834, %v1871
        %v1896 = vadd.f32 %v1835, %v1873
        %v1897 = vadd.f32 %v1836, %v1875
        %v1898 = vadd.f32 %v1837, %v1877
        %v1899 = vadd.f32 %v1838, %v1879
        %v1901 = vrot.slane %v1598, 4
        %v1902 = vsel %vm1067, %v1858, %v1901
        %1903 = vrot.lane.b32.xlu0 %v1843, 32
        %v1904 = vpop.permute.xlu0 %1903
        %1905 = vrot.lane.b32.xlu0 %v1845, 32
        %v1906 = vpop.permute.xlu0 %1905
        %1907 = vrot.lane.b32.xlu0 %v1847, 32
        %v1908 = vpop.permute.xlu0 %1907
        %1909 = vrot.lane.b32.xlu0 %v1849, 32
        %v1910 = vpop.permute.xlu0 %1909
        %1911 = vrot.lane.b32.xlu0 %v1851, 32
        %v1912 = vpop.permute.xlu0 %1911
        %1913 = vrot.lane.b32.xlu0 %v1853, 32
        %v1914 = vpop.permute.xlu0 %1913
        %1915 = vrot.lane.b32.xlu0 %v1855, 32
        %v1916 = vpop.permute.xlu0 %1915
        %1917 = vrot.lane.b32.xlu0 %v1857, 32
        %v1918 = vpop.permute.xlu0 %1917
        %1919 = vrot.lane.b32.xlu0 %v1859, 32
        %v1920 = vpop.permute.xlu0 %1919
        %1921 = vrot.lane.b32.xlu0 %v1902, 32
        %v1922 = vpop.permute.xlu0 %1921
        %v1933 = vadd.f32 %v1890, %v1904
        %v1934 = vadd.f32 %v1891, %v1906
        %v1935 = vadd.f32 %v1892, %v1908
        %v1936 = vadd.f32 %v1893, %v1910
        %v1937 = vadd.f32 %v1894, %v1912
        %v1938 = vadd.f32 %v1895, %v1914
        %v1939 = vadd.f32 %v1896, %v1916
        %v1940 = vadd.f32 %v1897, %v1918
        %v1941 = vadd.f32 %v1898, %v1920
        %v1942 = vadd.f32 %v1899, %v1922
        %v1943 = vrot.slane %v1538, 5
        %v1944 = vrot.slane %v1544, 5
        %v1945 = vsel %vm1172, %v1943, %v1944
        %v1946 = vrot.slane %v1550, 5
        %v1947 = vsel %vm1172, %v1944, %v1946
        %v1948 = vrot.slane %v1556, 5
        %v1949 = vsel %vm1172, %v1946, %v1948
        %v1950 = vrot.slane %v1562, 5
        %v1951 = vsel %vm1172, %v1948, %v1950
        %v1952 = vrot.slane %v1568, 5
        %v1953 = vsel %vm1172, %v1950, %v1952
        %v1954 = vrot.slane %v1574, 5
        %v1955 = vsel %vm1172, %v1952, %v1954
        %v1956 = vrot.slane %v1580, 5
        %v1957 = vsel %vm1172, %v1954, %v1956
        %v1958 = vrot.slane %v1586, 5
        %v1959 = vsel %vm1172, %v1956, %v1958
        %v1960 = vrot.slane %v1592, 5
        %v1961 = vsel %vm1172, %v1958, %v1960
        %v1962 = vrot.slane %v1598, 5
        %v1963 = vsel %vm1172, %v1960, %v1962
        %1964 = vrot.lane.b32.xlu0 %v1945, 16
        %v1965 = vpop.permute.xlu0 %1964
        %1966 = vrot.lane.b32.xlu0 %v1947, 16
        %v1967 = vpop.permute.xlu0 %1966
        %1968 = vrot.lane.b32.xlu0 %v1949, 16
        %v1969 = vpop.permute.xlu0 %1968
        %1970 = vrot.lane.b32.xlu0 %v1951, 16
        %v1971 = vpop.permute.xlu0 %1970
        %1972 = vrot.lane.b32.xlu0 %v1953, 16
        %v1973 = vpop.permute.xlu0 %1972
        %1974 = vrot.lane.b32.xlu0 %v1955, 16
        %v1975 = vpop.permute.xlu0 %1974
        %1976 = vrot.lane.b32.xlu0 %v1957, 16
        %v1977 = vpop.permute.xlu0 %1976
        %1978 = vrot.lane.b32.xlu0 %v1959, 16
        %v1979 = vpop.permute.xlu0 %1978
        %1980 = vrot.lane.b32.xlu0 %v1961, 16
        %v1981 = vpop.permute.xlu0 %1980
        %1982 = vrot.lane.b32.xlu0 %v1963, 16
        %v1983 = vpop.permute.xlu0 %1982
        %v1994 = vadd.f32 %v1933, %v1965
        %v1995 = vadd.f32 %v1934, %v1967
        %v1996 = vadd.f32 %v1935, %v1969
        %v1997 = vadd.f32 %v1936, %v1971
        %v1998 = vadd.f32 %v1937, %v1973
        %v1999 = vadd.f32 %v1938, %v1975
        %v2000 = vadd.f32 %v1939, %v1977
        %v2001 = vadd.f32 %v1940, %v1979
        %v2002 = vadd.f32 %v1941, %v1981
        %v2003 = vadd.f32 %v1942, %v1983
        %v2015 = vrot.slane %v1540, 6
        %v2016 = vrot.slane %v1546, 6
        %v2017 = vsel %vm1245, %v2015, %v2016
        %v2018 = vrot.slane %v1552, 6
        %v2019 = vsel %vm1245, %v2016, %v2018
        %v2020 = vrot.slane %v1558, 6
        %v2021 = vsel %vm1245, %v2018, %v2020
        %v2022 = vrot.slane %v1564, 6
        %v2023 = vsel %vm1245, %v2020, %v2022
        %v2024 = vrot.slane %v1570, 6
        %v2025 = vsel %vm1245, %v2022, %v2024
        %v2026 = vrot.slane %v1576, 6
        %v2027 = vsel %vm1245, %v2024, %v2026
        %v2028 = vrot.slane %v1582, 6
        %v2029 = vsel %vm1245, %v2026, %v2028
        %v2030 = vrot.slane %v1588, 6
        %v2031 = vsel %vm1245, %v2028, %v2030
        %v2032 = vrot.slane %v1594, 6
        %v2033 = vsel %vm1245, %v2030, %v2032
        %v2034 = vrot.slane %v1600, 6
        %v2035 = vsel %vm1245, %v2032, %v2034
        %v2046 = vadd.f32 %v1994, %v2017
        %v2047 = vadd.f32 %v1995, %v2019
        %v2048 = vadd.f32 %v1996, %v2021
        %v2049 = vadd.f32 %v1997, %v2023
        %v2050 = vadd.f32 %v1998, %v2025
        %v2051 = vadd.f32 %v1999, %v2027
        %v2052 = vadd.f32 %v2000, %v2029
        %v2053 = vadd.f32 %v2001, %v2031
        %v2054 = vadd.f32 %v2002, %v2033
        %v2055 = vadd.f32 %v2003, %v2035
        %v2056 = vlaneseq
        %v2057 = vshrl.u32 %v2056, 7
        %v2058 = vsub.s32 0, %v2057
        %v2059 = vrot.slane %v1421, %v2058
        %v2060 = vadd.f32 %v2046, %v2059
        %v2061 = vadd.f32 %v2047, %v2059
        %v2062 = vadd.f32 %v2048, %v2059
        %v2063 = vadd.f32 %v2049, %v2059
        %v2064 = vadd.f32 %v2050, %v2059
        %v2065 = vadd.f32 %v2051, %v2059
        %v2066 = vadd.f32 %v2052, %v2059
        %v2067 = vadd.f32 %v2053, %v2059
        %v2068 = vadd.f32 %v2054, %v2059
        %v2069 = vadd.f32 %v2055, %v2059
        %v2070 = vrot.slane %v615, 3
        %v2071 = vrot.slane %v616, 3
        %v2072 = vsel %vm1005, %v2070, %v2071
        %v2073 = vrot.slane %v617, 3
        %v2074 = vsel %vm1005, %v2071, %v2073
        %v2075 = vrot.slane %v618, 3
        %v2076 = vsel %vm1005, %v2073, %v2075
        %v2077 = vrot.slane %v619, 3
        %v2078 = vsel %vm1005, %v2075, %v2077
        %v2079 = vrot.slane %v620, 3
        %v2080 = vsel %vm1005, %v2077, %v2079
        %v2081 = vrot.slane %v621, 3
        %v2082 = vsel %vm1005, %v2079, %v2081
        %v2083 = vrot.slane %v622, 3
        %v2084 = vsel %vm1005, %v2081, %v2083
        %v2085 = vrot.slane %v623, 3
        %v2086 = vsel %vm1005, %v2083, %v2085
        %v2087 = vrot.slane %v624, 3
        %v2088 = vsel %vm1005, %v2085, %v2087
        %v2089 = vrot.slane %v625, 3
        %v2090 = vsel %vm1005, %v2087, %v2089
        %v2101 = vadd.f32 %v2060, %v2072
        %v2102 = vadd.f32 %v2061, %v2074
        %v2103 = vadd.f32 %v2062, %v2076
        %v2104 = vadd.f32 %v2063, %v2078
        %v2105 = vadd.f32 %v2064, %v2080
        %v2106 = vadd.f32 %v2065, %v2082
        %v2107 = vadd.f32 %v2066, %v2084
        %v2108 = vadd.f32 %v2067, %v2086
        %v2109 = vadd.f32 %v2068, %v2088
        %v2110 = vadd.f32 %v2069, %v2090
        %s2111 = sld [smem:[#allocation3 + $0x2]]
        %vm2112 = vcmp.ge.f32.partialorder %v2101, 0.0
        %vm2113 = vcmp.ge.f32.partialorder %v2102, 0.0
        %vm2114 = vcmp.ge.f32.partialorder %v2103, 0.0
        %vm2115 = vcmp.ge.f32.partialorder %v2104, 0.0
        %vm2116 = vcmp.ge.f32.partialorder %v2105, 0.0
        %vm2117 = vcmp.ge.f32.partialorder %v2106, 0.0
        %vm2118 = vcmp.ge.f32.partialorder %v2107, 0.0
        %vm2119 = vcmp.ge.f32.partialorder %v2108, 0.0
        %vm2120 = vcmp.ge.f32.partialorder %v2109, 0.0
        %vm2121 = vcmp.ge.f32.partialorder %v2110, 0.0
        %v2122 = vstv %s2111
        %v2123 = vmul.f32 %v2122, %v2101
        %v2124 = vmul.f32 %v2122, %v2102
        %v2125 = vmul.f32 %v2122, %v2103
        %v2126 = vmul.f32 %v2122, %v2104
        %v2127 = vmul.f32 %v2122, %v2105
        %v2128 = vmul.f32 %v2122, %v2106
        %v2129 = vmul.f32 %v2122, %v2107
        %v2130 = vmul.f32 %v2122, %v2108
        %v2131 = vmul.f32 %v2122, %v2109
        %v2132 = vmul.f32 %v2122, %v2110
        %v2133 = vsel %vm2112, %v2101, %v2123
        %v2134 = vsel %vm2113, %v2102, %v2124
        %v2135 = vsel %vm2114, %v2103, %v2125
        %v2136 = vsel %vm2115, %v2104, %v2126
        %v2137 = vsel %vm2116, %v2105, %v2127
        %v2138 = vsel %vm2117, %v2106, %v2128
        %v2139 = vsel %vm2118, %v2107, %v2129
        %v2140 = vsel %vm2119, %v2108, %v2130
        %v2141 = vsel %vm2120, %v2109, %v2131
        %v2142 = vsel %vm2121, %v2110, %v2132
        %v2143 = vmul.f32 %v2133, %v1336
        %v2144 = vmul.f32 %v2134, %v1341
        %v2145 = vmul.f32 %v2135, %v1346
        %v2146 = vmul.f32 %v2136, %v1351
        %v2147 = vmul.f32 %v2137, %v1356
        %v2148 = vmul.f32 %v2138, %v1361
        %v2149 = vmul.f32 %v2139, %v1366
        %v2150 = vmul.f32 %v2140, %v1371
        %v2151 = vmul.f32 %v2141, %v1376
        %v2152 = vmul.f32 %v2142, %v1381
        %2153 = vst.msk [vmem:[#allocation2 + $0xb] sm:$0xff] %vm627, %v2143
        %2154 = vst.msk [vmem:[#allocation2 + $0x13] sm:$0xff] %vm627, %v2144
        %2155 = vst.msk [vmem:[#allocation2 + $0x1b] sm:$0xff] %vm627, %v2145
        %2156 = vst.msk [vmem:[#allocation2 + $0x23] sm:$0xff] %vm627, %v2146
        %2157 = vst.msk [vmem:[#allocation2 + $0x2b] sm:$0xff] %vm627, %v2147
        %2158 = vst.msk [vmem:[#allocation2 + $0x33] sm:$0xff] %vm627, %v2148
        %2159 = vst.msk [vmem:[#allocation2 + $0x3b] sm:$0xff] %vm627, %v2149
        %2160 = vst.msk [vmem:[#allocation2 + $0x43] sm:$0xff] %vm627, %v2150
        %2161 = vst.msk [vmem:[#allocation2 + $0x4b] sm:$0xff] %vm627, %v2151
        %2162 = vst.msk [vmem:[#allocation2 + $0x53] sm:$0xff] %vm627, %v2152
        %v2163 = vld [vmem:[#allocation2] sm:$0xff]
        %v2164 = vld [vmem:[#allocation2 + $0x8] sm:$0xff]
        %v2165 = vld [vmem:[#allocation2 + $0x10] sm:$0xff]
        %v2166 = vld [vmem:[#allocation2 + $0x18] sm:$0xff]
        %v2167 = vld [vmem:[#allocation2 + $0x20] sm:$0xff]
        %v2168 = vld [vmem:[#allocation2 + $0x28] sm:$0xff]
        %v2169 = vld [vmem:[#allocation2 + $0x30] sm:$0xff]
        %v2170 = vld [vmem:[#allocation2 + $0x38] sm:$0xff]
        %v2171 = vld [vmem:[#allocation2 + $0x40] sm:$0xff]
        %v2172 = vld [vmem:[#allocation2 + $0x48] sm:$0xff]
        %v2173 = vld [vmem:[#allocation2 + $0x50] sm:$0xff]
        %v2174 = vld [vmem:[#allocation2 + $0x58] sm:$0xff]
        %v2175 = vld [vmem:[#allocation2 + $0x60] sm:$0x3f]
        %s2176 = scalar_lea.vmem %s3, 64
        %v2177 = vld [vmem:[%s2176] sm:$0xff]
        %v2178 = vld [vmem:[%s2176 + $0x8] sm:$0xff]
        %v2179 = vld [vmem:[%s2176 + $0x10] sm:$0xff]
        %v2180 = vld [vmem:[%s2176 + $0x18] sm:$0xff]
        %v2181 = vld [vmem:[%s4 + $0x3] sm:$0x1]
        %v2183 = vsel %vm627, %v2163, 0
        %v2186 = vsel %vm627, %v2164, 0
        %v2189 = vsel %vm627, %v2165, 0
        %v2192 = vsel %vm627, %v2166, 0
        %v2195 = vsel %vm627, %v2167, 0
        %v2198 = vsel %vm627, %v2168, 0
        %v2201 = vsel %vm627, %v2169, 0
        %v2204 = vsel %vm627, %v2170, 0
        %v2207 = vsel %vm627, %v2171, 0
        %v2210 = vsel %vm627, %v2172, 0
        %v2213 = vsel %vm627, %v2173, 0
        %v2216 = vsel %vm627, %v2174, 0
        %v2219 = vsel %vm627, %v2175, 0
        %2221 = vmatprep.subr.mxu0 %v2178
        %2222 = vmatpush1.msra.mxu0 %v2177
        %2223 = vmatprep.subr.mxu0 %v2180
        %2224 = vmatpush1.msra.mxu0 %v2179
        %2225 = vmatprep.subr.mxu0 0.0
        %2226 = vmatpush1.msra.mxu0 0.0
        %2227 = vmatprep.subr.mxu0 0.0
        %2228 = vmatpush1.msra.mxu0 0.0
        %2229 = vmatprep.subr.mxu0 0.0
        %2230 = vmatpush1.msra.mxu0 0.0
        %2231 = vmatprep.subr.mxu0 0.0
        %2232 = vmatpush1.msra.mxu0 0.0
        %2233 = vmatprep.subr.mxu0 0.0
        %2234 = vmatpush1.msra.mxu0 0.0
        %2235 = vmatprep.subr.mxu0 0.0
        %2236 = vmatpush1.msra.mxu0 0.0
        %2237 = vmatprep.subr.mxu0 0.0
        %2238 = vmatpush1.msra.mxu0 0.0
        %2239 = vmatprep.subr.mxu0 0.0
        %2240 = vmatpush1.msra.mxu0 0.0
        %2241 = vmatprep.subr.mxu0 0.0
        %2242 = vmatpush1.msra.mxu0 0.0
        %2243 = vmatprep.subr.mxu0 0.0
        %2244 = vmatpush1.msra.mxu0 0.0
        %2245 = vmatprep.subr.mxu0 0.0
        %2246 = vmatpush1.msra.mxu0 0.0
        %2247 = vmatprep.subr.mxu0 0.0
        %2248 = vmatpush1.msra.mxu0 0.0
        %2249 = vmatprep.subr.mxu0 0.0
        %2250 = vmatpush1.msra.mxu0 0.0
        %2251 = vmatprep.subr.mxu0 0.0
        %2252 = vmatpush1.msra.mxu0 0.0
        %2253 = vmatprep.subr.mxu0 0.0
        %2254 = vmatpush1.msra.mxu0 0.0
        %2255 = vmatprep.subr.mxu0 0.0
        %2256 = vmatpush1.msra.mxu0 0.0
        %2257 = vmatprep.subr.mxu0 0.0
        %2258 = vmatpush1.msra.mxu0 0.0
        %2259 = vmatprep.subr.mxu0 0.0
        %2260 = vmatpush1.msra.mxu0 0.0
        %2261 = vmatprep.subr.mxu0 0.0
        %2262 = vmatpush1.msra.mxu0 0.0
        %2263 = vmatprep.subr.mxu0 0.0
        %2264 = vmatpush1.msra.mxu0 0.0
        %2265 = vmatprep.subr.mxu0 0.0
        %2266 = vmatpush1.msra.mxu0 0.0
        %2267 = vmatprep.subr.mxu0 0.0
        %2268 = vmatpush1.msra.mxu0 0.0
        %2269 = vmatprep.subr.mxu0 0.0
        %2270 = vmatpush1.msra.mxu0 0.0
        %2271 = vmatprep.subr.mxu0 0.0
        %2272 = vmatpush1.msra.mxu0 0.0
        %2273 = vmatprep.subr.mxu0 0.0
        %2274 = vmatpush1.msra.mxu0 0.0
        %2275 = vmatprep.subr.mxu0 0.0
        %2276 = vmatpush1.msra.mxu0 0.0
        %2277 = vmatprep.subr.mxu0 0.0
        %2278 = vmatpush1.msra.mxu0 0.0
        %2279 = vmatprep.subr.mxu0 0.0
        %2280 = vmatpush1.msra.mxu0 0.0
        %2281 = vmatprep.subr.mxu0 0.0
        %2282 = vmatpush1.msra.mxu0 0.0
        %2283 = vmatprep.subr.mxu0 0.0
        %2284 = vmatpush1.msra.mxu0 0.0
        %2285 = vmatprep.mubr.f32.mxu0 0.0
        %2286 = vmatmul.mubr.f32.gmra.mrb[0].mxu0 %v2183
        %v2287 = vpop.f32.mrb[0].mxu0
        %v2288 = vadd.f32 0.0, %v2287
        %v2289 = vpop.f32.mrb[0].mxu0
        %2290 = vmatprep.mubr.f32.mxu0 0.0
        %2291 = vmatmul.mubr.f32.gmra.mrb[0].mxu0 %v2186
        %v2292 = vpop.f32.mrb[0].mxu0
        %v2293 = vadd.f32 0.0, %v2292
        %v2294 = vpop.f32.mrb[0].mxu0
        %2295 = vmatprep.mubr.f32.mxu0 0.0
        %2296 = vmatmul.mubr.f32.gmra.mrb[0].mxu0 %v2189
        %v2297 = vpop.f32.mrb[0].mxu0
        %v2298 = vadd.f32 0.0, %v2297
        %v2299 = vpop.f32.mrb[0].mxu0
        %v2300 = vadd.f32 0.0, %v2299
        %2301 = vmatprep.mubr.f32.mxu0 0.0
        %2302 = vmatmul.mubr.f32.gmra.mrb[0].mxu0 %v2192
        %v2303 = vpop.f32.mrb[0].mxu0
        %v2304 = vadd.f32 0.0, %v2303
        %v2305 = vpop.f32.mrb[0].mxu0
        %v2306 = vadd.f32 0.0, %v2305
        %2307 = vmatprep.mubr.f32.mxu0 0.0
        %2308 = vmatmul.mubr.f32.gmra.mrb[0].mxu0 %v2195
        %v2309 = vpop.f32.mrb[0].mxu0
        %v2310 = vadd.f32 0.0, %v2309
        %v2311 = vpop.f32.mrb[0].mxu0
        %v2312 = vadd.f32 0.0, %v2311
        %2313 = vmatprep.mubr.f32.mxu0 0.0
        %2314 = vmatmul.mubr.f32.gmra.mrb[0].mxu0 %v2198
        %v2315 = vpop.f32.mrb[0].mxu0
        %v2316 = vadd.f32 0.0, %v2315
        %v2317 = vpop.f32.mrb[0].mxu0
        %v2318 = vadd.f32 0.0, %v2317
        %2319 = vmatprep.mubr.f32.mxu0 0.0
        %2320 = vmatmul.mubr.f32.gmra.mrb[0].mxu0 %v2201
        %v2321 = vpop.f32.mrb[0].mxu0
        %v2322 = vadd.f32 0.0, %v2321
        %v2323 = vpop.f32.mrb[0].mxu0
        %v2324 = vadd.f32 0.0, %v2323
        %2325 = vmatprep.mubr.f32.mxu0 0.0
        %2326 = vmatmul.mubr.f32.gmra.mrb[0].mxu0 %v2204
        %v2327 = vpop.f32.mrb[0].mxu0
        %v2328 = vadd.f32 0.0, %v2327
        %v2329 = vpop.f32.mrb[0].mxu0
        %v2330 = vadd.f32 0.0, %v2329
        %2331 = vmatprep.mubr.f32.mxu0 0.0
        %2332 = vmatmul.mubr.f32.gmra.mrb[0].mxu0 %v2207
        %v2333 = vpop.f32.mrb[0].mxu0
        %v2334 = vadd.f32 0.0, %v2333
        %v2335 = vpop.f32.mrb[0].mxu0
        %v2336 = vadd.f32 0.0, %v2335
        %2337 = vmatprep.mubr.f32.mxu0 0.0
        %2338 = vmatmul.mubr.f32.gmra.mrb[0].mxu0 %v2210
        %v2339 = vpop.f32.mrb[0].mxu0
        %v2340 = vadd.f32 0.0, %v2339
        %v2341 = vpop.f32.mrb[0].mxu0
        %v2342 = vadd.f32 0.0, %v2341
        %2343 = vmatprep.mubr.f32.mxu0 0.0
        %2344 = vmatmul.mubr.f32.gmra.mrb[0].mxu0 %v2213
        %v2345 = vpop.f32.mrb[0].mxu0
        %v2346 = vadd.f32 0.0, %v2345
        %v2347 = vpop.f32.mrb[0].mxu0
        %v2348 = vadd.f32 0.0, %v2347
        %2349 = vmatprep.mubr.f32.mxu0 0.0
        %2350 = vmatmul.mubr.f32.gmra.mrb[0].mxu0 %v2216
        %v2351 = vpop.f32.mrb[0].mxu0
        %v2352 = vadd.f32 0.0, %v2351
        %v2353 = vpop.f32.mrb[0].mxu0
        %v2354 = vadd.f32 0.0, %v2353
        %2355 = vmatprep.mubr.f32.mxu0 0.0
        %2356 = vmatmul.mubr.f32.gmra.mrb[0].mxu0 %v2219
        %v2357 = vpop.f32.mrb[0].mxu0
        %v2358 = vadd.f32 0.0, %v2357
        %v2359 = vpop.f32.mrb[0].mxu0
        %v2360 = vadd.f32 0.0, %v2359
        %2361 = vdwg.mxu0
        %v2373 = vrot.slane %v2288, 1
        %v2374 = vrot.slane %v2293, 1
        %v2375 = vsel %vm838, %v2373, %v2374
        %v2376 = vrot.slane %v2298, 1
        %v2377 = vsel %vm838, %v2374, %v2376
        %v2378 = vrot.slane %v2304, 1
        %v2379 = vsel %vm838, %v2376, %v2378
        %v2380 = vrot.slane %v2310, 1
        %v2381 = vsel %vm838, %v2378, %v2380
        %v2382 = vrot.slane %v2316, 1
        %v2383 = vsel %vm838, %v2380, %v2382
        %v2384 = vrot.slane %v2322, 1
        %v2385 = vsel %vm838, %v2382, %v2384
        %v2386 = vrot.slane %v2328, 1
        %v2387 = vsel %vm838, %v2384, %v2386
        %v2388 = vrot.slane %v2334, 1
        %v2389 = vsel %vm838, %v2386, %v2388
        %v2390 = vrot.slane %v2340, 1
        %v2391 = vsel %vm838, %v2388, %v2390
        %v2392 = vrot.slane %v2346, 1
        %v2393 = vsel %vm838, %v2390, %v2392
        %2394 = vrot.lane.b32.xlu0 %v2375, 112
        %v2395 = vpop.permute.xlu0 %2394
        %2396 = vrot.lane.b32.xlu0 %v2377, 112
        %v2397 = vpop.permute.xlu0 %2396
        %2398 = vrot.lane.b32.xlu0 %v2379, 112
        %v2399 = vpop.permute.xlu0 %2398
        %2400 = vrot.lane.b32.xlu0 %v2381, 112
        %v2401 = vpop.permute.xlu0 %2400
        %2402 = vrot.lane.b32.xlu0 %v2383, 112
        %v2403 = vpop.permute.xlu0 %2402
        %2404 = vrot.lane.b32.xlu0 %v2385, 112
        %v2405 = vpop.permute.xlu0 %2404
        %2406 = vrot.lane.b32.xlu0 %v2387, 112
        %v2407 = vpop.permute.xlu0 %2406
        %2408 = vrot.lane.b32.xlu0 %v2389, 112
        %v2409 = vpop.permute.xlu0 %2408
        %2410 = vrot.lane.b32.xlu0 %v2391, 112
        %v2411 = vpop.permute.xlu0 %2410
        %2412 = vrot.lane.b32.xlu0 %v2393, 112
        %v2413 = vpop.permute.xlu0 %2412
        %v2424 = vadd.f32 %v2288, %v2395
        %v2425 = vadd.f32 %v2293, %v2397
        %v2426 = vadd.f32 %v2298, %v2399
        %v2427 = vadd.f32 %v2304, %v2401
        %v2428 = vadd.f32 %v2310, %v2403
        %v2429 = vadd.f32 %v2316, %v2405
        %v2430 = vadd.f32 %v2322, %v2407
        %v2431 = vadd.f32 %v2328, %v2409
        %v2432 = vadd.f32 %v2334, %v2411
        %v2433 = vadd.f32 %v2340, %v2413
        %v2434 = vrot.slane %v2288, 2
        %v2435 = vrot.slane %v2293, 2
        %v2436 = vsel %vm900, %v2434, %v2435
        %v2437 = vrot.slane %v2298, 2
        %v2438 = vsel %vm900, %v2435, %v2437
        %v2439 = vrot.slane %v2304, 2
        %v2440 = vsel %vm900, %v2437, %v2439
        %v2441 = vrot.slane %v2310, 2
        %v2442 = vsel %vm900, %v2439, %v2441
        %v2443 = vrot.slane %v2316, 2
        %v2444 = vsel %vm900, %v2441, %v2443
        %v2445 = vrot.slane %v2322, 2
        %v2446 = vsel %vm900, %v2443, %v2445
        %v2447 = vrot.slane %v2328, 2
        %v2448 = vsel %vm900, %v2445, %v2447
        %v2449 = vrot.slane %v2334, 2
        %v2450 = vsel %vm900, %v2447, %v2449
        %v2451 = vrot.slane %v2340, 2
        %v2452 = vsel %vm900, %v2449, %v2451
        %v2453 = vrot.slane %v2346, 2
        %v2454 = vsel %vm900, %v2451, %v2453
        %2455 = vrot.lane.b32.xlu0 %v2436, 96
        %v2456 = vpop.permute.xlu0 %2455
        %2457 = vrot.lane.b32.xlu0 %v2438, 96
        %v2458 = vpop.permute.xlu0 %2457
        %2459 = vrot.lane.b32.xlu0 %v2440, 96
        %v2460 = vpop.permute.xlu0 %2459
        %2461 = vrot.lane.b32.xlu0 %v2442, 96
        %v2462 = vpop.permute.xlu0 %2461
        %2463 = vrot.lane.b32.xlu0 %v2444, 96
        %v2464 = vpop.permute.xlu0 %2463
        %2465 = vrot.lane.b32.xlu0 %v2446, 96
        %v2466 = vpop.permute.xlu0 %2465
        %2467 = vrot.lane.b32.xlu0 %v2448, 96
        %v2468 = vpop.permute.xlu0 %2467
        %2469 = vrot.lane.b32.xlu0 %v2450, 96
        %v2470 = vpop.permute.xlu0 %2469
        %2471 = vrot.lane.b32.xlu0 %v2452, 96
        %v2472 = vpop.permute.xlu0 %2471
        %2473 = vrot.lane.b32.xlu0 %v2454, 96
        %v2474 = vpop.permute.xlu0 %2473
        %v2485 = vadd.f32 %v2424, %v2456
        %v2486 = vadd.f32 %v2425, %v2458
        %v2487 = vadd.f32 %v2426, %v2460
        %v2488 = vadd.f32 %v2427, %v2462
        %v2489 = vadd.f32 %v2428, %v2464
        %v2490 = vadd.f32 %v2429, %v2466
        %v2491 = vadd.f32 %v2430, %v2468
        %v2492 = vadd.f32 %v2431, %v2470
        %v2493 = vadd.f32 %v2432, %v2472
        %v2494 = vadd.f32 %v2433, %v2474
        %v2496 = vrot.slane %v2352, 2
        %v2497 = vsel %vm900, %v2453, %v2496
        %2498 = vrot.lane.b32.xlu0 %v2438, 80
        %v2499 = vpop.permute.xlu0 %2498
        %2500 = vrot.lane.b32.xlu0 %v2440, 80
        %v2501 = vpop.permute.xlu0 %2500
        %2502 = vrot.lane.b32.xlu0 %v2442, 80
        %v2503 = vpop.permute.xlu0 %2502
        %2504 = vrot.lane.b32.xlu0 %v2444, 80
        %v2505 = vpop.permute.xlu0 %2504
        %2506 = vrot.lane.b32.xlu0 %v2446, 80
        %v2507 = vpop.permute.xlu0 %2506
        %2508 = vrot.lane.b32.xlu0 %v2448, 80
        %v2509 = vpop.permute.xlu0 %2508
        %2510 = vrot.lane.b32.xlu0 %v2450, 80
        %v2511 = vpop.permute.xlu0 %2510
        %2512 = vrot.lane.b32.xlu0 %v2452, 80
        %v2513 = vpop.permute.xlu0 %2512
        %2514 = vrot.lane.b32.xlu0 %v2454, 80
        %v2515 = vpop.permute.xlu0 %2514
        %2516 = vrot.lane.b32.xlu0 %v2497, 80
        %v2517 = vpop.permute.xlu0 %2516
        %v2528 = vadd.f32 %v2485, %v2499
        %v2529 = vadd.f32 %v2486, %v2501
        %v2530 = vadd.f32 %v2487, %v2503
        %v2531 = vadd.f32 %v2488, %v2505
        %v2532 = vadd.f32 %v2489, %v2507
        %v2533 = vadd.f32 %v2490, %v2509
        %v2534 = vadd.f32 %v2491, %v2511
        %v2535 = vadd.f32 %v2492, %v2513
        %v2536 = vadd.f32 %v2493, %v2515
        %v2537 = vadd.f32 %v2494, %v2517
        %v2538 = vrot.slane %v2293, 3
        %v2539 = vrot.slane %v2298, 3
        %v2540 = vsel %vm1005, %v2538, %v2539
        %v2541 = vrot.slane %v2304, 3
        %v2542 = vsel %vm1005, %v2539, %v2541
        %v2543 = vrot.slane %v2310, 3
        %v2544 = vsel %vm1005, %v2541, %v2543
        %v2545 = vrot.slane %v2316, 3
        %v2546 = vsel %vm1005, %v2543, %v2545
        %v2547 = vrot.slane %v2322, 3
        %v2548 = vsel %vm1005, %v2545, %v2547
        %v2549 = vrot.slane %v2328, 3
        %v2550 = vsel %vm1005, %v2547, %v2549
        %v2551 = vrot.slane %v2334, 3
        %v2552 = vsel %vm1005, %v2549, %v2551
        %v2553 = vrot.slane %v2340, 3
        %v2554 = vsel %vm1005, %v2551, %v2553
        %v2555 = vrot.slane %v2346, 3
        %v2556 = vsel %vm1005, %v2553, %v2555
        %v2557 = vrot.slane %v2352, 3
        %v2558 = vsel %vm1005, %v2555, %v2557
        %2559 = vrot.lane.b32.xlu0 %v2540, 64
        %v2560 = vpop.permute.xlu0 %2559
        %2561 = vrot.lane.b32.xlu0 %v2542, 64
        %v2562 = vpop.permute.xlu0 %2561
        %2563 = vrot.lane.b32.xlu0 %v2544, 64
        %v2564 = vpop.permute.xlu0 %2563
        %2565 = vrot.lane.b32.xlu0 %v2546, 64
        %v2566 = vpop.permute.xlu0 %2565
        %2567 = vrot.lane.b32.xlu0 %v2548, 64
        %v2568 = vpop.permute.xlu0 %2567
        %2569 = vrot.lane.b32.xlu0 %v2550, 64
        %v2570 = vpop.permute.xlu0 %2569
        %2571 = vrot.lane.b32.xlu0 %v2552, 64
        %v2572 = vpop.permute.xlu0 %2571
        %2573 = vrot.lane.b32.xlu0 %v2554, 64
        %v2574 = vpop.permute.xlu0 %2573
        %2575 = vrot.lane.b32.xlu0 %v2556, 64
        %v2576 = vpop.permute.xlu0 %2575
        %2577 = vrot.lane.b32.xlu0 %v2558, 64
        %v2578 = vpop.permute.xlu0 %2577
        %v2589 = vadd.f32 %v2528, %v2560
        %v2590 = vadd.f32 %v2529, %v2562
        %v2591 = vadd.f32 %v2530, %v2564
        %v2592 = vadd.f32 %v2531, %v2566
        %v2593 = vadd.f32 %v2532, %v2568
        %v2594 = vadd.f32 %v2533, %v2570
        %v2595 = vadd.f32 %v2534, %v2572
        %v2596 = vadd.f32 %v2535, %v2574
        %v2597 = vadd.f32 %v2536, %v2576
        %v2598 = vadd.f32 %v2537, %v2578
        %v2599 = vrot.slane %v2293, 4
        %v2600 = vrot.slane %v2298, 4
        %v2601 = vsel %vm1067, %v2599, %v2600
        %v2602 = vrot.slane %v2304, 4
        %v2603 = vsel %vm1067, %v2600, %v2602
        %v2604 = vrot.slane %v2310, 4
        %v2605 = vsel %vm1067, %v2602, %v2604
        %v2606 = vrot.slane %v2316, 4
        %v2607 = vsel %vm1067, %v2604, %v2606
        %v2608 = vrot.slane %v2322, 4
        %v2609 = vsel %vm1067, %v2606, %v2608
        %v2610 = vrot.slane %v2328, 4
        %v2611 = vsel %vm1067, %v2608, %v2610
        %v2612 = vrot.slane %v2334, 4
        %v2613 = vsel %vm1067, %v2610, %v2612
        %v2614 = vrot.slane %v2340, 4
        %v2615 = vsel %vm1067, %v2612, %v2614
        %v2616 = vrot.slane %v2346, 4
        %v2617 = vsel %vm1067, %v2614, %v2616
        %v2618 = vrot.slane %v2352, 4
        %v2619 = vsel %vm1067, %v2616, %v2618
        %2620 = vrot.lane.b32.xlu0 %v2601, 48
        %v2621 = vpop.permute.xlu0 %2620
        %2622 = vrot.lane.b32.xlu0 %v2603, 48
        %v2623 = vpop.permute.xlu0 %2622
        %2624 = vrot.lane.b32.xlu0 %v2605, 48
        %v2625 = vpop.permute.xlu0 %2624
        %2626 = vrot.lane.b32.xlu0 %v2607, 48
        %v2627 = vpop.permute.xlu0 %2626
        %2628 = vrot.lane.b32.xlu0 %v2609, 48
        %v2629 = vpop.permute.xlu0 %2628
        %2630 = vrot.lane.b32.xlu0 %v2611, 48
        %v2631 = vpop.permute.xlu0 %2630
        %2632 = vrot.lane.b32.xlu0 %v2613, 48
        %v2633 = vpop.permute.xlu0 %2632
        %2634 = vrot.lane.b32.xlu0 %v2615, 48
        %v2635 = vpop.permute.xlu0 %2634
        %2636 = vrot.lane.b32.xlu0 %v2617, 48
        %v2637 = vpop.permute.xlu0 %2636
        %2638 = vrot.lane.b32.xlu0 %v2619, 48
        %v2639 = vpop.permute.xlu0 %2638
        %v2650 = vadd.f32 %v2589, %v2621
        %v2651 = vadd.f32 %v2590, %v2623
        %v2652 = vadd.f32 %v2591, %v2625
        %v2653 = vadd.f32 %v2592, %v2627
        %v2654 = vadd.f32 %v2593, %v2629
        %v2655 = vadd.f32 %v2594, %v2631
        %v2656 = vadd.f32 %v2595, %v2633
        %v2657 = vadd.f32 %v2596, %v2635
        %v2658 = vadd.f32 %v2597, %v2637
        %v2659 = vadd.f32 %v2598, %v2639
        %v2661 = vrot.slane %v2358, 4
        %v2662 = vsel %vm1067, %v2618, %v2661
        %2663 = vrot.lane.b32.xlu0 %v2603, 32
        %v2664 = vpop.permute.xlu0 %2663
        %2665 = vrot.lane.b32.xlu0 %v2605, 32
        %v2666 = vpop.permute.xlu0 %2665
        %2667 = vrot.lane.b32.xlu0 %v2607, 32
        %v2668 = vpop.permute.xlu0 %2667
        %2669 = vrot.lane.b32.xlu0 %v2609, 32
        %v2670 = vpop.permute.xlu0 %2669
        %2671 = vrot.lane.b32.xlu0 %v2611, 32
        %v2672 = vpop.permute.xlu0 %2671
        %2673 = vrot.lane.b32.xlu0 %v2613, 32
        %v2674 = vpop.permute.xlu0 %2673
        %2675 = vrot.lane.b32.xlu0 %v2615, 32
        %v2676 = vpop.permute.xlu0 %2675
        %2677 = vrot.lane.b32.xlu0 %v2617, 32
        %v2678 = vpop.permute.xlu0 %2677
        %2679 = vrot.lane.b32.xlu0 %v2619, 32
        %v2680 = vpop.permute.xlu0 %2679
        %2681 = vrot.lane.b32.xlu0 %v2662, 32
        %v2682 = vpop.permute.xlu0 %2681
        %v2693 = vadd.f32 %v2650, %v2664
        %v2694 = vadd.f32 %v2651, %v2666
        %v2695 = vadd.f32 %v2652, %v2668
        %v2696 = vadd.f32 %v2653, %v2670
        %v2697 = vadd.f32 %v2654, %v2672
        %v2698 = vadd.f32 %v2655, %v2674
        %v2699 = vadd.f32 %v2656, %v2676
        %v2700 = vadd.f32 %v2657, %v2678
        %v2701 = vadd.f32 %v2658, %v2680
        %v2702 = vadd.f32 %v2659, %v2682
        %v2703 = vrot.slane %v2298, 5
        %v2704 = vrot.slane %v2304, 5
        %v2705 = vsel %vm1172, %v2703, %v2704
        %v2706 = vrot.slane %v2310, 5
        %v2707 = vsel %vm1172, %v2704, %v2706
        %v2708 = vrot.slane %v2316, 5
        %v2709 = vsel %vm1172, %v2706, %v2708
        %v2710 = vrot.slane %v2322, 5
        %v2711 = vsel %vm1172, %v2708, %v2710
        %v2712 = vrot.slane %v2328, 5
        %v2713 = vsel %vm1172, %v2710, %v2712
        %v2714 = vrot.slane %v2334, 5
        %v2715 = vsel %vm1172, %v2712, %v2714
        %v2716 = vrot.slane %v2340, 5
        %v2717 = vsel %vm1172, %v2714, %v2716
        %v2718 = vrot.slane %v2346, 5
        %v2719 = vsel %vm1172, %v2716, %v2718
        %v2720 = vrot.slane %v2352, 5
        %v2721 = vsel %vm1172, %v2718, %v2720
        %v2722 = vrot.slane %v2358, 5
        %v2723 = vsel %vm1172, %v2720, %v2722
        %2724 = vrot.lane.b32.xlu0 %v2705, 16
        %v2725 = vpop.permute.xlu0 %2724
        %2726 = vrot.lane.b32.xlu0 %v2707, 16
        %v2727 = vpop.permute.xlu0 %2726
        %2728 = vrot.lane.b32.xlu0 %v2709, 16
        %v2729 = vpop.permute.xlu0 %2728
        %2730 = vrot.lane.b32.xlu0 %v2711, 16
        %v2731 = vpop.permute.xlu0 %2730
        %2732 = vrot.lane.b32.xlu0 %v2713, 16
        %v2733 = vpop.permute.xlu0 %2732
        %2734 = vrot.lane.b32.xlu0 %v2715, 16
        %v2735 = vpop.permute.xlu0 %2734
        %2736 = vrot.lane.b32.xlu0 %v2717, 16
        %v2737 = vpop.permute.xlu0 %2736
        %2738 = vrot.lane.b32.xlu0 %v2719, 16
        %v2739 = vpop.permute.xlu0 %2738
        %2740 = vrot.lane.b32.xlu0 %v2721, 16
        %v2741 = vpop.permute.xlu0 %2740
        %2742 = vrot.lane.b32.xlu0 %v2723, 16
        %v2743 = vpop.permute.xlu0 %2742
        %v2754 = vadd.f32 %v2693, %v2725
        %v2755 = vadd.f32 %v2694, %v2727
        %v2756 = vadd.f32 %v2695, %v2729
        %v2757 = vadd.f32 %v2696, %v2731
        %v2758 = vadd.f32 %v2697, %v2733
        %v2759 = vadd.f32 %v2698, %v2735
        %v2760 = vadd.f32 %v2699, %v2737
        %v2761 = vadd.f32 %v2700, %v2739
        %v2762 = vadd.f32 %v2701, %v2741
        %v2763 = vadd.f32 %v2702, %v2743
        %v2775 = vrot.slane %v2300, 6
        %v2776 = vrot.slane %v2306, 6
        %v2777 = vsel %vm1245, %v2775, %v2776
        %v2778 = vrot.slane %v2312, 6
        %v2779 = vsel %vm1245, %v2776, %v2778
        %v2780 = vrot.slane %v2318, 6
        %v2781 = vsel %vm1245, %v2778, %v2780
        %v2782 = vrot.slane %v2324, 6
        %v2783 = vsel %vm1245, %v2780, %v2782
        %v2784 = vrot.slane %v2330, 6
        %v2785 = vsel %vm1245, %v2782, %v2784
        %v2786 = vrot.slane %v2336, 6
        %v2787 = vsel %vm1245, %v2784, %v2786
        %v2788 = vrot.slane %v2342, 6
        %v2789 = vsel %vm1245, %v2786, %v2788
        %v2790 = vrot.slane %v2348, 6
        %v2791 = vsel %vm1245, %v2788, %v2790
        %v2792 = vrot.slane %v2354, 6
        %v2793 = vsel %vm1245, %v2790, %v2792
        %v2794 = vrot.slane %v2360, 6
        %v2795 = vsel %vm1245, %v2792, %v2794
        %v2806 = vadd.f32 %v2754, %v2777
        %v2807 = vadd.f32 %v2755, %v2779
        %v2808 = vadd.f32 %v2756, %v2781
        %v2809 = vadd.f32 %v2757, %v2783
        %v2810 = vadd.f32 %v2758, %v2785
        %v2811 = vadd.f32 %v2759, %v2787
        %v2812 = vadd.f32 %v2760, %v2789
        %v2813 = vadd.f32 %v2761, %v2791
        %v2814 = vadd.f32 %v2762, %v2793
        %v2815 = vadd.f32 %v2763, %v2795
        %v2816 = vlaneseq
        %v2817 = vshrl.u32 %v2816, 7
        %v2818 = vsub.s32 0, %v2817
        %v2819 = vrot.slane %v2181, %v2818
        %v2820 = vadd.f32 %v2806, %v2819
        %v2821 = vadd.f32 %v2807, %v2819
        %v2822 = vadd.f32 %v2808, %v2819
        %v2823 = vadd.f32 %v2809, %v2819
        %v2824 = vadd.f32 %v2810, %v2819
        %v2825 = vadd.f32 %v2811, %v2819
        %v2826 = vadd.f32 %v2812, %v2819
        %v2827 = vadd.f32 %v2813, %v2819
        %v2828 = vadd.f32 %v2814, %v2819
        %v2829 = vadd.f32 %v2815, %v2819
        %s2830 = sld [smem:[#allocation3 + $0x3]]
        %vm2831 = vcmp.ge.f32.partialorder %v2820, 0.0
        %vm2832 = vcmp.ge.f32.partialorder %v2821, 0.0
        %vm2833 = vcmp.ge.f32.partialorder %v2822, 0.0
        %vm2834 = vcmp.ge.f32.partialorder %v2823, 0.0
        %vm2835 = vcmp.ge.f32.partialorder %v2824, 0.0
        %vm2836 = vcmp.ge.f32.partialorder %v2825, 0.0
        %vm2837 = vcmp.ge.f32.partialorder %v2826, 0.0
        %vm2838 = vcmp.ge.f32.partialorder %v2827, 0.0
        %vm2839 = vcmp.ge.f32.partialorder %v2828, 0.0
        %vm2840 = vcmp.ge.f32.partialorder %v2829, 0.0
        %v2841 = vstv %s2830
        %v2842 = vmul.f32 %v2841, %v2820
        %v2843 = vmul.f32 %v2841, %v2821
        %v2844 = vmul.f32 %v2841, %v2822
        %v2845 = vmul.f32 %v2841, %v2823
        %v2846 = vmul.f32 %v2841, %v2824
        %v2847 = vmul.f32 %v2841, %v2825
        %v2848 = vmul.f32 %v2841, %v2826
        %v2849 = vmul.f32 %v2841, %v2827
        %v2850 = vmul.f32 %v2841, %v2828
        %v2851 = vmul.f32 %v2841, %v2829
        %v2852 = vsel %vm2831, %v2820, %v2842
        %v2853 = vsel %vm2832, %v2821, %v2843
        %v2854 = vsel %vm2833, %v2822, %v2844
        %v2855 = vsel %vm2834, %v2823, %v2845
        %v2856 = vsel %vm2835, %v2824, %v2846
        %v2857 = vsel %vm2836, %v2825, %v2847
        %v2858 = vsel %vm2837, %v2826, %v2848
        %v2859 = vsel %vm2838, %v2827, %v2849
        %v2860 = vsel %vm2839, %v2828, %v2850
        %v2861 = vsel %vm2840, %v2829, %v2851
        %v2862 = vmul.f32 %v2852, %v1336
        %v2863 = vmul.f32 %v2853, %v1341
        %v2864 = vmul.f32 %v2854, %v1346
        %v2865 = vmul.f32 %v2855, %v1351
        %v2866 = vmul.f32 %v2856, %v1356
        %v2867 = vmul.f32 %v2857, %v1361
        %v2868 = vmul.f32 %v2858, %v1366
        %v2869 = vmul.f32 %v2859, %v1371
        %v2870 = vmul.f32 %v2860, %v1376
        %v2871 = vmul.f32 %v2861, %v1381
        %2872 = vst.msk [vmem:[#allocation2 + $0xb] sm:$0xff] %vm627, %v2862
        %2873 = vst.msk [vmem:[#allocation2 + $0x13] sm:$0xff] %vm627, %v2863
        %2874 = vst.msk [vmem:[#allocation2 + $0x1b] sm:$0xff] %vm627, %v2864
        %2875 = vst.msk [vmem:[#allocation2 + $0x23] sm:$0xff] %vm627, %v2865
        %2876 = vst.msk [vmem:[#allocation2 + $0x2b] sm:$0xff] %vm627, %v2866
        %2877 = vst.msk [vmem:[#allocation2 + $0x33] sm:$0xff] %vm627, %v2867
        %2878 = vst.msk [vmem:[#allocation2 + $0x3b] sm:$0xff] %vm627, %v2868
        %2879 = vst.msk [vmem:[#allocation2 + $0x43] sm:$0xff] %vm627, %v2869
        %2880 = vst.msk [vmem:[#allocation2 + $0x4b] sm:$0xff] %vm627, %v2870
        %2881 = vst.msk [vmem:[#allocation2 + $0x53] sm:$0xff] %vm627, %v2871
        %v2882 = vld [vmem:[#allocation2] sm:$0xff]
        %v2883 = vld [vmem:[#allocation2 + $0x8] sm:$0xff]
        %v2884 = vld [vmem:[#allocation2 + $0x10] sm:$0xff]
        %v2885 = vld [vmem:[#allocation2 + $0x18] sm:$0xff]
        %v2886 = vld [vmem:[#allocation2 + $0x20] sm:$0xff]
        %v2887 = vld [vmem:[#allocation2 + $0x28] sm:$0xff]
        %v2888 = vld [vmem:[#allocation2 + $0x30] sm:$0xff]
        %v2889 = vld [vmem:[#allocation2 + $0x38] sm:$0xff]
        %v2890 = vld [vmem:[#allocation2 + $0x40] sm:$0xff]
        %v2891 = vld [vmem:[#allocation2 + $0x48] sm:$0xff]
        %v2892 = vld [vmem:[#allocation2 + $0x50] sm:$0xff]
        %v2893 = vld [vmem:[#allocation2 + $0x58] sm:$0xff]
        %v2894 = vld [vmem:[#allocation2 + $0x60] sm:$0x3f]
        %s2895 = scalar_lea.vmem %s3, 96
        %v2896 = vld [vmem:[%s2895] sm:$0xff]
        %v2897 = vld [vmem:[%s2895 + $0x8] sm:$0xff]
        %v2898 = vld [vmem:[%s2895 + $0x10] sm:$0xff]
        %v2899 = vld [vmem:[%s2895 + $0x18] sm:$0xff]
        %v2900 = vld [vmem:[%s4 + $0x4] sm:$0x1]
        %v2902 = vsel %vm627, %v2882, 0
        %v2905 = vsel %vm627, %v2883, 0
        %v2908 = vsel %vm627, %v2884, 0
        %v2911 = vsel %vm627, %v2885, 0
        %v2914 = vsel %vm627, %v2886, 0
        %v2917 = vsel %vm627, %v2887, 0
        %v2920 = vsel %vm627, %v2888, 0
        %v2923 = vsel %vm627, %v2889, 0
        %v2926 = vsel %vm627, %v2890, 0
        %v2929 = vsel %vm627, %v2891, 0
        %v2932 = vsel %vm627, %v2892, 0
        %v2935 = vsel %vm627, %v2893, 0
        %v2938 = vsel %vm627, %v2894, 0
        %2940 = vmatprep.subr.mxu0 %v2897
        %2941 = vmatpush1.msra.mxu0 %v2896
        %2942 = vmatprep.subr.mxu0 %v2899
        %2943 = vmatpush1.msra.mxu0 %v2898
        %2944 = vmatprep.subr.mxu0 0.0
        %2945 = vmatpush1.msra.mxu0 0.0
        %2946 = vmatprep.subr.mxu0 0.0
        %2947 = vmatpush1.msra.mxu0 0.0
        %2948 = vmatprep.subr.mxu0 0.0
        %2949 = vmatpush1.msra.mxu0 0.0
        %2950 = vmatprep.subr.mxu0 0.0
        %2951 = vmatpush1.msra.mxu0 0.0
        %2952 = vmatprep.subr.mxu0 0.0
        %2953 = vmatpush1.msra.mxu0 0.0
        %2954 = vmatprep.subr.mxu0 0.0
        %2955 = vmatpush1.msra.mxu0 0.0
        %2956 = vmatprep.subr.mxu0 0.0
        %2957 = vmatpush1.msra.mxu0 0.0
        %2958 = vmatprep.subr.mxu0 0.0
        %2959 = vmatpush1.msra.mxu0 0.0
        %2960 = vmatprep.subr.mxu0 0.0
        %2961 = vmatpush1.msra.mxu0 0.0
        %2962 = vmatprep.subr.mxu0 0.0
        %2963 = vmatpush1.msra.mxu0 0.0
        %2964 = vmatprep.subr.mxu0 0.0
        %2965 = vmatpush1.msra.mxu0 0.0
        %2966 = vmatprep.subr.mxu0 0.0
        %2967 = vmatpush1.msra.mxu0 0.0
        %2968 = vmatprep.subr.mxu0 0.0
        %2969 = vmatpush1.msra.mxu0 0.0
        %2970 = vmatprep.subr.mxu0 0.0
        %2971 = vmatpush1.msra.mxu0 0.0
        %2972 = vmatprep.subr.mxu0 0.0
        %2973 = vmatpush1.msra.mxu0 0.0
        %2974 = vmatprep.subr.mxu0 0.0
        %2975 = vmatpush1.msra.mxu0 0.0
        %2976 = vmatprep.subr.mxu0 0.0
        %2977 = vmatpush1.msra.mxu0 0.0
        %2978 = vmatprep.subr.mxu0 0.0
        %2979 = vmatpush1.msra.mxu0 0.0
        %2980 = vmatprep.subr.mxu0 0.0
        %2981 = vmatpush1.msra.mxu0 0.0
        %2982 = vmatprep.subr.mxu0 0.0
        %2983 = vmatpush1.msra.mxu0 0.0
        %2984 = vmatprep.subr.mxu0 0.0
        %2985 = vmatpush1.msra.mxu0 0.0
        %2986 = vmatprep.subr.mxu0 0.0
        %2987 = vmatpush1.msra.mxu0 0.0
        %2988 = vmatprep.subr.mxu0 0.0
        %2989 = vmatpush1.msra.mxu0 0.0
        %2990 = vmatprep.subr.mxu0 0.0
        %2991 = vmatpush1.msra.mxu0 0.0
        %2992 = vmatprep.subr.mxu0 0.0
        %2993 = vmatpush1.msra.mxu0 0.0
        %2994 = vmatprep.subr.mxu0 0.0
        %2995 = vmatpush1.msra.mxu0 0.0
        %2996 = vmatprep.subr.mxu0 0.0
        %2997 = vmatpush1.msra.mxu0 0.0
        %2998 = vmatprep.subr.mxu0 0.0
        %2999 = vmatpush1.msra.mxu0 0.0
        %3000 = vmatprep.subr.mxu0 0.0
        %3001 = vmatpush1.msra.mxu0 0.0
        %3002 = vmatprep.subr.mxu0 0.0
        %3003 = vmatpush1.msra.mxu0 0.0
        %3004 = vmatprep.mubr.f32.mxu0 0.0
        %3005 = vmatmul.mubr.f32.gmra.mrb[0].mxu0 %v2902
        %v3006 = vpop.f32.mrb[0].mxu0
        %v3007 = vadd.f32 0.0, %v3006
        %v3008 = vpop.f32.mrb[0].mxu0
        %3009 = vmatprep.mubr.f32.mxu0 0.0
        %3010 = vmatmul.mubr.f32.gmra.mrb[0].mxu0 %v2905
        %v3011 = vpop.f32.mrb[0].mxu0
        %v3012 = vadd.f32 0.0, %v3011
        %v3013 = vpop.f32.mrb[0].mxu0
        %3014 = vmatprep.mubr.f32.mxu0 0.0
        %3015 = vmatmul.mubr.f32.gmra.mrb[0].mxu0 %v2908
        %v3016 = vpop.f32.mrb[0].mxu0
        %v3017 = vadd.f32 0.0, %v3016
        %v3018 = vpop.f32.mrb[0].mxu0
        %v3019 = vadd.f32 0.0, %v3018
        %3020 = vmatprep.mubr.f32.mxu0 0.0
        %3021 = vmatmul.mubr.f32.gmra.mrb[0].mxu0 %v2911
        %v3022 = vpop.f32.mrb[0].mxu0
        %v3023 = vadd.f32 0.0, %v3022
        %v3024 = vpop.f32.mrb[0].mxu0
        %v3025 = vadd.f32 0.0, %v3024
        %3026 = vmatprep.mubr.f32.mxu0 0.0
        %3027 = vmatmul.mubr.f32.gmra.mrb[0].mxu0 %v2914
        %v3028 = vpop.f32.mrb[0].mxu0
        %v3029 = vadd.f32 0.0, %v3028
        %v3030 = vpop.f32.mrb[0].mxu0
        %v3031 = vadd.f32 0.0, %v3030
        %3032 = vmatprep.mubr.f32.mxu0 0.0
        %3033 = vmatmul.mubr.f32.gmra.mrb[0].mxu0 %v2917
        %v3034 = vpop.f32.mrb[0].mxu0
        %v3035 = vadd.f32 0.0, %v3034
        %v3036 = vpop.f32.mrb[0].mxu0
        %v3037 = vadd.f32 0.0, %v3036
        %3038 = vmatprep.mubr.f32.mxu0 0.0
        %3039 = vmatmul.mubr.f32.gmra.mrb[0].mxu0 %v2920
        %v3040 = vpop.f32.mrb[0].mxu0
        %v3041 = vadd.f32 0.0, %v3040
        %v3042 = vpop.f32.mrb[0].mxu0
        %v3043 = vadd.f32 0.0, %v3042
        %3044 = vmatprep.mubr.f32.mxu0 0.0
        %3045 = vmatmul.mubr.f32.gmra.mrb[0].mxu0 %v2923
        %v3046 = vpop.f32.mrb[0].mxu0
        %v3047 = vadd.f32 0.0, %v3046
        %v3048 = vpop.f32.mrb[0].mxu0
        %v3049 = vadd.f32 0.0, %v3048
        %3050 = vmatprep.mubr.f32.mxu0 0.0
        %3051 = vmatmul.mubr.f32.gmra.mrb[0].mxu0 %v2926
        %v3052 = vpop.f32.mrb[0].mxu0
        %v3053 = vadd.f32 0.0, %v3052
        %v3054 = vpop.f32.mrb[0].mxu0
        %v3055 = vadd.f32 0.0, %v3054
        %3056 = vmatprep.mubr.f32.mxu0 0.0
        %3057 = vmatmul.mubr.f32.gmra.mrb[0].mxu0 %v2929
        %v3058 = vpop.f32.mrb[0].mxu0
        %v3059 = vadd.f32 0.0, %v3058
        %v3060 = vpop.f32.mrb[0].mxu0
        %v3061 = vadd.f32 0.0, %v3060
        %3062 = vmatprep.mubr.f32.mxu0 0.0
        %3063 = vmatmul.mubr.f32.gmra.mrb[0].mxu0 %v2932
        %v3064 = vpop.f32.mrb[0].mxu0
        %v3065 = vadd.f32 0.0, %v3064
        %v3066 = vpop.f32.mrb[0].mxu0
        %v3067 = vadd.f32 0.0, %v3066
        %3068 = vmatprep.mubr.f32.mxu0 0.0
        %3069 = vmatmul.mubr.f32.gmra.mrb[0].mxu0 %v2935
        %v3070 = vpop.f32.mrb[0].mxu0
        %v3071 = vadd.f32 0.0, %v3070
        %v3072 = vpop.f32.mrb[0].mxu0
        %v3073 = vadd.f32 0.0, %v3072
        %3074 = vmatprep.mubr.f32.mxu0 0.0
        %3075 = vmatmul.mubr.f32.gmra.mrb[0].mxu0 %v2938
        %v3076 = vpop.f32.mrb[0].mxu0
        %v3077 = vadd.f32 0.0, %v3076
        %v3078 = vpop.f32.mrb[0].mxu0
        %v3079 = vadd.f32 0.0, %v3078
        %3080 = vdwg.mxu0
        %v3092 = vrot.slane %v3007, 1
        %v3093 = vrot.slane %v3012, 1
        %v3094 = vsel %vm838, %v3092, %v3093
        %v3095 = vrot.slane %v3017, 1
        %v3096 = vsel %vm838, %v3093, %v3095
        %v3097 = vrot.slane %v3023, 1
        %v3098 = vsel %vm838, %v3095, %v3097
        %v3099 = vrot.slane %v3029, 1
        %v3100 = vsel %vm838, %v3097, %v3099
        %v3101 = vrot.slane %v3035, 1
        %v3102 = vsel %vm838, %v3099, %v3101
        %v3103 = vrot.slane %v3041, 1
        %v3104 = vsel %vm838, %v3101, %v3103
        %v3105 = vrot.slane %v3047, 1
        %v3106 = vsel %vm838, %v3103, %v3105
        %v3107 = vrot.slane %v3053, 1
        %v3108 = vsel %vm838, %v3105, %v3107
        %v3109 = vrot.slane %v3059, 1
        %v3110 = vsel %vm838, %v3107, %v3109
        %v3111 = vrot.slane %v3065, 1
        %v3112 = vsel %vm838, %v3109, %v3111
        %3113 = vrot.lane.b32.xlu0 %v3094, 112
        %v3114 = vpop.permute.xlu0 %3113
        %3115 = vrot.lane.b32.xlu0 %v3096, 112
        %v3116 = vpop.permute.xlu0 %3115
        %3117 = vrot.lane.b32.xlu0 %v3098, 112
        %v3118 = vpop.permute.xlu0 %3117
        %3119 = vrot.lane.b32.xlu0 %v3100, 112
        %v3120 = vpop.permute.xlu0 %3119
        %3121 = vrot.lane.b32.xlu0 %v3102, 112
        %v3122 = vpop.permute.xlu0 %3121
        %3123 = vrot.lane.b32.xlu0 %v3104, 112
        %v3124 = vpop.permute.xlu0 %3123
        %3125 = vrot.lane.b32.xlu0 %v3106, 112
        %v3126 = vpop.permute.xlu0 %3125
        %3127 = vrot.lane.b32.xlu0 %v3108, 112
        %v3128 = vpop.permute.xlu0 %3127
        %3129 = vrot.lane.b32.xlu0 %v3110, 112
        %v3130 = vpop.permute.xlu0 %3129
        %3131 = vrot.lane.b32.xlu0 %v3112, 112
        %v3132 = vpop.permute.xlu0 %3131
        %v3143 = vadd.f32 %v3007, %v3114
        %v3144 = vadd.f32 %v3012, %v3116
        %v3145 = vadd.f32 %v3017, %v3118
        %v3146 = vadd.f32 %v3023, %v3120
        %v3147 = vadd.f32 %v3029, %v3122
        %v3148 = vadd.f32 %v3035, %v3124
        %v3149 = vadd.f32 %v3041, %v3126
        %v3150 = vadd.f32 %v3047, %v3128
        %v3151 = vadd.f32 %v3053, %v3130
        %v3152 = vadd.f32 %v3059, %v3132
        %v3153 = vrot.slane %v3007, 2
        %v3154 = vrot.slane %v3012, 2
        %v3155 = vsel %vm900, %v3153, %v3154
        %v3156 = vrot.slane %v3017, 2
        %v3157 = vsel %vm900, %v3154, %v3156
        %v3158 = vrot.slane %v3023, 2
        %v3159 = vsel %vm900, %v3156, %v3158
        %v3160 = vrot.slane %v3029, 2
        %v3161 = vsel %vm900, %v3158, %v3160
        %v3162 = vrot.slane %v3035, 2
        %v3163 = vsel %vm900, %v3160, %v3162
        %v3164 = vrot.slane %v3041, 2
        %v3165 = vsel %vm900, %v3162, %v3164
        %v3166 = vrot.slane %v3047, 2
        %v3167 = vsel %vm900, %v3164, %v3166
        %v3168 = vrot.slane %v3053, 2
        %v3169 = vsel %vm900, %v3166, %v3168
        %v3170 = vrot.slane %v3059, 2
        %v3171 = vsel %vm900, %v3168, %v3170
        %v3172 = vrot.slane %v3065, 2
        %v3173 = vsel %vm900, %v3170, %v3172
        %3174 = vrot.lane.b32.xlu0 %v3155, 96
        %v3175 = vpop.permute.xlu0 %3174
        %3176 = vrot.lane.b32.xlu0 %v3157, 96
        %v3177 = vpop.permute.xlu0 %3176
        %3178 = vrot.lane.b32.xlu0 %v3159, 96
        %v3179 = vpop.permute.xlu0 %3178
        %3180 = vrot.lane.b32.xlu0 %v3161, 96
        %v3181 = vpop.permute.xlu0 %3180
        %3182 = vrot.lane.b32.xlu0 %v3163, 96
        %v3183 = vpop.permute.xlu0 %3182
        %3184 = vrot.lane.b32.xlu0 %v3165, 96
        %v3185 = vpop.permute.xlu0 %3184
        %3186 = vrot.lane.b32.xlu0 %v3167, 96
        %v3187 = vpop.permute.xlu0 %3186
        %3188 = vrot.lane.b32.xlu0 %v3169, 96
        %v3189 = vpop.permute.xlu0 %3188
        %3190 = vrot.lane.b32.xlu0 %v3171, 96
        %v3191 = vpop.permute.xlu0 %3190
        %3192 = vrot.lane.b32.xlu0 %v3173, 96
        %v3193 = vpop.permute.xlu0 %3192
        %v3204 = vadd.f32 %v3143, %v3175
        %v3205 = vadd.f32 %v3144, %v3177
        %v3206 = vadd.f32 %v3145, %v3179
        %v3207 = vadd.f32 %v3146, %v3181
        %v3208 = vadd.f32 %v3147, %v3183
        %v3209 = vadd.f32 %v3148, %v3185
        %v3210 = vadd.f32 %v3149, %v3187
        %v3211 = vadd.f32 %v3150, %v3189
        %v3212 = vadd.f32 %v3151, %v3191
        %v3213 = vadd.f32 %v3152, %v3193
        %v3215 = vrot.slane %v3071, 2
        %v3216 = vsel %vm900, %v3172, %v3215
        %3217 = vrot.lane.b32.xlu0 %v3157, 80
        %v3218 = vpop.permute.xlu0 %3217
        %3219 = vrot.lane.b32.xlu0 %v3159, 80
        %v3220 = vpop.permute.xlu0 %3219
        %3221 = vrot.lane.b32.xlu0 %v3161, 80
        %v3222 = vpop.permute.xlu0 %3221
        %3223 = vrot.lane.b32.xlu0 %v3163, 80
        %v3224 = vpop.permute.xlu0 %3223
        %3225 = vrot.lane.b32.xlu0 %v3165, 80
        %v3226 = vpop.permute.xlu0 %3225
        %3227 = vrot.lane.b32.xlu0 %v3167, 80
        %v3228 = vpop.permute.xlu0 %3227
        %3229 = vrot.lane.b32.xlu0 %v3169, 80
        %v3230 = vpop.permute.xlu0 %3229
        %3231 = vrot.lane.b32.xlu0 %v3171, 80
        %v3232 = vpop.permute.xlu0 %3231
        %3233 = vrot.lane.b32.xlu0 %v3173, 80
        %v3234 = vpop.permute.xlu0 %3233
        %3235 = vrot.lane.b32.xlu0 %v3216, 80
        %v3236 = vpop.permute.xlu0 %3235
        %v3247 = vadd.f32 %v3204, %v3218
        %v3248 = vadd.f32 %v3205, %v3220
        %v3249 = vadd.f32 %v3206, %v3222
        %v3250 = vadd.f32 %v3207, %v3224
        %v3251 = vadd.f32 %v3208, %v3226
        %v3252 = vadd.f32 %v3209, %v3228
        %v3253 = vadd.f32 %v3210, %v3230
        %v3254 = vadd.f32 %v3211, %v3232
        %v3255 = vadd.f32 %v3212, %v3234
        %v3256 = vadd.f32 %v3213, %v3236
        %v3257 = vrot.slane %v3012, 3
        %v3258 = vrot.slane %v3017, 3
        %v3259 = vsel %vm1005, %v3257, %v3258
        %v3260 = vrot.slane %v3023, 3
        %v3261 = vsel %vm1005, %v3258, %v3260
        %v3262 = vrot.slane %v3029, 3
        %v3263 = vsel %vm1005, %v3260, %v3262
        %v3264 = vrot.slane %v3035, 3
        %v3265 = vsel %vm1005, %v3262, %v3264
        %v3266 = vrot.slane %v3041, 3
        %v3267 = vsel %vm1005, %v3264, %v3266
        %v3268 = vrot.slane %v3047, 3
        %v3269 = vsel %vm1005, %v3266, %v3268
        %v3270 = vrot.slane %v3053, 3
        %v3271 = vsel %vm1005, %v3268, %v3270
        %v3272 = vrot.slane %v3059, 3
        %v3273 = vsel %vm1005, %v3270, %v3272
        %v3274 = vrot.slane %v3065, 3
        %v3275 = vsel %vm1005, %v3272, %v3274
        %v3276 = vrot.slane %v3071, 3
        %v3277 = vsel %vm1005, %v3274, %v3276
        %3278 = vrot.lane.b32.xlu0 %v3259, 64
        %v3279 = vpop.permute.xlu0 %3278
        %3280 = vrot.lane.b32.xlu0 %v3261, 64
        %v3281 = vpop.permute.xlu0 %3280
        %3282 = vrot.lane.b32.xlu0 %v3263, 64
        %v3283 = vpop.permute.xlu0 %3282
        %3284 = vrot.lane.b32.xlu0 %v3265, 64
        %v3285 = vpop.permute.xlu0 %3284
        %3286 = vrot.lane.b32.xlu0 %v3267, 64
        %v3287 = vpop.permute.xlu0 %3286
        %3288 = vrot.lane.b32.xlu0 %v3269, 64
        %v3289 = vpop.permute.xlu0 %3288
        %3290 = vrot.lane.b32.xlu0 %v3271, 64
        %v3291 = vpop.permute.xlu0 %3290
        %3292 = vrot.lane.b32.xlu0 %v3273, 64
        %v3293 = vpop.permute.xlu0 %3292
        %3294 = vrot.lane.b32.xlu0 %v3275, 64
        %v3295 = vpop.permute.xlu0 %3294
        %3296 = vrot.lane.b32.xlu0 %v3277, 64
        %v3297 = vpop.permute.xlu0 %3296
        %v3308 = vadd.f32 %v3247, %v3279
        %v3309 = vadd.f32 %v3248, %v3281
        %v3310 = vadd.f32 %v3249, %v3283
        %v3311 = vadd.f32 %v3250, %v3285
        %v3312 = vadd.f32 %v3251, %v3287
        %v3313 = vadd.f32 %v3252, %v3289
        %v3314 = vadd.f32 %v3253, %v3291
        %v3315 = vadd.f32 %v3254, %v3293
        %v3316 = vadd.f32 %v3255, %v3295
        %v3317 = vadd.f32 %v3256, %v3297
        %v3318 = vrot.slane %v3012, 4
        %v3319 = vrot.slane %v3017, 4
        %v3320 = vsel %vm1067, %v3318, %v3319
        %v3321 = vrot.slane %v3023, 4
        %v3322 = vsel %vm1067, %v3319, %v3321
        %v3323 = vrot.slane %v3029, 4
        %v3324 = vsel %vm1067, %v3321, %v3323
        %v3325 = vrot.slane %v3035, 4
        %v3326 = vsel %vm1067, %v3323, %v3325
        %v3327 = vrot.slane %v3041, 4
        %v3328 = vsel %vm1067, %v3325, %v3327
        %v3329 = vrot.slane %v3047, 4
        %v3330 = vsel %vm1067, %v3327, %v3329
        %v3331 = vrot.slane %v3053, 4
        %v3332 = vsel %vm1067, %v3329, %v3331
        %v3333 = vrot.slane %v3059, 4
        %v3334 = vsel %vm1067, %v3331, %v3333
        %v3335 = vrot.slane %v3065, 4
        %v3336 = vsel %vm1067, %v3333, %v3335
        %v3337 = vrot.slane %v3071, 4
        %v3338 = vsel %vm1067, %v3335, %v3337
        %3339 = vrot.lane.b32.xlu0 %v3320, 48
        %v3340 = vpop.permute.xlu0 %3339
        %3341 = vrot.lane.b32.xlu0 %v3322, 48
        %v3342 = vpop.permute.xlu0 %3341
        %3343 = vrot.lane.b32.xlu0 %v3324, 48
        %v3344 = vpop.permute.xlu0 %3343
        %3345 = vrot.lane.b32.xlu0 %v3326, 48
        %v3346 = vpop.permute.xlu0 %3345
        %3347 = vrot.lane.b32.xlu0 %v3328, 48
        %v3348 = vpop.permute.xlu0 %3347
        %3349 = vrot.lane.b32.xlu0 %v3330, 48
        %v3350 = vpop.permute.xlu0 %3349
        %3351 = vrot.lane.b32.xlu0 %v3332, 48
        %v3352 = vpop.permute.xlu0 %3351
        %3353 = vrot.lane.b32.xlu0 %v3334, 48
        %v3354 = vpop.permute.xlu0 %3353
        %3355 = vrot.lane.b32.xlu0 %v3336, 48
        %v3356 = vpop.permute.xlu0 %3355
        %3357 = vrot.lane.b32.xlu0 %v3338, 48
        %v3358 = vpop.permute.xlu0 %3357
        %v3369 = vadd.f32 %v3308, %v3340
        %v3370 = vadd.f32 %v3309, %v3342
        %v3371 = vadd.f32 %v3310, %v3344
        %v3372 = vadd.f32 %v3311, %v3346
        %v3373 = vadd.f32 %v3312, %v3348
        %v3374 = vadd.f32 %v3313, %v3350
        %v3375 = vadd.f32 %v3314, %v3352
        %v3376 = vadd.f32 %v3315, %v3354
        %v3377 = vadd.f32 %v3316, %v3356
        %v3378 = vadd.f32 %v3317, %v3358
        %v3380 = vrot.slane %v3077, 4
        %v3381 = vsel %vm1067, %v3337, %v3380
        %3382 = vrot.lane.b32.xlu0 %v3322, 32
        %v3383 = vpop.permute.xlu0 %3382
        %3384 = vrot.lane.b32.xlu0 %v3324, 32
        %v3385 = vpop.permute.xlu0 %3384
        %3386 = vrot.lane.b32.xlu0 %v3326, 32
        %v3387 = vpop.permute.xlu0 %3386
        %3388 = vrot.lane.b32.xlu0 %v3328, 32
        %v3389 = vpop.permute.xlu0 %3388
        %3390 = vrot.lane.b32.xlu0 %v3330, 32
        %v3391 = vpop.permute.xlu0 %3390
        %3392 = vrot.lane.b32.xlu0 %v3332, 32
        %v3393 = vpop.permute.xlu0 %3392
        %3394 = vrot.lane.b32.xlu0 %v3334, 32
        %v3395 = vpop.permute.xlu0 %3394
        %3396 = vrot.lane.b32.xlu0 %v3336, 32
        %v3397 = vpop.permute.xlu0 %3396
        %3398 = vrot.lane.b32.xlu0 %v3338, 32
        %v3399 = vpop.permute.xlu0 %3398
        %3400 = vrot.lane.b32.xlu0 %v3381, 32
        %v3401 = vpop.permute.xlu0 %3400
        %v3412 = vadd.f32 %v3369, %v3383
        %v3413 = vadd.f32 %v3370, %v3385
        %v3414 = vadd.f32 %v3371, %v3387
        %v3415 = vadd.f32 %v3372, %v3389
        %v3416 = vadd.f32 %v3373, %v3391
        %v3417 = vadd.f32 %v3374, %v3393
        %v3418 = vadd.f32 %v3375, %v3395
        %v3419 = vadd.f32 %v3376, %v3397
        %v3420 = vadd.f32 %v3377, %v3399
        %v3421 = vadd.f32 %v3378, %v3401
        %v3422 = vrot.slane %v3017, 5
        %v3423 = vrot.slane %v3023, 5
        %v3424 = vsel %vm1172, %v3422, %v3423
        %v3425 = vrot.slane %v3029, 5
        %v3426 = vsel %vm1172, %v3423, %v3425
        %v3427 = vrot.slane %v3035, 5
        %v3428 = vsel %vm1172, %v3425, %v3427
        %v3429 = vrot.slane %v3041, 5
        %v3430 = vsel %vm1172, %v3427, %v3429
        %v3431 = vrot.slane %v3047, 5
        %v3432 = vsel %vm1172, %v3429, %v3431
        %v3433 = vrot.slane %v3053, 5
        %v3434 = vsel %vm1172, %v3431, %v3433
        %v3435 = vrot.slane %v3059, 5
        %v3436 = vsel %vm1172, %v3433, %v3435
        %v3437 = vrot.slane %v3065, 5
        %v3438 = vsel %vm1172, %v3435, %v3437
        %v3439 = vrot.slane %v3071, 5
        %v3440 = vsel %vm1172, %v3437, %v3439
        %v3441 = vrot.slane %v3077, 5
        %v3442 = vsel %vm1172, %v3439, %v3441
        %3443 = vrot.lane.b32.xlu0 %v3424, 16
        %v3444 = vpop.permute.xlu0 %3443
        %3445 = vrot.lane.b32.xlu0 %v3426, 16
        %v3446 = vpop.permute.xlu0 %3445
        %3447 = vrot.lane.b32.xlu0 %v3428, 16
        %v3448 = vpop.permute.xlu0 %3447
        %3449 = vrot.lane.b32.xlu0 %v3430, 16
        %v3450 = vpop.permute.xlu0 %3449
        %3451 = vrot.lane.b32.xlu0 %v3432, 16
        %v3452 = vpop.permute.xlu0 %3451
        %3453 = vrot.lane.b32.xlu0 %v3434, 16
        %v3454 = vpop.permute.xlu0 %3453
        %3455 = vrot.lane.b32.xlu0 %v3436, 16
        %v3456 = vpop.permute.xlu0 %3455
        %3457 = vrot.lane.b32.xlu0 %v3438, 16
        %v3458 = vpop.permute.xlu0 %3457
        %3459 = vrot.lane.b32.xlu0 %v3440, 16
        %v3460 = vpop.permute.xlu0 %3459
        %3461 = vrot.lane.b32.xlu0 %v3442, 16
        %v3462 = vpop.permute.xlu0 %3461
        %v3473 = vadd.f32 %v3412, %v3444
        %v3474 = vadd.f32 %v3413, %v3446
        %v3475 = vadd.f32 %v3414, %v3448
        %v3476 = vadd.f32 %v3415, %v3450
        %v3477 = vadd.f32 %v3416, %v3452
        %v3478 = vadd.f32 %v3417, %v3454
        %v3479 = vadd.f32 %v3418, %v3456
        %v3480 = vadd.f32 %v3419, %v3458
        %v3481 = vadd.f32 %v3420, %v3460
        %v3482 = vadd.f32 %v3421, %v3462
        %v3494 = vrot.slane %v3019, 6
        %v3495 = vrot.slane %v3025, 6
        %v3496 = vsel %vm1245, %v3494, %v3495
        %v3497 = vrot.slane %v3031, 6
        %v3498 = vsel %vm1245, %v3495, %v3497
        %v3499 = vrot.slane %v3037, 6
        %v3500 = vsel %vm1245, %v3497, %v3499
        %v3501 = vrot.slane %v3043, 6
        %v3502 = vsel %vm1245, %v3499, %v3501
        %v3503 = vrot.slane %v3049, 6
        %v3504 = vsel %vm1245, %v3501, %v3503
        %v3505 = vrot.slane %v3055, 6
        %v3506 = vsel %vm1245, %v3503, %v3505
        %v3507 = vrot.slane %v3061, 6
        %v3508 = vsel %vm1245, %v3505, %v3507
        %v3509 = vrot.slane %v3067, 6
        %v3510 = vsel %vm1245, %v3507, %v3509
        %v3511 = vrot.slane %v3073, 6
        %v3512 = vsel %vm1245, %v3509, %v3511
        %v3513 = vrot.slane %v3079, 6
        %v3514 = vsel %vm1245, %v3511, %v3513
        %v3525 = vadd.f32 %v3473, %v3496
        %v3526 = vadd.f32 %v3474, %v3498
        %v3527 = vadd.f32 %v3475, %v3500
        %v3528 = vadd.f32 %v3476, %v3502
        %v3529 = vadd.f32 %v3477, %v3504
        %v3530 = vadd.f32 %v3478, %v3506
        %v3531 = vadd.f32 %v3479, %v3508
        %v3532 = vadd.f32 %v3480, %v3510
        %v3533 = vadd.f32 %v3481, %v3512
        %v3534 = vadd.f32 %v3482, %v3514
        %v3535 = vlaneseq
        %v3536 = vshrl.u32 %v3535, 7
        %v3537 = vsub.s32 0, %v3536
        %v3538 = vrot.slane %v2900, %v3537
        %v3539 = vadd.f32 %v3525, %v3538
        %v3540 = vadd.f32 %v3526, %v3538
        %v3541 = vadd.f32 %v3527, %v3538
        %v3542 = vadd.f32 %v3528, %v3538
        %v3543 = vadd.f32 %v3529, %v3538
        %v3544 = vadd.f32 %v3530, %v3538
        %v3545 = vadd.f32 %v3531, %v3538
        %v3546 = vadd.f32 %v3532, %v3538
        %v3547 = vadd.f32 %v3533, %v3538
        %v3548 = vadd.f32 %v3534, %v3538
        %v3549 = vadd.f32 %v3539, %v2133
        %v3550 = vadd.f32 %v3540, %v2134
        %v3551 = vadd.f32 %v3541, %v2135
        %v3552 = vadd.f32 %v3542, %v2136
        %v3553 = vadd.f32 %v3543, %v2137
        %v3554 = vadd.f32 %v3544, %v2138
        %v3555 = vadd.f32 %v3545, %v2139
        %v3556 = vadd.f32 %v3546, %v2140
        %v3557 = vadd.f32 %v3547, %v2141
        %v3558 = vadd.f32 %v3548, %v2142
        %s3559 = sld [smem:[#allocation3 + $0x4]]
        %vm3560 = vcmp.ge.f32.partialorder %v3549, 0.0
        %vm3561 = vcmp.ge.f32.partialorder %v3550, 0.0
        %vm3562 = vcmp.ge.f32.partialorder %v3551, 0.0
        %vm3563 = vcmp.ge.f32.partialorder %v3552, 0.0
        %vm3564 = vcmp.ge.f32.partialorder %v3553, 0.0
        %vm3565 = vcmp.ge.f32.partialorder %v3554, 0.0
        %vm3566 = vcmp.ge.f32.partialorder %v3555, 0.0
        %vm3567 = vcmp.ge.f32.partialorder %v3556, 0.0
        %vm3568 = vcmp.ge.f32.partialorder %v3557, 0.0
        %vm3569 = vcmp.ge.f32.partialorder %v3558, 0.0
        %v3570 = vstv %s3559
        %v3571 = vmul.f32 %v3570, %v3549
        %v3572 = vmul.f32 %v3570, %v3550
        %v3573 = vmul.f32 %v3570, %v3551
        %v3574 = vmul.f32 %v3570, %v3552
        %v3575 = vmul.f32 %v3570, %v3553
        %v3576 = vmul.f32 %v3570, %v3554
        %v3577 = vmul.f32 %v3570, %v3555
        %v3578 = vmul.f32 %v3570, %v3556
        %v3579 = vmul.f32 %v3570, %v3557
        %v3580 = vmul.f32 %v3570, %v3558
        %v3581 = vsel %vm3560, %v3549, %v3571
        %v3582 = vsel %vm3561, %v3550, %v3572
        %v3583 = vsel %vm3562, %v3551, %v3573
        %v3584 = vsel %vm3563, %v3552, %v3574
        %v3585 = vsel %vm3564, %v3553, %v3575
        %v3586 = vsel %vm3565, %v3554, %v3576
        %v3587 = vsel %vm3566, %v3555, %v3577
        %v3588 = vsel %vm3567, %v3556, %v3578
        %v3589 = vsel %vm3568, %v3557, %v3579
        %v3590 = vsel %vm3569, %v3558, %v3580
        %v3591 = vsel %vm627, %v3581, 0.0
        %3592 = vadd.xlane.f32.xlu0 %v3591
        %v3593 = vpop.xlane.xlu0 %3592
        %v3594 = vsel %vm627, %v3582, 0.0
        %3595 = vadd.xlane.f32.xlu0 %v3594
        %v3596 = vpop.xlane.xlu0 %3595
        %v3597 = vsel %vm627, %v3583, 0.0
        %3598 = vadd.xlane.f32.xlu0 %v3597
        %v3599 = vpop.xlane.xlu0 %3598
        %v3600 = vsel %vm627, %v3584, 0.0
        %3601 = vadd.xlane.f32.xlu0 %v3600
        %v3602 = vpop.xlane.xlu0 %3601
        %v3603 = vsel %vm627, %v3585, 0.0
        %3604 = vadd.xlane.f32.xlu0 %v3603
        %v3605 = vpop.xlane.xlu0 %3604
        %v3606 = vsel %vm627, %v3586, 0.0
        %3607 = vadd.xlane.f32.xlu0 %v3606
        %v3608 = vpop.xlane.xlu0 %3607
        %v3609 = vsel %vm627, %v3587, 0.0
        %3610 = vadd.xlane.f32.xlu0 %v3609
        %v3611 = vpop.xlane.xlu0 %3610
        %v3612 = vsel %vm627, %v3588, 0.0
        %3613 = vadd.xlane.f32.xlu0 %v3612
        %v3614 = vpop.xlane.xlu0 %3613
        %v3615 = vsel %vm627, %v3589, 0.0
        %3616 = vadd.xlane.f32.xlu0 %v3615
        %v3617 = vpop.xlane.xlu0 %3616
        %v3618 = vsel %vm627, %v3590, 0.0
        %3619 = vadd.xlane.f32.xlu0 %v3618
        %v3620 = vpop.xlane.xlu0 %3619
        %v3621 = vrcp.pop 16.0
        %v3622 = vmul.f32 %v3593, %v3621
        %v3623 = vmul.f32 %v3596, %v3621
        %v3624 = vmul.f32 %v3599, %v3621
        %v3625 = vmul.f32 %v3602, %v3621
        %v3626 = vmul.f32 %v3605, %v3621
        %v3627 = vmul.f32 %v3608, %v3621
        %v3628 = vmul.f32 %v3611, %v3621
        %v3629 = vmul.f32 %v3614, %v3621
        %v3630 = vmul.f32 %v3617, %v3621
        %v3631 = vmul.f32 %v3620, %v3621
        %v3632 = vsub.f32 %v3581, %v3622
        %v3633 = vsub.f32 %v3582, %v3623
        %v3634 = vsub.f32 %v3583, %v3624
        %v3635 = vsub.f32 %v3584, %v3625
        %v3636 = vsub.f32 %v3585, %v3626
        %v3637 = vsub.f32 %v3586, %v3627
        %v3638 = vsub.f32 %v3587, %v3628
        %v3639 = vsub.f32 %v3588, %v3629
        %v3640 = vsub.f32 %v3589, %v3630
        %v3641 = vsub.f32 %v3590, %v3631
        %v3642 = vmul.f32 %v3632, %v3632
        %v3643 = vmul.f32 %v3633, %v3633
        %v3644 = vmul.f32 %v3634, %v3634
        %v3645 = vmul.f32 %v3635, %v3635
        %v3646 = vmul.f32 %v3636, %v3636
        %v3647 = vmul.f32 %v3637, %v3637
        %v3648 = vmul.f32 %v3638, %v3638
        %v3649 = vmul.f32 %v3639, %v3639
        %v3650 = vmul.f32 %v3640, %v3640
        %v3651 = vmul.f32 %v3641, %v3641
        %v3652 = vsel %vm627, %v3642, 0.0
        %3653 = vadd.xlane.f32.xlu0 %v3652
        %v3654 = vpop.xlane.xlu0 %3653
        %v3655 = vsel %vm627, %v3643, 0.0
        %3656 = vadd.xlane.f32.xlu0 %v3655
        %v3657 = vpop.xlane.xlu0 %3656
        %v3658 = vsel %vm627, %v3644, 0.0
        %3659 = vadd.xlane.f32.xlu0 %v3658
        %v3660 = vpop.xlane.xlu0 %3659
        %v3661 = vsel %vm627, %v3645, 0.0
        %3662 = vadd.xlane.f32.xlu0 %v3661
        %v3663 = vpop.xlane.xlu0 %3662
        %v3664 = vsel %vm627, %v3646, 0.0
        %3665 = vadd.xlane.f32.xlu0 %v3664
        %v3666 = vpop.xlane.xlu0 %3665
        %v3667 = vsel %vm627, %v3647, 0.0
        %3668 = vadd.xlane.f32.xlu0 %v3667
        %v3669 = vpop.xlane.xlu0 %3668
        %v3670 = vsel %vm627, %v3648, 0.0
        %3671 = vadd.xlane.f32.xlu0 %v3670
        %v3672 = vpop.xlane.xlu0 %3671
        %v3673 = vsel %vm627, %v3649, 0.0
        %3674 = vadd.xlane.f32.xlu0 %v3673
        %v3675 = vpop.xlane.xlu0 %3674
        %v3676 = vsel %vm627, %v3650, 0.0
        %3677 = vadd.xlane.f32.xlu0 %v3676
        %v3678 = vpop.xlane.xlu0 %3677
        %v3679 = vsel %vm627, %v3651, 0.0
        %3680 = vadd.xlane.f32.xlu0 %v3679
        %v3681 = vpop.xlane.xlu0 %3680
        %v3682 = vmul.f32 %v3654, %v3621
        %v3683 = vmul.f32 %v3657, %v3621
        %v3684 = vmul.f32 %v3660, %v3621
        %v3685 = vmul.f32 %v3663, %v3621
        %v3686 = vmul.f32 %v3666, %v3621
        %v3687 = vmul.f32 %v3669, %v3621
        %v3688 = vmul.f32 %v3672, %v3621
        %v3689 = vmul.f32 %v3675, %v3621
        %v3690 = vmul.f32 %v3678, %v3621
        %v3691 = vmul.f32 %v3681, %v3621
        %v3692 = vadd.f32 %v3682, 1e-05
        %v3693 = vadd.f32 %v3683, 1e-05
        %v3694 = vadd.f32 %v3684, 1e-05
        %v3695 = vadd.f32 %v3685, 1e-05
        %v3696 = vadd.f32 %v3686, 1e-05
        %v3697 = vadd.f32 %v3687, 1e-05
        %v3698 = vadd.f32 %v3688, 1e-05
        %v3699 = vadd.f32 %v3689, 1e-05
        %v3700 = vadd.f32 %v3690, 1e-05
        %v3701 = vadd.f32 %v3691, 1e-05
        %v3702 = vrsqrt.pop %v3692
        %v3703 = vrsqrt.pop %v3693
        %v3704 = vrsqrt.pop %v3694
        %v3705 = vrsqrt.pop %v3695
        %v3706 = vrsqrt.pop %v3696
        %v3707 = vrsqrt.pop %v3697
        %v3708 = vrsqrt.pop %v3698
        %v3709 = vrsqrt.pop %v3699
        %v3710 = vrsqrt.pop %v3700
        %v3711 = vrsqrt.pop %v3701
        %v3712 = vmul.f32 %v3632, %v3702
        %v3713 = vmul.f32 %v3633, %v3703
        %v3714 = vmul.f32 %v3634, %v3704
        %v3715 = vmul.f32 %v3635, %v3705
        %v3716 = vmul.f32 %v3636, %v3706
        %v3717 = vmul.f32 %v3637, %v3707
        %v3718 = vmul.f32 %v3638, %v3708
        %v3719 = vmul.f32 %v3639, %v3709
        %v3720 = vmul.f32 %v3640, %v3710
        %v3721 = vmul.f32 %v3641, %v3711
        %v3722 = vld [vmem:[%s5] sm:$0x1]
        %v3723 = vlaneseq
        %v3724 = vshrl.u32 %v3723, 7
        %v3725 = vsub.s32 0, %v3724
        %v3726 = vrot.slane %v3722, %v3725
        %v3727 = vmul.f32 %v3712, %v3726
        %v3728 = vmul.f32 %v3713, %v3726
        %v3729 = vmul.f32 %v3714, %v3726
        %v3730 = vmul.f32 %v3715, %v3726
        %v3731 = vmul.f32 %v3716, %v3726
        %v3732 = vmul.f32 %v3717, %v3726
        %v3733 = vmul.f32 %v3718, %v3726
        %v3734 = vmul.f32 %v3719, %v3726
        %v3735 = vmul.f32 %v3720, %v3726
        %v3736 = vmul.f32 %v3721, %v3726
        %v3737 = vld [vmem:[%s5 + $0x1] sm:$0x1]
        %v3738 = vlaneseq
        %v3739 = vshrl.u32 %v3738, 7
        %v3740 = vsub.s32 0, %v3739
        %v3741 = vrot.slane %v3737, %v3740
        %v3742 = vadd.f32 %v3727, %v3741
        %v3743 = vadd.f32 %v3728, %v3741
        %v3744 = vadd.f32 %v3729, %v3741
        %v3745 = vadd.f32 %v3730, %v3741
        %v3746 = vadd.f32 %v3731, %v3741
        %v3747 = vadd.f32 %v3732, %v3741
        %v3748 = vadd.f32 %v3733, %v3741
        %v3749 = vadd.f32 %v3734, %v3741
        %v3750 = vadd.f32 %v3735, %v3741
        %v3751 = vadd.f32 %v3736, %v3741
        %3752 = vst.msk [vmem:[%s292] sm:$0xff] %vm627, %v3742
        %3753 = vst.msk [vmem:[%s292 + $0x8] sm:$0xff] %vm627, %v3743
        %3754 = vst.msk [vmem:[%s292 + $0x10] sm:$0xff] %vm627, %v3744
        %3755 = vst.msk [vmem:[%s292 + $0x18] sm:$0xff] %vm627, %v3745
        %3756 = vst.msk [vmem:[%s292 + $0x20] sm:$0xff] %vm627, %v3746
        %3757 = vst.msk [vmem:[%s292 + $0x28] sm:$0xff] %vm627, %v3747
        %3758 = vst.msk [vmem:[%s292 + $0x30] sm:$0xff] %vm627, %v3748
        %3759 = vst.msk [vmem:[%s292 + $0x38] sm:$0xff] %vm627, %v3749
        %3760 = vst.msk [vmem:[%s292 + $0x40] sm:$0xff] %vm627, %v3750
        %3761 = vst.msk [vmem:[%s292 + $0x48] sm:$0xff] %vm627, %v3751
        %p3762 = scmp.lt.s32.totalorder %s19, 1
        %s3763 = scalar_select %p3762, %s19, 1
        %s3764 = smul.addr %s3763, 10
        %s3765 = smul.addr %s3764, 8
        %s3766 = scalar_lea.vmem %s7, %s3765
        // Predicated region
        $region53: #{feature_extractor_pallas.5} parent=47 // pred_check
          %p3767 = pneg %p189
        $region54: #{feature_extractor_pallas.5} parent=47 // pred_check_branch
          %3769 = sbr.rel (%p3767) target = $region56
        $region55: #{feature_extractor_pallas.5} parent=47 // pred_region
          _
        $region56: #{feature_extractor_pallas.5} parent=47 // pred_fallthru
          _
      $region48: #{feature_extractor_pallas.5} parent=5 // pred_fallthru
        _
      %p3770 = scmp.le.s32.totalorder 2, %s14
      // Predicated region
      $region57: #{feature_extractor_pallas.5} parent=5 // pred_check
        %p3771 = pneg %p3770
      $region58: #{feature_extractor_pallas.5} parent=5 // pred_check_branch
        %3773 = sbr.rel (%p3771) target = $region60
      $region59: #{feature_extractor_pallas.5} parent=5 // pred_region
        %s3774 = ssub.s32 %s14, 2
        // Predicated region
        $region61: #{feature_extractor_pallas.5} parent=59 // pred_check
          %p3775 = pneg %p195
        $region62: #{feature_extractor_pallas.5} parent=59 // pred_check_branch
          %3777 = sbr.rel (%p3775) target = $region64
        $region63: #{feature_extractor_pallas.5} parent=59 // pred_region
          %p3778 = scmp.lt.s32.totalorder %s20, 1
          %s3779 = scalar_select %p3778, %s20, 1
          %s3780 = smul.addr %s3779, 10
          %s3781 = smul.addr %s3780, 8
          %s3782 = scalar_lea.vmem %s7, %s3781
        $region64: #{feature_extractor_pallas.5} parent=59 // pred_fallthru
          _
      $region60: #{feature_extractor_pallas.5} parent=5 // pred_fallthru
        _
    $region6: #{feature_extractor_pallas.5} parent=1 // loop_footer
      %s18 = sadd.s32 1, %s14
    $region7: #{feature_extractor_pallas.5} parent=1 // loop_footer_branch
      %13 = sbr.rel target = $region3
    $region8: #{feature_extractor_pallas.5} parent=1 // loop_exit
      _
    %3783 = vsyncpa [#allocation4], 1
    %s3784 = scalar_lea.sflag [#allocation4], 1
    %3785 = vsyncpa %s3784, 1

// kernel: feature_extractor_pallas.6
$region0: #{feature_extractor_pallas.6}
  #allocation0 [shape = 'u32[]', space=smem, size = 0x4, offset = 0x4, fixed_abs, tag = 'smem constant byte address 0x4 - core index']
  #allocation1 [shape = 'u32[144,128]{1,0:T(1,128)}', space=vmem, size = 0x12000, scoped, tag = 'internal scratch']
  #allocation2 [shape = 'f32[38,32]{1,0:T(8,128)}', space=vmem, size = 0x5000, scoped, tag = 'scratch operand']
  %s0 = inlined_call_operand.vmem [shape: f32[2,38,64], index: 0, kind: input, shape index: {}]
  %s1 = inlined_call_operand.vmem [shape: f32[38,1], index: 1, kind: input, shape index: {}]
  %s2 = inlined_call_operand.vmem [shape: f32[64,32], index: 2, kind: input, shape index: {}]
  %s3 = inlined_call_operand.vmem [shape: f32[4,32,288], index: 3, kind: input, shape index: {}]
  %s4 = inlined_call_operand.vmem [shape: f32[5,32], index: 4, kind: input, shape index: {}]
  %s5 = inlined_call_operand.vmem [shape: f32[2,32], index: 5, kind: input, shape index: {}]
  %s6 = inlined_call_operand.vmem [shape: f32[5], index: 6, kind: input, shape index: {}]
  %s7 = inlined_call_operand.vmem [shape: f32[2,24,32], index: 7, kind: output, shape index: {}]
  %s8 = sld [smem:[#allocation0]]
  $region65: #{feature_extractor_pallas.6} parent=0
    _
  %s10 = ssub.s32 1, %s8
  %s11 = scalar_select 0, %s10, %s8
  $region1: #{feature_extractor_pallas.6} parent=0
    #allocation3 [shape = 'u8[512]{0}', space=smem, size = 0x200, scoped, tag = 'input window, operand 6, single buffered']
    #allocation4 [shape = 's32[2]{0}', space=sflag, size = 0x8, scoped, tag = 'scoped memory for feature_extractor_pallas.6']
    %12 = vsyncpa [#allocation4], 0
    loop: start=0, step=1, limit=4
    $region2: #{feature_extractor_pallas.6} parent=1 // loop_pre_header
      _
    $region3: #{feature_extractor_pallas.6} parent=1 // loop_header
      %s14 = sphi 0, %s18
      %p15 = scmp.ge.s32.totalorder %s14, 4
      %s24 = sphi 0, %s26
      %s27 = sphi 0, %s24
      %s28 = sphi 0, %s27
      %s44 = sphi 0, %s28
      %s48 = sphi 0, %s48
      %s50 = sphi 0, %s48
      %s51 = sphi 0, %s50
      %s65 = sphi 0, %s51
      %s69 = sphi 0, %s69
      %s71 = sphi 0, %s69
      %s72 = sphi 0, %s71
      %s86 = sphi 0, %s72
      %s90 = sphi 0, %s90
      %s92 = sphi 0, %s90
      %s93 = sphi 0, %s92
      %s107 = sphi 0, %s93
      %s111 = sphi 0, %s111
      %s113 = sphi 0, %s111
      %s114 = sphi 0, %s113
      %s128 = sphi 0, %s114
      %s132 = sphi 0, %s132
      %s134 = sphi 0, %s132
      %s135 = sphi 0, %s134
      %s149 = sphi 0, %s135
      %s153 = sphi 0, %s153
      %s155 = sphi 0, %s153
      %s156 = sphi 0, %s155
      %s170 = sphi 0, %s156
      %s176 = sphi 0, %s178
      %s179 = sphi 0, %s176
      %s180 = sphi 0, %s179
      %s196 = sphi 0, %s180
    $region4: #{feature_extractor_pallas.6} parent=1 // loop_header_branch
      %17 = sbr.rel (%p15) target = $region8
    $region5: #{feature_extractor_pallas.6} parent=1 // loop_body
      %s19 = ssub.s32 %s14, 1
      %s20 = ssub.s32 %s14, 2
      %s21 = sadd.s32 %s14, 1
      %s22 = ssub.s32 %s14, %s21
      %p23 = scmp.eq.s32.totalorder %s22, 0
      %s25 = sadd.s32 %s24, 1
      %s26 = scalar_select %p23, %s24, %s25
      %p29 = pneg %p23
      %p30 = scmp.eq.s32.totalorder %s14, 1
      %p31 = por %p29, %p30
      %p32 = scmp.ne.s32.totalorder %s24, %s27
      %p33 = scmp.eq.s32.totalorder %s14, 0
      %p34 = por %p32, %p33
      %p35 = scmp.ne.s32.totalorder %s24, %s27
      %p36 = scmp.eq.s32.totalorder %s19, 1
      %p37 = por %p35, %p36
      %p38 = scmp.ne.s32.totalorder %s27, %s28
      %p39 = scmp.eq.s32.totalorder %s19, 0
      %p40 = por %p38, %p39
      %p41 = scmp.ne.s32.totalorder %s27, %s28
      %p42 = scmp.eq.s32.totalorder %s20, 1
      %p43 = por %p41, %p42
      %p45 = scmp.ne.s32.totalorder %s28, %s44
      %p46 = scmp.eq.s32.totalorder %s20, 0
      %p47 = por %p45, %p46
      %s49 = sadd.s32 %s48, 1
      %p52 = scmp.eq.s32.totalorder %s14, 1
      %p53 = scmp.ne.s32.totalorder %s48, %s50
      %p54 = scmp.eq.s32.totalorder %s14, 0
      %p55 = por %p53, %p54
      %p56 = scmp.ne.s32.totalorder %s48, %s50
      %p57 = scmp.eq.s32.totalorder %s19, 1
      %p58 = por %p56, %p57
      %p59 = scmp.ne.s32.totalorder %s50, %s51
      %p60 = scmp.eq.s32.totalorder %s19, 0
      %p61 = por %p59, %p60
      %p62 = scmp.ne.s32.totalorder %s50, %s51
      %p63 = scmp.eq.s32.totalorder %s20, 1
      %p64 = por %p62, %p63
      %p66 = scmp.ne.s32.totalorder %s51, %s65
      %p67 = scmp.eq.s32.totalorder %s20, 0
      %p68 = por %p66, %p67
      %s70 = sadd.s32 %s69, 1
      %p73 = scmp.eq.s32.totalorder %s14, 1
      %p74 = scmp.ne.s32.totalorder %s69, %s71
      %p75 = scmp.eq.s32.totalorder %s14, 0
      %p76 = por %p74, %p75
      %p77 = scmp.ne.s32.totalorder %s69, %s71
      %p78 = scmp.eq.s32.totalorder %s19, 1
      %p79 = por %p77, %p78
      %p80 = scmp.ne.s32.totalorder %s71, %s72
      %p81 = scmp.eq.s32.totalorder %s19, 0
      %p82 = por %p80, %p81
      %p83 = scmp.ne.s32.totalorder %s71, %s72
      %p84 = scmp.eq.s32.totalorder %s20, 1
      %p85 = por %p83, %p84
      %p87 = scmp.ne.s32.totalorder %s72, %s86
      %p88 = scmp.eq.s32.totalorder %s20, 0
      %p89 = por %p87, %p88
      %s91 = sadd.s32 %s90, 1
      %p94 = scmp.eq.s32.totalorder %s14, 1
      %p95 = scmp.ne.s32.totalorder %s90, %s92
      %p96 = scmp.eq.s32.totalorder %s14, 0
      %p97 = por %p95, %p96
      %p98 = scmp.ne.s32.totalorder %s90, %s92
      %p99 = scmp.eq.s32.totalorder %s19, 1
      %p100 = por %p98, %p99
      %p101 = scmp.ne.s32.totalorder %s92, %s93
      %p102 = scmp.eq.s32.totalorder %s19, 0
      %p103 = por %p101, %p102
      %p104 = scmp.ne.s32.totalorder %s92, %s93
      %p105 = scmp.eq.s32.totalorder %s20, 1
      %p106 = por %p104, %p105
      %p108 = scmp.ne.s32.totalorder %s93, %s107
      %p109 = scmp.eq.s32.totalorder %s20, 0
      %p110 = por %p108, %p109
      %s112 = sadd.s32 %s111, 1
      %p115 = scmp.eq.s32.totalorder %s14, 1
      %p116 = scmp.ne.s32.totalorder %s111, %s113
      %p117 = scmp.eq.s32.totalorder %s14, 0
      %p118 = por %p116, %p117
      %p119 = scmp.ne.s32.totalorder %s111, %s113
      %p120 = scmp.eq.s32.totalorder %s19, 1
      %p121 = por %p119, %p120
      %p122 = scmp.ne.s32.totalorder %s113, %s114
      %p123 = scmp.eq.s32.totalorder %s19, 0
      %p124 = por %p122, %p123
      %p125 = scmp.ne.s32.totalorder %s113, %s114
      %p126 = scmp.eq.s32.totalorder %s20, 1
      %p127 = por %p125, %p126
      %p129 = scmp.ne.s32.totalorder %s114, %s128
      %p130 = scmp.eq.s32.totalorder %s20, 0
      %p131 = por %p129, %p130
      %s133 = sadd.s32 %s132, 1
      %p136 = scmp.eq.s32.totalorder %s14, 1
      %p137 = scmp.ne.s32.totalorder %s132, %s134
      %p138 = scmp.eq.s32.totalorder %s14, 0
      %p139 = por %p137, %p138
      %p140 = scmp.ne.s32.totalorder %s132, %s134
      %p141 = scmp.eq.s32.totalorder %s19, 1
      %p142 = por %p140, %p141
      %p143 = scmp.ne.s32.totalorder %s134, %s135
      %p144 = scmp.eq.s32.totalorder %s19, 0
      %p145 = por %p143, %p144
      %p146 = scmp.ne.s32.totalorder %s134, %s135
      %p147 = scmp.eq.s32.totalorder %s20, 1
      %p148 = por %p146, %p147
      %p150 = scmp.ne.s32.totalorder %s135, %s149
      %p151 = scmp.eq.s32.totalorder %s20, 0
      %p152 = por %p150, %p151
      %s154 = sadd.s32 %s153, 1
      %p157 = scmp.eq.s32.totalorder %s14, 1
      %p158 = scmp.ne.s32.totalorder %s153, %s155
      %p159 = scmp.eq.s32.totalorder %s14, 0
      %p160 = por %p158, %p159
      %p161 = scmp.ne.s32.totalorder %s153, %s155
      %p162 = scmp.eq.s32.totalorder %s19, 1
      %p163 = por %p161, %p162
      %p164 = scmp.ne.s32.totalorder %s155, %s156
      %p165 = scmp.eq.s32.totalorder %s19, 0
      %p166 = por %p164, %p165
      %p167 = scmp.ne.s32.totalorder %s155, %s156
      %p168 = scmp.eq.s32.totalorder %s20, 1
      %p169 = por %p167, %p168
      %p171 = scmp.ne.s32.totalorder %s156, %s170
      %p172 = scmp.eq.s32.totalorder %s20, 0
      %p173 = por %p171, %p172
      %s174 = ssub.s32 %s14, %s21
      %p175 = scmp.eq.s32.totalorder %s174, 0
      %s177 = sadd.s32 %s176, 1
      %s178 = scalar_select %p175, %s176, %s177
      %p181 = pneg %p175
      %p182 = scmp.eq.s32.totalorder %s14, 1
      %p183 = por %p181, %p182
      %p184 = scmp.ne.s32.totalorder %s176, %s179
      %p185 = scmp.eq.s32.totalorder %s14, 0
      %p186 = por %p184, %p185
      %p187 = scmp.ne.s32.totalorder %s176, %s179
      %p188 = scmp.eq.s32.totalorder %s19, 1
      %p189 = por %p187, %p188
      %p190 = scmp.ne.s32.totalorder %s179, %s180
      %p191 = scmp.eq.s32.totalorder %s19, 0
      %p192 = por %p190, %p191
      %p193 = scmp.ne.s32.totalorder %s179, %s180
      %p194 = scmp.eq.s32.totalorder %s20, 1
      %p195 = por %p193, %p194
      %p197 = scmp.ne.s32.totalorder %s180, %s196
      %p198 = scmp.eq.s32.totalorder %s20, 0
      %p199 = por %p197, %p198
      %p200 = scmp.le.s32.totalorder 1, %s14
      %p201 = scmp.lt.s32.totalorder %s14, 3
      %p202 = pnand %p200, %p201
      %p203 = pneg %p202
      // Predicated region
      $region9: #{feature_extractor_pallas.6} parent=5 // pred_check
        _
      $region10: #{feature_extractor_pallas.6} parent=5 // pred_check_branch
        %205 = sbr.rel (%p202) target = $region12
      $region11: #{feature_extractor_pallas.6} parent=5 // pred_region
        %s206 = ssub.s32 %s14, 1
        // Predicated region
        $region13: #{feature_extractor_pallas.6} parent=11 // pred_check
          %p207 = pneg %p61
        $region14: #{feature_extractor_pallas.6} parent=11 // pred_check_branch
          %209 = sbr.rel (%p207) target = $region16
        $region15: #{feature_extractor_pallas.6} parent=11 // pred_region
          _
        $region16: #{feature_extractor_pallas.6} parent=11 // pred_fallthru
          _
        // Predicated region
        $region17: #{feature_extractor_pallas.6} parent=11 // pred_check
          %p210 = pneg %p82
        $region18: #{feature_extractor_pallas.6} parent=11 // pred_check_branch
          %212 = sbr.rel (%p210) target = $region20
        $region19: #{feature_extractor_pallas.6} parent=11 // pred_region
          _
        $region20: #{feature_extractor_pallas.6} parent=11 // pred_fallthru
          _
        // Predicated region
        $region21: #{feature_extractor_pallas.6} parent=11 // pred_check
          %p213 = pneg %p103
        $region22: #{feature_extractor_pallas.6} parent=11 // pred_check_branch
          %215 = sbr.rel (%p213) target = $region24
        $region23: #{feature_extractor_pallas.6} parent=11 // pred_region
          _
        $region24: #{feature_extractor_pallas.6} parent=11 // pred_fallthru
          _
        // Predicated region
        $region25: #{feature_extractor_pallas.6} parent=11 // pred_check
          %p216 = pneg %p124
        $region26: #{feature_extractor_pallas.6} parent=11 // pred_check_branch
          %218 = sbr.rel (%p216) target = $region28
        $region27: #{feature_extractor_pallas.6} parent=11 // pred_region
          _
        $region28: #{feature_extractor_pallas.6} parent=11 // pred_fallthru
          _
        // Predicated region
        $region29: #{feature_extractor_pallas.6} parent=11 // pred_check
          %p219 = pneg %p145
        $region30: #{feature_extractor_pallas.6} parent=11 // pred_check_branch
          %221 = sbr.rel (%p219) target = $region32
        $region31: #{feature_extractor_pallas.6} parent=11 // pred_region
          _
        $region32: #{feature_extractor_pallas.6} parent=11 // pred_fallthru
          _
        // Predicated region
        $region33: #{feature_extractor_pallas.6} parent=11 // pred_check
          %p222 = pneg %p166
        $region34: #{feature_extractor_pallas.6} parent=11 // pred_check_branch
          %224 = sbr.rel (%p222) target = $region36
        $region35: #{feature_extractor_pallas.6} parent=11 // pred_region
          %s226 = ssub.s32 16, 16
          %227 = vsyncadd [#allocation4], %s226
          %s229 = sshll.u32 %s6, 4
          %s230 = int_to_ptr.vmem [resolvable:$true] %s229
          %232 = dma.vmem_to_smem %s230, 16, [#allocation3], [#allocation4]
        $region36: #{feature_extractor_pallas.6} parent=11 // pred_fallthru
          _
      $region12: #{feature_extractor_pallas.6} parent=5 // pred_fallthru
        _
      %p233 = scmp.lt.s32.totalorder %s14, 2
      // Predicated region
      $region37: #{feature_extractor_pallas.6} parent=5 // pred_check
        %p234 = pneg %p233
      $region38: #{feature_extractor_pallas.6} parent=5 // pred_check_branch
        %236 = sbr.rel (%p234) target = $region40
      $region39: #{feature_extractor_pallas.6} parent=5 // pred_region
        // Predicated region
        $region41: #{feature_extractor_pallas.6} parent=39 // pred_check
          %p237 = pneg %p34
        $region42: #{feature_extractor_pallas.6} parent=39 // pred_check_branch
          %239 = sbr.rel (%p237) target = $region44
        $region43: #{feature_extractor_pallas.6} parent=39 // pred_region
          %p240 = scmp.lt.s32.totalorder %s14, 1
          %s241 = scalar_select %p240, %s14, 1
          %s242 = smul.addr %s241, 5
          %s243 = smul.addr %s242, 8
          %s244 = scalar_lea.vmem %s0, %s243
        $region44: #{feature_extractor_pallas.6} parent=39 // pred_fallthru
          _
      $region40: #{feature_extractor_pallas.6} parent=5 // pred_fallthru
        _
      %p245 = scmp.le.s32.totalorder 1, %s14
      %p246 = scmp.lt.s32.totalorder %s14, 3
      %p247 = pnand %p245, %p246
      %p248 = pneg %p247
      // Predicated region
      $region45: #{feature_extractor_pallas.6} parent=5 // pred_check
        _
      $region46: #{feature_extractor_pallas.6} parent=5 // pred_check_branch
        %250 = sbr.rel (%p247) target = $region48
      $region47: #{feature_extractor_pallas.6} parent=5 // pred_region
        %s251 = ssub.s32 %s14, 1
        // Predicated region
        $region49: #{feature_extractor_pallas.6} parent=47 // pred_check
          %p252 = pneg %p166
        $region50: #{feature_extractor_pallas.6} parent=47 // pred_check_branch
          %254 = sbr.rel (%p252) target = $region52
        $region51: #{feature_extractor_pallas.6} parent=47 // pred_region
          %255 = dma.done [#allocation4], 16
        $region52: #{feature_extractor_pallas.6} parent=47 // pred_fallthru
          _
        %256 = sfence
        %p257 = scmp.lt.s32.totalorder %s19, 1
        %s258 = scalar_select %p257, %s19, 1
        %s259 = smul.addr %s258, 5
        %s260 = smul.addr %s259, 8
        %s261 = scalar_lea.vmem %s0, %s260
        %p262 = pneg %p40
        %p263 = pneg %p37
        %p264 = pneg %p61
        %p265 = pneg %p58
        %p266 = pneg %p82
        %p267 = pneg %p79
        %p268 = pneg %p103
        %p269 = pneg %p100
        %p270 = pneg %p124
        %p271 = pneg %p121
        %p272 = pneg %p145
        %p273 = pneg %p142
        %p274 = pneg %p166
        %p275 = pneg %p163
        %p276 = pneg %p192
        %p277 = pneg %p189
        %p278 = scmp.lt.s32.totalorder %s19, 1
        %s279 = scalar_select %p278, %s19, 1
        %s280 = smul.addr %s279, 3
        %s281 = smul.addr %s280, 8
        %s282 = scalar_lea.vmem %s7, %s281
        %p283 = scmp.lt.s32.totalorder %s19, 1
        %s284 = scalar_select %p283, %s19, 1
        %s285 = smul.addr %s284, 5
        %s286 = smul.addr %s285, 8
        %s287 = scalar_lea.vmem %s0, %s286
        %p288 = scmp.lt.s32.totalorder %s19, 1
        %s289 = scalar_select %p288, %s19, 1
        %s290 = smul.addr %s289, 3
        %s291 = smul.addr %s290, 8
        %s292 = scalar_lea.vmem %s7, %s291
        %v293 = vld [vmem:[%s1] sm:$0xff]
        %v294 = vld [vmem:[%s1 + $0x8] sm:$0xff]
        %v295 = vld [vmem:[%s1 + $0x10] sm:$0xff]
        %v296 = vld [vmem:[%s1 + $0x18] sm:$0xff]
        %v297 = vld [vmem:[%s1 + $0x20] sm:$0x3f]
        %v298 = vld [vmem:[%s1 + $0x7] sm:$0xff]
        %v299 = vld [vmem:[%s1 + $0xf] sm:$0xff]
        %v300 = vld [vmem:[%s1 + $0x17] sm:$0xff]
        %v301 = vld [vmem:[%s287] sm:$0xff]
        %v302 = vld [vmem:[%s287 + $0x8] sm:$0xff]
        %v303 = vld [vmem:[%s287 + $0x10] sm:$0xff]
        %v304 = vld [vmem:[%s287 + $0x18] sm:$0xff]
        %v305 = vld [vmem:[%s287 + $0x20] sm:$0x3f]
        %v306 = vld [vmem:[%s2] sm:$0xff]
        %v307 = vld [vmem:[%s2 + $0x8] sm:$0xff]
        %v308 = vld [vmem:[%s2 + $0x10] sm:$0xff]
        %v309 = vld [vmem:[%s2 + $0x18] sm:$0xff]
        %v310 = vld [vmem:[%s2 + $0x20] sm:$0xff]
        %v311 = vld [vmem:[%s2 + $0x28] sm:$0xff]
        %v312 = vld [vmem:[%s2 + $0x30] sm:$0xff]
        %v313 = vld [vmem:[%s2 + $0x38] sm:$0xff]
        %v314 = vld [vmem:[%s4] sm:$0x1]
        %v315 = vlaneseq
        %v316 = vshrl.u32 %v315, 7
        %v317 = vsub.s32 0, %v316
        %v318 = vrot.slane %v314, %v317
        %vm319 = vcmask 523264
        %v321 = vsel %vm319, %v301, 0
        %v324 = vsel %vm319, %v302, 0
        %v327 = vsel %vm319, %v303, 0
        %v330 = vsel %vm319, %v304, 0
        %v333 = vsel %vm319, %v305, 0
        %335 = vmatprep.subr.mxu0 0.0
        %336 = vmatpush1.msra.mxu0 %v306
        %337 = vmatprep.subr.mxu0 0.0
        %338 = vmatpush1.msra.mxu0 %v307
        %339 = vmatprep.subr.mxu0 0.0
        %340 = vmatpush1.msra.mxu0 %v308
        %341 = vmatprep.subr.mxu0 0.0
        %342 = vmatpush1.msra.mxu0 %v309
        %343 = vmatprep.subr.mxu0 0.0
        %344 = vmatpush1.msra.mxu0 %v310
        %345 = vmatprep.subr.mxu0 0.0
        %346 = vmatpush1.msra.mxu0 %v311
        %347 = vmatprep.subr.mxu0 0.0
        %348 = vmatpush1.msra.mxu0 %v312
        %349 = vmatprep.subr.mxu0 0.0
        %350 = vmatpush1.msra.mxu0 %v313
        %351 = vmatprep.subr.mxu0 0.0
        %352 = vmatpush1.msra.mxu0 0.0
        %353 = vmatprep.subr.mxu0 0.0
        %354 = vmatpush1.msra.mxu0 0.0
        %355 = vmatprep.subr.mxu0 0.0
        %356 = vmatpush1.msra.mxu0 0.0
        %357 = vmatprep.subr.mxu0 0.0
        %358 = vmatpush1.msra.mxu0 0.0
        %359 = vmatprep.subr.mxu0 0.0
        %360 = vmatpush1.msra.mxu0 0.0
        %361 = vmatprep.subr.mxu0 0.0
        %362 = vmatpush1.msra.mxu0 0.0
        %363 = vmatprep.subr.mxu0 0.0
        %364 = vmatpush1.msra.mxu0 0.0
        %365 = vmatprep.subr.mxu0 0.0
        %366 = vmatpush1.msra.mxu0 0.0
        %367 = vmatprep.subr.mxu0 0.0
        %368 = vmatpush1.msra.mxu0 0.0
        %369 = vmatprep.subr.mxu0 0.0
        %370 = vmatpush1.msra.mxu0 0.0
        %371 = vmatprep.subr.mxu0 0.0
        %372 = vmatpush1.msra.mxu0 0.0
        %373 = vmatprep.subr.mxu0 0.0
        %374 = vmatpush1.msra.mxu0 0.0
        %375 = vmatprep.subr.mxu0 0.0
        %376 = vmatpush1.msra.mxu0 0.0
        %377 = vmatprep.subr.mxu0 0.0
        %378 = vmatpush1.msra.mxu0 0.0
        %379 = vmatprep.subr.mxu0 0.0
        %380 = vmatpush1.msra.mxu0 0.0
        %381 = vmatprep.subr.mxu0 0.0
        %382 = vmatpush1.msra.mxu0 0.0
        %383 = vmatprep.subr.mxu0 0.0
        %384 = vmatpush1.msra.mxu0 0.0
        %385 = vmatprep.subr.mxu0 0.0
        %386 = vmatpush1.msra.mxu0 0.0
        %387 = vmatprep.subr.mxu0 0.0
        %388 = vmatpush1.msra.mxu0 0.0
        %389 = vmatprep.subr.mxu0 0.0
        %390 = vmatpush1.msra.mxu0 0.0
        %391 = vmatprep.subr.mxu0 0.0
        %392 = vmatpush1.msra.mxu0 0.0
        %393 = vmatprep.subr.mxu0 0.0
        %394 = vmatpush1.msra.mxu0 0.0
        %395 = vmatprep.subr.mxu0 0.0
        %396 = vmatpush1.msra.mxu0 0.0
        %397 = vmatprep.subr.mxu0 0.0
        %398 = vmatpush1.msra.mxu0 0.0
        %399 = vmatprep.mubr.f32.mxu0 0.0
        %400 = vmatmul.mubr.f32.gmra.mrb[0].mxu0 %v321
        %v401 = vpop.f32.mrb[0].mxu0
        %v402 = vadd.f32 %v318, %v401
        %v403 = vpop.f32.mrb[0].mxu0
        %404 = vmatprep.mubr.f32.mxu0 0.0
        %405 = vmatmul.mubr.f32.gmra.mrb[0].mxu0 %v324
        %v406 = vpop.f32.mrb[0].mxu0
        %v407 = vadd.f32 %v318, %v406
        %v408 = vpop.f32.mrb[0].mxu0
        %409 = vmatprep.mubr.f32.mxu0 0.0
        %410 = vmatmul.mubr.f32.gmra.mrb[0].mxu0 %v327
        %v411 = vpop.f32.mrb[0].mxu0
        %v412 = vadd.f32 %v318, %v411
        %v413 = vpop.f32.mrb[0].mxu0
        %414 = vmatprep.mubr.f32.mxu0 0.0
        %415 = vmatmul.mubr.f32.gmra.mrb[0].mxu0 %v330
        %v416 = vpop.f32.mrb[0].mxu0
        %v417 = vadd.f32 %v318, %v416
        %v418 = vpop.f32.mrb[0].mxu0
        %419 = vmatprep.mubr.f32.mxu0 0.0
        %420 = vmatmul.mubr.f32.gmra.mrb[0].mxu0 %v333
        %v421 = vpop.f32.mrb[0].mxu0
        %v422 = vadd.f32 %v318, %v421
        %v423 = vpop.f32.mrb[0].mxu0
        %424 = vdwg.mxu0
        %s425 = sld [smem:[#allocation3]]
        %vm426 = vcmp.ge.f32.partialorder %v402, 0.0
        %vm427 = vcmp.ge.f32.partialorder %v407, 0.0
        %vm428 = vcmp.ge.f32.partialorder %v412, 0.0
        %vm429 = vcmp.ge.f32.partialorder %v417, 0.0
        %vm430 = vcmp.ge.f32.partialorder %v422, 0.0
        %v431 = vstv %s425
        %v432 = vmul.f32 %v431, %v402
        %v433 = vmul.f32 %v431, %v407
        %v434 = vmul.f32 %v431, %v412
        %v435 = vmul.f32 %v431, %v417
        %v436 = vmul.f32 %v431, %v422
        %v437 = vsel %vm426, %v402, %v432
        %v438 = vsel %vm427, %v407, %v433
        %v439 = vsel %vm428, %v412, %v434
        %v440 = vsel %vm429, %v417, %v435
        %v441 = vsel %vm430, %v422, %v436
        %443 = vset.pattern.permute.xlu0 0
        %444 = vperm.xlu0 %443, %v293
        %v445 = vpop.permute.xlu0 %444
        %448 = vset.pattern.permute.xlu0 0
        %449 = vperm.xlu0 %448, %v294
        %v450 = vpop.permute.xlu0 %449
        %453 = vset.pattern.permute.xlu0 0
        %454 = vperm.xlu0 %453, %v295
        %v455 = vpop.permute.xlu0 %454
        %458 = vset.pattern.permute.xlu0 0
        %459 = vperm.xlu0 %458, %v296
        %v460 = vpop.permute.xlu0 %459
        %463 = vset.pattern.permute.xlu0 0
        %464 = vperm.xlu0 %463, %v297
        %v465 = vpop.permute.xlu0 %464
        %v467 = vmul.f32 %v437, %v445
        %v468 = vmul.f32 %v438, %v450
        %v469 = vmul.f32 %v439, %v455
        %v470 = vmul.f32 %v440, %v460
        %v471 = vmul.f32 %v441, %v465
        %vm472 = vcmask 261120
        %473 = vst.msk [vmem:[#allocation2] sm:$0xff] %vm472, 0.0
        %474 = vst.msk [vmem:[#allocation2 + $0x8] sm:$0xff] %vm472, 0.0
        %475 = vst.msk [vmem:[#allocation2 + $0x10] sm:$0xff] %vm472, 0.0
        %476 = vst.msk [vmem:[#allocation2 + $0x18] sm:$0xff] %vm472, 0.0
        %vm477 = vcmask 259072
        %478 = vst.msk [vmem:[#allocation2 + $0x20] sm:$0x3f] %vm477, 0.0
        %v479 = vld [vmem:[%s3] sm:$0xff]
        %v480 = vld [vmem:[%s3 + $0x8] sm:$0xff]
        %v481 = vld [vmem:[%s3 + $0x10] sm:$0xff]
        %v482 = vld [vmem:[%s3 + $0x18] sm:$0xff]
        %v483 = vld [vmem:[%s3 + $0x20] sm:$0xff]
        %v484 = vld [vmem:[%s3 + $0x28] sm:$0xff]
        %v485 = vld [vmem:[%s3 + $0x30] sm:$0xff]
        %v486 = vld [vmem:[%s3 + $0x38] sm:$0xff]
        %v487 = vld [vmem:[%s3 + $0x40] sm:$0xff]
        %v488 = vld [vmem:[%s3 + $0x48] sm:$0xff]
        %v489 = vld [vmem:[%s3 + $0x50] sm:$0xff]
        %v490 = vld [vmem:[%s3 + $0x58] sm:$0xff]
        %v491 = vld [vmem:[%s4 + $0x1] sm:$0x1]
        %v493 = vsel %vm472, %v467, 0
        %v496 = vsel %vm472, %v468, 0
        %v499 = vsel %vm472, %v469, 0
        %v502 = vsel %vm472, %v470, 0
        %v505 = vsel %vm472, %v471, 0
        %507 = vmatprep.subr.mxu0 %v480
        %508 = vmatpush1.msra.mxu0 %v479
        %509 = vmatprep.subr.mxu0 %v483
        %510 = vmatpush1.msra.mxu0 %v482
        %511 = vmatprep.subr.mxu0 %v486
        %512 = vmatpush1.msra.mxu0 %v485
        %513 = vmatprep.subr.mxu0 %v489
        %514 = vmatpush1.msra.mxu0 %v488
        %515 = vmatprep.subr.mxu0 0.0
        %516 = vmatpush1.msra.mxu0 0.0
        %517 = vmatprep.subr.mxu0 0.0
        %518 = vmatpush1.msra.mxu0 0.0
        %519 = vmatprep.subr.mxu0 0.0
        %520 = vmatpush1.msra.mxu0 0.0
        %521 = vmatprep.subr.mxu0 0.0
        %522 = vmatpush1.msra.mxu0 0.0
        %523 = vmatprep.subr.mxu0 0.0
        %524 = vmatpush1.msra.mxu0 0.0
        %525 = vmatprep.subr.mxu0 0.0
        %526 = vmatpush1.msra.mxu0 0.0
        %527 = vmatprep.subr.mxu0 0.0
        %528 = vmatpush1.msra.mxu0 0.0
        %529 = vmatprep.subr.mxu0 0.0
        %530 = vmatpush1.msra.mxu0 0.0
        %531 = vmatprep.subr.mxu0 0.0
        %532 = vmatpush1.msra.mxu0 0.0
        %533 = vmatprep.subr.mxu0 0.0
        %534 = vmatpush1.msra.mxu0 0.0
        %535 = vmatprep.subr.mxu0 0.0
        %536 = vmatpush1.msra.mxu0 0.0
        %537 = vmatprep.subr.mxu0 0.0
        %538 = vmatpush1.msra.mxu0 0.0
        %539 = vmatprep.subr.mxu0 0.0
        %540 = vmatpush1.msra.mxu0 0.0
        %541 = vmatprep.subr.mxu0 0.0
        %542 = vmatpush1.msra.mxu0 0.0
        %543 = vmatprep.subr.mxu0 0.0
        %544 = vmatpush1.msra.mxu0 0.0
        %545 = vmatprep.subr.mxu0 0.0
        %546 = vmatpush1.msra.mxu0 0.0
        %547 = vmatprep.subr.mxu0 0.0
        %548 = vmatpush1.msra.mxu0 0.0
        %549 = vmatprep.subr.mxu0 0.0
        %550 = vmatpush1.msra.mxu0 0.0
        %551 = vmatprep.subr.mxu0 0.0
        %552 = vmatpush1.msra.mxu0 0.0
        %553 = vmatprep.subr.mxu0 0.0
        %554 = vmatpush1.msra.mxu0 0.0
        %555 = vmatprep.subr.mxu0 0.0
        %556 = vmatpush1.msra.mxu0 0.0
        %557 = vmatprep.subr.mxu0 0.0
        %558 = vmatpush1.msra.mxu0 0.0
        %559 = vmatprep.subr.mxu0 0.0
        %560 = vmatpush1.msra.mxu0 0.0
        %561 = vmatprep.subr.mxu0 0.0
        %562 = vmatpush1.msra.mxu0 0.0
        %563 = vmatprep.subr.mxu0 0.0
        %564 = vmatpush1.msra.mxu0 0.0
        %565 = vmatprep.subr.mxu0 0.0
        %566 = vmatpush1.msra.mxu0 0.0
        %567 = vmatprep.subr.mxu0 0.0
        %568 = vmatpush1.msra.mxu0 0.0
        %569 = vmatprep.subr.mxu0 0.0
        %570 = vmatpush1.msra.mxu0 0.0
        %571 = vmatprep.mubr.f32.mxu0 0.0
        %572 = vmatmul.mubr.f32.gmra.mrb[0].mxu0 %v493
        %v573 = vpop.f32.mrb[0].mxu0
        %v574 = vadd.f32 0.0, %v573
        %v575 = vpop.f32.mrb[0].mxu0
        %v576 = vadd.f32 0.0, %v575
        %577 = vmatprep.mubr.f32.mxu0 0.0
        %578 = vmatmul.mubr.f32.gmra.mrb[0].mxu0 %v496
        %v579 = vpop.f32.mrb[0].mxu0
        %v580 = vadd.f32 0.0, %v579
        %v581 = vpop.f32.mrb[0].mxu0
        %v582 = vadd.f32 0.0, %v581
        %583 = vmatprep.mubr.f32.mxu0 0.0
        %584 = vmatmul.mubr.f32.gmra.mrb[0].mxu0 %v499
        %v585 = vpop.f32.mrb[0].mxu0
        %v586 = vadd.f32 0.0, %v585
        %v587 = vpop.f32.mrb[0].mxu0
        %v588 = vadd.f32 0.0, %v587
        %589 = vmatprep.mubr.f32.mxu0 0.0
        %590 = vmatmul.mubr.f32.gmra.mrb[0].mxu0 %v502
        %v591 = vpop.f32.mrb[0].mxu0
        %v592 = vadd.f32 0.0, %v591
        %v593 = vpop.f32.mrb[0].mxu0
        %v594 = vadd.f32 0.0, %v593
        %595 = vmatprep.mubr.f32.mxu0 0.0
        %596 = vmatmul.mubr.f32.gmra.mrb[0].mxu0 %v505
        %v597 = vpop.f32.mrb[0].mxu0
        %v598 = vpop.f32.mrb[0].mxu0
        %v599 = vadd.f32 0.0, %v598
        %600 = vdwg.mxu0
        %601 = vmatprep.subr.mxu0 0.0
        %602 = vmatpush1.msra.mxu0 %v481
        %603 = vmatprep.subr.mxu0 0.0
        %604 = vmatpush1.msra.mxu0 %v484
        %605 = vmatprep.subr.mxu0 0.0
        %606 = vmatpush1.msra.mxu0 %v487
        %607 = vmatprep.subr.mxu0 0.0
        %608 = vmatpush1.msra.mxu0 %v490
        %609 = vmatprep.subr.mxu0 0.0
        %610 = vmatpush1.msra.mxu0 0.0
        %611 = vmatprep.subr.mxu0 0.0
        %612 = vmatpush1.msra.mxu0 0.0
        %613 = vmatprep.subr.mxu0 0.0
        %614 = vmatpush1.msra.mxu0 0.0
        %615 = vmatprep.subr.mxu0 0.0
        %616 = vmatpush1.msra.mxu0 0.0
        %617 = vmatprep.subr.mxu0 0.0
        %618 = vmatpush1.msra.mxu0 0.0
        %619 = vmatprep.subr.mxu0 0.0
        %620 = vmatpush1.msra.mxu0 0.0
        %621 = vmatprep.subr.mxu0 0.0
        %622 = vmatpush1.msra.mxu0 0.0
        %623 = vmatprep.subr.mxu0 0.0
        %624 = vmatpush1.msra.mxu0 0.0
        %625 = vmatprep.subr.mxu0 0.0
        %626 = vmatpush1.msra.mxu0 0.0
        %627 = vmatprep.subr.mxu0 0.0
        %628 = vmatpush1.msra.mxu0 0.0
        %629 = vmatprep.subr.mxu0 0.0
        %630 = vmatpush1.msra.mxu0 0.0
        %631 = vmatprep.subr.mxu0 0.0
        %632 = vmatpush1.msra.mxu0 0.0
        %633 = vmatprep.subr.mxu0 0.0
        %634 = vmatpush1.msra.mxu0 0.0
        %635 = vmatprep.subr.mxu0 0.0
        %636 = vmatpush1.msra.mxu0 0.0
        %637 = vmatprep.subr.mxu0 0.0
        %638 = vmatpush1.msra.mxu0 0.0
        %639 = vmatprep.subr.mxu0 0.0
        %640 = vmatpush1.msra.mxu0 0.0
        %641 = vmatprep.subr.mxu0 0.0
        %642 = vmatpush1.msra.mxu0 0.0
        %643 = vmatprep.subr.mxu0 0.0
        %644 = vmatpush1.msra.mxu0 0.0
        %645 = vmatprep.subr.mxu0 0.0
        %646 = vmatpush1.msra.mxu0 0.0
        %647 = vmatprep.subr.mxu0 0.0
        %648 = vmatpush1.msra.mxu0 0.0
        %649 = vmatprep.subr.mxu0 0.0
        %650 = vmatpush1.msra.mxu0 0.0
        %651 = vmatprep.subr.mxu0 0.0
        %652 = vmatpush1.msra.mxu0 0.0
        %653 = vmatprep.subr.mxu0 0.0
        %654 = vmatpush1.msra.mxu0 0.0
        %655 = vmatprep.subr.mxu0 0.0
        %656 = vmatpush1.msra.mxu0 0.0
        %657 = vmatprep.subr.mxu0 0.0
        %658 = vmatpush1.msra.mxu0 0.0
        %659 = vmatprep.subr.mxu0 0.0
        %660 = vmatpush1.msra.mxu0 0.0
        %661 = vmatprep.subr.mxu0 0.0
        %662 = vmatpush1.msra.mxu0 0.0
        %663 = vmatprep.subr.mxu0 0.0
        %664 = vmatpush1.msra.mxu0 0.0
        %665 = vmatprep.mubr.f32.mxu0 0.0
        %666 = vmatmul.mubr.f32.gmra.mrb[0].mxu0 %v493
        %v667 = vpop.f32.mrb[0].mxu0
        %v668 = vpop.f32.mrb[0].mxu0
        %669 = vmatprep.mubr.f32.mxu0 0.0
        %670 = vmatmul.mubr.f32.gmra.mrb[0].mxu0 %v496
        %v671 = vpop.f32.mrb[0].mxu0
        %v672 = vadd.f32 0.0, %v671
        %v673 = vpop.f32.mrb[0].mxu0
        %674 = vmatprep.mubr.f32.mxu0 0.0
        %675 = vmatmul.mubr.f32.gmra.mrb[0].mxu0 %v499
        %v676 = vpop.f32.mrb[0].mxu0
        %v677 = vadd.f32 0.0, %v676
        %v678 = vpop.f32.mrb[0].mxu0
        %679 = vmatprep.mubr.f32.mxu0 0.0
        %680 = vmatmul.mubr.f32.gmra.mrb[0].mxu0 %v502
        %v681 = vpop.f32.mrb[0].mxu0
        %v682 = vadd.f32 0.0, %v681
        %v683 = vpop.f32.mrb[0].mxu0
        %684 = vmatprep.mubr.f32.mxu0 0.0
        %685 = vmatmul.mubr.f32.gmra.mrb[0].mxu0 %v505
        %v686 = vpop.f32.mrb[0].mxu0
        %v687 = vadd.f32 0.0, %v686
        %v688 = vpop.f32.mrb[0].mxu0
        %689 = vdwg.mxu0
        %vm694 = vcmask 1046528
        %v695 = vrot.slane %v574, 1
        %v696 = vrot.slane %v580, 1
        %v697 = vsel %vm694, %v695, %v696
        %v698 = vrot.slane %v586, 1
        %v699 = vsel %vm694, %v696, %v698
        %v700 = vrot.slane %v592, 1
        %v701 = vsel %vm694, %v698, %v700
        %702 = vrot.lane.b32.xlu0 %v697, 96
        %v703 = vpop.permute.xlu0 %702
        %704 = vrot.lane.b32.xlu0 %v699, 96
        %v705 = vpop.permute.xlu0 %704
        %706 = vrot.lane.b32.xlu0 %v701, 96
        %v707 = vpop.permute.xlu0 %706
        %v711 = vadd.f32 %v574, %v703
        %v712 = vadd.f32 %v580, %v705
        %v713 = vadd.f32 %v586, %v707
        %vm714 = vcmask 1045504
        %v715 = vrot.slane %v574, 2
        %v716 = vrot.slane %v580, 2
        %v717 = vsel %vm714, %v715, %v716
        %v718 = vrot.slane %v586, 2
        %v719 = vsel %vm714, %v716, %v718
        %v720 = vrot.slane %v592, 2
        %v721 = vsel %vm714, %v718, %v720
        %722 = vrot.lane.b32.xlu0 %v717, 64
        %v723 = vpop.permute.xlu0 %722
        %724 = vrot.lane.b32.xlu0 %v719, 64
        %v725 = vpop.permute.xlu0 %724
        %726 = vrot.lane.b32.xlu0 %v721, 64
        %v727 = vpop.permute.xlu0 %726
        %v731 = vadd.f32 %v711, %v723
        %v732 = vadd.f32 %v712, %v725
        %v733 = vadd.f32 %v713, %v727
        %vm734 = vcmask 1041408
        %v735 = vrot.slane %v574, 6
        %v736 = vrot.slane %v580, 6
        %v737 = vsel %vm734, %v735, %v736
        %v738 = vrot.slane %v586, 6
        %v739 = vsel %vm734, %v736, %v738
        %v740 = vrot.slane %v592, 6
        %v741 = vsel %vm734, %v738, %v740
        %742 = vrot.lane.b32.xlu0 %v737, 32
        %v743 = vpop.permute.xlu0 %742
        %744 = vrot.lane.b32.xlu0 %v739, 32
        %v745 = vpop.permute.xlu0 %744
        %746 = vrot.lane.b32.xlu0 %v741, 32
        %v747 = vpop.permute.xlu0 %746
        %v751 = vadd.f32 %v731, %v743
        %v752 = vadd.f32 %v732, %v745
        %v753 = vadd.f32 %v733, %v747
        %vm758 = vcmask 1040384
        %v759 = vrot.slane %v576, 7
        %v760 = vrot.slane %v582, 7
        %v761 = vsel %vm758, %v759, %v760
        %v762 = vrot.slane %v588, 7
        %v763 = vsel %vm758, %v760, %v762
        %v764 = vrot.slane %v594, 7
        %v765 = vsel %vm758, %v762, %v764
        %v769 = vadd.f32 %v751, %v761
        %v770 = vadd.f32 %v752, %v763
        %v771 = vadd.f32 %v753, %v765
        %772 = vrot.lane.b32.xlu0 %v582, 96
        %v773 = vpop.permute.xlu0 %772
        %774 = vrot.lane.b32.xlu0 %v588, 96
        %v775 = vpop.permute.xlu0 %774
        %776 = vrot.lane.b32.xlu0 %v594, 96
        %v777 = vpop.permute.xlu0 %776
        %v781 = vadd.f32 %v769, %v773
        %v782 = vadd.f32 %v770, %v775
        %v783 = vadd.f32 %v771, %v777
        %vm785 = vcmask 1043456
        %v786 = vrot.slane %v582, 4
        %v787 = vrot.slane %v588, 4
        %v788 = vsel %vm785, %v786, %v787
        %v789 = vrot.slane %v594, 4
        %v790 = vsel %vm785, %v787, %v789
        %v791 = vrot.slane %v599, 4
        %v792 = vsel %vm785, %v789, %v791
        %793 = vrot.lane.b32.xlu0 %v788, 64
        %v794 = vpop.permute.xlu0 %793
        %795 = vrot.lane.b32.xlu0 %v790, 64
        %v796 = vpop.permute.xlu0 %795
        %797 = vrot.lane.b32.xlu0 %v792, 64
        %v798 = vpop.permute.xlu0 %797
        %v802 = vadd.f32 %v781, %v794
        %v803 = vadd.f32 %v782, %v796
        %v804 = vadd.f32 %v783, %v798
        %vm805 = vcmask 1042432
        %v806 = vrot.slane %v582, 5
        %v807 = vrot.slane %v588, 5
        %v808 = vsel %vm805, %v806, %v807
        %v809 = vrot.slane %v594, 5
        %v810 = vsel %vm805, %v807, %v809
        %v811 = vrot.slane %v599, 5
        %v812 = vsel %vm805, %v809, %v811
        %813 = vrot.lane.b32.xlu0 %v808, 32
        %v814 = vpop.permute.xlu0 %813
        %815 = vrot.lane.b32.xlu0 %v810, 32
        %v816 = vpop.permute.xlu0 %815
        %817 = vrot.lane.b32.xlu0 %v812, 32
        %v818 = vpop.permute.xlu0 %817
        %v822 = vadd.f32 %v802, %v814
        %v823 = vadd.f32 %v803, %v816
        %v824 = vadd.f32 %v804, %v818
        %v829 = vrot.slane %v672, 6
        %v830 = vrot.slane %v677, 6
        %v831 = vsel %vm734, %v829, %v830
        %v832 = vrot.slane %v682, 6
        %v833 = vsel %vm734, %v830, %v832
        %v834 = vrot.slane %v687, 6
        %v835 = vsel %vm734, %v832, %v834
        %v839 = vadd.f32 %v822, %v831
        %v840 = vadd.f32 %v823, %v833
        %v841 = vadd.f32 %v824, %v835
        %v842 = vlaneseq
        %v843 = vshrl.u32 %v842, 7
        %v844 = vsub.s32 0, %v843
        %v845 = vrot.slane %v491, %v844
        %v846 = vadd.f32 %v839, %v845
        %v847 = vadd.f32 %v840, %v845
        %v848 = vadd.f32 %v841, %v845
        %s849 = sld [smem:[#allocation3 + $0x1]]
        %vm850 = vcmp.ge.f32.partialorder %v846, 0.0
        %vm851 = vcmp.ge.f32.partialorder %v847, 0.0
        %vm852 = vcmp.ge.f32.partialorder %v848, 0.0
        %v853 = vstv %s849
        %v854 = vmul.f32 %v853, %v846
        %v855 = vmul.f32 %v853, %v847
        %v856 = vmul.f32 %v853, %v848
        %v857 = vsel %vm850, %v846, %v854
        %v858 = vsel %vm851, %v847, %v855
        %v859 = vsel %vm852, %v848, %v856
        %861 = vset.pattern.permute.xlu0 0
        %862 = vperm.xlu0 %861, %v298
        %v863 = vpop.permute.xlu0 %862
        %866 = vset.pattern.permute.xlu0 0
        %867 = vperm.xlu0 %866, %v299
        %v868 = vpop.permute.xlu0 %867
        %871 = vset.pattern.permute.xlu0 0
        %872 = vperm.xlu0 %871, %v300
        %v873 = vpop.permute.xlu0 %872
        %v875 = vmul.f32 %v857, %v863
        %v876 = vmul.f32 %v858, %v868
        %v877 = vmul.f32 %v859, %v873
        %878 = vst.msk [vmem:[#allocation2 + $0x7] sm:$0xff] %vm472, %v875
        %879 = vst.msk [vmem:[#allocation2 + $0xf] sm:$0xff] %vm472, %v876
        %880 = vst.msk [vmem:[#allocation2 + $0x17] sm:$0xff] %vm472, %v877
        %v881 = vld [vmem:[#allocation2] sm:$0xff]
        %v882 = vld [vmem:[#allocation2 + $0x8] sm:$0xff]
        %v883 = vld [vmem:[#allocation2 + $0x10] sm:$0xff]
        %v884 = vld [vmem:[#allocation2 + $0x18] sm:$0xff]
        %v885 = vld [vmem:[#allocation2 + $0x20] sm:$0x3f]
        %s886 = scalar_lea.vmem %s3, 96
        %v887 = vld [vmem:[%s886] sm:$0xff]
        %v888 = vld [vmem:[%s886 + $0x8] sm:$0xff]
        %v889 = vld [vmem:[%s886 + $0x10] sm:$0xff]
        %v890 = vld [vmem:[%s886 + $0x18] sm:$0xff]
        %v891 = vld [vmem:[%s886 + $0x20] sm:$0xff]
        %v892 = vld [vmem:[%s886 + $0x28] sm:$0xff]
        %v893 = vld [vmem:[%s886 + $0x30] sm:$0xff]
        %v894 = vld [vmem:[%s886 + $0x38] sm:$0xff]
        %v895 = vld [vmem:[%s886 + $0x40] sm:$0xff]
        %v896 = vld [vmem:[%s886 + $0x48] sm:$0xff]
        %v897 = vld [vmem:[%s886 + $0x50] sm:$0xff]
        %v898 = vld [vmem:[%s886 + $0x58] sm:$0xff]
        %v899 = vld [vmem:[%s4 + $0x2] sm:$0x1]
        %v901 = vsel %vm472, %v881, 0
        %v904 = vsel %vm472, %v882, 0
        %v907 = vsel %vm472, %v883, 0
        %v910 = vsel %vm472, %v884, 0
        %v913 = vsel %vm472, %v885, 0
        %915 = vmatprep.subr.mxu0 %v888
        %916 = vmatpush1.msra.mxu0 %v887
        %917 = vmatprep.subr.mxu0 %v891
        %918 = vmatpush1.msra.mxu0 %v890
        %919 = vmatprep.subr.mxu0 %v894
        %920 = vmatpush1.msra.mxu0 %v893
        %921 = vmatprep.subr.mxu0 %v897
        %922 = vmatpush1.msra.mxu0 %v896
        %923 = vmatprep.subr.mxu0 0.0
        %924 = vmatpush1.msra.mxu0 0.0
        %925 = vmatprep.subr.mxu0 0.0
        %926 = vmatpush1.msra.mxu0 0.0
        %927 = vmatprep.subr.mxu0 0.0
        %928 = vmatpush1.msra.mxu0 0.0
        %929 = vmatprep.subr.mxu0 0.0
        %930 = vmatpush1.msra.mxu0 0.0
        %931 = vmatprep.subr.mxu0 0.0
        %932 = vmatpush1.msra.mxu0 0.0
        %933 = vmatprep.subr.mxu0 0.0
        %934 = vmatpush1.msra.mxu0 0.0
        %935 = vmatprep.subr.mxu0 0.0
        %936 = vmatpush1.msra.mxu0 0.0
        %937 = vmatprep.subr.mxu0 0.0
        %938 = vmatpush1.msra.mxu0 0.0
        %939 = vmatprep.subr.mxu0 0.0
        %940 = vmatpush1.msra.mxu0 0.0
        %941 = vmatprep.subr.mxu0 0.0
        %942 = vmatpush1.msra.mxu0 0.0
        %943 = vmatprep.subr.mxu0 0.0
        %944 = vmatpush1.msra.mxu0 0.0
        %945 = vmatprep.subr.mxu0 0.0
        %946 = vmatpush1.msra.mxu0 0.0
        %947 = vmatprep.subr.mxu0 0.0
        %948 = vmatpush1.msra.mxu0 0.0
        %949 = vmatprep.subr.mxu0 0.0
        %950 = vmatpush1.msra.mxu0 0.0
        %951 = vmatprep.subr.mxu0 0.0
        %952 = vmatpush1.msra.mxu0 0.0
        %953 = vmatprep.subr.mxu0 0.0
        %954 = vmatpush1.msra.mxu0 0.0
        %955 = vmatprep.subr.mxu0 0.0
        %956 = vmatpush1.msra.mxu0 0.0
        %957 = vmatprep.subr.mxu0 0.0
        %958 = vmatpush1.msra.mxu0 0.0
        %959 = vmatprep.subr.mxu0 0.0
        %960 = vmatpush1.msra.mxu0 0.0
        %961 = vmatprep.subr.mxu0 0.0
        %962 = vmatpush1.msra.mxu0 0.0
        %963 = vmatprep.subr.mxu0 0.0
        %964 = vmatpush1.msra.mxu0 0.0
        %965 = vmatprep.subr.mxu0 0.0
        %966 = vmatpush1.msra.mxu0 0.0
        %967 = vmatprep.subr.mxu0 0.0
        %968 = vmatpush1.msra.mxu0 0.0
        %969 = vmatprep.subr.mxu0 0.0
        %970 = vmatpush1.msra.mxu0 0.0
        %971 = vmatprep.subr.mxu0 0.0
        %972 = vmatpush1.msra.mxu0 0.0
        %973 = vmatprep.subr.mxu0 0.0
        %974 = vmatpush1.msra.mxu0 0.0
        %975 = vmatprep.subr.mxu0 0.0
        %976 = vmatpush1.msra.mxu0 0.0
        %977 = vmatprep.subr.mxu0 0.0
        %978 = vmatpush1.msra.mxu0 0.0
        %979 = vmatprep.mubr.f32.mxu0 0.0
        %980 = vmatmul.mubr.f32.gmra.mrb[0].mxu0 %v901
        %v981 = vpop.f32.mrb[0].mxu0
        %v982 = vadd.f32 0.0, %v981
        %v983 = vpop.f32.mrb[0].mxu0
        %v984 = vadd.f32 0.0, %v983
        %985 = vmatprep.mubr.f32.mxu0 0.0
        %986 = vmatmul.mubr.f32.gmra.mrb[0].mxu0 %v904
        %v987 = vpop.f32.mrb[0].mxu0
        %v988 = vadd.f32 0.0, %v987
        %v989 = vpop.f32.mrb[0].mxu0
        %v990 = vadd.f32 0.0, %v989
        %991 = vmatprep.mubr.f32.mxu0 0.0
        %992 = vmatmul.mubr.f32.gmra.mrb[0].mxu0 %v907
        %v993 = vpop.f32.mrb[0].mxu0
        %v994 = vadd.f32 0.0, %v993
        %v995 = vpop.f32.mrb[0].mxu0
        %v996 = vadd.f32 0.0, %v995
        %997 = vmatprep.mubr.f32.mxu0 0.0
        %998 = vmatmul.mubr.f32.gmra.mrb[0].mxu0 %v910
        %v999 = vpop.f32.mrb[0].mxu0
        %v1000 = vadd.f32 0.0, %v999
        %v1001 = vpop.f32.mrb[0].mxu0
        %v1002 = vadd.f32 0.0, %v1001
        %1003 = vmatprep.mubr.f32.mxu0 0.0
        %1004 = vmatmul.mubr.f32.gmra.mrb[0].mxu0 %v913
        %v1005 = vpop.f32.mrb[0].mxu0
        %v1006 = vpop.f32.mrb[0].mxu0
        %v1007 = vadd.f32 0.0, %v1006
        %1008 = vdwg.mxu0
        %1009 = vmatprep.subr.mxu0 0.0
        %1010 = vmatpush1.msra.mxu0 %v889
        %1011 = vmatprep.subr.mxu0 0.0
        %1012 = vmatpush1.msra.mxu0 %v892
        %1013 = vmatprep.subr.mxu0 0.0
        %1014 = vmatpush1.msra.mxu0 %v895
        %1015 = vmatprep.subr.mxu0 0.0
        %1016 = vmatpush1.msra.mxu0 %v898
        %1017 = vmatprep.subr.mxu0 0.0
        %1018 = vmatpush1.msra.mxu0 0.0
        %1019 = vmatprep.subr.mxu0 0.0
        %1020 = vmatpush1.msra.mxu0 0.0
        %1021 = vmatprep.subr.mxu0 0.0
        %1022 = vmatpush1.msra.mxu0 0.0
        %1023 = vmatprep.subr.mxu0 0.0
        %1024 = vmatpush1.msra.mxu0 0.0
        %1025 = vmatprep.subr.mxu0 0.0
        %1026 = vmatpush1.msra.mxu0 0.0
        %1027 = vmatprep.subr.mxu0 0.0
        %1028 = vmatpush1.msra.mxu0 0.0
        %1029 = vmatprep.subr.mxu0 0.0
        %1030 = vmatpush1.msra.mxu0 0.0
        %1031 = vmatprep.subr.mxu0 0.0
        %1032 = vmatpush1.msra.mxu0 0.0
        %1033 = vmatprep.subr.mxu0 0.0
        %1034 = vmatpush1.msra.mxu0 0.0
        %1035 = vmatprep.subr.mxu0 0.0
        %1036 = vmatpush1.msra.mxu0 0.0
        %1037 = vmatprep.subr.mxu0 0.0
        %1038 = vmatpush1.msra.mxu0 0.0
        %1039 = vmatprep.subr.mxu0 0.0
        %1040 = vmatpush1.msra.mxu0 0.0
        %1041 = vmatprep.subr.mxu0 0.0
        %1042 = vmatpush1.msra.mxu0 0.0
        %1043 = vmatprep.subr.mxu0 0.0
        %1044 = vmatpush1.msra.mxu0 0.0
        %1045 = vmatprep.subr.mxu0 0.0
        %1046 = vmatpush1.msra.mxu0 0.0
        %1047 = vmatprep.subr.mxu0 0.0
        %1048 = vmatpush1.msra.mxu0 0.0
        %1049 = vmatprep.subr.mxu0 0.0
        %1050 = vmatpush1.msra.mxu0 0.0
        %1051 = vmatprep.subr.mxu0 0.0
        %1052 = vmatpush1.msra.mxu0 0.0
        %1053 = vmatprep.subr.mxu0 0.0
        %1054 = vmatpush1.msra.mxu0 0.0
        %1055 = vmatprep.subr.mxu0 0.0
        %1056 = vmatpush1.msra.mxu0 0.0
        %1057 = vmatprep.subr.mxu0 0.0
        %1058 = vmatpush1.msra.mxu0 0.0
        %1059 = vmatprep.subr.mxu0 0.0
        %1060 = vmatpush1.msra.mxu0 0.0
        %1061 = vmatprep.subr.mxu0 0.0
        %1062 = vmatpush1.msra.mxu0 0.0
        %1063 = vmatprep.subr.mxu0 0.0
        %1064 = vmatpush1.msra.mxu0 0.0
        %1065 = vmatprep.subr.mxu0 0.0
        %1066 = vmatpush1.msra.mxu0 0.0
        %1067 = vmatprep.subr.mxu0 0.0
        %1068 = vmatpush1.msra.mxu0 0.0
        %1069 = vmatprep.subr.mxu0 0.0
        %1070 = vmatpush1.msra.mxu0 0.0
        %1071 = vmatprep.subr.mxu0 0.0
        %1072 = vmatpush1.msra.mxu0 0.0
        %1073 = vmatprep.mubr.f32.mxu0 0.0
        %1074 = vmatmul.mubr.f32.gmra.mrb[0].mxu0 %v901
        %v1075 = vpop.f32.mrb[0].mxu0
        %v1076 = vpop.f32.mrb[0].mxu0
        %1077 = vmatprep.mubr.f32.mxu0 0.0
        %1078 = vmatmul.mubr.f32.gmra.mrb[0].mxu0 %v904
        %v1079 = vpop.f32.mrb[0].mxu0
        %v1080 = vadd.f32 0.0, %v1079
        %v1081 = vpop.f32.mrb[0].mxu0
        %1082 = vmatprep.mubr.f32.mxu0 0.0
        %1083 = vmatmul.mubr.f32.gmra.mrb[0].mxu0 %v907
        %v1084 = vpop.f32.mrb[0].mxu0
        %v1085 = vadd.f32 0.0, %v1084
        %v1086 = vpop.f32.mrb[0].mxu0
        %1087 = vmatprep.mubr.f32.mxu0 0.0
        %1088 = vmatmul.mubr.f32.gmra.mrb[0].mxu0 %v910
        %v1089 = vpop.f32.mrb[0].mxu0
        %v1090 = vadd.f32 0.0, %v1089
        %v1091 = vpop.f32.mrb[0].mxu0
        %1092 = vmatprep.mubr.f32.mxu0 0.0
        %1093 = vmatmul.mubr.f32.gmra.mrb[0].mxu0 %v913
        %v1094 = vpop.f32.mrb[0].mxu0
        %v1095 = vadd.f32 0.0, %v1094
        %v1096 = vpop.f32.mrb[0].mxu0
        %1097 = vdwg.mxu0
        %v1102 = vrot.slane %v982, 1
        %v1103 = vrot.slane %v988, 1
        %v1104 = vsel %vm694, %v1102, %v1103
        %v1105 = vrot.slane %v994, 1
        %v1106 = vsel %vm694, %v1103, %v1105
        %v1107 = vrot.slane %v1000, 1
        %v1108 = vsel %vm694, %v1105, %v1107
        %1109 = vrot.lane.b32.xlu0 %v1104, 96
        %v1110 = vpop.permute.xlu0 %1109
        %1111 = vrot.lane.b32.xlu0 %v1106, 96
        %v1112 = vpop.permute.xlu0 %1111
        %1113 = vrot.lane.b32.xlu0 %v1108, 96
        %v1114 = vpop.permute.xlu0 %1113
        %v1118 = vadd.f32 %v982, %v1110
        %v1119 = vadd.f32 %v988, %v1112
        %v1120 = vadd.f32 %v994, %v1114
        %v1121 = vrot.slane %v982, 2
        %v1122 = vrot.slane %v988, 2
        %v1123 = vsel %vm714, %v1121, %v1122
        %v1124 = vrot.slane %v994, 2
        %v1125 = vsel %vm714, %v1122, %v1124
        %v1126 = vrot.slane %v1000, 2
        %v1127 = vsel %vm714, %v1124, %v1126
        %1128 = vrot.lane.b32.xlu0 %v1123, 64
        %v1129 = vpop.permute.xlu0 %1128
        %1130 = vrot.lane.b32.xlu0 %v1125, 64
        %v1131 = vpop.permute.xlu0 %1130
        %1132 = vrot.lane.b32.xlu0 %v1127, 64
        %v1133 = vpop.permute.xlu0 %1132
        %v1137 = vadd.f32 %v1118, %v1129
        %v1138 = vadd.f32 %v1119, %v1131
        %v1139 = vadd.f32 %v1120, %v1133
        %v1140 = vrot.slane %v982, 6
        %v1141 = vrot.slane %v988, 6
        %v1142 = vsel %vm734, %v1140, %v1141
        %v1143 = vrot.slane %v994, 6
        %v1144 = vsel %vm734, %v1141, %v1143
        %v1145 = vrot.slane %v1000, 6
        %v1146 = vsel %vm734, %v1143, %v1145
        %1147 = vrot.lane.b32.xlu0 %v1142, 32
        %v1148 = vpop.permute.xlu0 %1147
        %1149 = vrot.lane.b32.xlu0 %v1144, 32
        %v1150 = vpop.permute.xlu0 %1149
        %1151 = vrot.lane.b32.xlu0 %v1146, 32
        %v1152 = vpop.permute.xlu0 %1151
        %v1156 = vadd.f32 %v1137, %v1148
        %v1157 = vadd.f32 %v1138, %v1150
        %v1158 = vadd.f32 %v1139, %v1152
        %v1163 = vrot.slane %v984, 7
        %v1164 = vrot.slane %v990, 7
        %v1165 = vsel %vm758, %v1163, %v1164
        %v1166 = vrot.slane %v996, 7
        %v1167 = vsel %vm758, %v1164, %v1166
        %v1168 = vrot.slane %v1002, 7
        %v1169 = vsel %vm758, %v1166, %v1168
        %v1173 = vadd.f32 %v1156, %v1165
        %v1174 = vadd.f32 %v1157, %v1167
        %v1175 = vadd.f32 %v1158, %v1169
        %1176 = vrot.lane.b32.xlu0 %v990, 96
        %v1177 = vpop.permute.xlu0 %1176
        %1178 = vrot.lane.b32.xlu0 %v996, 96
        %v1179 = vpop.permute.xlu0 %1178
        %1180 = vrot.lane.b32.xlu0 %v1002, 96
        %v1181 = vpop.permute.xlu0 %1180
        %v1185 = vadd.f32 %v1173, %v1177
        %v1186 = vadd.f32 %v1174, %v1179
        %v1187 = vadd.f32 %v1175, %v1181
        %v1189 = vrot.slane %v990, 4
        %v1190 = vrot.slane %v996, 4
        %v1191 = vsel %vm785, %v1189, %v1190
        %v1192 = vrot.slane %v1002, 4
        %v1193 = vsel %vm785, %v1190, %v1192
        %v1194 = vrot.slane %v1007, 4
        %v1195 = vsel %vm785, %v1192, %v1194
        %1196 = vrot.lane.b32.xlu0 %v1191, 64
        %v1197 = vpop.permute.xlu0 %1196
        %1198 = vrot.lane.b32.xlu0 %v1193, 64
        %v1199 = vpop.permute.xlu0 %1198
        %1200 = vrot.lane.b32.xlu0 %v1195, 64
        %v1201 = vpop.permute.xlu0 %1200
        %v1205 = vadd.f32 %v1185, %v1197
        %v1206 = vadd.f32 %v1186, %v1199
        %v1207 = vadd.f32 %v1187, %v1201
        %v1208 = vrot.slane %v990, 5
        %v1209 = vrot.slane %v996, 5
        %v1210 = vsel %vm805, %v1208, %v1209
        %v1211 = vrot.slane %v1002, 5
        %v1212 = vsel %vm805, %v1209, %v1211
        %v1213 = vrot.slane %v1007, 5
        %v1214 = vsel %vm805, %v1211, %v1213
        %1215 = vrot.lane.b32.xlu0 %v1210, 32
        %v1216 = vpop.permute.xlu0 %1215
        %1217 = vrot.lane.b32.xlu0 %v1212, 32
        %v1218 = vpop.permute.xlu0 %1217
        %1219 = vrot.lane.b32.xlu0 %v1214, 32
        %v1220 = vpop.permute.xlu0 %1219
        %v1224 = vadd.f32 %v1205, %v1216
        %v1225 = vadd.f32 %v1206, %v1218
        %v1226 = vadd.f32 %v1207, %v1220
        %v1231 = vrot.slane %v1080, 6
        %v1232 = vrot.slane %v1085, 6
        %v1233 = vsel %vm734, %v1231, %v1232
        %v1234 = vrot.slane %v1090, 6
        %v1235 = vsel %vm734, %v1232, %v1234
        %v1236 = vrot.slane %v1095, 6
        %v1237 = vsel %vm734, %v1234, %v1236
        %v1241 = vadd.f32 %v1224, %v1233
        %v1242 = vadd.f32 %v1225, %v1235
        %v1243 = vadd.f32 %v1226, %v1237
        %v1244 = vlaneseq
        %v1245 = vshrl.u32 %v1244, 7
        %v1246 = vsub.s32 0, %v1245
        %v1247 = vrot.slane %v899, %v1246
        %v1248 = vadd.f32 %v1241, %v1247
        %v1249 = vadd.f32 %v1242, %v1247
        %v1250 = vadd.f32 %v1243, %v1247
        %v1251 = vrot.slane %v467, 7
        %v1252 = vrot.slane %v468, 7
        %v1253 = vsel %vm758, %v1251, %v1252
        %v1254 = vrot.slane %v469, 7
        %v1255 = vsel %vm758, %v1252, %v1254
        %v1256 = vrot.slane %v470, 7
        %v1257 = vsel %vm758, %v1254, %v1256
        %v1261 = vadd.f32 %v1248, %v1253
        %v1262 = vadd.f32 %v1249, %v1255
        %v1263 = vadd.f32 %v1250, %v1257
        %s1264 = sld [smem:[#allocation3 + $0x2]]
        %vm1265 = vcmp.ge.f32.partialorder %v1261, 0.0
        %vm1266 = vcmp.ge.f32.partialorder %v1262, 0.0
        %vm1267 = vcmp.ge.f32.partialorder %v1263, 0.0
        %v1268 = vstv %s1264
        %v1269 = vmul.f32 %v1268, %v1261
        %v1270 = vmul.f32 %v1268, %v1262
        %v1271 = vmul.f32 %v1268, %v1263
        %v1272 = vsel %vm1265, %v1261, %v1269
        %v1273 = vsel %vm1266, %v1262, %v1270
        %v1274 = vsel %vm1267, %v1263, %v1271
        %v1275 = vmul.f32 %v1272, %v863
        %v1276 = vmul.f32 %v1273, %v868
        %v1277 = vmul.f32 %v1274, %v873
        %1278 = vst.msk [vmem:[#allocation2 + $0x7] sm:$0xff] %vm472, %v1275
        %1279 = vst.msk [vmem:[#allocation2 + $0xf] sm:$0xff] %vm472, %v1276
        %1280 = vst.msk [vmem:[#allocation2 + $0x17] sm:$0xff] %vm472, %v1277
        %v1281 = vld [vmem:[#allocation2] sm:$0xff]
        %v1282 = vld [vmem:[#allocation2 + $0x8] sm:$0xff]
        %v1283 = vld [vmem:[#allocation2 + $0x10] sm:$0xff]
        %v1284 = vld [vmem:[#allocation2 + $0x18] sm:$0xff]
        %v1285 = vld [vmem:[#allocation2 + $0x20] sm:$0x3f]
        %s1286 = scalar_lea.vmem %s3, 192
        %v1287 = vld [vmem:[%s1286] sm:$0xff]
        %v1288 = vld [vmem:[%s1286 + $0x8] sm:$0xff]
        %v1289 = vld [vmem:[%s1286 + $0x10] sm:$0xff]
        %v1290 = vld [vmem:[%s1286 + $0x18] sm:$0xff]
        %v1291 = vld [vmem:[%s1286 + $0x20] sm:$0xff]
        %v1292 = vld [vmem:[%s1286 + $0x28] sm:$0xff]
        %v1293 = vld [vmem:[%s1286 + $0x30] sm:$0xff]
        %v1294 = vld [vmem:[%s1286 + $0x38] sm:$0xff]
        %v1295 = vld [vmem:[%s1286 + $0x40] sm:$0xff]
        %v1296 = vld [vmem:[%s1286 + $0x48] sm:$0xff]
        %v1297 = vld [vmem:[%s1286 + $0x50] sm:$0xff]
        %v1298 = vld [vmem:[%s1286 + $0x58] sm:$0xff]
        %v1299 = vld [vmem:[%s4 + $0x3] sm:$0x1]
        %v1301 = vsel %vm472, %v1281, 0
        %v1304 = vsel %vm472, %v1282, 0
        %v1307 = vsel %vm472, %v1283, 0
        %v1310 = vsel %vm472, %v1284, 0
        %v1313 = vsel %vm472, %v1285, 0
        %1315 = vmatprep.subr.mxu0 %v1288
        %1316 = vmatpush1.msra.mxu0 %v1287
        %1317 = vmatprep.subr.mxu0 %v1291
        %1318 = vmatpush1.msra.mxu0 %v1290
        %1319 = vmatprep.subr.mxu0 %v1294
        %1320 = vmatpush1.msra.mxu0 %v1293
        %1321 = vmatprep.subr.mxu0 %v1297
        %1322 = vmatpush1.msra.mxu0 %v1296
        %1323 = vmatprep.subr.mxu0 0.0
        %1324 = vmatpush1.msra.mxu0 0.0
        %1325 = vmatprep.subr.mxu0 0.0
        %1326 = vmatpush1.msra.mxu0 0.0
        %1327 = vmatprep.subr.mxu0 0.0
        %1328 = vmatpush1.msra.mxu0 0.0
        %1329 = vmatprep.subr.mxu0 0.0
        %1330 = vmatpush1.msra.mxu0 0.0
        %1331 = vmatprep.subr.mxu0 0.0
        %1332 = vmatpush1.msra.mxu0 0.0
        %1333 = vmatprep.subr.mxu0 0.0
        %1334 = vmatpush1.msra.mxu0 0.0
        %1335 = vmatprep.subr.mxu0 0.0
        %1336 = vmatpush1.msra.mxu0 0.0
        %1337 = vmatprep.subr.mxu0 0.0
        %1338 = vmatpush1.msra.mxu0 0.0
        %1339 = vmatprep.subr.mxu0 0.0
        %1340 = vmatpush1.msra.mxu0 0.0
        %1341 = vmatprep.subr.mxu0 0.0
        %1342 = vmatpush1.msra.mxu0 0.0
        %1343 = vmatprep.subr.mxu0 0.0
        %1344 = vmatpush1.msra.mxu0 0.0
        %1345 = vmatprep.subr.mxu0 0.0
        %1346 = vmatpush1.msra.mxu0 0.0
        %1347 = vmatprep.subr.mxu0 0.0
        %1348 = vmatpush1.msra.mxu0 0.0
        %1349 = vmatprep.subr.mxu0 0.0
        %1350 = vmatpush1.msra.mxu0 0.0
        %1351 = vmatprep.subr.mxu0 0.0
        %1352 = vmatpush1.msra.mxu0 0.0
        %1353 = vmatprep.subr.mxu0 0.0
        %1354 = vmatpush1.msra.mxu0 0.0
        %1355 = vmatprep.subr.mxu0 0.0
        %1356 = vmatpush1.msra.mxu0 0.0
        %1357 = vmatprep.subr.mxu0 0.0
        %1358 = vmatpush1.msra.mxu0 0.0
        %1359 = vmatprep.subr.mxu0 0.0
        %1360 = vmatpush1.msra.mxu0 0.0
        %1361 = vmatprep.subr.mxu0 0.0
        %1362 = vmatpush1.msra.mxu0 0.0
        %1363 = vmatprep.subr.mxu0 0.0
        %1364 = vmatpush1.msra.mxu0 0.0
        %1365 = vmatprep.subr.mxu0 0.0
        %1366 = vmatpush1.msra.mxu0 0.0
        %1367 = vmatprep.subr.mxu0 0.0
        %1368 = vmatpush1.msra.mxu0 0.0
        %1369 = vmatprep.subr.mxu0 0.0
        %1370 = vmatpush1.msra.mxu0 0.0
        %1371 = vmatprep.subr.mxu0 0.0
        %1372 = vmatpush1.msra.mxu0 0.0
        %1373 = vmatprep.subr.mxu0 0.0
        %1374 = vmatpush1.msra.mxu0 0.0
        %1375 = vmatprep.subr.mxu0 0.0
        %1376 = vmatpush1.msra.mxu0 0.0
        %1377 = vmatprep.subr.mxu0 0.0
        %1378 = vmatpush1.msra.mxu0 0.0
        %1379 = vmatprep.mubr.f32.mxu0 0.0
        %1380 = vmatmul.mubr.f32.gmra.mrb[0].mxu0 %v1301
        %v1381 = vpop.f32.mrb[0].mxu0
        %v1382 = vadd.f32 0.0, %v1381
        %v1383 = vpop.f32.mrb[0].mxu0
        %v1384 = vadd.f32 0.0, %v1383
        %1385 = vmatprep.mubr.f32.mxu0 0.0
        %1386 = vmatmul.mubr.f32.gmra.mrb[0].mxu0 %v1304
        %v1387 = vpop.f32.mrb[0].mxu0
        %v1388 = vadd.f32 0.0, %v1387
        %v1389 = vpop.f32.mrb[0].mxu0
        %v1390 = vadd.f32 0.0, %v1389
        %1391 = vmatprep.mubr.f32.mxu0 0.0
        %1392 = vmatmul.mubr.f32.gmra.mrb[0].mxu0 %v1307
        %v1393 = vpop.f32.mrb[0].mxu0
        %v1394 = vadd.f32 0.0, %v1393
        %v1395 = vpop.f32.mrb[0].mxu0
        %v1396 = vadd.f32 0.0, %v1395
        %1397 = vmatprep.mubr.f32.mxu0 0.0
        %1398 = vmatmul.mubr.f32.gmra.mrb[0].mxu0 %v1310
        %v1399 = vpop.f32.mrb[0].mxu0
        %v1400 = vadd.f32 0.0, %v1399
        %v1401 = vpop.f32.mrb[0].mxu0
        %v1402 = vadd.f32 0.0, %v1401
        %1403 = vmatprep.mubr.f32.mxu0 0.0
        %1404 = vmatmul.mubr.f32.gmra.mrb[0].mxu0 %v1313
        %v1405 = vpop.f32.mrb[0].mxu0
        %v1406 = vpop.f32.mrb[0].mxu0
        %v1407 = vadd.f32 0.0, %v1406
        %1408 = vdwg.mxu0
        %1409 = vmatprep.subr.mxu0 0.0
        %1410 = vmatpush1.msra.mxu0 %v1289
        %1411 = vmatprep.subr.mxu0 0.0
        %1412 = vmatpush1.msra.mxu0 %v1292
        %1413 = vmatprep.subr.mxu0 0.0
        %1414 = vmatpush1.msra.mxu0 %v1295
        %1415 = vmatprep.subr.mxu0 0.0
        %1416 = vmatpush1.msra.mxu0 %v1298
        %1417 = vmatprep.subr.mxu0 0.0
        %1418 = vmatpush1.msra.mxu0 0.0
        %1419 = vmatprep.subr.mxu0 0.0
        %1420 = vmatpush1.msra.mxu0 0.0
        %1421 = vmatprep.subr.mxu0 0.0
        %1422 = vmatpush1.msra.mxu0 0.0
        %1423 = vmatprep.subr.mxu0 0.0
        %1424 = vmatpush1.msra.mxu0 0.0
        %1425 = vmatprep.subr.mxu0 0.0
        %1426 = vmatpush1.msra.mxu0 0.0
        %1427 = vmatprep.subr.mxu0 0.0
        %1428 = vmatpush1.msra.mxu0 0.0
        %1429 = vmatprep.subr.mxu0 0.0
        %1430 = vmatpush1.msra.mxu0 0.0
        %1431 = vmatprep.subr.mxu0 0.0
        %1432 = vmatpush1.msra.mxu0 0.0
        %1433 = vmatprep.subr.mxu0 0.0
        %1434 = vmatpush1.msra.mxu0 0.0
        %1435 = vmatprep.subr.mxu0 0.0
        %1436 = vmatpush1.msra.mxu0 0.0
        %1437 = vmatprep.subr.mxu0 0.0
        %1438 = vmatpush1.msra.mxu0 0.0
        %1439 = vmatprep.subr.mxu0 0.0
        %1440 = vmatpush1.msra.mxu0 0.0
        %1441 = vmatprep.subr.mxu0 0.0
        %1442 = vmatpush1.msra.mxu0 0.0
        %1443 = vmatprep.subr.mxu0 0.0
        %1444 = vmatpush1.msra.mxu0 0.0
        %1445 = vmatprep.subr.mxu0 0.0
        %1446 = vmatpush1.msra.mxu0 0.0
        %1447 = vmatprep.subr.mxu0 0.0
        %1448 = vmatpush1.msra.mxu0 0.0
        %1449 = vmatprep.subr.mxu0 0.0
        %1450 = vmatpush1.msra.mxu0 0.0
        %1451 = vmatprep.subr.mxu0 0.0
        %1452 = vmatpush1.msra.mxu0 0.0
        %1453 = vmatprep.subr.mxu0 0.0
        %1454 = vmatpush1.msra.mxu0 0.0
        %1455 = vmatprep.subr.mxu0 0.0
        %1456 = vmatpush1.msra.mxu0 0.0
        %1457 = vmatprep.subr.mxu0 0.0
        %1458 = vmatpush1.msra.mxu0 0.0
        %1459 = vmatprep.subr.mxu0 0.0
        %1460 = vmatpush1.msra.mxu0 0.0
        %1461 = vmatprep.subr.mxu0 0.0
        %1462 = vmatpush1.msra.mxu0 0.0
        %1463 = vmatprep.subr.mxu0 0.0
        %1464 = vmatpush1.msra.mxu0 0.0
        %1465 = vmatprep.subr.mxu0 0.0
        %1466 = vmatpush1.msra.mxu0 0.0
        %1467 = vmatprep.subr.mxu0 0.0
        %1468 = vmatpush1.msra.mxu0 0.0
        %1469 = vmatprep.subr.mxu0 0.0
        %1470 = vmatpush1.msra.mxu0 0.0
        %1471 = vmatprep.subr.mxu0 0.0
        %1472 = vmatpush1.msra.mxu0 0.0
        %1473 = vmatprep.mubr.f32.mxu0 0.0
        %1474 = vmatmul.mubr.f32.gmra.mrb[0].mxu0 %v1301
        %v1475 = vpop.f32.mrb[0].mxu0
        %v1476 = vpop.f32.mrb[0].mxu0
        %1477 = vmatprep.mubr.f32.mxu0 0.0
        %1478 = vmatmul.mubr.f32.gmra.mrb[0].mxu0 %v1304
        %v1479 = vpop.f32.mrb[0].mxu0
        %v1480 = vadd.f32 0.0, %v1479
        %v1481 = vpop.f32.mrb[0].mxu0
        %1482 = vmatprep.mubr.f32.mxu0 0.0
        %1483 = vmatmul.mubr.f32.gmra.mrb[0].mxu0 %v1307
        %v1484 = vpop.f32.mrb[0].mxu0
        %v1485 = vadd.f32 0.0, %v1484
        %v1486 = vpop.f32.mrb[0].mxu0
        %1487 = vmatprep.mubr.f32.mxu0 0.0
        %1488 = vmatmul.mubr.f32.gmra.mrb[0].mxu0 %v1310
        %v1489 = vpop.f32.mrb[0].mxu0
        %v1490 = vadd.f32 0.0, %v1489
        %v1491 = vpop.f32.mrb[0].mxu0
        %1492 = vmatprep.mubr.f32.mxu0 0.0
        %1493 = vmatmul.mubr.f32.gmra.mrb[0].mxu0 %v1313
        %v1494 = vpop.f32.mrb[0].mxu0
        %v1495 = vadd.f32 0.0, %v1494
        %v1496 = vpop.f32.mrb[0].mxu0
        %1497 = vdwg.mxu0
        %v1502 = vrot.slane %v1382, 1
        %v1503 = vrot.slane %v1388, 1
        %v1504 = vsel %vm694, %v1502, %v1503
        %v1505 = vrot.slane %v1394, 1
        %v1506 = vsel %vm694, %v1503, %v1505
        %v1507 = vrot.slane %v1400, 1
        %v1508 = vsel %vm694, %v1505, %v1507
        %1509 = vrot.lane.b32.xlu0 %v1504, 96
        %v1510 = vpop.permute.xlu0 %1509
        %1511 = vrot.lane.b32.xlu0 %v1506, 96
        %v1512 = vpop.permute.xlu0 %1511
        %1513 = vrot.lane.b32.xlu0 %v1508, 96
        %v1514 = vpop.permute.xlu0 %1513
        %v1518 = vadd.f32 %v1382, %v1510
        %v1519 = vadd.f32 %v1388, %v1512
        %v1520 = vadd.f32 %v1394, %v1514
        %v1521 = vrot.slane %v1382, 2
        %v1522 = vrot.slane %v1388, 2
        %v1523 = vsel %vm714, %v1521, %v1522
        %v1524 = vrot.slane %v1394, 2
        %v1525 = vsel %vm714, %v1522, %v1524
        %v1526 = vrot.slane %v1400, 2
        %v1527 = vsel %vm714, %v1524, %v1526
        %1528 = vrot.lane.b32.xlu0 %v1523, 64
        %v1529 = vpop.permute.xlu0 %1528
        %1530 = vrot.lane.b32.xlu0 %v1525, 64
        %v1531 = vpop.permute.xlu0 %1530
        %1532 = vrot.lane.b32.xlu0 %v1527, 64
        %v1533 = vpop.permute.xlu0 %1532
        %v1537 = vadd.f32 %v1518, %v1529
        %v1538 = vadd.f32 %v1519, %v1531
        %v1539 = vadd.f32 %v1520, %v1533
        %v1540 = vrot.slane %v1382, 6
        %v1541 = vrot.slane %v1388, 6
        %v1542 = vsel %vm734, %v1540, %v1541
        %v1543 = vrot.slane %v1394, 6
        %v1544 = vsel %vm734, %v1541, %v1543
        %v1545 = vrot.slane %v1400, 6
        %v1546 = vsel %vm734, %v1543, %v1545
        %1547 = vrot.lane.b32.xlu0 %v1542, 32
        %v1548 = vpop.permute.xlu0 %1547
        %1549 = vrot.lane.b32.xlu0 %v1544, 32
        %v1550 = vpop.permute.xlu0 %1549
        %1551 = vrot.lane.b32.xlu0 %v1546, 32
        %v1552 = vpop.permute.xlu0 %1551
        %v1556 = vadd.f32 %v1537, %v1548
        %v1557 = vadd.f32 %v1538, %v1550
        %v1558 = vadd.f32 %v1539, %v1552
        %v1563 = vrot.slane %v1384, 7
        %v1564 = vrot.slane %v1390, 7
        %v1565 = vsel %vm758, %v1563, %v1564
        %v1566 = vrot.slane %v1396, 7
        %v1567 = vsel %vm758, %v1564, %v1566
        %v1568 = vrot.slane %v1402, 7
        %v1569 = vsel %vm758, %v1566, %v1568
        %v1573 = vadd.f32 %v1556, %v1565
        %v1574 = vadd.f32 %v1557, %v1567
        %v1575 = vadd.f32 %v1558, %v1569
        %1576 = vrot.lane.b32.xlu0 %v1390, 96
        %v1577 = vpop.permute.xlu0 %1576
        %1578 = vrot.lane.b32.xlu0 %v1396, 96
        %v1579 = vpop.permute.xlu0 %1578
        %1580 = vrot.lane.b32.xlu0 %v1402, 96
        %v1581 = vpop.permute.xlu0 %1580
        %v1585 = vadd.f32 %v1573, %v1577
        %v1586 = vadd.f32 %v1574, %v1579
        %v1587 = vadd.f32 %v1575, %v1581
        %v1589 = vrot.slane %v1390, 4
        %v1590 = vrot.slane %v1396, 4
        %v1591 = vsel %vm785, %v1589, %v1590
        %v1592 = vrot.slane %v1402, 4
        %v1593 = vsel %vm785, %v1590, %v1592
        %v1594 = vrot.slane %v1407, 4
        %v1595 = vsel %vm785, %v1592, %v1594
        %1596 = vrot.lane.b32.xlu0 %v1591, 64
        %v1597 = vpop.permute.xlu0 %1596
        %1598 = vrot.lane.b32.xlu0 %v1593, 64
        %v1599 = vpop.permute.xlu0 %1598
        %1600 = vrot.lane.b32.xlu0 %v1595, 64
        %v1601 = vpop.permute.xlu0 %1600
        %v1605 = vadd.f32 %v1585, %v1597
        %v1606 = vadd.f32 %v1586, %v1599
        %v1607 = vadd.f32 %v1587, %v1601
        %v1608 = vrot.slane %v1390, 5
        %v1609 = vrot.slane %v1396, 5
        %v1610 = vsel %vm805, %v1608, %v1609
        %v1611 = vrot.slane %v1402, 5
        %v1612 = vsel %vm805, %v1609, %v1611
        %v1613 = vrot.slane %v1407, 5
        %v1614 = vsel %vm805, %v1611, %v1613
        %1615 = vrot.lane.b32.xlu0 %v1610, 32
        %v1616 = vpop.permute.xlu0 %1615
        %1617 = vrot.lane.b32.xlu0 %v1612, 32
        %v1618 = vpop.permute.xlu0 %1617
        %1619 = vrot.lane.b32.xlu0 %v1614, 32
        %v1620 = vpop.permute.xlu0 %1619
        %v1624 = vadd.f32 %v1605, %v1616
        %v1625 = vadd.f32 %v1606, %v1618
        %v1626 = vadd.f32 %v1607, %v1620
        %v1631 = vrot.slane %v1480, 6
        %v1632 = vrot.slane %v1485, 6
        %v1633 = vsel %vm734, %v1631, %v1632
        %v1634 = vrot.slane %v1490, 6
        %v1635 = vsel %vm734, %v1632, %v1634
        %v1636 = vrot.slane %v1495, 6
        %v1637 = vsel %vm734, %v1634, %v1636
        %v1641 = vadd.f32 %v1624, %v1633
        %v1642 = vadd.f32 %v1625, %v1635
        %v1643 = vadd.f32 %v1626, %v1637
        %v1644 = vlaneseq
        %v1645 = vshrl.u32 %v1644, 7
        %v1646 = vsub.s32 0, %v1645
        %v1647 = vrot.slane %v1299, %v1646
        %v1648 = vadd.f32 %v1641, %v1647
        %v1649 = vadd.f32 %v1642, %v1647
        %v1650 = vadd.f32 %v1643, %v1647
        %s1651 = sld [smem:[#allocation3 + $0x3]]
        %vm1652 = vcmp.ge.f32.partialorder %v1648, 0.0
        %vm1653 = vcmp.ge.f32.partialorder %v1649, 0.0
        %vm1654 = vcmp.ge.f32.partialorder %v1650, 0.0
        %v1655 = vstv %s1651
        %v1656 = vmul.f32 %v1655, %v1648
        %v1657 = vmul.f32 %v1655, %v1649
        %v1658 = vmul.f32 %v1655, %v1650
        %v1659 = vsel %vm1652, %v1648, %v1656
        %v1660 = vsel %vm1653, %v1649, %v1657
        %v1661 = vsel %vm1654, %v1650, %v1658
        %v1662 = vmul.f32 %v1659, %v863
        %v1663 = vmul.f32 %v1660, %v868
        %v1664 = vmul.f32 %v1661, %v873
        %1665 = vst.msk [vmem:[#allocation2 + $0x7] sm:$0xff] %vm472, %v1662
        %1666 = vst.msk [vmem:[#allocation2 + $0xf] sm:$0xff] %vm472, %v1663
        %1667 = vst.msk [vmem:[#allocation2 + $0x17] sm:$0xff] %vm472, %v1664
        %v1668 = vld [vmem:[#allocation2] sm:$0xff]
        %v1669 = vld [vmem:[#allocation2 + $0x8] sm:$0xff]
        %v1670 = vld [vmem:[#allocation2 + $0x10] sm:$0xff]
        %v1671 = vld [vmem:[#allocation2 + $0x18] sm:$0xff]
        %v1672 = vld [vmem:[#allocation2 + $0x20] sm:$0x3f]
        %s1673 = scalar_lea.vmem %s3, 288
        %v1674 = vld [vmem:[%s1673] sm:$0xff]
        %v1675 = vld [vmem:[%s1673 + $0x8] sm:$0xff]
        %v1676 = vld [vmem:[%s1673 + $0x10] sm:$0xff]
        %v1677 = vld [vmem:[%s1673 + $0x18] sm:$0xff]
        %v1678 = vld [vmem:[%s1673 + $0x20] sm:$0xff]
        %v1679 = vld [vmem:[%s1673 + $0x28] sm:$0xff]
        %v1680 = vld [vmem:[%s1673 + $0x30] sm:$0xff]
        %v1681 = vld [vmem:[%s1673 + $0x38] sm:$0xff]
        %v1682 = vld [vmem:[%s1673 + $0x40] sm:$0xff]
        %v1683 = vld [vmem:[%s1673 + $0x48] sm:$0xff]
        %v1684 = vld [vmem:[%s1673 + $0x50] sm:$0xff]
        %v1685 = vld [vmem:[%s1673 + $0x58] sm:$0xff]
        %v1686 = vld [vmem:[%s4 + $0x4] sm:$0x1]
        %v1688 = vsel %vm472, %v1668, 0
        %v1691 = vsel %vm472, %v1669, 0
        %v1694 = vsel %vm472, %v1670, 0
        %v1697 = vsel %vm472, %v1671, 0
        %v1700 = vsel %vm472, %v1672, 0
        %1702 = vmatprep.subr.mxu0 %v1675
        %1703 = vmatpush1.msra.mxu0 %v1674
        %1704 = vmatprep.subr.mxu0 %v1678
        %1705 = vmatpush1.msra.mxu0 %v1677
        %1706 = vmatprep.subr.mxu0 %v1681
        %1707 = vmatpush1.msra.mxu0 %v1680
        %1708 = vmatprep.subr.mxu0 %v1684
        %1709 = vmatpush1.msra.mxu0 %v1683
        %1710 = vmatprep.subr.mxu0 0.0
        %1711 = vmatpush1.msra.mxu0 0.0
        %1712 = vmatprep.subr.mxu0 0.0
        %1713 = vmatpush1.msra.mxu0 0.0
        %1714 = vmatprep.subr.mxu0 0.0
        %1715 = vmatpush1.msra.mxu0 0.0
        %1716 = vmatprep.subr.mxu0 0.0
        %1717 = vmatpush1.msra.mxu0 0.0
        %1718 = vmatprep.subr.mxu0 0.0
        %1719 = vmatpush1.msra.mxu0 0.0
        %1720 = vmatprep.subr.mxu0 0.0
        %1721 = vmatpush1.msra.mxu0 0.0
        %1722 = vmatprep.subr.mxu0 0.0
        %1723 = vmatpush1.msra.mxu0 0.0
        %1724 = vmatprep.subr.mxu0 0.0
        %1725 = vmatpush1.msra.mxu0 0.0
        %1726 = vmatprep.subr.mxu0 0.0
        %1727 = vmatpush1.msra.mxu0 0.0
        %1728 = vmatprep.subr.mxu0 0.0
        %1729 = vmatpush1.msra.mxu0 0.0
        %1730 = vmatprep.subr.mxu0 0.0
        %1731 = vmatpush1.msra.mxu0 0.0
        %1732 = vmatprep.subr.mxu0 0.0
        %1733 = vmatpush1.msra.mxu0 0.0
        %1734 = vmatprep.subr.mxu0 0.0
        %1735 = vmatpush1.msra.mxu0 0.0
        %1736 = vmatprep.subr.mxu0 0.0
        %1737 = vmatpush1.msra.mxu0 0.0
        %1738 = vmatprep.subr.mxu0 0.0
        %1739 = vmatpush1.msra.mxu0 0.0
        %1740 = vmatprep.subr.mxu0 0.0
        %1741 = vmatpush1.msra.mxu0 0.0
        %1742 = vmatprep.subr.mxu0 0.0
        %1743 = vmatpush1.msra.mxu0 0.0
        %1744 = vmatprep.subr.mxu0 0.0
        %1745 = vmatpush1.msra.mxu0 0.0
        %1746 = vmatprep.subr.mxu0 0.0
        %1747 = vmatpush1.msra.mxu0 0.0
        %1748 = vmatprep.subr.mxu0 0.0
        %1749 = vmatpush1.msra.mxu0 0.0
        %1750 = vmatprep.subr.mxu0 0.0
        %1751 = vmatpush1.msra.mxu0 0.0
        %1752 = vmatprep.subr.mxu0 0.0
        %1753 = vmatpush1.msra.mxu0 0.0
        %1754 = vmatprep.subr.mxu0 0.0
        %1755 = vmatpush1.msra.mxu0 0.0
        %1756 = vmatprep.subr.mxu0 0.0
        %1757 = vmatpush1.msra.mxu0 0.0
        %1758 = vmatprep.subr.mxu0 0.0
        %1759 = vmatpush1.msra.mxu0 0.0
        %1760 = vmatprep.subr.mxu0 0.0
        %1761 = vmatpush1.msra.mxu0 0.0
        %1762 = vmatprep.subr.mxu0 0.0
        %1763 = vmatpush1.msra.mxu0 0.0
        %1764 = vmatprep.subr.mxu0 0.0
        %1765 = vmatpush1.msra.mxu0 0.0
        %1766 = vmatprep.mubr.f32.mxu0 0.0
        %1767 = vmatmul.mubr.f32.gmra.mrb[0].mxu0 %v1688
        %v1768 = vpop.f32.mrb[0].mxu0
        %v1769 = vadd.f32 0.0, %v1768
        %v1770 = vpop.f32.mrb[0].mxu0
        %v1771 = vadd.f32 0.0, %v1770
        %1772 = vmatprep.mubr.f32.mxu0 0.0
        %1773 = vmatmul.mubr.f32.gmra.mrb[0].mxu0 %v1691
        %v1774 = vpop.f32.mrb[0].mxu0
        %v1775 = vadd.f32 0.0, %v1774
        %v1776 = vpop.f32.mrb[0].mxu0
        %v1777 = vadd.f32 0.0, %v1776
        %1778 = vmatprep.mubr.f32.mxu0 0.0
        %1779 = vmatmul.mubr.f32.gmra.mrb[0].mxu0 %v1694
        %v1780 = vpop.f32.mrb[0].mxu0
        %v1781 = vadd.f32 0.0, %v1780
        %v1782 = vpop.f32.mrb[0].mxu0
        %v1783 = vadd.f32 0.0, %v1782
        %1784 = vmatprep.mubr.f32.mxu0 0.0
        %1785 = vmatmul.mubr.f32.gmra.mrb[0].mxu0 %v1697
        %v1786 = vpop.f32.mrb[0].mxu0
        %v1787 = vadd.f32 0.0, %v1786
        %v1788 = vpop.f32.mrb[0].mxu0
        %v1789 = vadd.f32 0.0, %v1788
        %1790 = vmatprep.mubr.f32.mxu0 0.0
        %1791 = vmatmul.mubr.f32.gmra.mrb[0].mxu0 %v1700
        %v1792 = vpop.f32.mrb[0].mxu0
        %v1793 = vpop.f32.mrb[0].mxu0
        %v1794 = vadd.f32 0.0, %v1793
        %1795 = vdwg.mxu0
        %1796 = vmatprep.subr.mxu0 0.0
        %1797 = vmatpush1.msra.mxu0 %v1676
        %1798 = vmatprep.subr.mxu0 0.0
        %1799 = vmatpush1.msra.mxu0 %v1679
        %1800 = vmatprep.subr.mxu0 0.0
        %1801 = vmatpush1.msra.mxu0 %v1682
        %1802 = vmatprep.subr.mxu0 0.0
        %1803 = vmatpush1.msra.mxu0 %v1685
        %1804 = vmatprep.subr.mxu0 0.0
        %1805 = vmatpush1.msra.mxu0 0.0
        %1806 = vmatprep.subr.mxu0 0.0
        %1807 = vmatpush1.msra.mxu0 0.0
        %1808 = vmatprep.subr.mxu0 0.0
        %1809 = vmatpush1.msra.mxu0 0.0
        %1810 = vmatprep.subr.mxu0 0.0
        %1811 = vmatpush1.msra.mxu0 0.0
        %1812 = vmatprep.subr.mxu0 0.0
        %1813 = vmatpush1.msra.mxu0 0.0
        %1814 = vmatprep.subr.mxu0 0.0
        %1815 = vmatpush1.msra.mxu0 0.0
        %1816 = vmatprep.subr.mxu0 0.0
        %1817 = vmatpush1.msra.mxu0 0.0
        %1818 = vmatprep.subr.mxu0 0.0
        %1819 = vmatpush1.msra.mxu0 0.0
        %1820 = vmatprep.subr.mxu0 0.0
        %1821 = vmatpush1.msra.mxu0 0.0
        %1822 = vmatprep.subr.mxu0 0.0
        %1823 = vmatpush1.msra.mxu0 0.0
        %1824 = vmatprep.subr.mxu0 0.0
        %1825 = vmatpush1.msra.mxu0 0.0
        %1826 = vmatprep.subr.mxu0 0.0
        %1827 = vmatpush1.msra.mxu0 0.0
        %1828 = vmatprep.subr.mxu0 0.0
        %1829 = vmatpush1.msra.mxu0 0.0
        %1830 = vmatprep.subr.mxu0 0.0
        %1831 = vmatpush1.msra.mxu0 0.0
        %1832 = vmatprep.subr.mxu0 0.0
        %1833 = vmatpush1.msra.mxu0 0.0
        %1834 = vmatprep.subr.mxu0 0.0
        %1835 = vmatpush1.msra.mxu0 0.0
        %1836 = vmatprep.subr.mxu0 0.0
        %1837 = vmatpush1.msra.mxu0 0.0
        %1838 = vmatprep.subr.mxu0 0.0
        %1839 = vmatpush1.msra.mxu0 0.0
        %1840 = vmatprep.subr.mxu0 0.0
        %1841 = vmatpush1.msra.mxu0 0.0
        %1842 = vmatprep.subr.mxu0 0.0
        %1843 = vmatpush1.msra.mxu0 0.0
        %1844 = vmatprep.subr.mxu0 0.0
        %1845 = vmatpush1.msra.mxu0 0.0
        %1846 = vmatprep.subr.mxu0 0.0
        %1847 = vmatpush1.msra.mxu0 0.0
        %1848 = vmatprep.subr.mxu0 0.0
        %1849 = vmatpush1.msra.mxu0 0.0
        %1850 = vmatprep.subr.mxu0 0.0
        %1851 = vmatpush1.msra.mxu0 0.0
        %1852 = vmatprep.subr.mxu0 0.0
        %1853 = vmatpush1.msra.mxu0 0.0
        %1854 = vmatprep.subr.mxu0 0.0
        %1855 = vmatpush1.msra.mxu0 0.0
        %1856 = vmatprep.subr.mxu0 0.0
        %1857 = vmatpush1.msra.mxu0 0.0
        %1858 = vmatprep.subr.mxu0 0.0
        %1859 = vmatpush1.msra.mxu0 0.0
        %1860 = vmatprep.mubr.f32.mxu0 0.0
        %1861 = vmatmul.mubr.f32.gmra.mrb[0].mxu0 %v1688
        %v1862 = vpop.f32.mrb[0].mxu0
        %v1863 = vpop.f32.mrb[0].mxu0
        %1864 = vmatprep.mubr.f32.mxu0 0.0
        %1865 = vmatmul.mubr.f32.gmra.mrb[0].mxu0 %v1691
        %v1866 = vpop.f32.mrb[0].mxu0
        %v1867 = vadd.f32 0.0, %v1866
        %v1868 = vpop.f32.mrb[0].mxu0
        %1869 = vmatprep.mubr.f32.mxu0 0.0
        %1870 = vmatmul.mubr.f32.gmra.mrb[0].mxu0 %v1694
        %v1871 = vpop.f32.mrb[0].mxu0
        %v1872 = vadd.f32 0.0, %v1871
        %v1873 = vpop.f32.mrb[0].mxu0
        %1874 = vmatprep.mubr.f32.mxu0 0.0
        %1875 = vmatmul.mubr.f32.gmra.mrb[0].mxu0 %v1697
        %v1876 = vpop.f32.mrb[0].mxu0
        %v1877 = vadd.f32 0.0, %v1876
        %v1878 = vpop.f32.mrb[0].mxu0
        %1879 = vmatprep.mubr.f32.mxu0 0.0
        %1880 = vmatmul.mubr.f32.gmra.mrb[0].mxu0 %v1700
        %v1881 = vpop.f32.mrb[0].mxu0
        %v1882 = vadd.f32 0.0, %v1881
        %v1883 = vpop.f32.mrb[0].mxu0
        %1884 = vdwg.mxu0
        %v1889 = vrot.slane %v1769, 1
        %v1890 = vrot.slane %v1775, 1
        %v1891 = vsel %vm694, %v1889, %v1890
        %v1892 = vrot.slane %v1781, 1
        %v1893 = vsel %vm694, %v1890, %v1892
        %v1894 = vrot.slane %v1787, 1
        %v1895 = vsel %vm694, %v1892, %v1894
        %1896 = vrot.lane.b32.xlu0 %v1891, 96
        %v1897 = vpop.permute.xlu0 %1896
        %1898 = vrot.lane.b32.xlu0 %v1893, 96
        %v1899 = vpop.permute.xlu0 %1898
        %1900 = vrot.lane.b32.xlu0 %v1895, 96
        %v1901 = vpop.permute.xlu0 %1900
        %v1905 = vadd.f32 %v1769, %v1897
        %v1906 = vadd.f32 %v1775, %v1899
        %v1907 = vadd.f32 %v1781, %v1901
        %v1908 = vrot.slane %v1769, 2
        %v1909 = vrot.slane %v1775, 2
        %v1910 = vsel %vm714, %v1908, %v1909
        %v1911 = vrot.slane %v1781, 2
        %v1912 = vsel %vm714, %v1909, %v1911
        %v1913 = vrot.slane %v1787, 2
        %v1914 = vsel %vm714, %v1911, %v1913
        %1915 = vrot.lane.b32.xlu0 %v1910, 64
        %v1916 = vpop.permute.xlu0 %1915
        %1917 = vrot.lane.b32.xlu0 %v1912, 64
        %v1918 = vpop.permute.xlu0 %1917
        %1919 = vrot.lane.b32.xlu0 %v1914, 64
        %v1920 = vpop.permute.xlu0 %1919
        %v1924 = vadd.f32 %v1905, %v1916
        %v1925 = vadd.f32 %v1906, %v1918
        %v1926 = vadd.f32 %v1907, %v1920
        %v1927 = vrot.slane %v1769, 6
        %v1928 = vrot.slane %v1775, 6
        %v1929 = vsel %vm734, %v1927, %v1928
        %v1930 = vrot.slane %v1781, 6
        %v1931 = vsel %vm734, %v1928, %v1930
        %v1932 = vrot.slane %v1787, 6
        %v1933 = vsel %vm734, %v1930, %v1932
        %1934 = vrot.lane.b32.xlu0 %v1929, 32
        %v1935 = vpop.permute.xlu0 %1934
        %1936 = vrot.lane.b32.xlu0 %v1931, 32
        %v1937 = vpop.permute.xlu0 %1936
        %1938 = vrot.lane.b32.xlu0 %v1933, 32
        %v1939 = vpop.permute.xlu0 %1938
        %v1943 = vadd.f32 %v1924, %v1935
        %v1944 = vadd.f32 %v1925, %v1937
        %v1945 = vadd.f32 %v1926, %v1939
        %v1950 = vrot.slane %v1771, 7
        %v1951 = vrot.slane %v1777, 7
        %v1952 = vsel %vm758, %v1950, %v1951
        %v1953 = vrot.slane %v1783, 7
        %v1954 = vsel %vm758, %v1951, %v1953
        %v1955 = vrot.slane %v1789, 7
        %v1956 = vsel %vm758, %v1953, %v1955
        %v1960 = vadd.f32 %v1943, %v1952
        %v1961 = vadd.f32 %v1944, %v1954
        %v1962 = vadd.f32 %v1945, %v1956
        %1963 = vrot.lane.b32.xlu0 %v1777, 96
        %v1964 = vpop.permute.xlu0 %1963
        %1965 = vrot.lane.b32.xlu0 %v1783, 96
        %v1966 = vpop.permute.xlu0 %1965
        %1967 = vrot.lane.b32.xlu0 %v1789, 96
        %v1968 = vpop.permute.xlu0 %1967
        %v1972 = vadd.f32 %v1960, %v1964
        %v1973 = vadd.f32 %v1961, %v1966
        %v1974 = vadd.f32 %v1962, %v1968
        %v1976 = vrot.slane %v1777, 4
        %v1977 = vrot.slane %v1783, 4
        %v1978 = vsel %vm785, %v1976, %v1977
        %v1979 = vrot.slane %v1789, 4
        %v1980 = vsel %vm785, %v1977, %v1979
        %v1981 = vrot.slane %v1794, 4
        %v1982 = vsel %vm785, %v1979, %v1981
        %1983 = vrot.lane.b32.xlu0 %v1978, 64
        %v1984 = vpop.permute.xlu0 %1983
        %1985 = vrot.lane.b32.xlu0 %v1980, 64
        %v1986 = vpop.permute.xlu0 %1985
        %1987 = vrot.lane.b32.xlu0 %v1982, 64
        %v1988 = vpop.permute.xlu0 %1987
        %v1992 = vadd.f32 %v1972, %v1984
        %v1993 = vadd.f32 %v1973, %v1986
        %v1994 = vadd.f32 %v1974, %v1988
        %v1995 = vrot.slane %v1777, 5
        %v1996 = vrot.slane %v1783, 5
        %v1997 = vsel %vm805, %v1995, %v1996
        %v1998 = vrot.slane %v1789, 5
        %v1999 = vsel %vm805, %v1996, %v1998
        %v2000 = vrot.slane %v1794, 5
        %v2001 = vsel %vm805, %v1998, %v2000
        %2002 = vrot.lane.b32.xlu0 %v1997, 32
        %v2003 = vpop.permute.xlu0 %2002
        %2004 = vrot.lane.b32.xlu0 %v1999, 32
        %v2005 = vpop.permute.xlu0 %2004
        %2006 = vrot.lane.b32.xlu0 %v2001, 32
        %v2007 = vpop.permute.xlu0 %2006
        %v2011 = vadd.f32 %v1992, %v2003
        %v2012 = vadd.f32 %v1993, %v2005
        %v2013 = vadd.f32 %v1994, %v2007
        %v2018 = vrot.slane %v1867, 6
        %v2019 = vrot.slane %v1872, 6
        %v2020 = vsel %vm734, %v2018, %v2019
        %v2021 = vrot.slane %v1877, 6
        %v2022 = vsel %vm734, %v2019, %v2021
        %v2023 = vrot.slane %v1882, 6
        %v2024 = vsel %vm734, %v2021, %v2023
        %v2028 = vadd.f32 %v2011, %v2020
        %v2029 = vadd.f32 %v2012, %v2022
        %v2030 = vadd.f32 %v2013, %v2024
        %v2031 = vlaneseq
        %v2032 = vshrl.u32 %v2031, 7
        %v2033 = vsub.s32 0, %v2032
        %v2034 = vrot.slane %v1686, %v2033
        %v2035 = vadd.f32 %v2028, %v2034
        %v2036 = vadd.f32 %v2029, %v2034
        %v2037 = vadd.f32 %v2030, %v2034
        %v2038 = vadd.f32 %v2035, %v1272
        %v2039 = vadd.f32 %v2036, %v1273
        %v2040 = vadd.f32 %v2037, %v1274
        %s2041 = sld [smem:[#allocation3 + $0x4]]
        %vm2042 = vcmp.ge.f32.partialorder %v2038, 0.0
        %vm2043 = vcmp.ge.f32.partialorder %v2039, 0.0
        %vm2044 = vcmp.ge.f32.partialorder %v2040, 0.0
        %v2045 = vstv %s2041
        %v2046 = vmul.f32 %v2045, %v2038
        %v2047 = vmul.f32 %v2045, %v2039
        %v2048 = vmul.f32 %v2045, %v2040
        %v2049 = vsel %vm2042, %v2038, %v2046
        %v2050 = vsel %vm2043, %v2039, %v2047
        %v2051 = vsel %vm2044, %v2040, %v2048
        %v2052 = vsel %vm472, %v2049, 0.0
        %2053 = vadd.xlane.f32.xlu0 %v2052
        %v2054 = vpop.xlane.xlu0 %2053
        %v2055 = vsel %vm472, %v2050, 0.0
        %2056 = vadd.xlane.f32.xlu0 %v2055
        %v2057 = vpop.xlane.xlu0 %2056
        %v2058 = vsel %vm472, %v2051, 0.0
        %2059 = vadd.xlane.f32.xlu0 %v2058
        %v2060 = vpop.xlane.xlu0 %2059
        %v2061 = vrcp.pop 32.0
        %v2062 = vmul.f32 %v2054, %v2061
        %v2063 = vmul.f32 %v2057, %v2061
        %v2064 = vmul.f32 %v2060, %v2061
        %v2065 = vsub.f32 %v2049, %v2062
        %v2066 = vsub.f32 %v2050, %v2063
        %v2067 = vsub.f32 %v2051, %v2064
        %v2068 = vmul.f32 %v2065, %v2065
        %v2069 = vmul.f32 %v2066, %v2066
        %v2070 = vmul.f32 %v2067, %v2067
        %v2071 = vsel %vm472, %v2068, 0.0
        %2072 = vadd.xlane.f32.xlu0 %v2071
        %v2073 = vpop.xlane.xlu0 %2072
        %v2074 = vsel %vm472, %v2069, 0.0
        %2075 = vadd.xlane.f32.xlu0 %v2074
        %v2076 = vpop.xlane.xlu0 %2075
        %v2077 = vsel %vm472, %v2070, 0.0
        %2078 = vadd.xlane.f32.xlu0 %v2077
        %v2079 = vpop.xlane.xlu0 %2078
        %v2080 = vmul.f32 %v2073, %v2061
        %v2081 = vmul.f32 %v2076, %v2061
        %v2082 = vmul.f32 %v2079, %v2061
        %v2083 = vadd.f32 %v2080, 1e-05
        %v2084 = vadd.f32 %v2081, 1e-05
        %v2085 = vadd.f32 %v2082, 1e-05
        %v2086 = vrsqrt.pop %v2083
        %v2087 = vrsqrt.pop %v2084
        %v2088 = vrsqrt.pop %v2085
        %v2089 = vmul.f32 %v2065, %v2086
        %v2090 = vmul.f32 %v2066, %v2087
        %v2091 = vmul.f32 %v2067, %v2088
        %v2092 = vld [vmem:[%s5] sm:$0x1]
        %v2093 = vlaneseq
        %v2094 = vshrl.u32 %v2093, 7
        %v2095 = vsub.s32 0, %v2094
        %v2096 = vrot.slane %v2092, %v2095
        %v2097 = vmul.f32 %v2089, %v2096
        %v2098 = vmul.f32 %v2090, %v2096
        %v2099 = vmul.f32 %v2091, %v2096
        %v2100 = vld [vmem:[%s5 + $0x1] sm:$0x1]
        %v2101 = vlaneseq
        %v2102 = vshrl.u32 %v2101, 7
        %v2103 = vsub.s32 0, %v2102
        %v2104 = vrot.slane %v2100, %v2103
        %v2105 = vadd.f32 %v2097, %v2104
        %v2106 = vadd.f32 %v2098, %v2104
        %v2107 = vadd.f32 %v2099, %v2104
        %2108 = vst.msk [vmem:[%s292] sm:$0xff] %vm472, %v2105
        %2109 = vst.msk [vmem:[%s292 + $0x8] sm:$0xff] %vm472, %v2106
        %2110 = vst.msk [vmem:[%s292 + $0x10] sm:$0xff] %vm472, %v2107
        %p2111 = scmp.lt.s32.totalorder %s19, 1
        %s2112 = scalar_select %p2111, %s19, 1
        %s2113 = smul.addr %s2112, 3
        %s2114 = smul.addr %s2113, 8
        %s2115 = scalar_lea.vmem %s7, %s2114
        // Predicated region
        $region53: #{feature_extractor_pallas.6} parent=47 // pred_check
          %p2116 = pneg %p189
        $region54: #{feature_extractor_pallas.6} parent=47 // pred_check_branch
          %2118 = sbr.rel (%p2116) target = $region56
        $region55: #{feature_extractor_pallas.6} parent=47 // pred_region
          _
        $region56: #{feature_extractor_pallas.6} parent=47 // pred_fallthru
          _
      $region48: #{feature_extractor_pallas.6} parent=5 // pred_fallthru
        _
      %p2119 = scmp.le.s32.totalorder 2, %s14
      // Predicated region
      $region57: #{feature_extractor_pallas.6} parent=5 // pred_check
        %p2120 = pneg %p2119
      $region58: #{feature_extractor_pallas.6} parent=5 // pred_check_branch
        %2122 = sbr.rel (%p2120) target = $region60
      $region59: #{feature_extractor_pallas.6} parent=5 // pred_region
        %s2123 = ssub.s32 %s14, 2
        // Predicated region
        $region61: #{feature_extractor_pallas.6} parent=59 // pred_check
          %p2124 = pneg %p195
        $region62: #{feature_extractor_pallas.6} parent=59 // pred_check_branch
          %2126 = sbr.rel (%p2124) target = $region64
        $region63: #{feature_extractor_pallas.6} parent=59 // pred_region
          %p2127 = scmp.lt.s32.totalorder %s20, 1
          %s2128 = scalar_select %p2127, %s20, 1
          %s2129 = smul.addr %s2128, 3
          %s2130 = smul.addr %s2129, 8
          %s2131 = scalar_lea.vmem %s7, %s2130
        $region64: #{feature_extractor_pallas.6} parent=59 // pred_fallthru
          _
      $region60: #{feature_extractor_pallas.6} parent=5 // pred_fallthru
        _
    $region6: #{feature_extractor_pallas.6} parent=1 // loop_footer
      %s18 = sadd.s32 1, %s14
    $region7: #{feature_extractor_pallas.6} parent=1 // loop_footer_branch
      %13 = sbr.rel target = $region3
    $region8: #{feature_extractor_pallas.6} parent=1 // loop_exit
      _
    %2132 = vsyncpa [#allocation4], 1
    %s2133 = scalar_lea.sflag [#allocation4], 1
    %2134 = vsyncpa %s2133, 1

// kernel: feature_extractor_pallas.7
$region0: #{feature_extractor_pallas.7}
  #allocation0 [shape = 'u32[]', space=smem, size = 0x4, offset = 0x4, fixed_abs, tag = 'smem constant byte address 0x4 - core index']
  #allocation1 [shape = 'u32[144,128]{1,0:T(1,128)}', space=vmem, size = 0x12000, scoped, tag = 'internal scratch']
  #allocation2 [shape = 'f32[18,64]{1,0:T(8,128)}', space=vmem, size = 0x3000, scoped, tag = 'scratch operand']
  %s0 = inlined_call_operand.vmem [shape: f32[2,18,128], index: 0, kind: input, shape index: {}]
  %s1 = inlined_call_operand.vmem [shape: f32[18,1], index: 1, kind: input, shape index: {}]
  %s2 = inlined_call_operand.vmem [shape: f32[128,64], index: 2, kind: input, shape index: {}]
  %s3 = inlined_call_operand.vmem [shape: f32[4,64,576], index: 3, kind: input, shape index: {}]
  %s4 = inlined_call_operand.vmem [shape: f32[5,64], index: 4, kind: input, shape index: {}]
  %s5 = inlined_call_operand.vmem [shape: f32[2,64], index: 5, kind: input, shape index: {}]
  %s6 = inlined_call_operand.vmem [shape: f32[5], index: 6, kind: input, shape index: {}]
  %s7 = inlined_call_operand.vmem [shape: f32[2,8,64], index: 7, kind: output, shape index: {}]
  %s8 = sld [smem:[#allocation0]]
  $region65: #{feature_extractor_pallas.7} parent=0
    _
  %s10 = ssub.s32 1, %s8
  %s11 = scalar_select 0, %s10, %s8
  $region1: #{feature_extractor_pallas.7} parent=0
    #allocation3 [shape = 'u8[512]{0}', space=smem, size = 0x200, scoped, tag = 'input window, operand 6, single buffered']
    #allocation4 [shape = 's32[2]{0}', space=sflag, size = 0x8, scoped, tag = 'scoped memory for feature_extractor_pallas.7']
    %12 = vsyncpa [#allocation4], 0
    loop: start=0, step=1, limit=4
    $region2: #{feature_extractor_pallas.7} parent=1 // loop_pre_header
      _
    $region3: #{feature_extractor_pallas.7} parent=1 // loop_header
      %s14 = sphi 0, %s18
      %p15 = scmp.ge.s32.totalorder %s14, 4
      %s24 = sphi 0, %s26
      %s27 = sphi 0, %s24
      %s28 = sphi 0, %s27
      %s44 = sphi 0, %s28
      %s48 = sphi 0, %s48
      %s50 = sphi 0, %s48
      %s51 = sphi 0, %s50
      %s65 = sphi 0, %s51
      %s69 = sphi 0, %s69
      %s71 = sphi 0, %s69
      %s72 = sphi 0, %s71
      %s86 = sphi 0, %s72
      %s90 = sphi 0, %s90
      %s92 = sphi 0, %s90
      %s93 = sphi 0, %s92
      %s107 = sphi 0, %s93
      %s111 = sphi 0, %s111
      %s113 = sphi 0, %s111
      %s114 = sphi 0, %s113
      %s128 = sphi 0, %s114
      %s132 = sphi 0, %s132
      %s134 = sphi 0, %s132
      %s135 = sphi 0, %s134
      %s149 = sphi 0, %s135
      %s153 = sphi 0, %s153
      %s155 = sphi 0, %s153
      %s156 = sphi 0, %s155
      %s170 = sphi 0, %s156
      %s176 = sphi 0, %s178
      %s179 = sphi 0, %s176
      %s180 = sphi 0, %s179
      %s196 = sphi 0, %s180
    $region4: #{feature_extractor_pallas.7} parent=1 // loop_header_branch
      %17 = sbr.rel (%p15) target = $region8
    $region5: #{feature_extractor_pallas.7} parent=1 // loop_body
      %s19 = ssub.s32 %s14, 1
      %s20 = ssub.s32 %s14, 2
      %s21 = sadd.s32 %s14, 1
      %s22 = ssub.s32 %s14, %s21
      %p23 = scmp.eq.s32.totalorder %s22, 0
      %s25 = sadd.s32 %s24, 1
      %s26 = scalar_select %p23, %s24, %s25
      %p29 = pneg %p23
      %p30 = scmp.eq.s32.totalorder %s14, 1
      %p31 = por %p29, %p30
      %p32 = scmp.ne.s32.totalorder %s24, %s27
      %p33 = scmp.eq.s32.totalorder %s14, 0
      %p34 = por %p32, %p33
      %p35 = scmp.ne.s32.totalorder %s24, %s27
      %p36 = scmp.eq.s32.totalorder %s19, 1
      %p37 = por %p35, %p36
      %p38 = scmp.ne.s32.totalorder %s27, %s28
      %p39 = scmp.eq.s32.totalorder %s19, 0
      %p40 = por %p38, %p39
      %p41 = scmp.ne.s32.totalorder %s27, %s28
      %p42 = scmp.eq.s32.totalorder %s20, 1
      %p43 = por %p41, %p42
      %p45 = scmp.ne.s32.totalorder %s28, %s44
      %p46 = scmp.eq.s32.totalorder %s20, 0
      %p47 = por %p45, %p46
      %s49 = sadd.s32 %s48, 1
      %p52 = scmp.eq.s32.totalorder %s14, 1
      %p53 = scmp.ne.s32.totalorder %s48, %s50
      %p54 = scmp.eq.s32.totalorder %s14, 0
      %p55 = por %p53, %p54
      %p56 = scmp.ne.s32.totalorder %s48, %s50
      %p57 = scmp.eq.s32.totalorder %s19, 1
      %p58 = por %p56, %p57
      %p59 = scmp.ne.s32.totalorder %s50, %s51
      %p60 = scmp.eq.s32.totalorder %s19, 0
      %p61 = por %p59, %p60
      %p62 = scmp.ne.s32.totalorder %s50, %s51
      %p63 = scmp.eq.s32.totalorder %s20, 1
      %p64 = por %p62, %p63
      %p66 = scmp.ne.s32.totalorder %s51, %s65
      %p67 = scmp.eq.s32.totalorder %s20, 0
      %p68 = por %p66, %p67
      %s70 = sadd.s32 %s69, 1
      %p73 = scmp.eq.s32.totalorder %s14, 1
      %p74 = scmp.ne.s32.totalorder %s69, %s71
      %p75 = scmp.eq.s32.totalorder %s14, 0
      %p76 = por %p74, %p75
      %p77 = scmp.ne.s32.totalorder %s69, %s71
      %p78 = scmp.eq.s32.totalorder %s19, 1
      %p79 = por %p77, %p78
      %p80 = scmp.ne.s32.totalorder %s71, %s72
      %p81 = scmp.eq.s32.totalorder %s19, 0
      %p82 = por %p80, %p81
      %p83 = scmp.ne.s32.totalorder %s71, %s72
      %p84 = scmp.eq.s32.totalorder %s20, 1
      %p85 = por %p83, %p84
      %p87 = scmp.ne.s32.totalorder %s72, %s86
      %p88 = scmp.eq.s32.totalorder %s20, 0
      %p89 = por %p87, %p88
      %s91 = sadd.s32 %s90, 1
      %p94 = scmp.eq.s32.totalorder %s14, 1
      %p95 = scmp.ne.s32.totalorder %s90, %s92
      %p96 = scmp.eq.s32.totalorder %s14, 0
      %p97 = por %p95, %p96
      %p98 = scmp.ne.s32.totalorder %s90, %s92
      %p99 = scmp.eq.s32.totalorder %s19, 1
      %p100 = por %p98, %p99
      %p101 = scmp.ne.s32.totalorder %s92, %s93
      %p102 = scmp.eq.s32.totalorder %s19, 0
      %p103 = por %p101, %p102
      %p104 = scmp.ne.s32.totalorder %s92, %s93
      %p105 = scmp.eq.s32.totalorder %s20, 1
      %p106 = por %p104, %p105
      %p108 = scmp.ne.s32.totalorder %s93, %s107
      %p109 = scmp.eq.s32.totalorder %s20, 0
      %p110 = por %p108, %p109
      %s112 = sadd.s32 %s111, 1
      %p115 = scmp.eq.s32.totalorder %s14, 1
      %p116 = scmp.ne.s32.totalorder %s111, %s113
      %p117 = scmp.eq.s32.totalorder %s14, 0
      %p118 = por %p116, %p117
      %p119 = scmp.ne.s32.totalorder %s111, %s113
      %p120 = scmp.eq.s32.totalorder %s19, 1
      %p121 = por %p119, %p120
      %p122 = scmp.ne.s32.totalorder %s113, %s114
      %p123 = scmp.eq.s32.totalorder %s19, 0
      %p124 = por %p122, %p123
      %p125 = scmp.ne.s32.totalorder %s113, %s114
      %p126 = scmp.eq.s32.totalorder %s20, 1
      %p127 = por %p125, %p126
      %p129 = scmp.ne.s32.totalorder %s114, %s128
      %p130 = scmp.eq.s32.totalorder %s20, 0
      %p131 = por %p129, %p130
      %s133 = sadd.s32 %s132, 1
      %p136 = scmp.eq.s32.totalorder %s14, 1
      %p137 = scmp.ne.s32.totalorder %s132, %s134
      %p138 = scmp.eq.s32.totalorder %s14, 0
      %p139 = por %p137, %p138
      %p140 = scmp.ne.s32.totalorder %s132, %s134
      %p141 = scmp.eq.s32.totalorder %s19, 1
      %p142 = por %p140, %p141
      %p143 = scmp.ne.s32.totalorder %s134, %s135
      %p144 = scmp.eq.s32.totalorder %s19, 0
      %p145 = por %p143, %p144
      %p146 = scmp.ne.s32.totalorder %s134, %s135
      %p147 = scmp.eq.s32.totalorder %s20, 1
      %p148 = por %p146, %p147
      %p150 = scmp.ne.s32.totalorder %s135, %s149
      %p151 = scmp.eq.s32.totalorder %s20, 0
      %p152 = por %p150, %p151
      %s154 = sadd.s32 %s153, 1
      %p157 = scmp.eq.s32.totalorder %s14, 1
      %p158 = scmp.ne.s32.totalorder %s153, %s155
      %p159 = scmp.eq.s32.totalorder %s14, 0
      %p160 = por %p158, %p159
      %p161 = scmp.ne.s32.totalorder %s153, %s155
      %p162 = scmp.eq.s32.totalorder %s19, 1
      %p163 = por %p161, %p162
      %p164 = scmp.ne.s32.totalorder %s155, %s156
      %p165 = scmp.eq.s32.totalorder %s19, 0
      %p166 = por %p164, %p165
      %p167 = scmp.ne.s32.totalorder %s155, %s156
      %p168 = scmp.eq.s32.totalorder %s20, 1
      %p169 = por %p167, %p168
      %p171 = scmp.ne.s32.totalorder %s156, %s170
      %p172 = scmp.eq.s32.totalorder %s20, 0
      %p173 = por %p171, %p172
      %s174 = ssub.s32 %s14, %s21
      %p175 = scmp.eq.s32.totalorder %s174, 0
      %s177 = sadd.s32 %s176, 1
      %s178 = scalar_select %p175, %s176, %s177
      %p181 = pneg %p175
      %p182 = scmp.eq.s32.totalorder %s14, 1
      %p183 = por %p181, %p182
      %p184 = scmp.ne.s32.totalorder %s176, %s179
      %p185 = scmp.eq.s32.totalorder %s14, 0
      %p186 = por %p184, %p185
      %p187 = scmp.ne.s32.totalorder %s176, %s179
      %p188 = scmp.eq.s32.totalorder %s19, 1
      %p189 = por %p187, %p188
      %p190 = scmp.ne.s32.totalorder %s179, %s180
      %p191 = scmp.eq.s32.totalorder %s19, 0
      %p192 = por %p190, %p191
      %p193 = scmp.ne.s32.totalorder %s179, %s180
      %p194 = scmp.eq.s32.totalorder %s20, 1
      %p195 = por %p193, %p194
      %p197 = scmp.ne.s32.totalorder %s180, %s196
      %p198 = scmp.eq.s32.totalorder %s20, 0
      %p199 = por %p197, %p198
      %p200 = scmp.le.s32.totalorder 1, %s14
      %p201 = scmp.lt.s32.totalorder %s14, 3
      %p202 = pnand %p200, %p201
      %p203 = pneg %p202
      // Predicated region
      $region9: #{feature_extractor_pallas.7} parent=5 // pred_check
        _
      $region10: #{feature_extractor_pallas.7} parent=5 // pred_check_branch
        %205 = sbr.rel (%p202) target = $region12
      $region11: #{feature_extractor_pallas.7} parent=5 // pred_region
        %s206 = ssub.s32 %s14, 1
        // Predicated region
        $region13: #{feature_extractor_pallas.7} parent=11 // pred_check
          %p207 = pneg %p61
        $region14: #{feature_extractor_pallas.7} parent=11 // pred_check_branch
          %209 = sbr.rel (%p207) target = $region16
        $region15: #{feature_extractor_pallas.7} parent=11 // pred_region
          _
        $region16: #{feature_extractor_pallas.7} parent=11 // pred_fallthru
          _
        // Predicated region
        $region17: #{feature_extractor_pallas.7} parent=11 // pred_check
          %p210 = pneg %p82
        $region18: #{feature_extractor_pallas.7} parent=11 // pred_check_branch
          %212 = sbr.rel (%p210) target = $region20
        $region19: #{feature_extractor_pallas.7} parent=11 // pred_region
          _
        $region20: #{feature_extractor_pallas.7} parent=11 // pred_fallthru
          _
        // Predicated region
        $region21: #{feature_extractor_pallas.7} parent=11 // pred_check
          %p213 = pneg %p103
        $region22: #{feature_extractor_pallas.7} parent=11 // pred_check_branch
          %215 = sbr.rel (%p213) target = $region24
        $region23: #{feature_extractor_pallas.7} parent=11 // pred_region
          _
        $region24: #{feature_extractor_pallas.7} parent=11 // pred_fallthru
          _
        // Predicated region
        $region25: #{feature_extractor_pallas.7} parent=11 // pred_check
          %p216 = pneg %p124
        $region26: #{feature_extractor_pallas.7} parent=11 // pred_check_branch
          %218 = sbr.rel (%p216) target = $region28
        $region27: #{feature_extractor_pallas.7} parent=11 // pred_region
          _
        $region28: #{feature_extractor_pallas.7} parent=11 // pred_fallthru
          _
        // Predicated region
        $region29: #{feature_extractor_pallas.7} parent=11 // pred_check
          %p219 = pneg %p145
        $region30: #{feature_extractor_pallas.7} parent=11 // pred_check_branch
          %221 = sbr.rel (%p219) target = $region32
        $region31: #{feature_extractor_pallas.7} parent=11 // pred_region
          _
        $region32: #{feature_extractor_pallas.7} parent=11 // pred_fallthru
          _
        // Predicated region
        $region33: #{feature_extractor_pallas.7} parent=11 // pred_check
          %p222 = pneg %p166
        $region34: #{feature_extractor_pallas.7} parent=11 // pred_check_branch
          %224 = sbr.rel (%p222) target = $region36
        $region35: #{feature_extractor_pallas.7} parent=11 // pred_region
          %s226 = ssub.s32 16, 16
          %227 = vsyncadd [#allocation4], %s226
          %s229 = sshll.u32 %s6, 4
          %s230 = int_to_ptr.vmem [resolvable:$true] %s229
          %232 = dma.vmem_to_smem %s230, 16, [#allocation3], [#allocation4]
        $region36: #{feature_extractor_pallas.7} parent=11 // pred_fallthru
          _
      $region12: #{feature_extractor_pallas.7} parent=5 // pred_fallthru
        _
      %p233 = scmp.lt.s32.totalorder %s14, 2
      // Predicated region
      $region37: #{feature_extractor_pallas.7} parent=5 // pred_check
        %p234 = pneg %p233
      $region38: #{feature_extractor_pallas.7} parent=5 // pred_check_branch
        %236 = sbr.rel (%p234) target = $region40
      $region39: #{feature_extractor_pallas.7} parent=5 // pred_region
        // Predicated region
        $region41: #{feature_extractor_pallas.7} parent=39 // pred_check
          %p237 = pneg %p34
        $region42: #{feature_extractor_pallas.7} parent=39 // pred_check_branch
          %239 = sbr.rel (%p237) target = $region44
        $region43: #{feature_extractor_pallas.7} parent=39 // pred_region
          %p240 = scmp.lt.s32.totalorder %s14, 1
          %s241 = scalar_select %p240, %s14, 1
          %s242 = smul.addr %s241, 3
          %s243 = smul.addr %s242, 8
          %s244 = scalar_lea.vmem %s0, %s243
        $region44: #{feature_extractor_pallas.7} parent=39 // pred_fallthru
          _
      $region40: #{feature_extractor_pallas.7} parent=5 // pred_fallthru
        _
      %p245 = scmp.le.s32.totalorder 1, %s14
      %p246 = scmp.lt.s32.totalorder %s14, 3
      %p247 = pnand %p245, %p246
      %p248 = pneg %p247
      // Predicated region
      $region45: #{feature_extractor_pallas.7} parent=5 // pred_check
        _
      $region46: #{feature_extractor_pallas.7} parent=5 // pred_check_branch
        %250 = sbr.rel (%p247) target = $region48
      $region47: #{feature_extractor_pallas.7} parent=5 // pred_region
        %s251 = ssub.s32 %s14, 1
        // Predicated region
        $region49: #{feature_extractor_pallas.7} parent=47 // pred_check
          %p252 = pneg %p166
        $region50: #{feature_extractor_pallas.7} parent=47 // pred_check_branch
          %254 = sbr.rel (%p252) target = $region52
        $region51: #{feature_extractor_pallas.7} parent=47 // pred_region
          %255 = dma.done [#allocation4], 16
        $region52: #{feature_extractor_pallas.7} parent=47 // pred_fallthru
          _
        %256 = sfence
        %p257 = scmp.lt.s32.totalorder %s19, 1
        %s258 = scalar_select %p257, %s19, 1
        %s259 = smul.addr %s258, 3
        %s260 = smul.addr %s259, 8
        %s261 = scalar_lea.vmem %s0, %s260
        %p262 = pneg %p40
        %p263 = pneg %p37
        %p264 = pneg %p61
        %p265 = pneg %p58
        %p266 = pneg %p82
        %p267 = pneg %p79
        %p268 = pneg %p103
        %p269 = pneg %p100
        %p270 = pneg %p124
        %p271 = pneg %p121
        %p272 = pneg %p145
        %p273 = pneg %p142
        %p274 = pneg %p166
        %p275 = pneg %p163
        %p276 = pneg %p192
        %p277 = pneg %p189
        %p278 = scmp.lt.s32.totalorder %s19, 1
        %s279 = scalar_select %p278, %s19, 1
        %s280 = smul.addr %s279, 8
        %s281 = scalar_lea.vmem %s7, %s280
        %p282 = scmp.lt.s32.totalorder %s19, 1
        %s283 = scalar_select %p282, %s19, 1
        %s284 = smul.addr %s283, 3
        %s285 = smul.addr %s284, 8
        %s286 = scalar_lea.vmem %s0, %s285
        %p287 = scmp.lt.s32.totalorder %s19, 1
        %s288 = scalar_select %p287, %s19, 1
        %s289 = smul.addr %s288, 8
        %s290 = scalar_lea.vmem %s7, %s289
        %v291 = vld [vmem:[%s1] sm:$0xff]
        %v292 = vld [vmem:[%s1 + $0x8] sm:$0xff]
        %v293 = vld [vmem:[%s1 + $0x10] sm:$0x3]
        %v294 = vld [vmem:[%s1 + $0x5] sm:$0xff]
        %v295 = vld [vmem:[%s286] sm:$0xff]
        %v296 = vld [vmem:[%s286 + $0x8] sm:$0xff]
        %v297 = vld [vmem:[%s286 + $0x10] sm:$0x3]
        %v298 = vld [vmem:[%s2] sm:$0xff]
        %v299 = vld [vmem:[%s2 + $0x8] sm:$0xff]
        %v300 = vld [vmem:[%s2 + $0x10] sm:$0xff]
        %v301 = vld [vmem:[%s2 + $0x18] sm:$0xff]
        %v302 = vld [vmem:[%s2 + $0x20] sm:$0xff]
        %v303 = vld [vmem:[%s2 + $0x28] sm:$0xff]
        %v304 = vld [vmem:[%s2 + $0x30] sm:$0xff]
        %v305 = vld [vmem:[%s2 + $0x38] sm:$0xff]
        %v306 = vld [vmem:[%s2 + $0x40] sm:$0xff]
        %v307 = vld [vmem:[%s2 + $0x48] sm:$0xff]
        %v308 = vld [vmem:[%s2 + $0x50] sm:$0xff]
        %v309 = vld [vmem:[%s2 + $0x58] sm:$0xff]
        %v310 = vld [vmem:[%s2 + $0x60] sm:$0xff]
        %v311 = vld [vmem:[%s2 + $0x68] sm:$0xff]
        %v312 = vld [vmem:[%s2 + $0x70] sm:$0xff]
        %v313 = vld [vmem:[%s2 + $0x78] sm:$0xff]
        %v314 = vld [vmem:[%s4] sm:$0x1]
        %v315 = vlaneseq
        %v316 = vshrl.u32 %v315, 7
        %v317 = vsub.s32 0, %v316
        %v318 = vrot.slane %v314, %v317
        %319 = vmatprep.subr.mxu0 0.0
        %320 = vmatpush1.msra.mxu0 %v298
        %321 = vmatprep.subr.mxu0 0.0
        %322 = vmatpush1.msra.mxu0 %v299
        %323 = vmatprep.subr.mxu0 0.0
        %324 = vmatpush1.msra.mxu0 %v300
        %325 = vmatprep.subr.mxu0 0.0
        %326 = vmatpush1.msra.mxu0 %v301
        %327 = vmatprep.subr.mxu0 0.0
        %328 = vmatpush1.msra.mxu0 %v302
        %329 = vmatprep.subr.mxu0 0.0
        %330 = vmatpush1.msra.mxu0 %v303
        %331 = vmatprep.subr.mxu0 0.0
        %332 = vmatpush1.msra.mxu0 %v304
        %333 = vmatprep.subr.mxu0 0.0
        %334 = vmatpush1.msra.mxu0 %v305
        %335 = vmatprep.subr.mxu0 0.0
        %336 = vmatpush1.msra.mxu0 %v306
        %337 = vmatprep.subr.mxu0 0.0
        %338 = vmatpush1.msra.mxu0 %v307
        %339 = vmatprep.subr.mxu0 0.0
        %340 = vmatpush1.msra.mxu0 %v308
        %341 = vmatprep.subr.mxu0 0.0
        %342 = vmatpush1.msra.mxu0 %v309
        %343 = vmatprep.subr.mxu0 0.0
        %344 = vmatpush1.msra.mxu0 %v310
        %345 = vmatprep.subr.mxu0 0.0
        %346 = vmatpush1.msra.mxu0 %v311
        %347 = vmatprep.subr.mxu0 0.0
        %348 = vmatpush1.msra.mxu0 %v312
        %349 = vmatprep.subr.mxu0 0.0
        %350 = vmatpush1.msra.mxu0 %v313
        %351 = vmatprep.subr.mxu0 0.0
        %352 = vmatpush1.msra.mxu0 0.0
        %353 = vmatprep.subr.mxu0 0.0
        %354 = vmatpush1.msra.mxu0 0.0
        %355 = vmatprep.subr.mxu0 0.0
        %356 = vmatpush1.msra.mxu0 0.0
        %357 = vmatprep.subr.mxu0 0.0
        %358 = vmatpush1.msra.mxu0 0.0
        %359 = vmatprep.subr.mxu0 0.0
        %360 = vmatpush1.msra.mxu0 0.0
        %361 = vmatprep.subr.mxu0 0.0
        %362 = vmatpush1.msra.mxu0 0.0
        %363 = vmatprep.subr.mxu0 0.0
        %364 = vmatpush1.msra.mxu0 0.0
        %365 = vmatprep.subr.mxu0 0.0
        %366 = vmatpush1.msra.mxu0 0.0
        %367 = vmatprep.subr.mxu0 0.0
        %368 = vmatpush1.msra.mxu0 0.0
        %369 = vmatprep.subr.mxu0 0.0
        %370 = vmatpush1.msra.mxu0 0.0
        %371 = vmatprep.subr.mxu0 0.0
        %372 = vmatpush1.msra.mxu0 0.0
        %373 = vmatprep.subr.mxu0 0.0
        %374 = vmatpush1.msra.mxu0 0.0
        %375 = vmatprep.subr.mxu0 0.0
        %376 = vmatpush1.msra.mxu0 0.0
        %377 = vmatprep.subr.mxu0 0.0
        %378 = vmatpush1.msra.mxu0 0.0
        %379 = vmatprep.subr.mxu0 0.0
        %380 = vmatpush1.msra.mxu0 0.0
        %381 = vmatprep.subr.mxu0 0.0
        %382 = vmatpush1.msra.mxu0 0.0
        %383 = vmatprep.mubr.f32.mxu0 0.0
        %384 = vmatmul.mubr.f32.gmra.mrb[0].mxu0 %v295
        %v385 = vpop.f32.mrb[0].mxu0
        %v386 = vadd.f32 %v318, %v385
        %v387 = vpop.f32.mrb[0].mxu0
        %388 = vmatprep.mubr.f32.mxu0 0.0
        %389 = vmatmul.mubr.f32.gmra.mrb[0].mxu0 %v296
        %v390 = vpop.f32.mrb[0].mxu0
        %v391 = vadd.f32 %v318, %v390
        %v392 = vpop.f32.mrb[0].mxu0
        %393 = vmatprep.mubr.f32.mxu0 0.0
        %394 = vmatmul.mubr.f32.gmra.mrb[0].mxu0 %v297
        %v395 = vpop.f32.mrb[0].mxu0
        %v396 = vadd.f32 %v318, %v395
        %v397 = vpop.f32.mrb[0].mxu0
        %398 = vdwg.mxu0
        %s399 = sld [smem:[#allocation3]]
        %vm400 = vcmp.ge.f32.partialorder %v386, 0.0
        %vm401 = vcmp.ge.f32.partialorder %v391, 0.0
        %vm402 = vcmp.ge.f32.partialorder %v396, 0.0
        %v403 = vstv %s399
        %v404 = vmul.f32 %v403, %v386
        %v405 = vmul.f32 %v403, %v391
        %v406 = vmul.f32 %v403, %v396
        %v407 = vsel %vm400, %v386, %v404
        %v408 = vsel %vm401, %v391, %v405
        %v409 = vsel %vm402, %v396, %v406
        %411 = vset.pattern.permute.xlu0 0
        %412 = vperm.xlu0 %411, %v291
        %v413 = vpop.permute.xlu0 %412
        %416 = vset.pattern.permute.xlu0 0
        %417 = vperm.xlu0 %416, %v292
        %v418 = vpop.permute.xlu0 %417
        %421 = vset.pattern.permute.xlu0 0
        %422 = vperm.xlu0 %421, %v293
        %v423 = vpop.permute.xlu0 %422
        %v425 = vmul.f32 %v407, %v413
        %v426 = vmul.f32 %v408, %v418
        %v427 = vmul.f32 %v409, %v423
        %vm428 = vcmask 523264
        %429 = vst.msk [vmem:[#allocation2] sm:$0xff] %vm428, 0.0
        %430 = vst.msk [vmem:[#allocation2 + $0x8] sm:$0xff] %vm428, 0.0
        %vm431 = vcmask 517120
        %432 = vst.msk [vmem:[#allocation2 + $0x10] sm:$0x3] %vm431, 0.0
        %v433 = vld [vmem:[%s3] sm:$0xff]
        %v434 = vld [vmem:[%s3 + $0x8] sm:$0xff]
        %v435 = vld [vmem:[%s3 + $0x10] sm:$0xff]
        %v436 = vld [vmem:[%s3 + $0x18] sm:$0xff]
        %v437 = vld [vmem:[%s3 + $0x20] sm:$0xff]
        %v438 = vld [vmem:[%s3 + $0x28] sm:$0xff]
        %v439 = vld [vmem:[%s3 + $0x30] sm:$0xff]
        %v440 = vld [vmem:[%s3 + $0x38] sm:$0xff]
        %v441 = vld [vmem:[%s3 + $0x40] sm:$0xff]
        %v442 = vld [vmem:[%s3 + $0x48] sm:$0xff]
        %v443 = vld [vmem:[%s3 + $0x50] sm:$0xff]
        %v444 = vld [vmem:[%s3 + $0x58] sm:$0xff]
        %v445 = vld [vmem:[%s3 + $0x60] sm:$0xff]
        %v446 = vld [vmem:[%s3 + $0x68] sm:$0xff]
        %v447 = vld [vmem:[%s3 + $0x70] sm:$0xff]
        %v448 = vld [vmem:[%s3 + $0x78] sm:$0xff]
        %v449 = vld [vmem:[%s3 + $0x80] sm:$0xff]
        %v450 = vld [vmem:[%s3 + $0x88] sm:$0xff]
        %v451 = vld [vmem:[%s3 + $0x90] sm:$0xff]
        %v452 = vld [vmem:[%s3 + $0x98] sm:$0xff]
        %v453 = vld [vmem:[%s3 + $0xa0] sm:$0xff]
        %v454 = vld [vmem:[%s3 + $0xa8] sm:$0xff]
        %v455 = vld [vmem:[%s3 + $0xb0] sm:$0xff]
        %v456 = vld [vmem:[%s3 + $0xb8] sm:$0xff]
        %v457 = vld [vmem:[%s3 + $0xc0] sm:$0xff]
        %v458 = vld [vmem:[%s3 + $0xc8] sm:$0xff]
        %v459 = vld [vmem:[%s3 + $0xd0] sm:$0xff]
        %v460 = vld [vmem:[%s3 + $0xd8] sm:$0xff]
        %v461 = vld [vmem:[%s3 + $0xe0] sm:$0xff]
        %v462 = vld [vmem:[%s3 + $0xe8] sm:$0xff]
        %v463 = vld [vmem:[%s3 + $0xf0] sm:$0xff]
        %v464 = vld [vmem:[%s3 + $0xf8] sm:$0xff]
        %v465 = vld [vmem:[%s3 + $0x100] sm:$0xff]
        %v466 = vld [vmem:[%s3 + $0x108] sm:$0xff]
        %v467 = vld [vmem:[%s3 + $0x110] sm:$0xff]
        %v468 = vld [vmem:[%s3 + $0x118] sm:$0xff]
        %v469 = vld [vmem:[%s3 + $0x120] sm:$0xff]
        %v470 = vld [vmem:[%s3 + $0x128] sm:$0xff]
        %v471 = vld [vmem:[%s3 + $0x130] sm:$0xff]
        %v472 = vld [vmem:[%s3 + $0x138] sm:$0xff]
        %v473 = vld [vmem:[%s4 + $0x1] sm:$0x1]
        %v475 = vsel %vm428, %v425, 0
        %v478 = vsel %vm428, %v426, 0
        %v481 = vsel %vm428, %v427, 0
        %483 = vmatprep.subr.mxu0 %v434
        %484 = vmatpush1.msra.mxu0 %v433
        %485 = vmatprep.subr.mxu0 %v439
        %486 = vmatpush1.msra.mxu0 %v438
        %487 = vmatprep.subr.mxu0 %v444
        %488 = vmatpush1.msra.mxu0 %v443
        %489 = vmatprep.subr.mxu0 %v449
        %490 = vmatpush1.msra.mxu0 %v448
        %491 = vmatprep.subr.mxu0 %v454
        %492 = vmatpush1.msra.mxu0 %v453
        %493 = vmatprep.subr.mxu0 %v459
        %494 = vmatpush1.msra.mxu0 %v458
        %495 = vmatprep.subr.mxu0 %v464
        %496 = vmatpush1.msra.mxu0 %v463
        %497 = vmatprep.subr.mxu0 %v469
        %498 = vmatpush1.msra.mxu0 %v468
        %499 = vmatprep.subr.mxu0 0.0
        %500 = vmatpush1.msra.mxu0 0.0
        %501 = vmatprep.subr.mxu0 0.0
        %502 = vmatpush1.msra.mxu0 0.0
        %503 = vmatprep.subr.mxu0 0.0
        %504 = vmatpush1.msra.mxu0 0.0
        %505 = vmatprep.subr.mxu0 0.0
        %506 = vmatpush1.msra.mxu0 0.0
        %507 = vmatprep.subr.mxu0 0.0
        %508 = vmatpush1.msra.mxu0 0.0
        %509 = vmatprep.subr.mxu0 0.0
        %510 = vmatpush1.msra.mxu0 0.0
        %511 = vmatprep.subr.mxu0 0.0
        %512 = vmatpush1.msra.mxu0 0.0
        %513 = vmatprep.subr.mxu0 0.0
        %514 = vmatpush1.msra.mxu0 0.0
        %515 = vmatprep.subr.mxu0 0.0
        %516 = vmatpush1.msra.mxu0 0.0
        %517 = vmatprep.subr.mxu0 0.0
        %518 = vmatpush1.msra.mxu0 0.0
        %519 = vmatprep.subr.mxu0 0.0
        %520 = vmatpush1.msra.mxu0 0.0
        %521 = vmatprep.subr.mxu0 0.0
        %522 = vmatpush1.msra.mxu0 0.0
        %523 = vmatprep.subr.mxu0 0.0
        %524 = vmatpush1.msra.mxu0 0.0
        %525 = vmatprep.subr.mxu0 0.0
        %526 = vmatpush1.msra.mxu0 0.0
        %527 = vmatprep.subr.mxu0 0.0
        %528 = vmatpush1.msra.mxu0 0.0
        %529 = vmatprep.subr.mxu0 0.0
        %530 = vmatpush1.msra.mxu0 0.0
        %531 = vmatprep.subr.mxu0 0.0
        %532 = vmatpush1.msra.mxu0 0.0
        %533 = vmatprep.subr.mxu0 0.0
        %534 = vmatpush1.msra.mxu0 0.0
        %535 = vmatprep.subr.mxu0 0.0
        %536 = vmatpush1.msra.mxu0 0.0
        %537 = vmatprep.subr.mxu0 0.0
        %538 = vmatpush1.msra.mxu0 0.0
        %539 = vmatprep.subr.mxu0 0.0
        %540 = vmatpush1.msra.mxu0 0.0
        %541 = vmatprep.subr.mxu0 0.0
        %542 = vmatpush1.msra.mxu0 0.0
        %543 = vmatprep.subr.mxu0 0.0
        %544 = vmatpush1.msra.mxu0 0.0
        %545 = vmatprep.subr.mxu0 0.0
        %546 = vmatpush1.msra.mxu0 0.0
        %547 = vmatprep.mubr.f32.mxu0 0.0
        %548 = vmatmul.mubr.f32.gmra.mrb[0].mxu0 %v475
        %v549 = vpop.f32.mrb[0].mxu0
        %v550 = vadd.f32 0.0, %v549
        %v551 = vpop.f32.mrb[0].mxu0
        %v552 = vadd.f32 0.0, %v551
        %553 = vmatprep.mubr.f32.mxu0 0.0
        %554 = vmatmul.mubr.f32.gmra.mrb[0].mxu0 %v478
        %v555 = vpop.f32.mrb[0].mxu0
        %v556 = vadd.f32 0.0, %v555
        %v557 = vpop.f32.mrb[0].mxu0
        %v558 = vadd.f32 0.0, %v557
        %559 = vmatprep.mubr.f32.mxu0 0.0
        %560 = vmatmul.mubr.f32.gmra.mrb[0].mxu0 %v481
        %v561 = vpop.f32.mrb[0].mxu0
        %v562 = vpop.f32.mrb[0].mxu0
        %563 = vdwg.mxu0
        %564 = vmatprep.subr.mxu0 %v436
        %565 = vmatpush1.msra.mxu0 %v435
        %566 = vmatprep.subr.mxu0 %v441
        %567 = vmatpush1.msra.mxu0 %v440
        %568 = vmatprep.subr.mxu0 %v446
        %569 = vmatpush1.msra.mxu0 %v445
        %570 = vmatprep.subr.mxu0 %v451
        %571 = vmatpush1.msra.mxu0 %v450
        %572 = vmatprep.subr.mxu0 %v456
        %573 = vmatpush1.msra.mxu0 %v455
        %574 = vmatprep.subr.mxu0 %v461
        %575 = vmatpush1.msra.mxu0 %v460
        %576 = vmatprep.subr.mxu0 %v466
        %577 = vmatpush1.msra.mxu0 %v465
        %578 = vmatprep.subr.mxu0 %v471
        %579 = vmatpush1.msra.mxu0 %v470
        %580 = vmatprep.subr.mxu0 0.0
        %581 = vmatpush1.msra.mxu0 0.0
        %582 = vmatprep.subr.mxu0 0.0
        %583 = vmatpush1.msra.mxu0 0.0
        %584 = vmatprep.subr.mxu0 0.0
        %585 = vmatpush1.msra.mxu0 0.0
        %586 = vmatprep.subr.mxu0 0.0
        %587 = vmatpush1.msra.mxu0 0.0
        %588 = vmatprep.subr.mxu0 0.0
        %589 = vmatpush1.msra.mxu0 0.0
        %590 = vmatprep.subr.mxu0 0.0
        %591 = vmatpush1.msra.mxu0 0.0
        %592 = vmatprep.subr.mxu0 0.0
        %593 = vmatpush1.msra.mxu0 0.0
        %594 = vmatprep.subr.mxu0 0.0
        %595 = vmatpush1.msra.mxu0 0.0
        %596 = vmatprep.subr.mxu0 0.0
        %597 = vmatpush1.msra.mxu0 0.0
        %598 = vmatprep.subr.mxu0 0.0
        %599 = vmatpush1.msra.mxu0 0.0
        %600 = vmatprep.subr.mxu0 0.0
        %601 = vmatpush1.msra.mxu0 0.0
        %602 = vmatprep.subr.mxu0 0.0
        %603 = vmatpush1.msra.mxu0 0.0
        %604 = vmatprep.subr.mxu0 0.0
        %605 = vmatpush1.msra.mxu0 0.0
        %606 = vmatprep.subr.mxu0 0.0
        %607 = vmatpush1.msra.mxu0 0.0
        %608 = vmatprep.subr.mxu0 0.0
        %609 = vmatpush1.msra.mxu0 0.0
        %610 = vmatprep.subr.mxu0 0.0
        %611 = vmatpush1.msra.mxu0 0.0
        %612 = vmatprep.subr.mxu0 0.0
        %613 = vmatpush1.msra.mxu0 0.0
        %614 = vmatprep.subr.mxu0 0.0
        %615 = vmatpush1.msra.mxu0 0.0
        %616 = vmatprep.subr.mxu0 0.0
        %617 = vmatpush1.msra.mxu0 0.0
        %618 = vmatprep.subr.mxu0 0.0
        %619 = vmatpush1.msra.mxu0 0.0
        %620 = vmatprep.subr.mxu0 0.0
        %621 = vmatpush1.msra.mxu0 0.0
        %622 = vmatprep.subr.mxu0 0.0
        %623 = vmatpush1.msra.mxu0 0.0
        %624 = vmatprep.subr.mxu0 0.0
        %625 = vmatpush1.msra.mxu0 0.0
        %626 = vmatprep.subr.mxu0 0.0
        %627 = vmatpush1.msra.mxu0 0.0
        %628 = vmatprep.mubr.f32.mxu0 0.0
        %629 = vmatmul.mubr.f32.gmra.mrb[0].mxu0 %v475
        %v630 = vpop.f32.mrb[0].mxu0
        %v631 = vadd.f32 0.0, %v630
        %v632 = vpop.f32.mrb[0].mxu0
        %633 = vmatprep.mubr.f32.mxu0 0.0
        %634 = vmatmul.mubr.f32.gmra.mrb[0].mxu0 %v478
        %v635 = vpop.f32.mrb[0].mxu0
        %v636 = vadd.f32 0.0, %v635
        %v637 = vpop.f32.mrb[0].mxu0
        %v638 = vadd.f32 0.0, %v637
        %639 = vmatprep.mubr.f32.mxu0 0.0
        %640 = vmatmul.mubr.f32.gmra.mrb[0].mxu0 %v481
        %v641 = vpop.f32.mrb[0].mxu0
        %v642 = vpop.f32.mrb[0].mxu0
        %v643 = vadd.f32 0.0, %v642
        %644 = vdwg.mxu0
        %645 = vmatprep.subr.mxu0 0.0
        %646 = vmatpush1.msra.mxu0 %v437
        %647 = vmatprep.subr.mxu0 0.0
        %648 = vmatpush1.msra.mxu0 %v442
        %649 = vmatprep.subr.mxu0 0.0
        %650 = vmatpush1.msra.mxu0 %v447
        %651 = vmatprep.subr.mxu0 0.0
        %652 = vmatpush1.msra.mxu0 %v452
        %653 = vmatprep.subr.mxu0 0.0
        %654 = vmatpush1.msra.mxu0 %v457
        %655 = vmatprep.subr.mxu0 0.0
        %656 = vmatpush1.msra.mxu0 %v462
        %657 = vmatprep.subr.mxu0 0.0
        %658 = vmatpush1.msra.mxu0 %v467
        %659 = vmatprep.subr.mxu0 0.0
        %660 = vmatpush1.msra.mxu0 %v472
        %661 = vmatprep.subr.mxu0 0.0
        %662 = vmatpush1.msra.mxu0 0.0
        %663 = vmatprep.subr.mxu0 0.0
        %664 = vmatpush1.msra.mxu0 0.0
        %665 = vmatprep.subr.mxu0 0.0
        %666 = vmatpush1.msra.mxu0 0.0
        %667 = vmatprep.subr.mxu0 0.0
        %668 = vmatpush1.msra.mxu0 0.0
        %669 = vmatprep.subr.mxu0 0.0
        %670 = vmatpush1.msra.mxu0 0.0
        %671 = vmatprep.subr.mxu0 0.0
        %672 = vmatpush1.msra.mxu0 0.0
        %673 = vmatprep.subr.mxu0 0.0
        %674 = vmatpush1.msra.mxu0 0.0
        %675 = vmatprep.subr.mxu0 0.0
        %676 = vmatpush1.msra.mxu0 0.0
        %677 = vmatprep.subr.mxu0 0.0
        %678 = vmatpush1.msra.mxu0 0.0
        %679 = vmatprep.subr.mxu0 0.0
        %680 = vmatpush1.msra.mxu0 0.0
        %681 = vmatprep.subr.mxu0 0.0
        %682 = vmatpush1.msra.mxu0 0.0
        %683 = vmatprep.subr.mxu0 0.0
        %684 = vmatpush1.msra.mxu0 0.0
        %685 = vmatprep.subr.mxu0 0.0
        %686 = vmatpush1.msra.mxu0 0.0
        %687 = vmatprep.subr.mxu0 0.0
        %688 = vmatpush1.msra.mxu0 0.0
        %689 = vmatprep.subr.mxu0 0.0
        %690 = vmatpush1.msra.mxu0 0.0
        %691 = vmatprep.subr.mxu0 0.0
        %692 = vmatpush1.msra.mxu0 0.0
        %693 = vmatprep.subr.mxu0 0.0
        %694 = vmatpush1.msra.mxu0 0.0
        %695 = vmatprep.subr.mxu0 0.0
        %696 = vmatpush1.msra.mxu0 0.0
        %697 = vmatprep.subr.mxu0 0.0
        %698 = vmatpush1.msra.mxu0 0.0
        %699 = vmatprep.subr.mxu0 0.0
        %700 = vmatpush1.msra.mxu0 0.0
        %701 = vmatprep.subr.mxu0 0.0
        %702 = vmatpush1.msra.mxu0 0.0
        %703 = vmatprep.subr.mxu0 0.0
        %704 = vmatpush1.msra.mxu0 0.0
        %705 = vmatprep.subr.mxu0 0.0
        %706 = vmatpush1.msra.mxu0 0.0
        %707 = vmatprep.subr.mxu0 0.0
        %708 = vmatpush1.msra.mxu0 0.0
        %709 = vmatprep.mubr.f32.mxu0 0.0
        %710 = vmatmul.mubr.f32.gmra.mrb[0].mxu0 %v475
        %v711 = vpop.f32.mrb[0].mxu0
        %v712 = vpop.f32.mrb[0].mxu0
        %713 = vmatprep.mubr.f32.mxu0 0.0
        %714 = vmatmul.mubr.f32.gmra.mrb[0].mxu0 %v478
        %v715 = vpop.f32.mrb[0].mxu0
        %v716 = vadd.f32 0.0, %v715
        %v717 = vpop.f32.mrb[0].mxu0
        %718 = vmatprep.mubr.f32.mxu0 0.0
        %719 = vmatmul.mubr.f32.gmra.mrb[0].mxu0 %v481
        %v720 = vpop.f32.mrb[0].mxu0
        %v721 = vadd.f32 0.0, %v720
        %v722 = vpop.f32.mrb[0].mxu0
        %723 = vdwg.mxu0
        %vm726 = vcmask 1046528
        %v727 = vrot.slane %v550, 1
        %v728 = vrot.slane %v556, 1
        %v729 = vsel %vm726, %v727, %v728
        %730 = vrot.lane.b32.xlu0 %v729, 64
        %v731 = vpop.permute.xlu0 %730
        %v733 = vadd.f32 %v550, %v731
        %vm736 = vcmask 1045504
        %v737 = vrot.slane %v552, 2
        %v738 = vrot.slane %v558, 2
        %v739 = vsel %vm736, %v737, %v738
        %v741 = vadd.f32 %v733, %v739
        %vm742 = vcmask 1043456
        %v743 = vrot.slane %v552, 4
        %v744 = vrot.slane %v558, 4
        %v745 = vsel %vm742, %v743, %v744
        %746 = vrot.lane.b32.xlu0 %v745, 64
        %v747 = vpop.permute.xlu0 %746
        %v749 = vadd.f32 %v741, %v747
        %vm752 = vcmask 1042432
        %v753 = vrot.slane %v631, 5
        %v754 = vrot.slane %v636, 5
        %v755 = vsel %vm752, %v753, %v754
        %v757 = vadd.f32 %v749, %v755
        %vm758 = vcmask 1041408
        %v759 = vrot.slane %v631, 6
        %v760 = vrot.slane %v636, 6
        %v761 = vsel %vm758, %v759, %v760
        %762 = vrot.lane.b32.xlu0 %v761, 64
        %v763 = vpop.permute.xlu0 %762
        %v765 = vadd.f32 %v757, %v763
        %v766 = vadd.f32 %v765, %v638
        %v769 = vrot.slane %v638, 1
        %v770 = vrot.slane %v643, 1
        %v771 = vsel %vm726, %v769, %v770
        %772 = vrot.lane.b32.xlu0 %v771, 64
        %v773 = vpop.permute.xlu0 %772
        %v775 = vadd.f32 %v766, %v773
        %v778 = vrot.slane %v716, 2
        %v779 = vrot.slane %v721, 2
        %v780 = vsel %vm736, %v778, %v779
        %v782 = vadd.f32 %v775, %v780
        %v783 = vlaneseq
        %v784 = vshrl.u32 %v783, 7
        %v785 = vsub.s32 0, %v784
        %v786 = vrot.slane %v473, %v785
        %v787 = vadd.f32 %v782, %v786
        %s788 = sld [smem:[#allocation3 + $0x1]]
        %vm789 = vcmp.ge.f32.partialorder %v787, 0.0
        %v790 = vstv %s788
        %v791 = vmul.f32 %v790, %v787
        %v792 = vsel %vm789, %v787, %v791
        %794 = vset.pattern.permute.xlu0 0
        %795 = vperm.xlu0 %794, %v294
        %v796 = vpop.permute.xlu0 %795
        %v798 = vmul.f32 %v792, %v796
        %799 = vst.msk [vmem:[#allocation2 + $0x5] sm:$0xff] %vm428, %v798
        %v800 = vld [vmem:[#allocation2] sm:$0xff]
        %v801 = vld [vmem:[#allocation2 + $0x8] sm:$0xff]
        %v802 = vld [vmem:[#allocation2 + $0x10] sm:$0x3]
        %s803 = scalar_lea.vmem %s3, 320
        %v804 = vld [vmem:[%s803] sm:$0xff]
        %v805 = vld [vmem:[%s803 + $0x8] sm:$0xff]
        %v806 = vld [vmem:[%s803 + $0x10] sm:$0xff]
        %v807 = vld [vmem:[%s803 + $0x18] sm:$0xff]
        %v808 = vld [vmem:[%s803 + $0x20] sm:$0xff]
        %v809 = vld [vmem:[%s803 + $0x28] sm:$0xff]
        %v810 = vld [vmem:[%s803 + $0x30] sm:$0xff]
        %v811 = vld [vmem:[%s803 + $0x38] sm:$0xff]
        %v812 = vld [vmem:[%s803 + $0x40] sm:$0xff]
        %v813 = vld [vmem:[%s803 + $0x48] sm:$0xff]
        %v814 = vld [vmem:[%s803 + $0x50] sm:$0xff]
        %v815 = vld [vmem:[%s803 + $0x58] sm:$0xff]
        %v816 = vld [vmem:[%s803 + $0x60] sm:$0xff]
        %v817 = vld [vmem:[%s803 + $0x68] sm:$0xff]
        %v818 = vld [vmem:[%s803 + $0x70] sm:$0xff]
        %v819 = vld [vmem:[%s803 + $0x78] sm:$0xff]
        %v820 = vld [vmem:[%s803 + $0x80] sm:$0xff]
        %v821 = vld [vmem:[%s803 + $0x88] sm:$0xff]
        %v822 = vld [vmem:[%s803 + $0x90] sm:$0xff]
        %v823 = vld [vmem:[%s803 + $0x98] sm:$0xff]
        %v824 = vld [vmem:[%s803 + $0xa0] sm:$0xff]
        %v825 = vld [vmem:[%s803 + $0xa8] sm:$0xff]
        %v826 = vld [vmem:[%s803 + $0xb0] sm:$0xff]
        %v827 = vld [vmem:[%s803 + $0xb8] sm:$0xff]
        %v828 = vld [vmem:[%s803 + $0xc0] sm:$0xff]
        %v829 = vld [vmem:[%s803 + $0xc8] sm:$0xff]
        %v830 = vld [vmem:[%s803 + $0xd0] sm:$0xff]
        %v831 = vld [vmem:[%s803 + $0xd8] sm:$0xff]
        %v832 = vld [vmem:[%s803 + $0xe0] sm:$0xff]
        %v833 = vld [vmem:[%s803 + $0xe8] sm:$0xff]
        %v834 = vld [vmem:[%s803 + $0xf0] sm:$0xff]
        %v835 = vld [vmem:[%s803 + $0xf8] sm:$0xff]
        %v836 = vld [vmem:[%s803 + $0x100] sm:$0xff]
        %v837 = vld [vmem:[%s803 + $0x108] sm:$0xff]
        %v838 = vld [vmem:[%s803 + $0x110] sm:$0xff]
        %v839 = vld [vmem:[%s803 + $0x118] sm:$0xff]
        %v840 = vld [vmem:[%s803 + $0x120] sm:$0xff]
        %v841 = vld [vmem:[%s803 + $0x128] sm:$0xff]
        %v842 = vld [vmem:[%s803 + $0x130] sm:$0xff]
        %v843 = vld [vmem:[%s803 + $0x138] sm:$0xff]
        %v844 = vld [vmem:[%s4 + $0x2] sm:$0x1]
        %v846 = vsel %vm428, %v800, 0
        %v849 = vsel %vm428, %v801, 0
        %v852 = vsel %vm428, %v802, 0
        %854 = vmatprep.subr.mxu0 %v805
        %855 = vmatpush1.msra.mxu0 %v804
        %856 = vmatprep.subr.mxu0 %v810
        %857 = vmatpush1.msra.mxu0 %v809
        %858 = vmatprep.subr.mxu0 %v815
        %859 = vmatpush1.msra.mxu0 %v814
        %860 = vmatprep.subr.mxu0 %v820
        %861 = vmatpush1.msra.mxu0 %v819
        %862 = vmatprep.subr.mxu0 %v825
        %863 = vmatpush1.msra.mxu0 %v824
        %864 = vmatprep.subr.mxu0 %v830
        %865 = vmatpush1.msra.mxu0 %v829
        %866 = vmatprep.subr.mxu0 %v835
        %867 = vmatpush1.msra.mxu0 %v834
        %868 = vmatprep.subr.mxu0 %v840
        %869 = vmatpush1.msra.mxu0 %v839
        %870 = vmatprep.subr.mxu0 0.0
        %871 = vmatpush1.msra.mxu0 0.0
        %872 = vmatprep.subr.mxu0 0.0
        %873 = vmatpush1.msra.mxu0 0.0
        %874 = vmatprep.subr.mxu0 0.0
        %875 = vmatpush1.msra.mxu0 0.0
        %876 = vmatprep.subr.mxu0 0.0
        %877 = vmatpush1.msra.mxu0 0.0
        %878 = vmatprep.subr.mxu0 0.0
        %879 = vmatpush1.msra.mxu0 0.0
        %880 = vmatprep.subr.mxu0 0.0
        %881 = vmatpush1.msra.mxu0 0.0
        %882 = vmatprep.subr.mxu0 0.0
        %883 = vmatpush1.msra.mxu0 0.0
        %884 = vmatprep.subr.mxu0 0.0
        %885 = vmatpush1.msra.mxu0 0.0
        %886 = vmatprep.subr.mxu0 0.0
        %887 = vmatpush1.msra.mxu0 0.0
        %888 = vmatprep.subr.mxu0 0.0
        %889 = vmatpush1.msra.mxu0 0.0
        %890 = vmatprep.subr.mxu0 0.0
        %891 = vmatpush1.msra.mxu0 0.0
        %892 = vmatprep.subr.mxu0 0.0
        %893 = vmatpush1.msra.mxu0 0.0
        %894 = vmatprep.subr.mxu0 0.0
        %895 = vmatpush1.msra.mxu0 0.0
        %896 = vmatprep.subr.mxu0 0.0
        %897 = vmatpush1.msra.mxu0 0.0
        %898 = vmatprep.subr.mxu0 0.0
        %899 = vmatpush1.msra.mxu0 0.0
        %900 = vmatprep.subr.mxu0 0.0
        %901 = vmatpush1.msra.mxu0 0.0
        %902 = vmatprep.subr.mxu0 0.0
        %903 = vmatpush1.msra.mxu0 0.0
        %904 = vmatprep.subr.mxu0 0.0
        %905 = vmatpush1.msra.mxu0 0.0
        %906 = vmatprep.subr.mxu0 0.0
        %907 = vmatpush1.msra.mxu0 0.0
        %908 = vmatprep.subr.mxu0 0.0
        %909 = vmatpush1.msra.mxu0 0.0
        %910 = vmatprep.subr.mxu0 0.0
        %911 = vmatpush1.msra.mxu0 0.0
        %912 = vmatprep.subr.mxu0 0.0
        %913 = vmatpush1.msra.mxu0 0.0
        %914 = vmatprep.subr.mxu0 0.0
        %915 = vmatpush1.msra.mxu0 0.0
        %916 = vmatprep.subr.mxu0 0.0
        %917 = vmatpush1.msra.mxu0 0.0
        %918 = vmatprep.mubr.f32.mxu0 0.0
        %919 = vmatmul.mubr.f32.gmra.mrb[0].mxu0 %v846
        %v920 = vpop.f32.mrb[0].mxu0
        %v921 = vadd.f32 0.0, %v920
        %v922 = vpop.f32.mrb[0].mxu0
        %v923 = vadd.f32 0.0, %v922
        %924 = vmatprep.mubr.f32.mxu0 0.0
        %925 = vmatmul.mubr.f32.gmra.mrb[0].mxu0 %v849
        %v926 = vpop.f32.mrb[0].mxu0
        %v927 = vadd.f32 0.0, %v926
        %v928 = vpop.f32.mrb[0].mxu0
        %v929 = vadd.f32 0.0, %v928
        %930 = vmatprep.mubr.f32.mxu0 0.0
        %931 = vmatmul.mubr.f32.gmra.mrb[0].mxu0 %v852
        %v932 = vpop.f32.mrb[0].mxu0
        %v933 = vpop.f32.mrb[0].mxu0
        %934 = vdwg.mxu0
        %935 = vmatprep.subr.mxu0 %v807
        %936 = vmatpush1.msra.mxu0 %v806
        %937 = vmatprep.subr.mxu0 %v812
        %938 = vmatpush1.msra.mxu0 %v811
        %939 = vmatprep.subr.mxu0 %v817
        %940 = vmatpush1.msra.mxu0 %v816
        %941 = vmatprep.subr.mxu0 %v822
        %942 = vmatpush1.msra.mxu0 %v821
        %943 = vmatprep.subr.mxu0 %v827
        %944 = vmatpush1.msra.mxu0 %v826
        %945 = vmatprep.subr.mxu0 %v832
        %946 = vmatpush1.msra.mxu0 %v831
        %947 = vmatprep.subr.mxu0 %v837
        %948 = vmatpush1.msra.mxu0 %v836
        %949 = vmatprep.subr.mxu0 %v842
        %950 = vmatpush1.msra.mxu0 %v841
        %951 = vmatprep.subr.mxu0 0.0
        %952 = vmatpush1.msra.mxu0 0.0
        %953 = vmatprep.subr.mxu0 0.0
        %954 = vmatpush1.msra.mxu0 0.0
        %955 = vmatprep.subr.mxu0 0.0
        %956 = vmatpush1.msra.mxu0 0.0
        %957 = vmatprep.subr.mxu0 0.0
        %958 = vmatpush1.msra.mxu0 0.0
        %959 = vmatprep.subr.mxu0 0.0
        %960 = vmatpush1.msra.mxu0 0.0
        %961 = vmatprep.subr.mxu0 0.0
        %962 = vmatpush1.msra.mxu0 0.0
        %963 = vmatprep.subr.mxu0 0.0
        %964 = vmatpush1.msra.mxu0 0.0
        %965 = vmatprep.subr.mxu0 0.0
        %966 = vmatpush1.msra.mxu0 0.0
        %967 = vmatprep.subr.mxu0 0.0
        %968 = vmatpush1.msra.mxu0 0.0
        %969 = vmatprep.subr.mxu0 0.0
        %970 = vmatpush1.msra.mxu0 0.0
        %971 = vmatprep.subr.mxu0 0.0
        %972 = vmatpush1.msra.mxu0 0.0
        %973 = vmatprep.subr.mxu0 0.0
        %974 = vmatpush1.msra.mxu0 0.0
        %975 = vmatprep.subr.mxu0 0.0
        %976 = vmatpush1.msra.mxu0 0.0
        %977 = vmatprep.subr.mxu0 0.0
        %978 = vmatpush1.msra.mxu0 0.0
        %979 = vmatprep.subr.mxu0 0.0
        %980 = vmatpush1.msra.mxu0 0.0
        %981 = vmatprep.subr.mxu0 0.0
        %982 = vmatpush1.msra.mxu0 0.0
        %983 = vmatprep.subr.mxu0 0.0
        %984 = vmatpush1.msra.mxu0 0.0
        %985 = vmatprep.subr.mxu0 0.0
        %986 = vmatpush1.msra.mxu0 0.0
        %987 = vmatprep.subr.mxu0 0.0
        %988 = vmatpush1.msra.mxu0 0.0
        %989 = vmatprep.subr.mxu0 0.0
        %990 = vmatpush1.msra.mxu0 0.0
        %991 = vmatprep.subr.mxu0 0.0
        %992 = vmatpush1.msra.mxu0 0.0
        %993 = vmatprep.subr.mxu0 0.0
        %994 = vmatpush1.msra.mxu0 0.0
        %995 = vmatprep.subr.mxu0 0.0
        %996 = vmatpush1.msra.mxu0 0.0
        %997 = vmatprep.subr.mxu0 0.0
        %998 = vmatpush1.msra.mxu0 0.0
        %999 = vmatprep.mubr.f32.mxu0 0.0
        %1000 = vmatmul.mubr.f32.gmra.mrb[0].mxu0 %v846
        %v1001 = vpop.f32.mrb[0].mxu0
        %v1002 = vadd.f32 0.0, %v1001
        %v1003 = vpop.f32.mrb[0].mxu0
        %1004 = vmatprep.mubr.f32.mxu0 0.0
        %1005 = vmatmul.mubr.f32.gmra.mrb[0].mxu0 %v849
        %v1006 = vpop.f32.mrb[0].mxu0
        %v1007 = vadd.f32 0.0, %v1006
        %v1008 = vpop.f32.mrb[0].mxu0
        %v1009 = vadd.f32 0.0, %v1008
        %1010 = vmatprep.mubr.f32.mxu0 0.0
        %1011 = vmatmul.mubr.f32.gmra.mrb[0].mxu0 %v852
        %v1012 = vpop.f32.mrb[0].mxu0
        %v1013 = vpop.f32.mrb[0].mxu0
        %v1014 = vadd.f32 0.0, %v1013
        %1015 = vdwg.mxu0
        %1016 = vmatprep.subr.mxu0 0.0
        %1017 = vmatpush1.msra.mxu0 %v808
        %1018 = vmatprep.subr.mxu0 0.0
        %1019 = vmatpush1.msra.mxu0 %v813
        %1020 = vmatprep.subr.mxu0 0.0
        %1021 = vmatpush1.msra.mxu0 %v818
        %1022 = vmatprep.subr.mxu0 0.0
        %1023 = vmatpush1.msra.mxu0 %v823
        %1024 = vmatprep.subr.mxu0 0.0
        %1025 = vmatpush1.msra.mxu0 %v828
        %1026 = vmatprep.subr.mxu0 0.0
        %1027 = vmatpush1.msra.mxu0 %v833
        %1028 = vmatprep.subr.mxu0 0.0
        %1029 = vmatpush1.msra.mxu0 %v838
        %1030 = vmatprep.subr.mxu0 0.0
        %1031 = vmatpush1.msra.mxu0 %v843
        %1032 = vmatprep.subr.mxu0 0.0
        %1033 = vmatpush1.msra.mxu0 0.0
        %1034 = vmatprep.subr.mxu0 0.0
        %1035 = vmatpush1.msra.mxu0 0.0
        %1036 = vmatprep.subr.mxu0 0.0
        %1037 = vmatpush1.msra.mxu0 0.0
        %1038 = vmatprep.subr.mxu0 0.0
        %1039 = vmatpush1.msra.mxu0 0.0
        %1040 = vmatprep.subr.mxu0 0.0
        %1041 = vmatpush1.msra.mxu0 0.0
        %1042 = vmatprep.subr.mxu0 0.0
        %1043 = vmatpush1.msra.mxu0 0.0
        %1044 = vmatprep.subr.mxu0 0.0
        %1045 = vmatpush1.msra.mxu0 0.0
        %1046 = vmatprep.subr.mxu0 0.0
        %1047 = vmatpush1.msra.mxu0 0.0
        %1048 = vmatprep.subr.mxu0 0.0
        %1049 = vmatpush1.msra.mxu0 0.0
        %1050 = vmatprep.subr.mxu0 0.0
        %1051 = vmatpush1.msra.mxu0 0.0
        %1052 = vmatprep.subr.mxu0 0.0
        %1053 = vmatpush1.msra.mxu0 0.0
        %1054 = vmatprep.subr.mxu0 0.0
        %1055 = vmatpush1.msra.mxu0 0.0
        %1056 = vmatprep.subr.mxu0 0.0
        %1057 = vmatpush1.msra.mxu0 0.0
        %1058 = vmatprep.subr.mxu0 0.0
        %1059 = vmatpush1.msra.mxu0 0.0
        %1060 = vmatprep.subr.mxu0 0.0
        %1061 = vmatpush1.msra.mxu0 0.0
        %1062 = vmatprep.subr.mxu0 0.0
        %1063 = vmatpush1.msra.mxu0 0.0
        %1064 = vmatprep.subr.mxu0 0.0
        %1065 = vmatpush1.msra.mxu0 0.0
        %1066 = vmatprep.subr.mxu0 0.0
        %1067 = vmatpush1.msra.mxu0 0.0
        %1068 = vmatprep.subr.mxu0 0.0
        %1069 = vmatpush1.msra.mxu0 0.0
        %1070 = vmatprep.subr.mxu0 0.0
        %1071 = vmatpush1.msra.mxu0 0.0
        %1072 = vmatprep.subr.mxu0 0.0
        %1073 = vmatpush1.msra.mxu0 0.0
        %1074 = vmatprep.subr.mxu0 0.0
        %1075 = vmatpush1.msra.mxu0 0.0
        %1076 = vmatprep.subr.mxu0 0.0
        %1077 = vmatpush1.msra.mxu0 0.0
        %1078 = vmatprep.subr.mxu0 0.0
        %1079 = vmatpush1.msra.mxu0 0.0
        %1080 = vmatprep.mubr.f32.mxu0 0.0
        %1081 = vmatmul.mubr.f32.gmra.mrb[0].mxu0 %v846
        %v1082 = vpop.f32.mrb[0].mxu0
        %v1083 = vpop.f32.mrb[0].mxu0
        %1084 = vmatprep.mubr.f32.mxu0 0.0
        %1085 = vmatmul.mubr.f32.gmra.mrb[0].mxu0 %v849
        %v1086 = vpop.f32.mrb[0].mxu0
        %v1087 = vadd.f32 0.0, %v1086
        %v1088 = vpop.f32.mrb[0].mxu0
        %1089 = vmatprep.mubr.f32.mxu0 0.0
        %1090 = vmatmul.mubr.f32.gmra.mrb[0].mxu0 %v852
        %v1091 = vpop.f32.mrb[0].mxu0
        %v1092 = vadd.f32 0.0, %v1091
        %v1093 = vpop.f32.mrb[0].mxu0
        %1094 = vdwg.mxu0
        %v1097 = vrot.slane %v921, 1
        %v1098 = vrot.slane %v927, 1
        %v1099 = vsel %vm726, %v1097, %v1098
        %1100 = vrot.lane.b32.xlu0 %v1099, 64
        %v1101 = vpop.permute.xlu0 %1100
        %v1103 = vadd.f32 %v921, %v1101
        %v1106 = vrot.slane %v923, 2
        %v1107 = vrot.slane %v929, 2
        %v1108 = vsel %vm736, %v1106, %v1107
        %v1110 = vadd.f32 %v1103, %v1108
        %v1111 = vrot.slane %v923, 4
        %v1112 = vrot.slane %v929, 4
        %v1113 = vsel %vm742, %v1111, %v1112
        %1114 = vrot.lane.b32.xlu0 %v1113, 64
        %v1115 = vpop.permute.xlu0 %1114
        %v1117 = vadd.f32 %v1110, %v1115
        %v1120 = vrot.slane %v1002, 5
        %v1121 = vrot.slane %v1007, 5
        %v1122 = vsel %vm752, %v1120, %v1121
        %v1124 = vadd.f32 %v1117, %v1122
        %v1125 = vrot.slane %v1002, 6
        %v1126 = vrot.slane %v1007, 6
        %v1127 = vsel %vm758, %v1125, %v1126
        %1128 = vrot.lane.b32.xlu0 %v1127, 64
        %v1129 = vpop.permute.xlu0 %1128
        %v1131 = vadd.f32 %v1124, %v1129
        %v1132 = vadd.f32 %v1131, %v1009
        %v1135 = vrot.slane %v1009, 1
        %v1136 = vrot.slane %v1014, 1
        %v1137 = vsel %vm726, %v1135, %v1136
        %1138 = vrot.lane.b32.xlu0 %v1137, 64
        %v1139 = vpop.permute.xlu0 %1138
        %v1141 = vadd.f32 %v1132, %v1139
        %v1144 = vrot.slane %v1087, 2
        %v1145 = vrot.slane %v1092, 2
        %v1146 = vsel %vm736, %v1144, %v1145
        %v1148 = vadd.f32 %v1141, %v1146
        %v1149 = vlaneseq
        %v1150 = vshrl.u32 %v1149, 7
        %v1151 = vsub.s32 0, %v1150
        %v1152 = vrot.slane %v844, %v1151
        %v1153 = vadd.f32 %v1148, %v1152
        %v1154 = vrot.slane %v425, 5
        %v1155 = vrot.slane %v426, 5
        %v1156 = vsel %vm752, %v1154, %v1155
        %v1158 = vadd.f32 %v1153, %v1156
        %s1159 = sld [smem:[#allocation3 + $0x2]]
        %vm1160 = vcmp.ge.f32.partialorder %v1158, 0.0
        %v1161 = vstv %s1159
        %v1162 = vmul.f32 %v1161, %v1158
        %v1163 = vsel %vm1160, %v1158, %v1162
        %v1164 = vmul.f32 %v1163, %v796
        %1165 = vst.msk [vmem:[#allocation2 + $0x5] sm:$0xff] %vm428, %v1164
        %v1166 = vld [vmem:[#allocation2] sm:$0xff]
        %v1167 = vld [vmem:[#allocation2 + $0x8] sm:$0xff]
        %v1168 = vld [vmem:[#allocation2 + $0x10] sm:$0x3]
        %s1169 = scalar_lea.vmem %s3, 640
        %v1170 = vld [vmem:[%s1169] sm:$0xff]
        %v1171 = vld [vmem:[%s1169 + $0x8] sm:$0xff]
        %v1172 = vld [vmem:[%s1169 + $0x10] sm:$0xff]
        %v1173 = vld [vmem:[%s1169 + $0x18] sm:$0xff]
        %v1174 = vld [vmem:[%s1169 + $0x20] sm:$0xff]
        %v1175 = vld [vmem:[%s1169 + $0x28] sm:$0xff]
        %v1176 = vld [vmem:[%s1169 + $0x30] sm:$0xff]
        %v1177 = vld [vmem:[%s1169 + $0x38] sm:$0xff]
        %v1178 = vld [vmem:[%s1169 + $0x40] sm:$0xff]
        %v1179 = vld [vmem:[%s1169 + $0x48] sm:$0xff]
        %v1180 = vld [vmem:[%s1169 + $0x50] sm:$0xff]
        %v1181 = vld [vmem:[%s1169 + $0x58] sm:$0xff]
        %v1182 = vld [vmem:[%s1169 + $0x60] sm:$0xff]
        %v1183 = vld [vmem:[%s1169 + $0x68] sm:$0xff]
        %v1184 = vld [vmem:[%s1169 + $0x70] sm:$0xff]
        %v1185 = vld [vmem:[%s1169 + $0x78] sm:$0xff]
        %v1186 = vld [vmem:[%s1169 + $0x80] sm:$0xff]
        %v1187 = vld [vmem:[%s1169 + $0x88] sm:$0xff]
        %v1188 = vld [vmem:[%s1169 + $0x90] sm:$0xff]
        %v1189 = vld [vmem:[%s1169 + $0x98] sm:$0xff]
        %v1190 = vld [vmem:[%s1169 + $0xa0] sm:$0xff]
        %v1191 = vld [vmem:[%s1169 + $0xa8] sm:$0xff]
        %v1192 = vld [vmem:[%s1169 + $0xb0] sm:$0xff]
        %v1193 = vld [vmem:[%s1169 + $0xb8] sm:$0xff]
        %v1194 = vld [vmem:[%s1169 + $0xc0] sm:$0xff]
        %v1195 = vld [vmem:[%s1169 + $0xc8] sm:$0xff]
        %v1196 = vld [vmem:[%s1169 + $0xd0] sm:$0xff]
        %v1197 = vld [vmem:[%s1169 + $0xd8] sm:$0xff]
        %v1198 = vld [vmem:[%s1169 + $0xe0] sm:$0xff]
        %v1199 = vld [vmem:[%s1169 + $0xe8] sm:$0xff]
        %v1200 = vld [vmem:[%s1169 + $0xf0] sm:$0xff]
        %v1201 = vld [vmem:[%s1169 + $0xf8] sm:$0xff]
        %v1202 = vld [vmem:[%s1169 + $0x100] sm:$0xff]
        %v1203 = vld [vmem:[%s1169 + $0x108] sm:$0xff]
        %v1204 = vld [vmem:[%s1169 + $0x110] sm:$0xff]
        %v1205 = vld [vmem:[%s1169 + $0x118] sm:$0xff]
        %v1206 = vld [vmem:[%s1169 + $0x120] sm:$0xff]
        %v1207 = vld [vmem:[%s1169 + $0x128] sm:$0xff]
        %v1208 = vld [vmem:[%s1169 + $0x130] sm:$0xff]
        %v1209 = vld [vmem:[%s1169 + $0x138] sm:$0xff]
        %v1210 = vld [vmem:[%s4 + $0x3] sm:$0x1]
        %v1212 = vsel %vm428, %v1166, 0
        %v1215 = vsel %vm428, %v1167, 0
        %v1218 = vsel %vm428, %v1168, 0
        %1220 = vmatprep.subr.mxu0 %v1171
        %1221 = vmatpush1.msra.mxu0 %v1170
        %1222 = vmatprep.subr.mxu0 %v1176
        %1223 = vmatpush1.msra.mxu0 %v1175
        %1224 = vmatprep.subr.mxu0 %v1181
        %1225 = vmatpush1.msra.mxu0 %v1180
        %1226 = vmatprep.subr.mxu0 %v1186
        %1227 = vmatpush1.msra.mxu0 %v1185
        %1228 = vmatprep.subr.mxu0 %v1191
        %1229 = vmatpush1.msra.mxu0 %v1190
        %1230 = vmatprep.subr.mxu0 %v1196
        %1231 = vmatpush1.msra.mxu0 %v1195
        %1232 = vmatprep.subr.mxu0 %v1201
        %1233 = vmatpush1.msra.mxu0 %v1200
        %1234 = vmatprep.subr.mxu0 %v1206
        %1235 = vmatpush1.msra.mxu0 %v1205
        %1236 = vmatprep.subr.mxu0 0.0
        %1237 = vmatpush1.msra.mxu0 0.0
        %1238 = vmatprep.subr.mxu0 0.0
        %1239 = vmatpush1.msra.mxu0 0.0
        %1240 = vmatprep.subr.mxu0 0.0
        %1241 = vmatpush1.msra.mxu0 0.0
        %1242 = vmatprep.subr.mxu0 0.0
        %1243 = vmatpush1.msra.mxu0 0.0
        %1244 = vmatprep.subr.mxu0 0.0
        %1245 = vmatpush1.msra.mxu0 0.0
        %1246 = vmatprep.subr.mxu0 0.0
        %1247 = vmatpush1.msra.mxu0 0.0
        %1248 = vmatprep.subr.mxu0 0.0
        %1249 = vmatpush1.msra.mxu0 0.0
        %1250 = vmatprep.subr.mxu0 0.0
        %1251 = vmatpush1.msra.mxu0 0.0
        %1252 = vmatprep.subr.mxu0 0.0
        %1253 = vmatpush1.msra.mxu0 0.0
        %1254 = vmatprep.subr.mxu0 0.0
        %1255 = vmatpush1.msra.mxu0 0.0
        %1256 = vmatprep.subr.mxu0 0.0
        %1257 = vmatpush1.msra.mxu0 0.0
        %1258 = vmatprep.subr.mxu0 0.0
        %1259 = vmatpush1.msra.mxu0 0.0
        %1260 = vmatprep.subr.mxu0 0.0
        %1261 = vmatpush1.msra.mxu0 0.0
        %1262 = vmatprep.subr.mxu0 0.0
        %1263 = vmatpush1.msra.mxu0 0.0
        %1264 = vmatprep.subr.mxu0 0.0
        %1265 = vmatpush1.msra.mxu0 0.0
        %1266 = vmatprep.subr.mxu0 0.0
        %1267 = vmatpush1.msra.mxu0 0.0
        %1268 = vmatprep.subr.mxu0 0.0
        %1269 = vmatpush1.msra.mxu0 0.0
        %1270 = vmatprep.subr.mxu0 0.0
        %1271 = vmatpush1.msra.mxu0 0.0
        %1272 = vmatprep.subr.mxu0 0.0
        %1273 = vmatpush1.msra.mxu0 0.0
        %1274 = vmatprep.subr.mxu0 0.0
        %1275 = vmatpush1.msra.mxu0 0.0
        %1276 = vmatprep.subr.mxu0 0.0
        %1277 = vmatpush1.msra.mxu0 0.0
        %1278 = vmatprep.subr.mxu0 0.0
        %1279 = vmatpush1.msra.mxu0 0.0
        %1280 = vmatprep.subr.mxu0 0.0
        %1281 = vmatpush1.msra.mxu0 0.0
        %1282 = vmatprep.subr.mxu0 0.0
        %1283 = vmatpush1.msra.mxu0 0.0
        %1284 = vmatprep.mubr.f32.mxu0 0.0
        %1285 = vmatmul.mubr.f32.gmra.mrb[0].mxu0 %v1212
        %v1286 = vpop.f32.mrb[0].mxu0
        %v1287 = vadd.f32 0.0, %v1286
        %v1288 = vpop.f32.mrb[0].mxu0
        %v1289 = vadd.f32 0.0, %v1288
        %1290 = vmatprep.mubr.f32.mxu0 0.0
        %1291 = vmatmul.mubr.f32.gmra.mrb[0].mxu0 %v1215
        %v1292 = vpop.f32.mrb[0].mxu0
        %v1293 = vadd.f32 0.0, %v1292
        %v1294 = vpop.f32.mrb[0].mxu0
        %v1295 = vadd.f32 0.0, %v1294
        %1296 = vmatprep.mubr.f32.mxu0 0.0
        %1297 = vmatmul.mubr.f32.gmra.mrb[0].mxu0 %v1218
        %v1298 = vpop.f32.mrb[0].mxu0
        %v1299 = vpop.f32.mrb[0].mxu0
        %1300 = vdwg.mxu0
        %1301 = vmatprep.subr.mxu0 %v1173
        %1302 = vmatpush1.msra.mxu0 %v1172
        %1303 = vmatprep.subr.mxu0 %v1178
        %1304 = vmatpush1.msra.mxu0 %v1177
        %1305 = vmatprep.subr.mxu0 %v1183
        %1306 = vmatpush1.msra.mxu0 %v1182
        %1307 = vmatprep.subr.mxu0 %v1188
        %1308 = vmatpush1.msra.mxu0 %v1187
        %1309 = vmatprep.subr.mxu0 %v1193
        %1310 = vmatpush1.msra.mxu0 %v1192
        %1311 = vmatprep.subr.mxu0 %v1198
        %1312 = vmatpush1.msra.mxu0 %v1197
        %1313 = vmatprep.subr.mxu0 %v1203
        %1314 = vmatpush1.msra.mxu0 %v1202
        %1315 = vmatprep.subr.mxu0 %v1208
        %1316 = vmatpush1.msra.mxu0 %v1207
        %1317 = vmatprep.subr.mxu0 0.0
        %1318 = vmatpush1.msra.mxu0 0.0
        %1319 = vmatprep.subr.mxu0 0.0
        %1320 = vmatpush1.msra.mxu0 0.0
        %1321 = vmatprep.subr.mxu0 0.0
        %1322 = vmatpush1.msra.mxu0 0.0
        %1323 = vmatprep.subr.mxu0 0.0
        %1324 = vmatpush1.msra.mxu0 0.0
        %1325 = vmatprep.subr.mxu0 0.0
        %1326 = vmatpush1.msra.mxu0 0.0
        %1327 = vmatprep.subr.mxu0 0.0
        %1328 = vmatpush1.msra.mxu0 0.0
        %1329 = vmatprep.subr.mxu0 0.0
        %1330 = vmatpush1.msra.mxu0 0.0
        %1331 = vmatprep.subr.mxu0 0.0
        %1332 = vmatpush1.msra.mxu0 0.0
        %1333 = vmatprep.subr.mxu0 0.0
        %1334 = vmatpush1.msra.mxu0 0.0
        %1335 = vmatprep.subr.mxu0 0.0
        %1336 = vmatpush1.msra.mxu0 0.0
        %1337 = vmatprep.subr.mxu0 0.0
        %1338 = vmatpush1.msra.mxu0 0.0
        %1339 = vmatprep.subr.mxu0 0.0
        %1340 = vmatpush1.msra.mxu0 0.0
        %1341 = vmatprep.subr.mxu0 0.0
        %1342 = vmatpush1.msra.mxu0 0.0
        %1343 = vmatprep.subr.mxu0 0.0
        %1344 = vmatpush1.msra.mxu0 0.0
        %1345 = vmatprep.subr.mxu0 0.0
        %1346 = vmatpush1.msra.mxu0 0.0
        %1347 = vmatprep.subr.mxu0 0.0
        %1348 = vmatpush1.msra.mxu0 0.0
        %1349 = vmatprep.subr.mxu0 0.0
        %1350 = vmatpush1.msra.mxu0 0.0
        %1351 = vmatprep.subr.mxu0 0.0
        %1352 = vmatpush1.msra.mxu0 0.0
        %1353 = vmatprep.subr.mxu0 0.0
        %1354 = vmatpush1.msra.mxu0 0.0
        %1355 = vmatprep.subr.mxu0 0.0
        %1356 = vmatpush1.msra.mxu0 0.0
        %1357 = vmatprep.subr.mxu0 0.0
        %1358 = vmatpush1.msra.mxu0 0.0
        %1359 = vmatprep.subr.mxu0 0.0
        %1360 = vmatpush1.msra.mxu0 0.0
        %1361 = vmatprep.subr.mxu0 0.0
        %1362 = vmatpush1.msra.mxu0 0.0
        %1363 = vmatprep.subr.mxu0 0.0
        %1364 = vmatpush1.msra.mxu0 0.0
        %1365 = vmatprep.mubr.f32.mxu0 0.0
        %1366 = vmatmul.mubr.f32.gmra.mrb[0].mxu0 %v1212
        %v1367 = vpop.f32.mrb[0].mxu0
        %v1368 = vadd.f32 0.0, %v1367
        %v1369 = vpop.f32.mrb[0].mxu0
        %1370 = vmatprep.mubr.f32.mxu0 0.0
        %1371 = vmatmul.mubr.f32.gmra.mrb[0].mxu0 %v1215
        %v1372 = vpop.f32.mrb[0].mxu0
        %v1373 = vadd.f32 0.0, %v1372
        %v1374 = vpop.f32.mrb[0].mxu0
        %v1375 = vadd.f32 0.0, %v1374
        %1376 = vmatprep.mubr.f32.mxu0 0.0
        %1377 = vmatmul.mubr.f32.gmra.mrb[0].mxu0 %v1218
        %v1378 = vpop.f32.mrb[0].mxu0
        %v1379 = vpop.f32.mrb[0].mxu0
        %v1380 = vadd.f32 0.0, %v1379
        %1381 = vdwg.mxu0
        %1382 = vmatprep.subr.mxu0 0.0
        %1383 = vmatpush1.msra.mxu0 %v1174
        %1384 = vmatprep.subr.mxu0 0.0
        %1385 = vmatpush1.msra.mxu0 %v1179
        %1386 = vmatprep.subr.mxu0 0.0
        %1387 = vmatpush1.msra.mxu0 %v1184
        %1388 = vmatprep.subr.mxu0 0.0
        %1389 = vmatpush1.msra.mxu0 %v1189
        %1390 = vmatprep.subr.mxu0 0.0
        %1391 = vmatpush1.msra.mxu0 %v1194
        %1392 = vmatprep.subr.mxu0 0.0
        %1393 = vmatpush1.msra.mxu0 %v1199
        %1394 = vmatprep.subr.mxu0 0.0
        %1395 = vmatpush1.msra.mxu0 %v1204
        %1396 = vmatprep.subr.mxu0 0.0
        %1397 = vmatpush1.msra.mxu0 %v1209
        %1398 = vmatprep.subr.mxu0 0.0
        %1399 = vmatpush1.msra.mxu0 0.0
        %1400 = vmatprep.subr.mxu0 0.0
        %1401 = vmatpush1.msra.mxu0 0.0
        %1402 = vmatprep.subr.mxu0 0.0
        %1403 = vmatpush1.msra.mxu0 0.0
        %1404 = vmatprep.subr.mxu0 0.0
        %1405 = vmatpush1.msra.mxu0 0.0
        %1406 = vmatprep.subr.mxu0 0.0
        %1407 = vmatpush1.msra.mxu0 0.0
        %1408 = vmatprep.subr.mxu0 0.0
        %1409 = vmatpush1.msra.mxu0 0.0
        %1410 = vmatprep.subr.mxu0 0.0
        %1411 = vmatpush1.msra.mxu0 0.0
        %1412 = vmatprep.subr.mxu0 0.0
        %1413 = vmatpush1.msra.mxu0 0.0
        %1414 = vmatprep.subr.mxu0 0.0
        %1415 = vmatpush1.msra.mxu0 0.0
        %1416 = vmatprep.subr.mxu0 0.0
        %1417 = vmatpush1.msra.mxu0 0.0
        %1418 = vmatprep.subr.mxu0 0.0
        %1419 = vmatpush1.msra.mxu0 0.0
        %1420 = vmatprep.subr.mxu0 0.0
        %1421 = vmatpush1.msra.mxu0 0.0
        %1422 = vmatprep.subr.mxu0 0.0
        %1423 = vmatpush1.msra.mxu0 0.0
        %1424 = vmatprep.subr.mxu0 0.0
        %1425 = vmatpush1.msra.mxu0 0.0
        %1426 = vmatprep.subr.mxu0 0.0
        %1427 = vmatpush1.msra.mxu0 0.0
        %1428 = vmatprep.subr.mxu0 0.0
        %1429 = vmatpush1.msra.mxu0 0.0
        %1430 = vmatprep.subr.mxu0 0.0
        %1431 = vmatpush1.msra.mxu0 0.0
        %1432 = vmatprep.subr.mxu0 0.0
        %1433 = vmatpush1.msra.mxu0 0.0
        %1434 = vmatprep.subr.mxu0 0.0
        %1435 = vmatpush1.msra.mxu0 0.0
        %1436 = vmatprep.subr.mxu0 0.0
        %1437 = vmatpush1.msra.mxu0 0.0
        %1438 = vmatprep.subr.mxu0 0.0
        %1439 = vmatpush1.msra.mxu0 0.0
        %1440 = vmatprep.subr.mxu0 0.0
        %1441 = vmatpush1.msra.mxu0 0.0
        %1442 = vmatprep.subr.mxu0 0.0
        %1443 = vmatpush1.msra.mxu0 0.0
        %1444 = vmatprep.subr.mxu0 0.0
        %1445 = vmatpush1.msra.mxu0 0.0
        %1446 = vmatprep.mubr.f32.mxu0 0.0
        %1447 = vmatmul.mubr.f32.gmra.mrb[0].mxu0 %v1212
        %v1448 = vpop.f32.mrb[0].mxu0
        %v1449 = vpop.f32.mrb[0].mxu0
        %1450 = vmatprep.mubr.f32.mxu0 0.0
        %1451 = vmatmul.mubr.f32.gmra.mrb[0].mxu0 %v1215
        %v1452 = vpop.f32.mrb[0].mxu0
        %v1453 = vadd.f32 0.0, %v1452
        %v1454 = vpop.f32.mrb[0].mxu0
        %1455 = vmatprep.mubr.f32.mxu0 0.0
        %1456 = vmatmul.mubr.f32.gmra.mrb[0].mxu0 %v1218
        %v1457 = vpop.f32.mrb[0].mxu0
        %v1458 = vadd.f32 0.0, %v1457
        %v1459 = vpop.f32.mrb[0].mxu0
        %1460 = vdwg.mxu0
        %v1463 = vrot.slane %v1287, 1
        %v1464 = vrot.slane %v1293, 1
        %v1465 = vsel %vm726, %v1463, %v1464
        %1466 = vrot.lane.b32.xlu0 %v1465, 64
        %v1467 = vpop.permute.xlu0 %1466
        %v1469 = vadd.f32 %v1287, %v1467
        %v1472 = vrot.slane %v1289, 2
        %v1473 = vrot.slane %v1295, 2
        %v1474 = vsel %vm736, %v1472, %v1473
        %v1476 = vadd.f32 %v1469, %v1474
        %v1477 = vrot.slane %v1289, 4
        %v1478 = vrot.slane %v1295, 4
        %v1479 = vsel %vm742, %v1477, %v1478
        %1480 = vrot.lane.b32.xlu0 %v1479, 64
        %v1481 = vpop.permute.xlu0 %1480
        %v1483 = vadd.f32 %v1476, %v1481
        %v1486 = vrot.slane %v1368, 5
        %v1487 = vrot.slane %v1373, 5
        %v1488 = vsel %vm752, %v1486, %v1487
        %v1490 = vadd.f32 %v1483, %v1488
        %v1491 = vrot.slane %v1368, 6
        %v1492 = vrot.slane %v1373, 6
        %v1493 = vsel %vm758, %v1491, %v1492
        %1494 = vrot.lane.b32.xlu0 %v1493, 64
        %v1495 = vpop.permute.xlu0 %1494
        %v1497 = vadd.f32 %v1490, %v1495
        %v1498 = vadd.f32 %v1497, %v1375
        %v1501 = vrot.slane %v1375, 1
        %v1502 = vrot.slane %v1380, 1
        %v1503 = vsel %vm726, %v1501, %v1502
        %1504 = vrot.lane.b32.xlu0 %v1503, 64
        %v1505 = vpop.permute.xlu0 %1504
        %v1507 = vadd.f32 %v1498, %v1505
        %v1510 = vrot.slane %v1453, 2
        %v1511 = vrot.slane %v1458, 2
        %v1512 = vsel %vm736, %v1510, %v1511
        %v1514 = vadd.f32 %v1507, %v1512
        %v1515 = vlaneseq
        %v1516 = vshrl.u32 %v1515, 7
        %v1517 = vsub.s32 0, %v1516
        %v1518 = vrot.slane %v1210, %v1517
        %v1519 = vadd.f32 %v1514, %v1518
        %s1520 = sld [smem:[#allocation3 + $0x3]]
        %vm1521 = vcmp.ge.f32.partialorder %v1519, 0.0
        %v1522 = vstv %s1520
        %v1523 = vmul.f32 %v1522, %v1519
        %v1524 = vsel %vm1521, %v1519, %v1523
        %v1525 = vmul.f32 %v1524, %v796
        %1526 = vst.msk [vmem:[#allocation2 + $0x5] sm:$0xff] %vm428, %v1525
        %v1527 = vld [vmem:[#allocation2] sm:$0xff]
        %v1528 = vld [vmem:[#allocation2 + $0x8] sm:$0xff]
        %v1529 = vld [vmem:[#allocation2 + $0x10] sm:$0x3]
        %s1530 = scalar_lea.vmem %s3, 960
        %v1531 = vld [vmem:[%s1530] sm:$0xff]
        %v1532 = vld [vmem:[%s1530 + $0x8] sm:$0xff]
        %v1533 = vld [vmem:[%s1530 + $0x10] sm:$0xff]
        %v1534 = vld [vmem:[%s1530 + $0x18] sm:$0xff]
        %v1535 = vld [vmem:[%s1530 + $0x20] sm:$0xff]
        %v1536 = vld [vmem:[%s1530 + $0x28] sm:$0xff]
        %v1537 = vld [vmem:[%s1530 + $0x30] sm:$0xff]
        %v1538 = vld [vmem:[%s1530 + $0x38] sm:$0xff]
        %v1539 = vld [vmem:[%s1530 + $0x40] sm:$0xff]
        %v1540 = vld [vmem:[%s1530 + $0x48] sm:$0xff]
        %v1541 = vld [vmem:[%s1530 + $0x50] sm:$0xff]
        %v1542 = vld [vmem:[%s1530 + $0x58] sm:$0xff]
        %v1543 = vld [vmem:[%s1530 + $0x60] sm:$0xff]
        %v1544 = vld [vmem:[%s1530 + $0x68] sm:$0xff]
        %v1545 = vld [vmem:[%s1530 + $0x70] sm:$0xff]
        %v1546 = vld [vmem:[%s1530 + $0x78] sm:$0xff]
        %v1547 = vld [vmem:[%s1530 + $0x80] sm:$0xff]
        %v1548 = vld [vmem:[%s1530 + $0x88] sm:$0xff]
        %v1549 = vld [vmem:[%s1530 + $0x90] sm:$0xff]
        %v1550 = vld [vmem:[%s1530 + $0x98] sm:$0xff]
        %v1551 = vld [vmem:[%s1530 + $0xa0] sm:$0xff]
        %v1552 = vld [vmem:[%s1530 + $0xa8] sm:$0xff]
        %v1553 = vld [vmem:[%s1530 + $0xb0] sm:$0xff]
        %v1554 = vld [vmem:[%s1530 + $0xb8] sm:$0xff]
        %v1555 = vld [vmem:[%s1530 + $0xc0] sm:$0xff]
        %v1556 = vld [vmem:[%s1530 + $0xc8] sm:$0xff]
        %v1557 = vld [vmem:[%s1530 + $0xd0] sm:$0xff]
        %v1558 = vld [vmem:[%s1530 + $0xd8] sm:$0xff]
        %v1559 = vld [vmem:[%s1530 + $0xe0] sm:$0xff]
        %v1560 = vld [vmem:[%s1530 + $0xe8] sm:$0xff]
        %v1561 = vld [vmem:[%s1530 + $0xf0] sm:$0xff]
        %v1562 = vld [vmem:[%s1530 + $0xf8] sm:$0xff]
        %v1563 = vld [vmem:[%s1530 + $0x100] sm:$0xff]
        %v1564 = vld [vmem:[%s1530 + $0x108] sm:$0xff]
        %v1565 = vld [vmem:[%s1530 + $0x110] sm:$0xff]
        %v1566 = vld [vmem:[%s1530 + $0x118] sm:$0xff]
        %v1567 = vld [vmem:[%s1530 + $0x120] sm:$0xff]
        %v1568 = vld [vmem:[%s1530 + $0x128] sm:$0xff]
        %v1569 = vld [vmem:[%s1530 + $0x130] sm:$0xff]
        %v1570 = vld [vmem:[%s1530 + $0x138] sm:$0xff]
        %v1571 = vld [vmem:[%s4 + $0x4] sm:$0x1]
        %v1573 = vsel %vm428, %v1527, 0
        %v1576 = vsel %vm428, %v1528, 0
        %v1579 = vsel %vm428, %v1529, 0
        %1581 = vmatprep.subr.mxu0 %v1532
        %1582 = vmatpush1.msra.mxu0 %v1531
        %1583 = vmatprep.subr.mxu0 %v1537
        %1584 = vmatpush1.msra.mxu0 %v1536
        %1585 = vmatprep.subr.mxu0 %v1542
        %1586 = vmatpush1.msra.mxu0 %v1541
        %1587 = vmatprep.subr.mxu0 %v1547
        %1588 = vmatpush1.msra.mxu0 %v1546
        %1589 = vmatprep.subr.mxu0 %v1552
        %1590 = vmatpush1.msra.mxu0 %v1551
        %1591 = vmatprep.subr.mxu0 %v1557
        %1592 = vmatpush1.msra.mxu0 %v1556
        %1593 = vmatprep.subr.mxu0 %v1562
        %1594 = vmatpush1.msra.mxu0 %v1561
        %1595 = vmatprep.subr.mxu0 %v1567
        %1596 = vmatpush1.msra.mxu0 %v1566
        %1597 = vmatprep.subr.mxu0 0.0
        %1598 = vmatpush1.msra.mxu0 0.0
        %1599 = vmatprep.subr.mxu0 0.0
        %1600 = vmatpush1.msra.mxu0 0.0
        %1601 = vmatprep.subr.mxu0 0.0
        %1602 = vmatpush1.msra.mxu0 0.0
        %1603 = vmatprep.subr.mxu0 0.0
        %1604 = vmatpush1.msra.mxu0 0.0
        %1605 = vmatprep.subr.mxu0 0.0
        %1606 = vmatpush1.msra.mxu0 0.0
        %1607 = vmatprep.subr.mxu0 0.0
        %1608 = vmatpush1.msra.mxu0 0.0
        %1609 = vmatprep.subr.mxu0 0.0
        %1610 = vmatpush1.msra.mxu0 0.0
        %1611 = vmatprep.subr.mxu0 0.0
        %1612 = vmatpush1.msra.mxu0 0.0
        %1613 = vmatprep.subr.mxu0 0.0
        %1614 = vmatpush1.msra.mxu0 0.0
        %1615 = vmatprep.subr.mxu0 0.0
        %1616 = vmatpush1.msra.mxu0 0.0
        %1617 = vmatprep.subr.mxu0 0.0
        %1618 = vmatpush1.msra.mxu0 0.0
        %1619 = vmatprep.subr.mxu0 0.0
        %1620 = vmatpush1.msra.mxu0 0.0
        %1621 = vmatprep.subr.mxu0 0.0
        %1622 = vmatpush1.msra.mxu0 0.0
        %1623 = vmatprep.subr.mxu0 0.0
        %1624 = vmatpush1.msra.mxu0 0.0
        %1625 = vmatprep.subr.mxu0 0.0
        %1626 = vmatpush1.msra.mxu0 0.0
        %1627 = vmatprep.subr.mxu0 0.0
        %1628 = vmatpush1.msra.mxu0 0.0
        %1629 = vmatprep.subr.mxu0 0.0
        %1630 = vmatpush1.msra.mxu0 0.0
        %1631 = vmatprep.subr.mxu0 0.0
        %1632 = vmatpush1.msra.mxu0 0.0
        %1633 = vmatprep.subr.mxu0 0.0
        %1634 = vmatpush1.msra.mxu0 0.0
        %1635 = vmatprep.subr.mxu0 0.0
        %1636 = vmatpush1.msra.mxu0 0.0
        %1637 = vmatprep.subr.mxu0 0.0
        %1638 = vmatpush1.msra.mxu0 0.0
        %1639 = vmatprep.subr.mxu0 0.0
        %1640 = vmatpush1.msra.mxu0 0.0
        %1641 = vmatprep.subr.mxu0 0.0
        %1642 = vmatpush1.msra.mxu0 0.0
        %1643 = vmatprep.subr.mxu0 0.0
        %1644 = vmatpush1.msra.mxu0 0.0
        %1645 = vmatprep.mubr.f32.mxu0 0.0
        %1646 = vmatmul.mubr.f32.gmra.mrb[0].mxu0 %v1573
        %v1647 = vpop.f32.mrb[0].mxu0
        %v1648 = vadd.f32 0.0, %v1647
        %v1649 = vpop.f32.mrb[0].mxu0
        %v1650 = vadd.f32 0.0, %v1649
        %1651 = vmatprep.mubr.f32.mxu0 0.0
        %1652 = vmatmul.mubr.f32.gmra.mrb[0].mxu0 %v1576
        %v1653 = vpop.f32.mrb[0].mxu0
        %v1654 = vadd.f32 0.0, %v1653
        %v1655 = vpop.f32.mrb[0].mxu0
        %v1656 = vadd.f32 0.0, %v1655
        %1657 = vmatprep.mubr.f32.mxu0 0.0
        %1658 = vmatmul.mubr.f32.gmra.mrb[0].mxu0 %v1579
        %v1659 = vpop.f32.mrb[0].mxu0
        %v1660 = vpop.f32.mrb[0].mxu0
        %1661 = vdwg.mxu0
        %1662 = vmatprep.subr.mxu0 %v1534
        %1663 = vmatpush1.msra.mxu0 %v1533
        %1664 = vmatprep.subr.mxu0 %v1539
        %1665 = vmatpush1.msra.mxu0 %v1538
        %1666 = vmatprep.subr.mxu0 %v1544
        %1667 = vmatpush1.msra.mxu0 %v1543
        %1668 = vmatprep.subr.mxu0 %v1549
        %1669 = vmatpush1.msra.mxu0 %v1548
        %1670 = vmatprep.subr.mxu0 %v1554
        %1671 = vmatpush1.msra.mxu0 %v1553
        %1672 = vmatprep.subr.mxu0 %v1559
        %1673 = vmatpush1.msra.mxu0 %v1558
        %1674 = vmatprep.subr.mxu0 %v1564
        %1675 = vmatpush1.msra.mxu0 %v1563
        %1676 = vmatprep.subr.mxu0 %v1569
        %1677 = vmatpush1.msra.mxu0 %v1568
        %1678 = vmatprep.subr.mxu0 0.0
        %1679 = vmatpush1.msra.mxu0 0.0
        %1680 = vmatprep.subr.mxu0 0.0
        %1681 = vmatpush1.msra.mxu0 0.0
        %1682 = vmatprep.subr.mxu0 0.0
        %1683 = vmatpush1.msra.mxu0 0.0
        %1684 = vmatprep.subr.mxu0 0.0
        %1685 = vmatpush1.msra.mxu0 0.0
        %1686 = vmatprep.subr.mxu0 0.0
        %1687 = vmatpush1.msra.mxu0 0.0
        %1688 = vmatprep.subr.mxu0 0.0
        %1689 = vmatpush1.msra.mxu0 0.0
        %1690 = vmatprep.subr.mxu0 0.0
        %1691 = vmatpush1.msra.mxu0 0.0
        %1692 = vmatprep.subr.mxu0 0.0
        %1693 = vmatpush1.msra.mxu0 0.0
        %1694 = vmatprep.subr.mxu0 0.0
        %1695 = vmatpush1.msra.mxu0 0.0
        %1696 = vmatprep.subr.mxu0 0.0
        %1697 = vmatpush1.msra.mxu0 0.0
        %1698 = vmatprep.subr.mxu0 0.0
        %1699 = vmatpush1.msra.mxu0 0.0
        %1700 = vmatprep.subr.mxu0 0.0
        %1701 = vmatpush1.msra.mxu0 0.0
        %1702 = vmatprep.subr.mxu0 0.0
        %1703 = vmatpush1.msra.mxu0 0.0
        %1704 = vmatprep.subr.mxu0 0.0
        %1705 = vmatpush1.msra.mxu0 0.0
        %1706 = vmatprep.subr.mxu0 0.0
        %1707 = vmatpush1.msra.mxu0 0.0
        %1708 = vmatprep.subr.mxu0 0.0
        %1709 = vmatpush1.msra.mxu0 0.0
        %1710 = vmatprep.subr.mxu0 0.0
        %1711 = vmatpush1.msra.mxu0 0.0
        %1712 = vmatprep.subr.mxu0 0.0
        %1713 = vmatpush1.msra.mxu0 0.0
        %1714 = vmatprep.subr.mxu0 0.0
        %1715 = vmatpush1.msra.mxu0 0.0
        %1716 = vmatprep.subr.mxu0 0.0
        %1717 = vmatpush1.msra.mxu0 0.0
        %1718 = vmatprep.subr.mxu0 0.0
        %1719 = vmatpush1.msra.mxu0 0.0
        %1720 = vmatprep.subr.mxu0 0.0
        %1721 = vmatpush1.msra.mxu0 0.0
        %1722 = vmatprep.subr.mxu0 0.0
        %1723 = vmatpush1.msra.mxu0 0.0
        %1724 = vmatprep.subr.mxu0 0.0
        %1725 = vmatpush1.msra.mxu0 0.0
        %1726 = vmatprep.mubr.f32.mxu0 0.0
        %1727 = vmatmul.mubr.f32.gmra.mrb[0].mxu0 %v1573
        %v1728 = vpop.f32.mrb[0].mxu0
        %v1729 = vadd.f32 0.0, %v1728
        %v1730 = vpop.f32.mrb[0].mxu0
        %1731 = vmatprep.mubr.f32.mxu0 0.0
        %1732 = vmatmul.mubr.f32.gmra.mrb[0].mxu0 %v1576
        %v1733 = vpop.f32.mrb[0].mxu0
        %v1734 = vadd.f32 0.0, %v1733
        %v1735 = vpop.f32.mrb[0].mxu0
        %v1736 = vadd.f32 0.0, %v1735
        %1737 = vmatprep.mubr.f32.mxu0 0.0
        %1738 = vmatmul.mubr.f32.gmra.mrb[0].mxu0 %v1579
        %v1739 = vpop.f32.mrb[0].mxu0
        %v1740 = vpop.f32.mrb[0].mxu0
        %v1741 = vadd.f32 0.0, %v1740
        %1742 = vdwg.mxu0
        %1743 = vmatprep.subr.mxu0 0.0
        %1744 = vmatpush1.msra.mxu0 %v1535
        %1745 = vmatprep.subr.mxu0 0.0
        %1746 = vmatpush1.msra.mxu0 %v1540
        %1747 = vmatprep.subr.mxu0 0.0
        %1748 = vmatpush1.msra.mxu0 %v1545
        %1749 = vmatprep.subr.mxu0 0.0
        %1750 = vmatpush1.msra.mxu0 %v1550
        %1751 = vmatprep.subr.mxu0 0.0
        %1752 = vmatpush1.msra.mxu0 %v1555
        %1753 = vmatprep.subr.mxu0 0.0
        %1754 = vmatpush1.msra.mxu0 %v1560
        %1755 = vmatprep.subr.mxu0 0.0
        %1756 = vmatpush1.msra.mxu0 %v1565
        %1757 = vmatprep.subr.mxu0 0.0
        %1758 = vmatpush1.msra.mxu0 %v1570
        %1759 = vmatprep.subr.mxu0 0.0
        %1760 = vmatpush1.msra.mxu0 0.0
        %1761 = vmatprep.subr.mxu0 0.0
        %1762 = vmatpush1.msra.mxu0 0.0
        %1763 = vmatprep.subr.mxu0 0.0
        %1764 = vmatpush1.msra.mxu0 0.0
        %1765 = vmatprep.subr.mxu0 0.0
        %1766 = vmatpush1.msra.mxu0 0.0
        %1767 = vmatprep.subr.mxu0 0.0
        %1768 = vmatpush1.msra.mxu0 0.0
        %1769 = vmatprep.subr.mxu0 0.0
        %1770 = vmatpush1.msra.mxu0 0.0
        %1771 = vmatprep.subr.mxu0 0.0
        %1772 = vmatpush1.msra.mxu0 0.0
        %1773 = vmatprep.subr.mxu0 0.0
        %1774 = vmatpush1.msra.mxu0 0.0
        %1775 = vmatprep.subr.mxu0 0.0
        %1776 = vmatpush1.msra.mxu0 0.0
        %1777 = vmatprep.subr.mxu0 0.0
        %1778 = vmatpush1.msra.mxu0 0.0
        %1779 = vmatprep.subr.mxu0 0.0
        %1780 = vmatpush1.msra.mxu0 0.0
        %1781 = vmatprep.subr.mxu0 0.0
        %1782 = vmatpush1.msra.mxu0 0.0
        %1783 = vmatprep.subr.mxu0 0.0
        %1784 = vmatpush1.msra.mxu0 0.0
        %1785 = vmatprep.subr.mxu0 0.0
        %1786 = vmatpush1.msra.mxu0 0.0
        %1787 = vmatprep.subr.mxu0 0.0
        %1788 = vmatpush1.msra.mxu0 0.0
        %1789 = vmatprep.subr.mxu0 0.0
        %1790 = vmatpush1.msra.mxu0 0.0
        %1791 = vmatprep.subr.mxu0 0.0
        %1792 = vmatpush1.msra.mxu0 0.0
        %1793 = vmatprep.subr.mxu0 0.0
        %1794 = vmatpush1.msra.mxu0 0.0
        %1795 = vmatprep.subr.mxu0 0.0
        %1796 = vmatpush1.msra.mxu0 0.0
        %1797 = vmatprep.subr.mxu0 0.0
        %1798 = vmatpush1.msra.mxu0 0.0
        %1799 = vmatprep.subr.mxu0 0.0
        %1800 = vmatpush1.msra.mxu0 0.0
        %1801 = vmatprep.subr.mxu0 0.0
        %1802 = vmatpush1.msra.mxu0 0.0
        %1803 = vmatprep.subr.mxu0 0.0
        %1804 = vmatpush1.msra.mxu0 0.0
        %1805 = vmatprep.subr.mxu0 0.0
        %1806 = vmatpush1.msra.mxu0 0.0
        %1807 = vmatprep.mubr.f32.mxu0 0.0
        %1808 = vmatmul.mubr.f32.gmra.mrb[0].mxu0 %v1573
        %v1809 = vpop.f32.mrb[0].mxu0
        %v1810 = vpop.f32.mrb[0].mxu0
        %1811 = vmatprep.mubr.f32.mxu0 0.0
        %1812 = vmatmul.mubr.f32.gmra.mrb[0].mxu0 %v1576
        %v1813 = vpop.f32.mrb[0].mxu0
        %v1814 = vadd.f32 0.0, %v1813
        %v1815 = vpop.f32.mrb[0].mxu0
        %1816 = vmatprep.mubr.f32.mxu0 0.0
        %1817 = vmatmul.mubr.f32.gmra.mrb[0].mxu0 %v1579
        %v1818 = vpop.f32.mrb[0].mxu0
        %v1819 = vadd.f32 0.0, %v1818
        %v1820 = vpop.f32.mrb[0].mxu0
        %1821 = vdwg.mxu0
        %v1824 = vrot.slane %v1648, 1
        %v1825 = vrot.slane %v1654, 1
        %v1826 = vsel %vm726, %v1824, %v1825
        %1827 = vrot.lane.b32.xlu0 %v1826, 64
        %v1828 = vpop.permute.xlu0 %1827
        %v1830 = vadd.f32 %v1648, %v1828
        %v1833 = vrot.slane %v1650, 2
        %v1834 = vrot.slane %v1656, 2
        %v1835 = vsel %vm736, %v1833, %v1834
        %v1837 = vadd.f32 %v1830, %v1835
        %v1838 = vrot.slane %v1650, 4
        %v1839 = vrot.slane %v1656, 4
        %v1840 = vsel %vm742, %v1838, %v1839
        %1841 = vrot.lane.b32.xlu0 %v1840, 64
        %v1842 = vpop.permute.xlu0 %1841
        %v1844 = vadd.f32 %v1837, %v1842
        %v1847 = vrot.slane %v1729, 5
        %v1848 = vrot.slane %v1734, 5
        %v1849 = vsel %vm752, %v1847, %v1848
        %v1851 = vadd.f32 %v1844, %v1849
        %v1852 = vrot.slane %v1729, 6
        %v1853 = vrot.slane %v1734, 6
        %v1854 = vsel %vm758, %v1852, %v1853
        %1855 = vrot.lane.b32.xlu0 %v1854, 64
        %v1856 = vpop.permute.xlu0 %1855
        %v1858 = vadd.f32 %v1851, %v1856
        %v1859 = vadd.f32 %v1858, %v1736
        %v1862 = vrot.slane %v1736, 1
        %v1863 = vrot.slane %v1741, 1
        %v1864 = vsel %vm726, %v1862, %v1863
        %1865 = vrot.lane.b32.xlu0 %v1864, 64
        %v1866 = vpop.permute.xlu0 %1865
        %v1868 = vadd.f32 %v1859, %v1866
        %v1871 = vrot.slane %v1814, 2
        %v1872 = vrot.slane %v1819, 2
        %v1873 = vsel %vm736, %v1871, %v1872
        %v1875 = vadd.f32 %v1868, %v1873
        %v1876 = vlaneseq
        %v1877 = vshrl.u32 %v1876, 7
        %v1878 = vsub.s32 0, %v1877
        %v1879 = vrot.slane %v1571, %v1878
        %v1880 = vadd.f32 %v1875, %v1879
        %v1881 = vadd.f32 %v1880, %v1163
        %s1882 = sld [smem:[#allocation3 + $0x4]]
        %vm1883 = vcmp.ge.f32.partialorder %v1881, 0.0
        %v1884 = vstv %s1882
        %v1885 = vmul.f32 %v1884, %v1881
        %v1886 = vsel %vm1883, %v1881, %v1885
        %v1887 = vsel %vm428, %v1886, 0.0
        %1888 = vadd.xlane.f32.xlu0 %v1887
        %v1889 = vpop.xlane.xlu0 %1888
        %v1890 = vrcp.pop 64.0
        %v1891 = vmul.f32 %v1889, %v1890
        %v1892 = vsub.f32 %v1886, %v1891
        %v1893 = vmul.f32 %v1892, %v1892
        %v1894 = vsel %vm428, %v1893, 0.0
        %1895 = vadd.xlane.f32.xlu0 %v1894
        %v1896 = vpop.xlane.xlu0 %1895
        %v1897 = vmul.f32 %v1896, %v1890
        %v1898 = vadd.f32 %v1897, 1e-05
        %v1899 = vrsqrt.pop %v1898
        %v1900 = vmul.f32 %v1892, %v1899
        %v1901 = vld [vmem:[%s5] sm:$0x1]
        %v1902 = vlaneseq
        %v1903 = vshrl.u32 %v1902, 7
        %v1904 = vsub.s32 0, %v1903
        %v1905 = vrot.slane %v1901, %v1904
        %v1906 = vmul.f32 %v1900, %v1905
        %v1907 = vld [vmem:[%s5 + $0x1] sm:$0x1]
        %v1908 = vlaneseq
        %v1909 = vshrl.u32 %v1908, 7
        %v1910 = vsub.s32 0, %v1909
        %v1911 = vrot.slane %v1907, %v1910
        %v1912 = vadd.f32 %v1906, %v1911
        %1913 = vst.msk [vmem:[%s290] sm:$0xff] %vm428, %v1912
        %p1914 = scmp.lt.s32.totalorder %s19, 1
        %s1915 = scalar_select %p1914, %s19, 1
        %s1916 = smul.addr %s1915, 8
        %s1917 = scalar_lea.vmem %s7, %s1916
        // Predicated region
        $region53: #{feature_extractor_pallas.7} parent=47 // pred_check
          %p1918 = pneg %p189
        $region54: #{feature_extractor_pallas.7} parent=47 // pred_check_branch
          %1920 = sbr.rel (%p1918) target = $region56
        $region55: #{feature_extractor_pallas.7} parent=47 // pred_region
          _
        $region56: #{feature_extractor_pallas.7} parent=47 // pred_fallthru
          _
      $region48: #{feature_extractor_pallas.7} parent=5 // pred_fallthru
        _
      %p1921 = scmp.le.s32.totalorder 2, %s14
      // Predicated region
      $region57: #{feature_extractor_pallas.7} parent=5 // pred_check
        %p1922 = pneg %p1921
      $region58: #{feature_extractor_pallas.7} parent=5 // pred_check_branch
        %1924 = sbr.rel (%p1922) target = $region60
      $region59: #{feature_extractor_pallas.7} parent=5 // pred_region
        %s1925 = ssub.s32 %s14, 2
        // Predicated region
        $region61: #{feature_extractor_pallas.7} parent=59 // pred_check
          %p1926 = pneg %p195
        $region62: #{feature_extractor_pallas.7} parent=59 // pred_check_branch
          %1928 = sbr.rel (%p1926) target = $region64
        $region63: #{feature_extractor_pallas.7} parent=59 // pred_region
          %p1929 = scmp.lt.s32.totalorder %s20, 1
          %s1930 = scalar_select %p1929, %s20, 1
          %s1931 = smul.addr %s1930, 8
          %s1932 = scalar_lea.vmem %s7, %s1931
        $region64: #{feature_extractor_pallas.7} parent=59 // pred_fallthru
          _
      $region60: #{feature_extractor_pallas.7} parent=5 // pred_fallthru
        _
    $region6: #{feature_extractor_pallas.7} parent=1 // loop_footer
      %s18 = sadd.s32 1, %s14
    $region7: #{feature_extractor_pallas.7} parent=1 // loop_footer_branch
      %13 = sbr.rel target = $region3
    $region8: #{feature_extractor_pallas.7} parent=1 // loop_exit
      _
    %1933 = vsyncpa [#allocation4], 1
    %s1934 = scalar_lea.sflag [#allocation4], 1
    %1935 = vsyncpa %s1934, 1

</llo_original>
